<compile_context>
chip_gen: v6e
topology: v6e:2x2x1
jax: 0.10.0
libtpu: 0.0.40
codegen_flags: <defaults>
</compile_context>

<pallas_src>
import math
import functools

import jax
import jax.numpy as jnp
from jax.experimental import pallas as pl
from jax.experimental.pallas import tpu as pltpu


def _layernorm(x, gamma, beta, eps=1e-5):
    mean = jnp.mean(x, axis=-1, keepdims=True)
    var = jnp.mean((x - mean) ** 2, axis=-1, keepdims=True)
    return (x - mean) * jax.lax.rsqrt(var + eps) * gamma + beta


def _pick_key_block(n1, target):
    """Largest key-block size <= target that divides N1 (multiple of 8)."""
    if n1 <= target:
        return n1
    divisors = [d for d in range(8, target + 1, 8) if n1 % d == 0]
    if divisors:
        return max(divisors)
    # TODO(synk): ragged N1 with no 8-aligned divisor <= target; fall back to a
    # single unmasked block rather than adding key masking.
    return n1


def _perceiver_attn_kernel(
    x_ref, lat_ref,
    g1_ref, b1_ref, g2_ref, b2_ref,
    wq_ref, wk_ref, wv_ref, wo_ref,
    out_ref,
    q_sc, ln_sc, m_sc, l_sc, acc_sc,
    *, heads, dim_head, mm_dtype,
):
    kv = pl.program_id(1)
    nkv = pl.num_programs(1)
    tk = x_ref.shape[1]
    N2 = lat_ref.shape[1]
    inner = heads * dim_head

    mm_dt = jnp.dtype(mm_dtype)
    exact_f32 = mm_dt == jnp.dtype(jnp.float32)

    def mm(a, b, spec=None):
        a = a.astype(mm_dt)
        b = b.astype(mm_dt)
        if spec is None:
            return jnp.dot(a, b, preferred_element_type=jnp.float32)
        return jnp.einsum(spec, a, b, preferred_element_type=jnp.float32)

    def to_heads(t, n):
        # (n, H*dh) -> (H, n, dh): head dim is the batch dim of the attention dots.
        return t.reshape(n, heads, dim_head).transpose(1, 0, 2)

    # ---- once per batch element: LN(latents), q projection, accumulator init ----
    @pl.when(kv == 0)
    def _init():
        ln = _layernorm(lat_ref[0].astype(jnp.float32), g2_ref[...], b2_ref[...])
        ln_sc[...] = ln
        # 1/sqrt(dim_head) is already folded into Wq by the wrapper.
        q = mm(ln, wq_ref[...])                       # (N2, inner)
        q_sc[...] = to_heads(q, N2)                   # (H, N2, dh)
        m_sc[...] = jnp.full_like(m_sc, -jnp.inf)
        l_sc[...] = jnp.zeros_like(l_sc)
        acc_sc[...] = jnp.zeros_like(acc_sc)

    # ---- every step: one block of image-token keys (online softmax update) ----
    xn = _layernorm(x_ref[0].astype(jnp.float32), g1_ref[...], b1_ref[...])  # (tk, D)
    k = mm(xn, wk_ref[...])                           # (tk, inner)
    v = mm(xn, wv_ref[...])                           # (tk, inner)
    kh = to_heads(k, tk)                              # (H, tk, dh)
    vh = to_heads(v, tk)

    s = mm(q_sc[...], kh, "hqd,hkd->hqk")             # (H, N2, tk), f32
    m_prev = m_sc[...]
    m_new = jnp.maximum(m_prev, jnp.max(s, axis=-1, keepdims=True))
    alpha = jnp.exp(m_prev - m_new)
    p = jnp.exp(s - m_new)
    l_sc[...] = alpha * l_sc[...] + jnp.sum(p, axis=-1, keepdims=True)
    acc_sc[...] = alpha * acc_sc[...] + mm(p, vh, "hqk,hkd->hqd")
    m_sc[...] = m_new

    # ---- last step: latent-token keys, finalize, output projection ----
    @pl.when(kv == nkv - 1)
    def _finalize():
        ln = ln_sc[...]
        kl = mm(ln, wk_ref[...])                      # (N2, inner)
        vl = mm(ln, wv_ref[...])
        klh = to_heads(kl, N2)
        vlh = to_heads(vl, N2)
        s2 = mm(q_sc[...], klh, "hqd,hkd->hqk")       # (H, N2, N2)
        m_p = m_sc[...]
        m_fin = jnp.maximum(m_p, jnp.max(s2, axis=-1, keepdims=True))
        alpha2 = jnp.exp(m_p - m_fin)
        p2 = jnp.exp(s2 - m_fin)
        l_fin = alpha2 * l_sc[...] + jnp.sum(p2, axis=-1, keepdims=True)
        acc = alpha2 * acc_sc[...] + mm(p2, vlh, "hqk,hkd->hqd")
        # Normalize once after p@v. approx reciprocal = EUP slot, free on the bf16 path.
        o = acc * pl.reciprocal(l_fin, approx=not exact_f32)
        o = o.transpose(1, 0, 2).reshape(N2, inner)   # (N2, H*dh)
        out_ref[0] = mm(o, wo_ref[...]).astype(out_ref.dtype)


def perceiver_attention(x, latents, params, *, heads, dim_head,
                        mxu_dtype=jnp.bfloat16, key_block=512):
    """x: (B, N1, D), latents: (B, N2, D) -> (B, N2, D)."""
    B, N1, D = x.shape
    _, N2, _ = latents.shape
    inner = heads * dim_head
    mm_dt = jnp.dtype(x.dtype if mxu_dtype is None else mxu_dtype)

    tk = _pick_key_block(N1, key_block)
    nkv = N1 // tk

    # LayerNorm params in f32 as (1, D) rows.
    g1 = params["g1"].reshape(1, D).astype(jnp.float32)
    b1 = params["b1"].reshape(1, D).astype(jnp.float32)
    g2 = params["g2"].reshape(1, D).astype(jnp.float32)
    b2 = params["b2"].reshape(1, D).astype(jnp.float32)

    # Fold the full 1/sqrt(dim_head) score scale into Wq once, then ship all
    # weights in the MXU dtype (halves weight DMA/VMEM on the bf16 path).
    wq = (params["wq"].astype(jnp.float32) * (float(dim_head) ** -0.5)).astype(mm_dt)
    wk = params["wk"].astype(mm_dt)
    wv = params["wv"].astype(mm_dt)
    wo = params["wo"].astype(mm_dt)

    kernel = functools.partial(_perceiver_attn_kernel, heads=heads,
                               dim_head=dim_head, mm_dtype=mm_dt)

    flops = 2 * B * (N2 * D * inner                     # q projection
                     + 2 * N1 * D * inner               # k/v over image tokens
                     + 2 * N2 * D * inner               # k/v over latents
                     + 2 * heads * N2 * (N1 + N2) * dim_head  # q@k^T + p@v
                     + N2 * inner * D)                  # output projection
    transcendentals = B * heads * N2 * (N1 + N2)
    bytes_accessed = int(x.size * x.dtype.itemsize
                         + latents.size * latents.dtype.itemsize
                         + (3 * D * inner + inner * D) * mm_dt.itemsize
                         + B * N2 * D * x.dtype.itemsize)
    cost = pl.CostEstimate(flops=int(flops),
                           transcendentals=int(transcendentals),
                           bytes_accessed=bytes_accessed)

    def build(single_buffer_weights):
        def wspec(r, c):
            # Grid-invariant weights: fetched once (index_map == (0,0)); single
            # buffering avoids reserving 2x their VMEM footprint.
            if single_buffer_weights:
                return pl.BlockSpec((r, c), lambda b, j: (0, 0),
                                    pipeline_mode=pl.Buffered(1))
            return pl.BlockSpec((r, c), lambda b, j: (0, 0))

        row = pl.BlockSpec((1, D), lambda b, j: (0, 0))
        grid_spec = pltpu.PrefetchScalarGridSpec(
            num_scalar_prefetch=0,
            grid=(B, nkv),
            in_specs=[
                pl.BlockSpec((1, tk, D), lambda b, j: (b, j, 0)),   # x key blocks
                pl.BlockSpec((1, N2, D), lambda b, j: (b, 0, 0)),   # latents
                row, row, row, row,                                 # LN gamma/beta
                wspec(D, inner), wspec(D, inner), wspec(D, inner),  # Wq, Wk, Wv
                wspec(inner, D),                                    # Wo
            ],
            out_specs=pl.BlockSpec((1, N2, D), lambda b, j: (b, 0, 0)),
            scratch_shapes=[
                pltpu.VMEM((heads, N2, dim_head), jnp.float32),     # q (head layout)
                pltpu.VMEM((N2, D), jnp.float32),                   # LN(latents)
                pltpu.VMEM((heads, N2, 1), jnp.float32),            # running max
                pltpu.VMEM((heads, N2, 1), jnp.float32),            # running denom
                pltpu.VMEM((heads, N2, dim_head), jnp.float32),     # running p@v acc
            ],
        )
        return pl.pallas_call(
            kernel,
            out_shape=jax.ShapeDtypeStruct((B, N2, D), x.dtype),
            grid_spec=grid_spec,
            compiler_params=pltpu.CompilerParams(
                dimension_semantics=("parallel", "arbitrary"),
                vmem_limit_bytes=48 * 1024 * 1024),
            cost_estimate=cost,
        )

    args = (x, latents, g1, b1, g2, b2, wq, wk, wv, wo)
    try:
        return jax.block_until_ready(build(True)(*args))
    except Exception:
        # Fallback: identical kernel with default double-buffered weight specs,
        # in case this jax version rejects pipeline_mode=pl.Buffered(1).
        return build(False)(*args)


def perceiver_attention_ref(x, latents, params, *, heads, dim_head):
    """Pure-JAX f32 reference mirroring the PyTorch forward."""
    B, N1, D = x.shape
    _, N2, _ = latents.shape
    xn = _layernorm(x, params["g1"], params["b1"])
    ln = _layernorm(latents, params["g2"], params["b2"])
    q = ln @ params["wq"]
    kv_in = jnp.concatenate([xn, ln], axis=1)
    k = kv_in @ params["wk"]
    v = kv_in @ params["wv"]

    def to_heads(t):
        b, l, _ = t.shape
        return t.reshape(b, l, heads, dim_head).transpose(0, 2, 1, 3)

    q, k, v = to_heads(q), to_heads(k), to_heads(v)
    scale = 1.0 / math.sqrt(math.sqrt(dim_head))
    w = jnp.einsum("bhqd,bhkd->bhqk", q * scale, k * scale)
    w = jax.nn.softmax(w.astype(jnp.float32), axis=-1).astype(w.dtype)
    o = jnp.einsum("bhqk,bhkd->bhqd", w, v)
    o = o.transpose(0, 2, 1, 3).reshape(B, N2, heads * dim_head)
    return o @ params["wo"]


if __name__ == "__main__":
    # Small shapes consistent with the module's forward.
    B, N1, N2, D = 2, 16, 8, 32
    HEADS, DIM_HEAD = 4, 8
    INNER = HEADS * DIM_HEAD

    key = jax.random.PRNGKey(0)
    keys = jax.random.split(key, 8)

    x = jax.random.normal(keys[0], (B, N1, D), dtype=jnp.float32)
    latents = jax.random.normal(keys[1], (B, N2, D), dtype=jnp.float32)

    params = {
        "g1": jnp.ones((D,), jnp.float32) + 0.1 * jax.random.normal(keys[2], (D,)),
        "b1": 0.1 * jax.random.normal(keys[3], (D,)),
        "g2": jnp.ones((D,), jnp.float32) + 0.1 * jax.random.normal(keys[4], (D,)),
        "b2": 0.1 * jax.random.normal(keys[5], (D,)),
        # Linear weights stored as (in, out): y = x @ W
        "wq": 0.1 * jax.random.normal(keys[6], (D, INNER), dtype=jnp.float32),
        "wk": 0.1 * jax.random.normal(jax.random.fold_in(key, 10), (D, INNER), dtype=jnp.float32),
        "wv": 0.1 * jax.random.normal(jax.random.fold_in(key, 11), (D, INNER), dtype=jnp.float32),
        "wo": 0.1 * jax.random.normal(keys[7], (INNER, D), dtype=jnp.float32),
    }

    ref = perceiver_attention_ref(x, latents, params, heads=HEADS, dim_head=DIM_HEAD)

    # 1) Exact f32-MXU path with a small key block (exercises the multi-block
    #    online softmax across the reduction grid axis) at tight tolerance.
    out_f32 = perceiver_attention(x, latents, params, heads=HEADS, dim_head=DIM_HEAD,
                                  mxu_dtype=jnp.float32, key_block=8)
    out_f32 = jax.block_until_ready(out_f32)
    assert out_f32.shape == (B, N2, D)
    assert jnp.allclose(out_f32, ref, atol=1e-4, rtol=1e-4), \
        float(jnp.max(jnp.abs(out_f32 - ref)))

    # 2) Default bf16-MXU fast path (native on v5e/v6e/v7x) at relaxed tolerance.
    out_bf16 = perceiver_attention(x, latents, params, heads=HEADS, dim_head=DIM_HEAD)
    out_bf16 = jax.block_until_ready(out_bf16)
    assert out_bf16.shape == (B, N2, D)
    assert jnp.allclose(out_bf16, ref, atol=3e-2, rtol=3e-2), \
        float(jnp.max(jnp.abs(out_bf16 - ref)))

    print("KERNEL_OK")
</pallas_src>

<mosaic_0001>
module attributes {stable_mosaic.version = 11 : i64} {
  func.func @_perceiver_attn_kernel(%arg0: i32, %arg1: i32, %arg2: memref<1x8x32xf32, #tpu.memory_space<vmem>>, %arg3: memref<1x8x32xf32, #tpu.memory_space<vmem>>, %arg4: memref<1x32xf32, #tpu.memory_space<vmem>>, %arg5: memref<1x32xf32, #tpu.memory_space<vmem>>, %arg6: memref<1x32xf32, #tpu.memory_space<vmem>>, %arg7: memref<1x32xf32, #tpu.memory_space<vmem>>, %arg8: memref<32x32xf32, #tpu.memory_space<vmem>>, %arg9: memref<32x32xf32, #tpu.memory_space<vmem>>, %arg10: memref<32x32xf32, #tpu.memory_space<vmem>>, %arg11: memref<32x32xf32, #tpu.memory_space<vmem>>, %arg12: memref<1x8x32xf32, #tpu.memory_space<vmem>>, %arg13: memref<4x8x8xf32, #tpu.memory_space<vmem>>, %arg14: memref<8x32xf32, #tpu.memory_space<vmem>>, %arg15: memref<4x8x1xf32, #tpu.memory_space<vmem>>, %arg16: memref<4x8x1xf32, #tpu.memory_space<vmem>>, %arg17: memref<4x8x8xf32, #tpu.memory_space<vmem>>) attributes {dimension_semantics = [#tpu.dimension_semantics<parallel>, #tpu.dimension_semantics<arbitrary>], iteration_bounds = array<i64: 2, 2>, scalar_prefetch = 0 : i64, scratch_operands = 5 : i64, tpu.core_type = #tpu.core_type<tc>, window_params = [{transform_indices = @transform_0, window_bounds = array<i64: 1, 8, 32>}, {transform_indices = @transform_1, window_bounds = array<i64: 1, 8, 32>}, {pipeline_mode = #tpu.pipeline_mode<synchronous>, transform_indices = @transform_2, window_bounds = array<i64: 1, 32>}, {pipeline_mode = #tpu.pipeline_mode<synchronous>, transform_indices = @transform_3, window_bounds = array<i64: 1, 32>}, {pipeline_mode = #tpu.pipeline_mode<synchronous>, transform_indices = @transform_4, window_bounds = array<i64: 1, 32>}, {pipeline_mode = #tpu.pipeline_mode<synchronous>, transform_indices = @transform_5, window_bounds = array<i64: 1, 32>}, {pipeline_mode = #tpu.pipeline_mode<synchronous>, transform_indices = @transform_6, window_bounds = array<i64: 32, 32>}, {pipeline_mode = #tpu.pipeline_mode<synchronous>, transform_indices = @transform_7, window_bounds = array<i64: 32, 32>}, {pipeline_mode = #tpu.pipeline_mode<synchronous>, transform_indices = @transform_8, window_bounds = array<i64: 32, 32>}, {pipeline_mode = #tpu.pipeline_mode<synchronous>, transform_indices = @transform_9, window_bounds = array<i64: 32, 32>}, {transform_indices = @transform_10, window_bounds = array<i64: 1, 8, 32>}]} {
    %c0_i32 = arith.constant 0 : i32
    %0 = arith.cmpi eq, %arg1, %c0_i32 : i32
    %1 = arith.extui %0 : i1 to i32
    %c0_i32_0 = arith.constant 0 : i32
    %2 = arith.cmpi ne, %1, %c0_i32_0 : i32
    scf.if %2 {
      %c0_43 = arith.constant 0 : index
      %c0_44 = arith.constant 0 : index
      %c0_45 = arith.constant 0 : index
      %64 = vector.load %arg3[%c0_43, %c0_44, %c0_45] : memref<1x8x32xf32, #tpu.memory_space<vmem>>, vector<1x8x32xf32>
      %65 = vector.shape_cast %64 : vector<1x8x32xf32> to vector<8x32xf32>
      %c0_46 = arith.constant 0 : index
      %c0_47 = arith.constant 0 : index
      %66 = vector.load %arg6[%c0_46, %c0_47] : memref<1x32xf32, #tpu.memory_space<vmem>>, vector<1x32xf32>
      %c0_48 = arith.constant 0 : index
      %c0_49 = arith.constant 0 : index
      %67 = vector.load %arg7[%c0_48, %c0_49] : memref<1x32xf32, #tpu.memory_space<vmem>>, vector<1x32xf32>
      %cst_50 = arith.constant dense<0.000000e+00> : vector<8xf32>
      %68 = vector.multi_reduction <add>, %65, %cst_50 [1] : vector<8x32xf32> to vector<8xf32>
      %69 = vector.shape_cast %68 : vector<8xf32> to vector<8x1xf32>
      %cst_51 = arith.constant 3.200000e+01 : f32
      %70 = vector.broadcast %cst_51 : f32 to vector<8x1xf32>
      %71 = arith.divf %69, %70 : vector<8x1xf32>
      %72 = vector.broadcast %71 : vector<8x1xf32> to vector<8x32xf32>
      %73 = arith.subf %65, %72 : vector<8x32xf32>
      %74 = arith.mulf %73, %73 : vector<8x32xf32>
      %cst_52 = arith.constant dense<0.000000e+00> : vector<8xf32>
      %75 = vector.multi_reduction <add>, %74, %cst_52 [1] : vector<8x32xf32> to vector<8xf32>
      %76 = vector.shape_cast %75 : vector<8xf32> to vector<8x1xf32>
      %cst_53 = arith.constant 3.200000e+01 : f32
      %77 = vector.broadcast %cst_53 : f32 to vector<8x1xf32>
      %78 = arith.divf %76, %77 : vector<8x1xf32>
      %79 = vector.broadcast %71 : vector<8x1xf32> to vector<8x32xf32>
      %80 = arith.subf %65, %79 : vector<8x32xf32>
      %cst_54 = arith.constant 9.99999974E-6 : f32
      %81 = vector.broadcast %cst_54 : f32 to vector<8x1xf32>
      %82 = arith.addf %78, %81 : vector<8x1xf32>
      %83 = math.rsqrt %82 : vector<8x1xf32>
      %84 = vector.broadcast %83 : vector<8x1xf32> to vector<8x32xf32>
      %85 = arith.mulf %80, %84 : vector<8x32xf32>
      %86 = vector.broadcast %66 : vector<1x32xf32> to vector<8x32xf32>
      %87 = arith.mulf %85, %86 : vector<8x32xf32>
      %88 = vector.broadcast %67 : vector<1x32xf32> to vector<8x32xf32>
      %89 = arith.addf %87, %88 : vector<8x32xf32>
      %c0_55 = arith.constant 0 : index
      %c0_56 = arith.constant 0 : index
      %90 = vector.load %arg14[%c0_55, %c0_56] : memref<8x32xf32, #tpu.memory_space<vmem>>, vector<8x32xf32>
      tpu.vector_store %arg14[%c0_55, %c0_56], %89 {strides = array<i32>} : memref<8x32xf32, #tpu.memory_space<vmem>>, vector<8x32xf32>,
      %c0_57 = arith.constant 0 : index
      %c0_58 = arith.constant 0 : index
      %91 = vector.load %arg8[%c0_57, %c0_58] : memref<32x32xf32, #tpu.memory_space<vmem>>, vector<32x32xf32>
      %cst_59 = arith.constant dense<0.000000e+00> : vector<8x32xf32>
      %92 = tpu.matmul %89, %91, %cst_59 {dimension_numbers = #tpu.dot_dimension_numbers<[1], [0], [0], [1], [0, 0, 1, 1], [], []>} : vector<8x32xf32>, vector<32x32xf32>, vector<8x32xf32> -> vector<8x32xf32>
      %93 = vector.shape_cast %92 : vector<8x32xf32> to vector<8x4x8xf32>
      %94 = tpu.transpose %93, [1, 0, 2] : vector<8x4x8xf32> -> vector<4x8x8xf32>
      %c0_60 = arith.constant 0 : index
      %c0_61 = arith.constant 0 : index
      %c0_62 = arith.constant 0 : index
      %95 = vector.load %arg13[%c0_60, %c0_61, %c0_62] : memref<4x8x8xf32, #tpu.memory_space<vmem>>, vector<4x8x8xf32>
      tpu.vector_store %arg13[%c0_60, %c0_61, %c0_62], %94 {strides = array<i32>} : memref<4x8x8xf32, #tpu.memory_space<vmem>>, vector<4x8x8xf32>,
      %cst_63 = arith.constant 0xFF800000 : f32
      %96 = vector.broadcast %cst_63 : f32 to vector<4x8x1xf32>
      %c0_64 = arith.constant 0 : index
      %c0_65 = arith.constant 0 : index
      %c0_66 = arith.constant 0 : index
      %97 = vector.load %arg15[%c0_64, %c0_65, %c0_66] : memref<4x8x1xf32, #tpu.memory_space<vmem>>, vector<4x8x1xf32>
      tpu.vector_store %arg15[%c0_64, %c0_65, %c0_66], %96 {strides = array<i32>} : memref<4x8x1xf32, #tpu.memory_space<vmem>>, vector<4x8x1xf32>,
      %cst_67 = arith.constant 0.000000e+00 : f32
      %98 = vector.broadcast %cst_67 : f32 to vector<4x8x1xf32>
      %c0_68 = arith.constant 0 : index
      %c0_69 = arith.constant 0 : index
      %c0_70 = arith.constant 0 : index
      %99 = vector.load %arg16[%c0_68, %c0_69, %c0_70] : memref<4x8x1xf32, #tpu.memory_space<vmem>>, vector<4x8x1xf32>
      tpu.vector_store %arg16[%c0_68, %c0_69, %c0_70], %98 {strides = array<i32>} : memref<4x8x1xf32, #tpu.memory_space<vmem>>, vector<4x8x1xf32>,
      %cst_71 = arith.constant 0.000000e+00 : f32
      %100 = vector.broadcast %cst_71 : f32 to vector<4x8x8xf32>
      %c0_72 = arith.constant 0 : index
      %c0_73 = arith.constant 0 : index
      %c0_74 = arith.constant 0 : index
      %101 = vector.load %arg17[%c0_72, %c0_73, %c0_74] : memref<4x8x8xf32, #tpu.memory_space<vmem>>, vector<4x8x8xf32>
      tpu.vector_store %arg17[%c0_72, %c0_73, %c0_74], %100 {strides = array<i32>} : memref<4x8x8xf32, #tpu.memory_space<vmem>>, vector<4x8x8xf32>,
    } else {
    }
    %c0 = arith.constant 0 : index
    %c0_1 = arith.constant 0 : index
    %c0_2 = arith.constant 0 : index
    %3 = vector.load %arg2[%c0, %c0_1, %c0_2] : memref<1x8x32xf32, #tpu.memory_space<vmem>>, vector<1x8x32xf32>
    %4 = vector.shape_cast %3 : vector<1x8x32xf32> to vector<8x32xf32>
    %c0_3 = arith.constant 0 : index
    %c0_4 = arith.constant 0 : index
    %5 = vector.load %arg4[%c0_3, %c0_4] : memref<1x32xf32, #tpu.memory_space<vmem>>, vector<1x32xf32>
    %c0_5 = arith.constant 0 : index
    %c0_6 = arith.constant 0 : index
    %6 = vector.load %arg5[%c0_5, %c0_6] : memref<1x32xf32, #tpu.memory_space<vmem>>, vector<1x32xf32>
    %cst = arith.constant dense<0.000000e+00> : vector<8xf32>
    %7 = vector.multi_reduction <add>, %4, %cst [1] : vector<8x32xf32> to vector<8xf32>
    %8 = vector.shape_cast %7 : vector<8xf32> to vector<8x1xf32>
    %cst_7 = arith.constant 3.200000e+01 : f32
    %9 = vector.broadcast %cst_7 : f32 to vector<8x1xf32>
    %10 = arith.divf %8, %9 : vector<8x1xf32>
    %11 = vector.broadcast %10 : vector<8x1xf32> to vector<8x32xf32>
    %12 = arith.subf %4, %11 : vector<8x32xf32>
    %13 = arith.mulf %12, %12 : vector<8x32xf32>
    %cst_8 = arith.constant dense<0.000000e+00> : vector<8xf32>
    %14 = vector.multi_reduction <add>, %13, %cst_8 [1] : vector<8x32xf32> to vector<8xf32>
    %15 = vector.shape_cast %14 : vector<8xf32> to vector<8x1xf32>
    %cst_9 = arith.constant 3.200000e+01 : f32
    %16 = vector.broadcast %cst_9 : f32 to vector<8x1xf32>
    %17 = arith.divf %15, %16 : vector<8x1xf32>
    %18 = vector.broadcast %10 : vector<8x1xf32> to vector<8x32xf32>
    %19 = arith.subf %4, %18 : vector<8x32xf32>
    %cst_10 = arith.constant 9.99999974E-6 : f32
    %20 = vector.broadcast %cst_10 : f32 to vector<8x1xf32>
    %21 = arith.addf %17, %20 : vector<8x1xf32>
    %22 = math.rsqrt %21 : vector<8x1xf32>
    %23 = vector.broadcast %22 : vector<8x1xf32> to vector<8x32xf32>
    %24 = arith.mulf %19, %23 : vector<8x32xf32>
    %25 = vector.broadcast %5 : vector<1x32xf32> to vector<8x32xf32>
    %26 = arith.mulf %24, %25 : vector<8x32xf32>
    %27 = vector.broadcast %6 : vector<1x32xf32> to vector<8x32xf32>
    %28 = arith.addf %26, %27 : vector<8x32xf32>
    %c0_11 = arith.constant 0 : index
    %c0_12 = arith.constant 0 : index
    %29 = vector.load %arg9[%c0_11, %c0_12] : memref<32x32xf32, #tpu.memory_space<vmem>>, vector<32x32xf32>
    %cst_13 = arith.constant dense<0.000000e+00> : vector<8x32xf32>
    %30 = tpu.matmul %28, %29, %cst_13 {dimension_numbers = #tpu.dot_dimension_numbers<[1], [0], [0], [1], [0, 0, 1, 1], [], []>} : vector<8x32xf32>, vector<32x32xf32>, vector<8x32xf32> -> vector<8x32xf32>
    %c0_14 = arith.constant 0 : index
    %c0_15 = arith.constant 0 : index
    %31 = vector.load %arg10[%c0_14, %c0_15] : memref<32x32xf32, #tpu.memory_space<vmem>>, vector<32x32xf32>
    %cst_16 = arith.constant dense<0.000000e+00> : vector<8x32xf32>
    %32 = tpu.matmul %28, %31, %cst_16 {dimension_numbers = #tpu.dot_dimension_numbers<[1], [0], [0], [1], [0, 0, 1, 1], [], []>} : vector<8x32xf32>, vector<32x32xf32>, vector<8x32xf32> -> vector<8x32xf32>
    %33 = vector.shape_cast %30 : vector<8x32xf32> to vector<8x4x8xf32>
    %34 = tpu.transpose %33, [1, 0, 2] : vector<8x4x8xf32> -> vector<4x8x8xf32>
    %35 = vector.shape_cast %32 : vector<8x32xf32> to vector<8x4x8xf32>
    %36 = tpu.transpose %35, [1, 0, 2] : vector<8x4x8xf32> -> vector<4x8x8xf32>
    %c0_17 = arith.constant 0 : index
    %c0_18 = arith.constant 0 : index
    %c0_19 = arith.constant 0 : index
    %37 = vector.load %arg13[%c0_17, %c0_18, %c0_19] : memref<4x8x8xf32, #tpu.memory_space<vmem>>, vector<4x8x8xf32>
    "tpu.trace_start"() <{level = 10 : i32, message = "hqd,hkd->hqk"}> : () -> ()
    %cst_20 = arith.constant dense<0.000000e+00> : vector<4x8x8xf32>
    %38 = tpu.matmul %37, %34, %cst_20 {dimension_numbers = #tpu.dot_dimension_numbers<[2], [2], [1], [1], [0, 0, 0, 1, 1, 1], [0], [0]>} : vector<4x8x8xf32>, vector<4x8x8xf32>, vector<4x8x8xf32> -> vector<4x8x8xf32>
    "tpu.trace_stop"() : () -> ()
    %c0_21 = arith.constant 0 : index
    %c0_22 = arith.constant 0 : index
    %c0_23 = arith.constant 0 : index
    %39 = vector.load %arg15[%c0_21, %c0_22, %c0_23] : memref<4x8x1xf32, #tpu.memory_space<vmem>>, vector<4x8x1xf32>
    %cst_24 = arith.constant dense<0xFF800000> : vector<4x8xf32>
    %40 = vector.multi_reduction <maximumf>, %38, %cst_24 [2] : vector<4x8x8xf32> to vector<4x8xf32>
    %41 = vector.shape_cast %40 : vector<4x8xf32> to vector<4x8x1xf32>
    %42 = arith.maximumf %39, %41 : vector<4x8x1xf32>
    %43 = arith.subf %39, %42 : vector<4x8x1xf32>
    %44 = math.exp %43 : vector<4x8x1xf32>
    %45 = vector.broadcast %42 : vector<4x8x1xf32> to vector<4x8x8xf32>
    %46 = arith.subf %38, %45 : vector<4x8x8xf32>
    %47 = math.exp %46 : vector<4x8x8xf32>
    %c0_25 = arith.constant 0 : index
    %c0_26 = arith.constant 0 : index
    %c0_27 = arith.constant 0 : index
    %48 = vector.load %arg16[%c0_25, %c0_26, %c0_27] : memref<4x8x1xf32, #tpu.memory_space<vmem>>, vector<4x8x1xf32>
    %49 = arith.mulf %44, %48 : vector<4x8x1xf32>
    %cst_28 = arith.constant dense<0.000000e+00> : vector<4x8xf32>
    %50 = vector.multi_reduction <add>, %47, %cst_28 [2] : vector<4x8x8xf32> to vector<4x8xf32>
    %51 = vector.shape_cast %50 : vector<4x8xf32> to vector<4x8x1xf32>
    %52 = arith.addf %49, %51 : vector<4x8x1xf32>
    %c0_29 = arith.constant 0 : index
    %c0_30 = arith.constant 0 : index
    %c0_31 = arith.constant 0 : index
    %53 = vector.load %arg16[%c0_29, %c0_30, %c0_31] : memref<4x8x1xf32, #tpu.memory_space<vmem>>, vector<4x8x1xf32>
    tpu.vector_store %arg16[%c0_29, %c0_30, %c0_31], %52 {strides = array<i32>} : memref<4x8x1xf32, #tpu.memory_space<vmem>>, vector<4x8x1xf32>,
    %c0_32 = arith.constant 0 : index
    %c0_33 = arith.constant 0 : index
    %c0_34 = arith.constant 0 : index
    %54 = vector.load %arg17[%c0_32, %c0_33, %c0_34] : memref<4x8x8xf32, #tpu.memory_space<vmem>>, vector<4x8x8xf32>
    %55 = vector.broadcast %44 : vector<4x8x1xf32> to vector<4x8x8xf32>
    %56 = arith.mulf %55, %54 : vector<4x8x8xf32>
    "tpu.trace_start"() <{level = 10 : i32, message = "hqk,hkd->hqd"}> : () -> ()
    %cst_35 = arith.constant dense<0.000000e+00> : vector<4x8x8xf32>
    %57 = tpu.matmul %47, %36, %cst_35 {dimension_numbers = #tpu.dot_dimension_numbers<[2], [1], [1], [2], [0, 0, 0, 1, 1, 2], [0], [0]>} : vector<4x8x8xf32>, vector<4x8x8xf32>, vector<4x8x8xf32> -> vector<4x8x8xf32>
    "tpu.trace_stop"() : () -> ()
    %58 = arith.addf %56, %57 : vector<4x8x8xf32>
    %c0_36 = arith.constant 0 : index
    %c0_37 = arith.constant 0 : index
    %c0_38 = arith.constant 0 : index
    %59 = vector.load %arg17[%c0_36, %c0_37, %c0_38] : memref<4x8x8xf32, #tpu.memory_space<vmem>>, vector<4x8x8xf32>
    tpu.vector_store %arg17[%c0_36, %c0_37, %c0_38], %58 {strides = array<i32>} : memref<4x8x8xf32, #tpu.memory_space<vmem>>, vector<4x8x8xf32>,
    %c0_39 = arith.constant 0 : index
    %c0_40 = arith.constant 0 : index
    %c0_41 = arith.constant 0 : index
    %60 = vector.load %arg15[%c0_39, %c0_40, %c0_41] : memref<4x8x1xf32, #tpu.memory_space<vmem>>, vector<4x8x1xf32>
    tpu.vector_store %arg15[%c0_39, %c0_40, %c0_41], %42 {strides = array<i32>} : memref<4x8x1xf32, #tpu.memory_space<vmem>>, vector<4x8x1xf32>,
    %c1_i32 = arith.constant 1 : i32
    %61 = arith.cmpi eq, %arg1, %c1_i32 : i32
    %62 = arith.extui %61 : i1 to i32
    %c0_i32_42 = arith.constant 0 : i32
    %63 = arith.cmpi ne, %62, %c0_i32_42 : i32
    scf.if %63 {
      %c0_43 = arith.constant 0 : index
      %c0_44 = arith.constant 0 : index
      %64 = vector.load %arg14[%c0_43, %c0_44] : memref<8x32xf32, #tpu.memory_space<vmem>>, vector<8x32xf32>
      %c0_45 = arith.constant 0 : index
      %c0_46 = arith.constant 0 : index
      %65 = vector.load %arg9[%c0_45, %c0_46] : memref<32x32xf32, #tpu.memory_space<vmem>>, vector<32x32xf32>
      %cst_47 = arith.constant dense<0.000000e+00> : vector<8x32xf32>
      %66 = tpu.matmul %64, %65, %cst_47 {dimension_numbers = #tpu.dot_dimension_numbers<[1], [0], [0], [1], [0, 0, 1, 1], [], []>} : vector<8x32xf32>, vector<32x32xf32>, vector<8x32xf32> -> vector<8x32xf32>
      %c0_48 = arith.constant 0 : index
      %c0_49 = arith.constant 0 : index
      %67 = vector.load %arg10[%c0_48, %c0_49] : memref<32x32xf32, #tpu.memory_space<vmem>>, vector<32x32xf32>
      %cst_50 = arith.constant dense<0.000000e+00> : vector<8x32xf32>
      %68 = tpu.matmul %64, %67, %cst_50 {dimension_numbers = #tpu.dot_dimension_numbers<[1], [0], [0], [1], [0, 0, 1, 1], [], []>} : vector<8x32xf32>, vector<32x32xf32>, vector<8x32xf32> -> vector<8x32xf32>
      %69 = vector.shape_cast %66 : vector<8x32xf32> to vector<8x4x8xf32>
      %70 = tpu.transpose %69, [1, 0, 2] : vector<8x4x8xf32> -> vector<4x8x8xf32>
      %71 = vector.shape_cast %68 : vector<8x32xf32> to vector<8x4x8xf32>
      %72 = tpu.transpose %71, [1, 0, 2] : vector<8x4x8xf32> -> vector<4x8x8xf32>
      %c0_51 = arith.constant 0 : index
      %c0_52 = arith.constant 0 : index
      %c0_53 = arith.constant 0 : index
      %73 = vector.load %arg13[%c0_51, %c0_52, %c0_53] : memref<4x8x8xf32, #tpu.memory_space<vmem>>, vector<4x8x8xf32>
      "tpu.trace_start"() <{level = 10 : i32, message = "hqd,hkd->hqk"}> : () -> ()
      %cst_54 = arith.constant dense<0.000000e+00> : vector<4x8x8xf32>
      %74 = tpu.matmul %73, %70, %cst_54 {dimension_numbers = #tpu.dot_dimension_numbers<[2], [2], [1], [1], [0, 0, 0, 1, 1, 1], [0], [0]>} : vector<4x8x8xf32>, vector<4x8x8xf32>, vector<4x8x8xf32> -> vector<4x8x8xf32>
      "tpu.trace_stop"() : () -> ()
      %c0_55 = arith.constant 0 : index
      %c0_56 = arith.constant 0 : index
      %c0_57 = arith.constant 0 : index
      %75 = vector.load %arg15[%c0_55, %c0_56, %c0_57] : memref<4x8x1xf32, #tpu.memory_space<vmem>>, vector<4x8x1xf32>
      %cst_58 = arith.constant dense<0xFF800000> : vector<4x8xf32>
      %76 = vector.multi_reduction <maximumf>, %74, %cst_58 [2] : vector<4x8x8xf32> to vector<4x8xf32>
      %77 = vector.shape_cast %76 : vector<4x8xf32> to vector<4x8x1xf32>
      %78 = arith.maximumf %75, %77 : vector<4x8x1xf32>
      %79 = arith.subf %75, %78 : vector<4x8x1xf32>
      %80 = math.exp %79 : vector<4x8x1xf32>
      %81 = vector.broadcast %78 : vector<4x8x1xf32> to vector<4x8x8xf32>
      %82 = arith.subf %74, %81 : vector<4x8x8xf32>
      %83 = math.exp %82 : vector<4x8x8xf32>
      %c0_59 = arith.constant 0 : index
      %c0_60 = arith.constant 0 : index
      %c0_61 = arith.constant 0 : index
      %84 = vector.load %arg16[%c0_59, %c0_60, %c0_61] : memref<4x8x1xf32, #tpu.memory_space<vmem>>, vector<4x8x1xf32>
      %85 = arith.mulf %80, %84 : vector<4x8x1xf32>
      %cst_62 = arith.constant dense<0.000000e+00> : vector<4x8xf32>
      %86 = vector.multi_reduction <add>, %83, %cst_62 [2] : vector<4x8x8xf32> to vector<4x8xf32>
      %87 = vector.shape_cast %86 : vector<4x8xf32> to vector<4x8x1xf32>
      %88 = arith.addf %85, %87 : vector<4x8x1xf32>
      %c0_63 = arith.constant 0 : index
      %c0_64 = arith.constant 0 : index
      %c0_65 = arith.constant 0 : index
      %89 = vector.load %arg17[%c0_63, %c0_64, %c0_65] : memref<4x8x8xf32, #tpu.memory_space<vmem>>, vector<4x8x8xf32>
      %90 = vector.broadcast %80 : vector<4x8x1xf32> to vector<4x8x8xf32>
      %91 = arith.mulf %90, %89 : vector<4x8x8xf32>
      "tpu.trace_start"() <{level = 10 : i32, message = "hqk,hkd->hqd"}> : () -> ()
      %cst_66 = arith.constant dense<0.000000e+00> : vector<4x8x8xf32>
      %92 = tpu.matmul %83, %72, %cst_66 {dimension_numbers = #tpu.dot_dimension_numbers<[2], [1], [1], [2], [0, 0, 0, 1, 1, 2], [0], [0]>} : vector<4x8x8xf32>, vector<4x8x8xf32>, vector<4x8x8xf32> -> vector<4x8x8xf32>
      "tpu.trace_stop"() : () -> ()
      %93 = arith.addf %91, %92 : vector<4x8x8xf32>
      %94 = tpu.reciprocal %88 : vector<4x8x1xf32> -> vector<4x8x1xf32>
      %95 = vector.broadcast %94 : vector<4x8x1xf32> to vector<4x8x8xf32>
      %96 = arith.mulf %93, %95 : vector<4x8x8xf32>
      %97 = tpu.transpose %96, [1, 0, 2] : vector<4x8x8xf32> -> vector<8x4x8xf32>
      %98 = vector.shape_cast %97 : vector<8x4x8xf32> to vector<8x32xf32>
      %c0_67 = arith.constant 0 : index
      %c0_68 = arith.constant 0 : index
      %99 = vector.load %arg11[%c0_67, %c0_68] : memref<32x32xf32, #tpu.memory_space<vmem>>, vector<32x32xf32>
      %cst_69 = arith.constant dense<0.000000e+00> : vector<8x32xf32>
      %100 = tpu.matmul %98, %99, %cst_69 {dimension_numbers = #tpu.dot_dimension_numbers<[1], [0], [0], [1], [0, 0, 1, 1], [], []>} : vector<8x32xf32>, vector<32x32xf32>, vector<8x32xf32> -> vector<8x32xf32>
      %c0_70 = arith.constant 0 : index
      %c0_71 = arith.constant 0 : index
      %c0_72 = arith.constant 0 : index
      %101 = vector.load %arg12[%c0_70, %c0_71, %c0_72] : memref<1x8x32xf32, #tpu.memory_space<vmem>>, vector<1x8x32xf32>
      %102 = vector.shape_cast %101 : vector<1x8x32xf32> to vector<8x32xf32>
      %103 = vector.shape_cast %100 : vector<8x32xf32> to vector<1x8x32xf32>
      tpu.vector_store %arg12[%c0_70, %c0_71, %c0_72], %103 {strides = array<i32>} : memref<1x8x32xf32, #tpu.memory_space<vmem>>, vector<1x8x32xf32>,
    } else {
    }
    return
  }
  func.func @transform_0(%arg0: i32, %arg1: i32) -> (i32, i32, i32) {
    %c0_i32 = arith.constant 0 : i32
    %c0_i32_0 = arith.constant 0 : i32
    return %arg0, %arg1, %c0_i32 : i32, i32, i32
  }
  func.func @transform_1(%arg0: i32, %arg1: i32) -> (i32, i32, i32) {
    %c0_i32 = arith.constant 0 : i32
    %c0_i32_0 = arith.constant 0 : i32
    %c0_i32_1 = arith.constant 0 : i32
    return %arg0, %c0_i32, %c0_i32_0 : i32, i32, i32
  }
  func.func @transform_2(%arg0: i32, %arg1: i32) -> (i32, i32) {
    %c0_i32 = arith.constant 0 : i32
    %c0_i32_0 = arith.constant 0 : i32
    %c0_i32_1 = arith.constant 0 : i32
    return %c0_i32, %c0_i32_0 : i32, i32
  }
  func.func @transform_3(%arg0: i32, %arg1: i32) -> (i32, i32) {
    %c0_i32 = arith.constant 0 : i32
    %c0_i32_0 = arith.constant 0 : i32
    %c0_i32_1 = arith.constant 0 : i32
    return %c0_i32, %c0_i32_0 : i32, i32
  }
  func.func @transform_4(%arg0: i32, %arg1: i32) -> (i32, i32) {
    %c0_i32 = arith.constant 0 : i32
    %c0_i32_0 = arith.constant 0 : i32
    %c0_i32_1 = arith.constant 0 : i32
    return %c0_i32, %c0_i32_0 : i32, i32
  }
  func.func @transform_5(%arg0: i32, %arg1: i32) -> (i32, i32) {
    %c0_i32 = arith.constant 0 : i32
    %c0_i32_0 = arith.constant 0 : i32
    %c0_i32_1 = arith.constant 0 : i32
    return %c0_i32, %c0_i32_0 : i32, i32
  }
  func.func @transform_6(%arg0: i32, %arg1: i32) -> (i32, i32) {
    %c0_i32 = arith.constant 0 : i32
    %c0_i32_0 = arith.constant 0 : i32
    %c0_i32_1 = arith.constant 0 : i32
    return %c0_i32, %c0_i32_0 : i32, i32
  }
  func.func @transform_7(%arg0: i32, %arg1: i32) -> (i32, i32) {
    %c0_i32 = arith.constant 0 : i32
    %c0_i32_0 = arith.constant 0 : i32
    %c0_i32_1 = arith.constant 0 : i32
    return %c0_i32, %c0_i32_0 : i32, i32
  }
  func.func @transform_8(%arg0: i32, %arg1: i32) -> (i32, i32) {
    %c0_i32 = arith.constant 0 : i32
    %c0_i32_0 = arith.constant 0 : i32
    %c0_i32_1 = arith.constant 0 : i32
    return %c0_i32, %c0_i32_0 : i32, i32
  }
  func.func @transform_9(%arg0: i32, %arg1: i32) -> (i32, i32) {
    %c0_i32 = arith.constant 0 : i32
    %c0_i32_0 = arith.constant 0 : i32
    %c0_i32_1 = arith.constant 0 : i32
    return %c0_i32, %c0_i32_0 : i32, i32
  }
  func.func @transform_10(%arg0: i32, %arg1: i32) -> (i32, i32, i32) {
    %c0_i32 = arith.constant 0 : i32
    %c0_i32_0 = arith.constant 0 : i32
    %c0_i32_1 = arith.constant 0 : i32
    return %arg0, %c0_i32, %c0_i32_0 : i32, i32, i32
  }
}

module attributes {stable_mosaic.version = 11 : i64} {
  func.func @_perceiver_attn_kernel(%arg0: i32, %arg1: i32, %arg2: memref<1x8x32xf32, #tpu.memory_space<vmem>>, %arg3: memref<1x8x32xf32, #tpu.memory_space<vmem>>, %arg4: memref<1x32xf32, #tpu.memory_space<vmem>>, %arg5: memref<1x32xf32, #tpu.memory_space<vmem>>, %arg6: memref<1x32xf32, #tpu.memory_space<vmem>>, %arg7: memref<1x32xf32, #tpu.memory_space<vmem>>, %arg8: memref<32x32xf32, #tpu.memory_space<vmem>>, %arg9: memref<32x32xf32, #tpu.memory_space<vmem>>, %arg10: memref<32x32xf32, #tpu.memory_space<vmem>>, %arg11: memref<32x32xf32, #tpu.memory_space<vmem>>, %arg12: memref<1x8x32xf32, #tpu.memory_space<vmem>>, %arg13: memref<4x8x8xf32, #tpu.memory_space<vmem>>, %arg14: memref<8x32xf32, #tpu.memory_space<vmem>>, %arg15: memref<4x8x1xf32, #tpu.memory_space<vmem>>, %arg16: memref<4x8x1xf32, #tpu.memory_space<vmem>>, %arg17: memref<4x8x8xf32, #tpu.memory_space<vmem>>) attributes {dimension_semantics = [#tpu.dimension_semantics<parallel>, #tpu.dimension_semantics<arbitrary>], iteration_bounds = array<i64: 2, 2>, scalar_prefetch = 0 : i64, scratch_operands = 5 : i64, tpu.core_type = #tpu.core_type<tc>, window_params = [{transform_indices = @transform_0, window_bounds = array<i64: 1, 8, 32>}, {transform_indices = @transform_1, window_bounds = array<i64: 1, 8, 32>}, {pipeline_mode = #tpu.pipeline_mode<synchronous>, transform_indices = @transform_2, window_bounds = array<i64: 1, 32>}, {pipeline_mode = #tpu.pipeline_mode<synchronous>, transform_indices = @transform_3, window_bounds = array<i64: 1, 32>}, {pipeline_mode = #tpu.pipeline_mode<synchronous>, transform_indices = @transform_4, window_bounds = array<i64: 1, 32>}, {pipeline_mode = #tpu.pipeline_mode<synchronous>, transform_indices = @transform_5, window_bounds = array<i64: 1, 32>}, {pipeline_mode = #tpu.pipeline_mode<synchronous>, transform_indices = @transform_6, window_bounds = array<i64: 32, 32>}, {pipeline_mode = #tpu.pipeline_mode<synchronous>, transform_indices = @transform_7, window_bounds = array<i64: 32, 32>}, {pipeline_mode = #tpu.pipeline_mode<synchronous>, transform_indices = @transform_8, window_bounds = array<i64: 32, 32>}, {pipeline_mode = #tpu.pipeline_mode<synchronous>, transform_indices = @transform_9, window_bounds = array<i64: 32, 32>}, {transform_indices = @transform_10, window_bounds = array<i64: 1, 8, 32>}]} {
    %c0_i32 = arith.constant 0 : i32
    %0 = arith.cmpi eq, %arg1, %c0_i32 : i32
    %1 = arith.extui %0 : i1 to i32
    %c0_i32_0 = arith.constant 0 : i32
    %2 = arith.cmpi ne, %1, %c0_i32_0 : i32
    scf.if %2 {
      %c0_43 = arith.constant 0 : index
      %c0_44 = arith.constant 0 : index
      %c0_45 = arith.constant 0 : index
      %64 = vector.load %arg3[%c0_43, %c0_44, %c0_45] : memref<1x8x32xf32, #tpu.memory_space<vmem>>, vector<1x8x32xf32>
      %65 = vector.shape_cast %64 : vector<1x8x32xf32> to vector<8x32xf32>
      %c0_46 = arith.constant 0 : index
      %c0_47 = arith.constant 0 : index
      %66 = vector.load %arg6[%c0_46, %c0_47] : memref<1x32xf32, #tpu.memory_space<vmem>>, vector<1x32xf32>
      %c0_48 = arith.constant 0 : index
      %c0_49 = arith.constant 0 : index
      %67 = vector.load %arg7[%c0_48, %c0_49] : memref<1x32xf32, #tpu.memory_space<vmem>>, vector<1x32xf32>
      %cst_50 = arith.constant dense<0.000000e+00> : vector<8xf32>
      %68 = vector.multi_reduction <add>, %65, %cst_50 [1] : vector<8x32xf32> to vector<8xf32>
      %69 = vector.shape_cast %68 : vector<8xf32> to vector<8x1xf32>
      %cst_51 = arith.constant 3.200000e+01 : f32
      %70 = vector.broadcast %cst_51 : f32 to vector<8x1xf32>
      %71 = arith.divf %69, %70 : vector<8x1xf32>
      %72 = vector.broadcast %71 : vector<8x1xf32> to vector<8x32xf32>
      %73 = arith.subf %65, %72 : vector<8x32xf32>
      %74 = arith.mulf %73, %73 : vector<8x32xf32>
      %cst_52 = arith.constant dense<0.000000e+00> : vector<8xf32>
      %75 = vector.multi_reduction <add>, %74, %cst_52 [1] : vector<8x32xf32> to vector<8xf32>
      %76 = vector.shape_cast %75 : vector<8xf32> to vector<8x1xf32>
      %cst_53 = arith.constant 3.200000e+01 : f32
      %77 = vector.broadcast %cst_53 : f32 to vector<8x1xf32>
      %78 = arith.divf %76, %77 : vector<8x1xf32>
      %79 = vector.broadcast %71 : vector<8x1xf32> to vector<8x32xf32>
      %80 = arith.subf %65, %79 : vector<8x32xf32>
      %cst_54 = arith.constant 9.99999974E-6 : f32
      %81 = vector.broadcast %cst_54 : f32 to vector<8x1xf32>
      %82 = arith.addf %78, %81 : vector<8x1xf32>
      %83 = math.rsqrt %82 : vector<8x1xf32>
      %84 = vector.broadcast %83 : vector<8x1xf32> to vector<8x32xf32>
      %85 = arith.mulf %80, %84 : vector<8x32xf32>
      %86 = vector.broadcast %66 : vector<1x32xf32> to vector<8x32xf32>
      %87 = arith.mulf %85, %86 : vector<8x32xf32>
      %88 = vector.broadcast %67 : vector<1x32xf32> to vector<8x32xf32>
      %89 = arith.addf %87, %88 : vector<8x32xf32>
      %c0_55 = arith.constant 0 : index
      %c0_56 = arith.constant 0 : index
      %90 = vector.load %arg14[%c0_55, %c0_56] : memref<8x32xf32, #tpu.memory_space<vmem>>, vector<8x32xf32>
      tpu.vector_store %arg14[%c0_55, %c0_56], %89 {strides = array<i32>} : memref<8x32xf32, #tpu.memory_space<vmem>>, vector<8x32xf32>,
      %c0_57 = arith.constant 0 : index
      %c0_58 = arith.constant 0 : index
      %91 = vector.load %arg8[%c0_57, %c0_58] : memref<32x32xf32, #tpu.memory_space<vmem>>, vector<32x32xf32>
      %cst_59 = arith.constant dense<0.000000e+00> : vector<8x32xf32>
      %92 = tpu.matmul %89, %91, %cst_59 {dimension_numbers = #tpu.dot_dimension_numbers<[1], [0], [0], [1], [0, 0, 1, 1], [], []>} : vector<8x32xf32>, vector<32x32xf32>, vector<8x32xf32> -> vector<8x32xf32>
      %93 = vector.shape_cast %92 : vector<8x32xf32> to vector<8x4x8xf32>
      %94 = tpu.transpose %93, [1, 0, 2] : vector<8x4x8xf32> -> vector<4x8x8xf32>
      %c0_60 = arith.constant 0 : index
      %c0_61 = arith.constant 0 : index
      %c0_62 = arith.constant 0 : index
      %95 = vector.load %arg13[%c0_60, %c0_61, %c0_62] : memref<4x8x8xf32, #tpu.memory_space<vmem>>, vector<4x8x8xf32>
      tpu.vector_store %arg13[%c0_60, %c0_61, %c0_62], %94 {strides = array<i32>} : memref<4x8x8xf32, #tpu.memory_space<vmem>>, vector<4x8x8xf32>,
      %cst_63 = arith.constant 0xFF800000 : f32
      %96 = vector.broadcast %cst_63 : f32 to vector<4x8x1xf32>
      %c0_64 = arith.constant 0 : index
      %c0_65 = arith.constant 0 : index
      %c0_66 = arith.constant 0 : index
      %97 = vector.load %arg15[%c0_64, %c0_65, %c0_66] : memref<4x8x1xf32, #tpu.memory_space<vmem>>, vector<4x8x1xf32>
      tpu.vector_store %arg15[%c0_64, %c0_65, %c0_66], %96 {strides = array<i32>} : memref<4x8x1xf32, #tpu.memory_space<vmem>>, vector<4x8x1xf32>,
      %cst_67 = arith.constant 0.000000e+00 : f32
      %98 = vector.broadcast %cst_67 : f32 to vector<4x8x1xf32>
      %c0_68 = arith.constant 0 : index
      %c0_69 = arith.constant 0 : index
      %c0_70 = arith.constant 0 : index
      %99 = vector.load %arg16[%c0_68, %c0_69, %c0_70] : memref<4x8x1xf32, #tpu.memory_space<vmem>>, vector<4x8x1xf32>
      tpu.vector_store %arg16[%c0_68, %c0_69, %c0_70], %98 {strides = array<i32>} : memref<4x8x1xf32, #tpu.memory_space<vmem>>, vector<4x8x1xf32>,
      %cst_71 = arith.constant 0.000000e+00 : f32
      %100 = vector.broadcast %cst_71 : f32 to vector<4x8x8xf32>
      %c0_72 = arith.constant 0 : index
      %c0_73 = arith.constant 0 : index
      %c0_74 = arith.constant 0 : index
      %101 = vector.load %arg17[%c0_72, %c0_73, %c0_74] : memref<4x8x8xf32, #tpu.memory_space<vmem>>, vector<4x8x8xf32>
      tpu.vector_store %arg17[%c0_72, %c0_73, %c0_74], %100 {strides = array<i32>} : memref<4x8x8xf32, #tpu.memory_space<vmem>>, vector<4x8x8xf32>,
    } else {
    }
    %c0 = arith.constant 0 : index
    %c0_1 = arith.constant 0 : index
    %c0_2 = arith.constant 0 : index
    %3 = vector.load %arg2[%c0, %c0_1, %c0_2] : memref<1x8x32xf32, #tpu.memory_space<vmem>>, vector<1x8x32xf32>
    %4 = vector.shape_cast %3 : vector<1x8x32xf32> to vector<8x32xf32>
    %c0_3 = arith.constant 0 : index
    %c0_4 = arith.constant 0 : index
    %5 = vector.load %arg4[%c0_3, %c0_4] : memref<1x32xf32, #tpu.memory_space<vmem>>, vector<1x32xf32>
    %c0_5 = arith.constant 0 : index
    %c0_6 = arith.constant 0 : index
    %6 = vector.load %arg5[%c0_5, %c0_6] : memref<1x32xf32, #tpu.memory_space<vmem>>, vector<1x32xf32>
    %cst = arith.constant dense<0.000000e+00> : vector<8xf32>
    %7 = vector.multi_reduction <add>, %4, %cst [1] : vector<8x32xf32> to vector<8xf32>
    %8 = vector.shape_cast %7 : vector<8xf32> to vector<8x1xf32>
    %cst_7 = arith.constant 3.200000e+01 : f32
    %9 = vector.broadcast %cst_7 : f32 to vector<8x1xf32>
    %10 = arith.divf %8, %9 : vector<8x1xf32>
    %11 = vector.broadcast %10 : vector<8x1xf32> to vector<8x32xf32>
    %12 = arith.subf %4, %11 : vector<8x32xf32>
    %13 = arith.mulf %12, %12 : vector<8x32xf32>
    %cst_8 = arith.constant dense<0.000000e+00> : vector<8xf32>
    %14 = vector.multi_reduction <add>, %13, %cst_8 [1] : vector<8x32xf32> to vector<8xf32>
    %15 = vector.shape_cast %14 : vector<8xf32> to vector<8x1xf32>
    %cst_9 = arith.constant 3.200000e+01 : f32
    %16 = vector.broadcast %cst_9 : f32 to vector<8x1xf32>
    %17 = arith.divf %15, %16 : vector<8x1xf32>
    %18 = vector.broadcast %10 : vector<8x1xf32> to vector<8x32xf32>
    %19 = arith.subf %4, %18 : vector<8x32xf32>
    %cst_10 = arith.constant 9.99999974E-6 : f32
    %20 = vector.broadcast %cst_10 : f32 to vector<8x1xf32>
    %21 = arith.addf %17, %20 : vector<8x1xf32>
    %22 = math.rsqrt %21 : vector<8x1xf32>
    %23 = vector.broadcast %22 : vector<8x1xf32> to vector<8x32xf32>
    %24 = arith.mulf %19, %23 : vector<8x32xf32>
    %25 = vector.broadcast %5 : vector<1x32xf32> to vector<8x32xf32>
    %26 = arith.mulf %24, %25 : vector<8x32xf32>
    %27 = vector.broadcast %6 : vector<1x32xf32> to vector<8x32xf32>
    %28 = arith.addf %26, %27 : vector<8x32xf32>
    %c0_11 = arith.constant 0 : index
    %c0_12 = arith.constant 0 : index
    %29 = vector.load %arg9[%c0_11, %c0_12] : memref<32x32xf32, #tpu.memory_space<vmem>>, vector<32x32xf32>
    %cst_13 = arith.constant dense<0.000000e+00> : vector<8x32xf32>
    %30 = tpu.matmul %28, %29, %cst_13 {dimension_numbers = #tpu.dot_dimension_numbers<[1], [0], [0], [1], [0, 0, 1, 1], [], []>} : vector<8x32xf32>, vector<32x32xf32>, vector<8x32xf32> -> vector<8x32xf32>
    %c0_14 = arith.constant 0 : index
    %c0_15 = arith.constant 0 : index
    %31 = vector.load %arg10[%c0_14, %c0_15] : memref<32x32xf32, #tpu.memory_space<vmem>>, vector<32x32xf32>
    %cst_16 = arith.constant dense<0.000000e+00> : vector<8x32xf32>
    %32 = tpu.matmul %28, %31, %cst_16 {dimension_numbers = #tpu.dot_dimension_numbers<[1], [0], [0], [1], [0, 0, 1, 1], [], []>} : vector<8x32xf32>, vector<32x32xf32>, vector<8x32xf32> -> vector<8x32xf32>
    %33 = vector.shape_cast %30 : vector<8x32xf32> to vector<8x4x8xf32>
    %34 = tpu.transpose %33, [1, 0, 2] : vector<8x4x8xf32> -> vector<4x8x8xf32>
    %35 = vector.shape_cast %32 : vector<8x32xf32> to vector<8x4x8xf32>
    %36 = tpu.transpose %35, [1, 0, 2] : vector<8x4x8xf32> -> vector<4x8x8xf32>
    %c0_17 = arith.constant 0 : index
    %c0_18 = arith.constant 0 : index
    %c0_19 = arith.constant 0 : index
    %37 = vector.load %arg13[%c0_17, %c0_18, %c0_19] : memref<4x8x8xf32, #tpu.memory_space<vmem>>, vector<4x8x8xf32>
    "tpu.trace_start"() <{level = 10 : i32, message = "hqd,hkd->hqk"}> : () -> ()
    %cst_20 = arith.constant dense<0.000000e+00> : vector<4x8x8xf32>
    %38 = tpu.matmul %37, %34, %cst_20 {dimension_numbers = #tpu.dot_dimension_numbers<[2], [2], [1], [1], [0, 0, 0, 1, 1, 1], [0], [0]>} : vector<4x8x8xf32>, vector<4x8x8xf32>, vector<4x8x8xf32> -> vector<4x8x8xf32>
    "tpu.trace_stop"() : () -> ()
    %c0_21 = arith.constant 0 : index
    %c0_22 = arith.constant 0 : index
    %c0_23 = arith.constant 0 : index
    %39 = vector.load %arg15[%c0_21, %c0_22, %c0_23] : memref<4x8x1xf32, #tpu.memory_space<vmem>>, vector<4x8x1xf32>
    %cst_24 = arith.constant dense<0xFF800000> : vector<4x8xf32>
    %40 = vector.multi_reduction <maximumf>, %38, %cst_24 [2] : vector<4x8x8xf32> to vector<4x8xf32>
    %41 = vector.shape_cast %40 : vector<4x8xf32> to vector<4x8x1xf32>
    %42 = arith.maximumf %39, %41 : vector<4x8x1xf32>
    %43 = arith.subf %39, %42 : vector<4x8x1xf32>
    %44 = math.exp %43 : vector<4x8x1xf32>
    %45 = vector.broadcast %42 : vector<4x8x1xf32> to vector<4x8x8xf32>
    %46 = arith.subf %38, %45 : vector<4x8x8xf32>
    %47 = math.exp %46 : vector<4x8x8xf32>
    %c0_25 = arith.constant 0 : index
    %c0_26 = arith.constant 0 : index
    %c0_27 = arith.constant 0 : index
    %48 = vector.load %arg16[%c0_25, %c0_26, %c0_27] : memref<4x8x1xf32, #tpu.memory_space<vmem>>, vector<4x8x1xf32>
    %49 = arith.mulf %44, %48 : vector<4x8x1xf32>
    %cst_28 = arith.constant dense<0.000000e+00> : vector<4x8xf32>
    %50 = vector.multi_reduction <add>, %47, %cst_28 [2] : vector<4x8x8xf32> to vector<4x8xf32>
    %51 = vector.shape_cast %50 : vector<4x8xf32> to vector<4x8x1xf32>
    %52 = arith.addf %49, %51 : vector<4x8x1xf32>
    %c0_29 = arith.constant 0 : index
    %c0_30 = arith.constant 0 : index
    %c0_31 = arith.constant 0 : index
    %53 = vector.load %arg16[%c0_29, %c0_30, %c0_31] : memref<4x8x1xf32, #tpu.memory_space<vmem>>, vector<4x8x1xf32>
    tpu.vector_store %arg16[%c0_29, %c0_30, %c0_31], %52 {strides = array<i32>} : memref<4x8x1xf32, #tpu.memory_space<vmem>>, vector<4x8x1xf32>,
    %c0_32 = arith.constant 0 : index
    %c0_33 = arith.constant 0 : index
    %c0_34 = arith.constant 0 : index
    %54 = vector.load %arg17[%c0_32, %c0_33, %c0_34] : memref<4x8x8xf32, #tpu.memory_space<vmem>>, vector<4x8x8xf32>
    %55 = vector.broadcast %44 : vector<4x8x1xf32> to vector<4x8x8xf32>
    %56 = arith.mulf %55, %54 : vector<4x8x8xf32>
    "tpu.trace_start"() <{level = 10 : i32, message = "hqk,hkd->hqd"}> : () -> ()
    %cst_35 = arith.constant dense<0.000000e+00> : vector<4x8x8xf32>
    %57 = tpu.matmul %47, %36, %cst_35 {dimension_numbers = #tpu.dot_dimension_numbers<[2], [1], [1], [2], [0, 0, 0, 1, 1, 2], [0], [0]>} : vector<4x8x8xf32>, vector<4x8x8xf32>, vector<4x8x8xf32> -> vector<4x8x8xf32>
    "tpu.trace_stop"() : () -> ()
    %58 = arith.addf %56, %57 : vector<4x8x8xf32>
    %c0_36 = arith.constant 0 : index
    %c0_37 = arith.constant 0 : index
    %c0_38 = arith.constant 0 : index
    %59 = vector.load %arg17[%c0_36, %c0_37, %c0_38] : memref<4x8x8xf32, #tpu.memory_space<vmem>>, vector<4x8x8xf32>
    tpu.vector_store %arg17[%c0_36, %c0_37, %c0_38], %58 {strides = array<i32>} : memref<4x8x8xf32, #tpu.memory_space<vmem>>, vector<4x8x8xf32>,
    %c0_39 = arith.constant 0 : index
    %c0_40 = arith.constant 0 : index
    %c0_41 = arith.constant 0 : index
    %60 = vector.load %arg15[%c0_39, %c0_40, %c0_41] : memref<4x8x1xf32, #tpu.memory_space<vmem>>, vector<4x8x1xf32>
    tpu.vector_store %arg15[%c0_39, %c0_40, %c0_41], %42 {strides = array<i32>} : memref<4x8x1xf32, #tpu.memory_space<vmem>>, vector<4x8x1xf32>,
    %c1_i32 = arith.constant 1 : i32
    %61 = arith.cmpi eq, %arg1, %c1_i32 : i32
    %62 = arith.extui %61 : i1 to i32
    %c0_i32_42 = arith.constant 0 : i32
    %63 = arith.cmpi ne, %62, %c0_i32_42 : i32
    scf.if %63 {
      %c0_43 = arith.constant 0 : index
      %c0_44 = arith.constant 0 : index
      %64 = vector.load %arg14[%c0_43, %c0_44] : memref<8x32xf32, #tpu.memory_space<vmem>>, vector<8x32xf32>
      %c0_45 = arith.constant 0 : index
      %c0_46 = arith.constant 0 : index
      %65 = vector.load %arg9[%c0_45, %c0_46] : memref<32x32xf32, #tpu.memory_space<vmem>>, vector<32x32xf32>
      %cst_47 = arith.constant dense<0.000000e+00> : vector<8x32xf32>
      %66 = tpu.matmul %64, %65, %cst_47 {dimension_numbers = #tpu.dot_dimension_numbers<[1], [0], [0], [1], [0, 0, 1, 1], [], []>} : vector<8x32xf32>, vector<32x32xf32>, vector<8x32xf32> -> vector<8x32xf32>
      %c0_48 = arith.constant 0 : index
      %c0_49 = arith.constant 0 : index
      %67 = vector.load %arg10[%c0_48, %c0_49] : memref<32x32xf32, #tpu.memory_space<vmem>>, vector<32x32xf32>
      %cst_50 = arith.constant dense<0.000000e+00> : vector<8x32xf32>
      %68 = tpu.matmul %64, %67, %cst_50 {dimension_numbers = #tpu.dot_dimension_numbers<[1], [0], [0], [1], [0, 0, 1, 1], [], []>} : vector<8x32xf32>, vector<32x32xf32>, vector<8x32xf32> -> vector<8x32xf32>
      %69 = vector.shape_cast %66 : vector<8x32xf32> to vector<8x4x8xf32>
      %70 = tpu.transpose %69, [1, 0, 2] : vector<8x4x8xf32> -> vector<4x8x8xf32>
      %71 = vector.shape_cast %68 : vector<8x32xf32> to vector<8x4x8xf32>
      %72 = tpu.transpose %71, [1, 0, 2] : vector<8x4x8xf32> -> vector<4x8x8xf32>
      %c0_51 = arith.constant 0 : index
      %c0_52 = arith.constant 0 : index
      %c0_53 = arith.constant 0 : index
      %73 = vector.load %arg13[%c0_51, %c0_52, %c0_53] : memref<4x8x8xf32, #tpu.memory_space<vmem>>, vector<4x8x8xf32>
      "tpu.trace_start"() <{level = 10 : i32, message = "hqd,hkd->hqk"}> : () -> ()
      %cst_54 = arith.constant dense<0.000000e+00> : vector<4x8x8xf32>
      %74 = tpu.matmul %73, %70, %cst_54 {dimension_numbers = #tpu.dot_dimension_numbers<[2], [2], [1], [1], [0, 0, 0, 1, 1, 1], [0], [0]>} : vector<4x8x8xf32>, vector<4x8x8xf32>, vector<4x8x8xf32> -> vector<4x8x8xf32>
      "tpu.trace_stop"() : () -> ()
      %c0_55 = arith.constant 0 : index
      %c0_56 = arith.constant 0 : index
      %c0_57 = arith.constant 0 : index
      %75 = vector.load %arg15[%c0_55, %c0_56, %c0_57] : memref<4x8x1xf32, #tpu.memory_space<vmem>>, vector<4x8x1xf32>
      %cst_58 = arith.constant dense<0xFF800000> : vector<4x8xf32>
      %76 = vector.multi_reduction <maximumf>, %74, %cst_58 [2] : vector<4x8x8xf32> to vector<4x8xf32>
      %77 = vector.shape_cast %76 : vector<4x8xf32> to vector<4x8x1xf32>
      %78 = arith.maximumf %75, %77 : vector<4x8x1xf32>
      %79 = arith.subf %75, %78 : vector<4x8x1xf32>
      %80 = math.exp %79 : vector<4x8x1xf32>
      %81 = vector.broadcast %78 : vector<4x8x1xf32> to vector<4x8x8xf32>
      %82 = arith.subf %74, %81 : vector<4x8x8xf32>
      %83 = math.exp %82 : vector<4x8x8xf32>
      %c0_59 = arith.constant 0 : index
      %c0_60 = arith.constant 0 : index
      %c0_61 = arith.constant 0 : index
      %84 = vector.load %arg16[%c0_59, %c0_60, %c0_61] : memref<4x8x1xf32, #tpu.memory_space<vmem>>, vector<4x8x1xf32>
      %85 = arith.mulf %80, %84 : vector<4x8x1xf32>
      %cst_62 = arith.constant dense<0.000000e+00> : vector<4x8xf32>
      %86 = vector.multi_reduction <add>, %83, %cst_62 [2] : vector<4x8x8xf32> to vector<4x8xf32>
      %87 = vector.shape_cast %86 : vector<4x8xf32> to vector<4x8x1xf32>
      %88 = arith.addf %85, %87 : vector<4x8x1xf32>
      %c0_63 = arith.constant 0 : index
      %c0_64 = arith.constant 0 : index
      %c0_65 = arith.constant 0 : index
      %89 = vector.load %arg17[%c0_63, %c0_64, %c0_65] : memref<4x8x8xf32, #tpu.memory_space<vmem>>, vector<4x8x8xf32>
      %90 = vector.broadcast %80 : vector<4x8x1xf32> to vector<4x8x8xf32>
      %91 = arith.mulf %90, %89 : vector<4x8x8xf32>
      "tpu.trace_start"() <{level = 10 : i32, message = "hqk,hkd->hqd"}> : () -> ()
      %cst_66 = arith.constant dense<0.000000e+00> : vector<4x8x8xf32>
      %92 = tpu.matmul %83, %72, %cst_66 {dimension_numbers = #tpu.dot_dimension_numbers<[2], [1], [1], [2], [0, 0, 0, 1, 1, 2], [0], [0]>} : vector<4x8x8xf32>, vector<4x8x8xf32>, vector<4x8x8xf32> -> vector<4x8x8xf32>
      "tpu.trace_stop"() : () -> ()
      %93 = arith.addf %91, %92 : vector<4x8x8xf32>
      %94 = tpu.reciprocal %88 : vector<4x8x1xf32> -> vector<4x8x1xf32>
      %95 = vector.broadcast %94 : vector<4x8x1xf32> to vector<4x8x8xf32>
      %96 = arith.mulf %93, %95 : vector<4x8x8xf32>
      %97 = tpu.transpose %96, [1, 0, 2] : vector<4x8x8xf32> -> vector<8x4x8xf32>
      %98 = vector.shape_cast %97 : vector<8x4x8xf32> to vector<8x32xf32>
      %c0_67 = arith.constant 0 : index
      %c0_68 = arith.constant 0 : index
      %99 = vector.load %arg11[%c0_67, %c0_68] : memref<32x32xf32, #tpu.memory_space<vmem>>, vector<32x32xf32>
      %cst_69 = arith.constant dense<0.000000e+00> : vector<8x32xf32>
      %100 = tpu.matmul %98, %99, %cst_69 {dimension_numbers = #tpu.dot_dimension_numbers<[1], [0], [0], [1], [0, 0, 1, 1], [], []>} : vector<8x32xf32>, vector<32x32xf32>, vector<8x32xf32> -> vector<8x32xf32>
      %c0_70 = arith.constant 0 : index
      %c0_71 = arith.constant 0 : index
      %c0_72 = arith.constant 0 : index
      %101 = vector.load %arg12[%c0_70, %c0_71, %c0_72] : memref<1x8x32xf32, #tpu.memory_space<vmem>>, vector<1x8x32xf32>
      %102 = vector.shape_cast %101 : vector<1x8x32xf32> to vector<8x32xf32>
      %103 = vector.shape_cast %100 : vector<8x32xf32> to vector<1x8x32xf32>
      tpu.vector_store %arg12[%c0_70, %c0_71, %c0_72], %103 {strides = array<i32>} : memref<1x8x32xf32, #tpu.memory_space<vmem>>, vector<1x8x32xf32>,
    } else {
    }
    return
  }
  func.func @transform_0(%arg0: i32, %arg1: i32) -> (i32, i32, i32) {
    %c0_i32 = arith.constant 0 : i32
    %c0_i32_0 = arith.constant 0 : i32
    return %arg0, %arg1, %c0_i32 : i32, i32, i32
  }
  func.func @transform_1(%arg0: i32, %arg1: i32) -> (i32, i32, i32) {
    %c0_i32 = arith.constant 0 : i32
    %c0_i32_0 = arith.constant 0 : i32
    %c0_i32_1 = arith.constant 0 : i32
    return %arg0, %c0_i32, %c0_i32_0 : i32, i32, i32
  }
  func.func @transform_2(%arg0: i32, %arg1: i32) -> (i32, i32) {
    %c0_i32 = arith.constant 0 : i32
    %c0_i32_0 = arith.constant 0 : i32
    %c0_i32_1 = arith.constant 0 : i32
    return %c0_i32, %c0_i32_0 : i32, i32
  }
  func.func @transform_3(%arg0: i32, %arg1: i32) -> (i32, i32) {
    %c0_i32 = arith.constant 0 : i32
    %c0_i32_0 = arith.constant 0 : i32
    %c0_i32_1 = arith.constant 0 : i32
    return %c0_i32, %c0_i32_0 : i32, i32
  }
  func.func @transform_4(%arg0: i32, %arg1: i32) -> (i32, i32) {
    %c0_i32 = arith.constant 0 : i32
    %c0_i32_0 = arith.constant 0 : i32
    %c0_i32_1 = arith.constant 0 : i32
    return %c0_i32, %c0_i32_0 : i32, i32
  }
  func.func @transform_5(%arg0: i32, %arg1: i32) -> (i32, i32) {
    %c0_i32 = arith.constant 0 : i32
    %c0_i32_0 = arith.constant 0 : i32
    %c0_i32_1 = arith.constant 0 : i32
    return %c0_i32, %c0_i32_0 : i32, i32
  }
  func.func @transform_6(%arg0: i32, %arg1: i32) -> (i32, i32) {
    %c0_i32 = arith.constant 0 : i32
    %c0_i32_0 = arith.constant 0 : i32
    %c0_i32_1 = arith.constant 0 : i32
    return %c0_i32, %c0_i32_0 : i32, i32
  }
  func.func @transform_7(%arg0: i32, %arg1: i32) -> (i32, i32) {
    %c0_i32 = arith.constant 0 : i32
    %c0_i32_0 = arith.constant 0 : i32
    %c0_i32_1 = arith.constant 0 : i32
    return %c0_i32, %c0_i32_0 : i32, i32
  }
  func.func @transform_8(%arg0: i32, %arg1: i32) -> (i32, i32) {
    %c0_i32 = arith.constant 0 : i32
    %c0_i32_0 = arith.constant 0 : i32
    %c0_i32_1 = arith.constant 0 : i32
    return %c0_i32, %c0_i32_0 : i32, i32
  }
  func.func @transform_9(%arg0: i32, %arg1: i32) -> (i32, i32) {
    %c0_i32 = arith.constant 0 : i32
    %c0_i32_0 = arith.constant 0 : i32
    %c0_i32_1 = arith.constant 0 : i32
    return %c0_i32, %c0_i32_0 : i32, i32
  }
  func.func @transform_10(%arg0: i32, %arg1: i32) -> (i32, i32, i32) {
    %c0_i32 = arith.constant 0 : i32
    %c0_i32_0 = arith.constant 0 : i32
    %c0_i32_1 = arith.constant 0 : i32
    return %arg0, %c0_i32, %c0_i32_0 : i32, i32, i32
  }
}

</mosaic_0001>

<llo_original>
// kernel: tpu_custom_call.1
$region0: #{tpu_custom_call.1}
  #allocation0 [shape = 'u32[]', space=smem, size = 0x4, offset = 0x4, fixed_abs, tag = 'smem constant byte address 0x4 - core index']
  #allocation1 [shape = 'u32[144,128]{1,0:T(1,128)}', space=vmem, size = 0x12000, scoped, tag = 'internal scratch']
  #allocation2 [shape = 'f32[4,8,8]{2,1,0:T(8,128)}', space=vmem, size = 0x4000, scoped, tag = 'scratch operand']
  #allocation3 [shape = 'f32[8,32]{1,0:T(8,128)}', space=vmem, size = 0x1000, scoped, tag = 'scratch operand']
  #allocation4 [shape = 'f32[4,8,1]{2,1,0:T(8,128)}', space=vmem, size = 0x4000, scoped, tag = 'scratch operand']
  #allocation5 [shape = 'f32[4,8,1]{2,1,0:T(8,128)}', space=vmem, size = 0x4000, scoped, tag = 'scratch operand']
  #allocation6 [shape = 'f32[4,8,8]{2,1,0:T(8,128)}', space=vmem, size = 0x4000, scoped, tag = 'scratch operand']
  %s0 = inlined_call_operand.hbm [shape: f32[2,16,32], index: 0, kind: input, shape index: {}]
  %s1 = inlined_call_operand.hbm [shape: f32[2,8,32], index: 1, kind: input, shape index: {}]
  %s2 = inlined_call_operand.vmem [shape: f32[1,32], index: 2, kind: input, shape index: {}]
  %s3 = inlined_call_operand.vmem [shape: f32[1,32], index: 3, kind: input, shape index: {}]
  %s4 = inlined_call_operand.vmem [shape: f32[1,32], index: 4, kind: input, shape index: {}]
  %s5 = inlined_call_operand.vmem [shape: f32[1,32], index: 5, kind: input, shape index: {}]
  %s6 = inlined_call_operand.hbm [shape: f32[32,32], index: 6, kind: input, shape index: {}]
  %s7 = inlined_call_operand.hbm [shape: f32[32,32], index: 7, kind: input, shape index: {}]
  %s8 = inlined_call_operand.hbm [shape: f32[32,32], index: 8, kind: input, shape index: {}]
  %s9 = inlined_call_operand.hbm [shape: f32[32,32], index: 9, kind: input, shape index: {}]
  %s10 = inlined_call_operand.hbm [shape: f32[2,8,32], index: 10, kind: output, shape index: {}]
  %s11 = sld [smem:[#allocation0]]
  $region105: #{tpu_custom_call.1} parent=0
    _
  %s13 = ssub.s32 1, %s11
  %s14 = scalar_select 0, %s13, %s11
  $region1: #{tpu_custom_call.1} parent=0
    #allocation7 [shape = 'u8[8192]{0}', space=vmem, size = 0x2000, scoped, tag = 'input window, operand 0']
    #allocation8 [shape = 's32[2]{0}', space=sflag, size = 0x8, scoped, tag = 'scoped memory for tpu_custom_call.1']
    #allocation9 [shape = 's32[2]{0}', space=sflag, size = 0x8, scoped, tag = 'scoped memory for tpu_custom_call.1']
    #allocation10 [shape = 'u8[8192]{0}', space=vmem, size = 0x2000, scoped, tag = 'input window, operand 1']
    #allocation11 [shape = 's32[2]{0}', space=sflag, size = 0x8, scoped, tag = 'scoped memory for tpu_custom_call.1']
    #allocation12 [shape = 'u8[16384]{0}', space=vmem, size = 0x4000, scoped, tag = 'input window, operand 6, single buffered']
    #allocation13 [shape = 'u8[16384]{0}', space=vmem, size = 0x4000, scoped, tag = 'input window, operand 7, single buffered']
    #allocation14 [shape = 's32[1]{0}', space=sflag, size = 0x4, scoped, tag = 'scoped memory for tpu_custom_call.1']
    #allocation15 [shape = 'u8[16384]{0}', space=vmem, size = 0x4000, scoped, tag = 'input window, operand 8, single buffered']
    #allocation16 [shape = 'u8[16384]{0}', space=vmem, size = 0x4000, scoped, tag = 'input window, operand 9, single buffered']
    #allocation17 [shape = 's32[1]{0}', space=sflag, size = 0x4, scoped, tag = 'scoped memory for tpu_custom_call.1']
    #allocation18 [shape = 'u8[8192]{0}', space=vmem, size = 0x2000, scoped, tag = 'output window, operand 0']
    %15 = vsyncpa [#allocation8], 0
    %s16 = scalar_lea.sflag [#allocation8], 1
    %17 = vsyncpa %s16, 0
    %18 = vsyncpa [#allocation11], 0
    %s19 = scalar_lea.sflag [#allocation11], 1
    %20 = vsyncpa %s19, 0
    %21 = vsyncpa [#allocation14], 0
    %22 = vsyncpa [#allocation17], 0
    %23 = vsyncpa [#allocation9], 0
    %s24 = scalar_lea.sflag [#allocation9], 1
    %25 = vsyncpa %s24, 0
    loop: start=0, step=1, limit=6
    $region2: #{tpu_custom_call.1} parent=1 // loop_pre_header
      _
    $region3: #{tpu_custom_call.1} parent=1 // loop_header
      %s27 = sphi 0, %s31
      %p28 = scmp.ge.s32.totalorder %s27, 6
      %s34 = sphi 0, %s46
      %s35 = sphi 0, %s42
      %s36 = sphi 0, %s34
      %s37 = sphi 0, %s35
      %s38 = sphi 0, %s36
      %s39 = sphi 0, %s37
      %s51 = sphi 0, %s53
      %s54 = sphi 0, %s51
      %s55 = sphi 0, %s54
      %s71 = sphi 0, %s55
      %s77 = sphi 0, %s79
      %s80 = sphi 0, %s77
      %s81 = sphi 0, %s80
      %s97 = sphi 0, %s81
      %s101 = sphi 0, %s101
      %s103 = sphi 0, %s101
      %s104 = sphi 0, %s103
      %s118 = sphi 0, %s104
      %s122 = sphi 0, %s122
      %s124 = sphi 0, %s122
      %s125 = sphi 0, %s124
      %s139 = sphi 0, %s125
      %s143 = sphi 0, %s143
      %s145 = sphi 0, %s143
      %s146 = sphi 0, %s145
      %s160 = sphi 0, %s146
      %s164 = sphi 0, %s164
      %s166 = sphi 0, %s164
      %s167 = sphi 0, %s166
      %s181 = sphi 0, %s167
      %s185 = sphi 0, %s185
      %s187 = sphi 0, %s185
      %s188 = sphi 0, %s187
      %s202 = sphi 0, %s188
      %s206 = sphi 0, %s206
      %s208 = sphi 0, %s206
      %s209 = sphi 0, %s208
      %s223 = sphi 0, %s209
      %s227 = sphi 0, %s227
      %s229 = sphi 0, %s227
      %s230 = sphi 0, %s229
      %s244 = sphi 0, %s230
      %s248 = sphi 0, %s248
      %s250 = sphi 0, %s248
      %s251 = sphi 0, %s250
      %s265 = sphi 0, %s251
      %s271 = sphi 0, %s273
      %s274 = sphi 0, %s271
      %s275 = sphi 0, %s274
      %s291 = sphi 0, %s275
    $region4: #{tpu_custom_call.1} parent=1 // loop_header_branch
      %30 = sbr.rel (%p28) target = $region8
    $region5: #{tpu_custom_call.1} parent=1 // loop_body
      %s32 = ssub.s32 %s27, 1
      %s33 = ssub.s32 %s27, 2
      %s40 = sadd.s32 1, %s35
      %p41 = scmp.ge.s32.totalorder %s40, 2
      %s42 = scalar_select %p41, 0, %s40
      %s43 = sadd.s32 1, %s34
      %s44 = scalar_select %p41, %s43, %s34
      %p45 = scmp.ge.s32.totalorder %s44, 2
      %s46 = scalar_select %p45, 0, %s44
      %s47 = ssub.s32 %s34, %s46
      %s48 = ssub.s32 %s35, %s42
      %s49 = sor.u32 %s47, %s48
      %p50 = scmp.eq.s32.totalorder %s49, 0
      %s52 = sadd.s32 %s51, 1
      %s53 = scalar_select %p50, %s51, %s52
      %p56 = pneg %p50
      %p57 = scmp.eq.s32.totalorder %s27, 3
      %p58 = por %p56, %p57
      %p59 = scmp.ne.s32.totalorder %s51, %s54
      %p60 = scmp.eq.s32.totalorder %s27, 0
      %p61 = por %p59, %p60
      %p62 = scmp.ne.s32.totalorder %s51, %s54
      %p63 = scmp.eq.s32.totalorder %s32, 3
      %p64 = por %p62, %p63
      %p65 = scmp.ne.s32.totalorder %s54, %s55
      %p66 = scmp.eq.s32.totalorder %s32, 0
      %p67 = por %p65, %p66
      %p68 = scmp.ne.s32.totalorder %s54, %s55
      %p69 = scmp.eq.s32.totalorder %s33, 3
      %p70 = por %p68, %p69
      %p72 = scmp.ne.s32.totalorder %s55, %s71
      %p73 = scmp.eq.s32.totalorder %s33, 0
      %p74 = por %p72, %p73
      %s75 = ssub.s32 %s34, %s46
      %p76 = scmp.eq.s32.totalorder %s75, 0
      %s78 = sadd.s32 %s77, 1
      %s79 = scalar_select %p76, %s77, %s78
      %p82 = pneg %p76
      %p83 = scmp.eq.s32.totalorder %s27, 3
      %p84 = por %p82, %p83
      %p85 = scmp.ne.s32.totalorder %s77, %s80
      %p86 = scmp.eq.s32.totalorder %s27, 0
      %p87 = por %p85, %p86
      %p88 = scmp.ne.s32.totalorder %s77, %s80
      %p89 = scmp.eq.s32.totalorder %s32, 3
      %p90 = por %p88, %p89
      %p91 = scmp.ne.s32.totalorder %s80, %s81
      %p92 = scmp.eq.s32.totalorder %s32, 0
      %p93 = por %p91, %p92
      %p94 = scmp.ne.s32.totalorder %s80, %s81
      %p95 = scmp.eq.s32.totalorder %s33, 3
      %p96 = por %p94, %p95
      %p98 = scmp.ne.s32.totalorder %s81, %s97
      %p99 = scmp.eq.s32.totalorder %s33, 0
      %p100 = por %p98, %p99
      %s102 = sadd.s32 %s101, 1
      %p105 = scmp.eq.s32.totalorder %s27, 3
      %p106 = scmp.ne.s32.totalorder %s101, %s103
      %p107 = scmp.eq.s32.totalorder %s27, 0
      %p108 = por %p106, %p107
      %p109 = scmp.ne.s32.totalorder %s101, %s103
      %p110 = scmp.eq.s32.totalorder %s32, 3
      %p111 = por %p109, %p110
      %p112 = scmp.ne.s32.totalorder %s103, %s104
      %p113 = scmp.eq.s32.totalorder %s32, 0
      %p114 = por %p112, %p113
      %p115 = scmp.ne.s32.totalorder %s103, %s104
      %p116 = scmp.eq.s32.totalorder %s33, 3
      %p117 = por %p115, %p116
      %p119 = scmp.ne.s32.totalorder %s104, %s118
      %p120 = scmp.eq.s32.totalorder %s33, 0
      %p121 = por %p119, %p120
      %s123 = sadd.s32 %s122, 1
      %p126 = scmp.eq.s32.totalorder %s27, 3
      %p127 = scmp.ne.s32.totalorder %s122, %s124
      %p128 = scmp.eq.s32.totalorder %s27, 0
      %p129 = por %p127, %p128
      %p130 = scmp.ne.s32.totalorder %s122, %s124
      %p131 = scmp.eq.s32.totalorder %s32, 3
      %p132 = por %p130, %p131
      %p133 = scmp.ne.s32.totalorder %s124, %s125
      %p134 = scmp.eq.s32.totalorder %s32, 0
      %p135 = por %p133, %p134
      %p136 = scmp.ne.s32.totalorder %s124, %s125
      %p137 = scmp.eq.s32.totalorder %s33, 3
      %p138 = por %p136, %p137
      %p140 = scmp.ne.s32.totalorder %s125, %s139
      %p141 = scmp.eq.s32.totalorder %s33, 0
      %p142 = por %p140, %p141
      %s144 = sadd.s32 %s143, 1
      %p147 = scmp.eq.s32.totalorder %s27, 3
      %p148 = scmp.ne.s32.totalorder %s143, %s145
      %p149 = scmp.eq.s32.totalorder %s27, 0
      %p150 = por %p148, %p149
      %p151 = scmp.ne.s32.totalorder %s143, %s145
      %p152 = scmp.eq.s32.totalorder %s32, 3
      %p153 = por %p151, %p152
      %p154 = scmp.ne.s32.totalorder %s145, %s146
      %p155 = scmp.eq.s32.totalorder %s32, 0
      %p156 = por %p154, %p155
      %p157 = scmp.ne.s32.totalorder %s145, %s146
      %p158 = scmp.eq.s32.totalorder %s33, 3
      %p159 = por %p157, %p158
      %p161 = scmp.ne.s32.totalorder %s146, %s160
      %p162 = scmp.eq.s32.totalorder %s33, 0
      %p163 = por %p161, %p162
      %s165 = sadd.s32 %s164, 1
      %p168 = scmp.eq.s32.totalorder %s27, 3
      %p169 = scmp.ne.s32.totalorder %s164, %s166
      %p170 = scmp.eq.s32.totalorder %s27, 0
      %p171 = por %p169, %p170
      %p172 = scmp.ne.s32.totalorder %s164, %s166
      %p173 = scmp.eq.s32.totalorder %s32, 3
      %p174 = por %p172, %p173
      %p175 = scmp.ne.s32.totalorder %s166, %s167
      %p176 = scmp.eq.s32.totalorder %s32, 0
      %p177 = por %p175, %p176
      %p178 = scmp.ne.s32.totalorder %s166, %s167
      %p179 = scmp.eq.s32.totalorder %s33, 3
      %p180 = por %p178, %p179
      %p182 = scmp.ne.s32.totalorder %s167, %s181
      %p183 = scmp.eq.s32.totalorder %s33, 0
      %p184 = por %p182, %p183
      %s186 = sadd.s32 %s185, 1
      %p189 = scmp.eq.s32.totalorder %s27, 3
      %p190 = scmp.ne.s32.totalorder %s185, %s187
      %p191 = scmp.eq.s32.totalorder %s27, 0
      %p192 = por %p190, %p191
      %p193 = scmp.ne.s32.totalorder %s185, %s187
      %p194 = scmp.eq.s32.totalorder %s32, 3
      %p195 = por %p193, %p194
      %p196 = scmp.ne.s32.totalorder %s187, %s188
      %p197 = scmp.eq.s32.totalorder %s32, 0
      %p198 = por %p196, %p197
      %p199 = scmp.ne.s32.totalorder %s187, %s188
      %p200 = scmp.eq.s32.totalorder %s33, 3
      %p201 = por %p199, %p200
      %p203 = scmp.ne.s32.totalorder %s188, %s202
      %p204 = scmp.eq.s32.totalorder %s33, 0
      %p205 = por %p203, %p204
      %s207 = sadd.s32 %s206, 1
      %p210 = scmp.eq.s32.totalorder %s27, 3
      %p211 = scmp.ne.s32.totalorder %s206, %s208
      %p212 = scmp.eq.s32.totalorder %s27, 0
      %p213 = por %p211, %p212
      %p214 = scmp.ne.s32.totalorder %s206, %s208
      %p215 = scmp.eq.s32.totalorder %s32, 3
      %p216 = por %p214, %p215
      %p217 = scmp.ne.s32.totalorder %s208, %s209
      %p218 = scmp.eq.s32.totalorder %s32, 0
      %p219 = por %p217, %p218
      %p220 = scmp.ne.s32.totalorder %s208, %s209
      %p221 = scmp.eq.s32.totalorder %s33, 3
      %p222 = por %p220, %p221
      %p224 = scmp.ne.s32.totalorder %s209, %s223
      %p225 = scmp.eq.s32.totalorder %s33, 0
      %p226 = por %p224, %p225
      %s228 = sadd.s32 %s227, 1
      %p231 = scmp.eq.s32.totalorder %s27, 3
      %p232 = scmp.ne.s32.totalorder %s227, %s229
      %p233 = scmp.eq.s32.totalorder %s27, 0
      %p234 = por %p232, %p233
      %p235 = scmp.ne.s32.totalorder %s227, %s229
      %p236 = scmp.eq.s32.totalorder %s32, 3
      %p237 = por %p235, %p236
      %p238 = scmp.ne.s32.totalorder %s229, %s230
      %p239 = scmp.eq.s32.totalorder %s32, 0
      %p240 = por %p238, %p239
      %p241 = scmp.ne.s32.totalorder %s229, %s230
      %p242 = scmp.eq.s32.totalorder %s33, 3
      %p243 = por %p241, %p242
      %p245 = scmp.ne.s32.totalorder %s230, %s244
      %p246 = scmp.eq.s32.totalorder %s33, 0
      %p247 = por %p245, %p246
      %s249 = sadd.s32 %s248, 1
      %p252 = scmp.eq.s32.totalorder %s27, 3
      %p253 = scmp.ne.s32.totalorder %s248, %s250
      %p254 = scmp.eq.s32.totalorder %s27, 0
      %p255 = por %p253, %p254
      %p256 = scmp.ne.s32.totalorder %s248, %s250
      %p257 = scmp.eq.s32.totalorder %s32, 3
      %p258 = por %p256, %p257
      %p259 = scmp.ne.s32.totalorder %s250, %s251
      %p260 = scmp.eq.s32.totalorder %s32, 0
      %p261 = por %p259, %p260
      %p262 = scmp.ne.s32.totalorder %s250, %s251
      %p263 = scmp.eq.s32.totalorder %s33, 3
      %p264 = por %p262, %p263
      %p266 = scmp.ne.s32.totalorder %s251, %s265
      %p267 = scmp.eq.s32.totalorder %s33, 0
      %p268 = por %p266, %p267
      %s269 = ssub.s32 %s34, %s46
      %p270 = scmp.eq.s32.totalorder %s269, 0
      %s272 = sadd.s32 %s271, 1
      %s273 = scalar_select %p270, %s271, %s272
      %p276 = pneg %p270
      %p277 = scmp.eq.s32.totalorder %s27, 3
      %p278 = por %p276, %p277
      %p279 = scmp.ne.s32.totalorder %s271, %s274
      %p280 = scmp.eq.s32.totalorder %s27, 0
      %p281 = por %p279, %p280
      %p282 = scmp.ne.s32.totalorder %s271, %s274
      %p283 = scmp.eq.s32.totalorder %s32, 3
      %p284 = por %p282, %p283
      %p285 = scmp.ne.s32.totalorder %s274, %s275
      %p286 = scmp.eq.s32.totalorder %s32, 0
      %p287 = por %p285, %p286
      %p288 = scmp.ne.s32.totalorder %s274, %s275
      %p289 = scmp.eq.s32.totalorder %s33, 3
      %p290 = por %p288, %p289
      %p292 = scmp.ne.s32.totalorder %s275, %s291
      %p293 = scmp.eq.s32.totalorder %s33, 0
      %p294 = por %p292, %p293
      %p295 = scmp.le.s32.totalorder 1, %s27
      %p296 = scmp.lt.s32.totalorder %s27, 5
      %p297 = pnand %p295, %p296
      %p298 = pneg %p297
      // Predicated region
      $region9: #{tpu_custom_call.1} parent=5 // pred_check
        _
      $region10: #{tpu_custom_call.1} parent=5 // pred_check_branch
        %300 = sbr.rel (%p297) target = $region12
      $region11: #{tpu_custom_call.1} parent=5 // pred_region
        %s301 = ssub.s32 %s27, 1
        // Predicated region
        $region13: #{tpu_custom_call.1} parent=11 // pred_check
          %p302 = pneg %p114
        $region14: #{tpu_custom_call.1} parent=11 // pred_check_branch
          %304 = sbr.rel (%p302) target = $region16
        $region15: #{tpu_custom_call.1} parent=11 // pred_region
          _
        $region16: #{tpu_custom_call.1} parent=11 // pred_fallthru
          _
        // Predicated region
        $region17: #{tpu_custom_call.1} parent=11 // pred_check
          %p305 = pneg %p135
        $region18: #{tpu_custom_call.1} parent=11 // pred_check_branch
          %307 = sbr.rel (%p305) target = $region20
        $region19: #{tpu_custom_call.1} parent=11 // pred_region
          _
        $region20: #{tpu_custom_call.1} parent=11 // pred_fallthru
          _
        // Predicated region
        $region21: #{tpu_custom_call.1} parent=11 // pred_check
          %p308 = pneg %p156
        $region22: #{tpu_custom_call.1} parent=11 // pred_check_branch
          %310 = sbr.rel (%p308) target = $region24
        $region23: #{tpu_custom_call.1} parent=11 // pred_region
          _
        $region24: #{tpu_custom_call.1} parent=11 // pred_fallthru
          _
        // Predicated region
        $region25: #{tpu_custom_call.1} parent=11 // pred_check
          %p311 = pneg %p177
        $region26: #{tpu_custom_call.1} parent=11 // pred_check_branch
          %313 = sbr.rel (%p311) target = $region28
        $region27: #{tpu_custom_call.1} parent=11 // pred_region
          _
        $region28: #{tpu_custom_call.1} parent=11 // pred_fallthru
          _
        // Predicated region
        $region29: #{tpu_custom_call.1} parent=11 // pred_check
          %p314 = pneg %p198
        $region30: #{tpu_custom_call.1} parent=11 // pred_check_branch
          %316 = sbr.rel (%p314) target = $region32
        $region31: #{tpu_custom_call.1} parent=11 // pred_region
          %s318 = ssub.s32 512, 512
          %319 = vsyncadd [#allocation11], %s318
          %s320 = sshll.u32 [#allocation12], 4
          %s321 = int_to_ptr.vmem [resolvable:$true] %s320
          %326 = dma.hbm_to_vmem [thread:$0]  %s6, 512, %s321, [#allocation11], 128, 128, 8
        $region32: #{tpu_custom_call.1} parent=11 // pred_fallthru
          _
        // Predicated region
        $region33: #{tpu_custom_call.1} parent=11 // pred_check
          %p327 = pneg %p219
        $region34: #{tpu_custom_call.1} parent=11 // pred_check_branch
          %329 = sbr.rel (%p327) target = $region36
        $region35: #{tpu_custom_call.1} parent=11 // pred_region
          %s331 = ssub.s32 512, 512
          %332 = vsyncadd [#allocation14], %s331
          %s333 = sshll.u32 [#allocation13], 4
          %s334 = int_to_ptr.vmem [resolvable:$true] %s333
          %339 = dma.hbm_to_vmem [thread:$0]  %s7, 512, %s334, [#allocation14], 128, 128, 8
        $region36: #{tpu_custom_call.1} parent=11 // pred_fallthru
          _
        // Predicated region
        $region37: #{tpu_custom_call.1} parent=11 // pred_check
          %p340 = pneg %p240
        $region38: #{tpu_custom_call.1} parent=11 // pred_check_branch
          %342 = sbr.rel (%p340) target = $region40
        $region39: #{tpu_custom_call.1} parent=11 // pred_region
          %s344 = ssub.s32 512, 512
          %345 = vsyncadd [#allocation14], %s344
          %s346 = sshll.u32 [#allocation15], 4
          %s347 = int_to_ptr.vmem [resolvable:$true] %s346
          %352 = dma.hbm_to_vmem [thread:$0]  %s8, 512, %s347, [#allocation14], 128, 128, 8
        $region40: #{tpu_custom_call.1} parent=11 // pred_fallthru
          _
        // Predicated region
        $region41: #{tpu_custom_call.1} parent=11 // pred_check
          %p353 = pneg %p261
        $region42: #{tpu_custom_call.1} parent=11 // pred_check_branch
          %355 = sbr.rel (%p353) target = $region44
        $region43: #{tpu_custom_call.1} parent=11 // pred_region
          %s357 = ssub.s32 512, 512
          %358 = vsyncadd [#allocation17], %s357
          %s359 = sshll.u32 [#allocation16], 4
          %s360 = int_to_ptr.vmem [resolvable:$true] %s359
          %365 = dma.hbm_to_vmem [thread:$0]  %s9, 512, %s360, [#allocation17], 128, 128, 8
        $region44: #{tpu_custom_call.1} parent=11 // pred_fallthru
          _
      $region12: #{tpu_custom_call.1} parent=5 // pred_fallthru
        _
      %p366 = scmp.lt.s32.totalorder %s27, 4
      // Predicated region
      $region45: #{tpu_custom_call.1} parent=5 // pred_check
        %p367 = pneg %p366
      $region46: #{tpu_custom_call.1} parent=5 // pred_check_branch
        %369 = sbr.rel (%p367) target = $region48
      $region47: #{tpu_custom_call.1} parent=5 // pred_region
        // Predicated region
        $region49: #{tpu_custom_call.1} parent=47 // pred_check
          %p370 = pneg %p61
        $region50: #{tpu_custom_call.1} parent=47 // pred_check_branch
          %372 = sbr.rel (%p370) target = $region52
        $region51: #{tpu_custom_call.1} parent=47 // pred_region
          %s373 = sand.u32 %s51, 1
          %s374 = scalar_lea.sflag [#allocation8], %s373
          %s375 = sand.u32 %s51, 1
          %s376 = smul.addr %s375, 8
          %s377 = scalar_lea.vmem [#allocation7], %s376
          %s379 = ssub.s32 128, 128
          %380 = vsyncadd %s374, %s379
          %s381 = smul.addr %s34, 2
          %s382 = sadd.s32 %s35, %s381
          %s383 = smul.addr %s382, 128
          %s384 = scalar_lea.hbm %s0, %s383
          %s386 = sshll.u32 %s377, 4
          %s387 = int_to_ptr.vmem [resolvable:$true] %s386
          %389 = dma.hbm_to_vmem [thread:$0]  %s384, 128, %s387, %s374
        $region52: #{tpu_custom_call.1} parent=47 // pred_fallthru
          _
        // Predicated region
        $region53: #{tpu_custom_call.1} parent=47 // pred_check
          %p390 = pneg %p87
        $region54: #{tpu_custom_call.1} parent=47 // pred_check_branch
          %392 = sbr.rel (%p390) target = $region56
        $region55: #{tpu_custom_call.1} parent=47 // pred_region
          %s393 = sand.u32 %s27, 1
          %s394 = scalar_lea.sflag [#allocation11], %s393
          %s395 = sand.u32 %s77, 1
          %s396 = smul.addr %s395, 8
          %s397 = scalar_lea.vmem [#allocation10], %s396
          %s399 = ssub.s32 128, 128
          %400 = vsyncadd %s394, %s399
          %s401 = smul.addr %s34, 128
          %s402 = scalar_lea.hbm %s1, %s401
          %s404 = sshll.u32 %s397, 4
          %s405 = int_to_ptr.vmem [resolvable:$true] %s404
          %407 = dma.hbm_to_vmem [thread:$0]  %s402, 128, %s405, %s394
        $region56: #{tpu_custom_call.1} parent=47 // pred_fallthru
          _
      $region48: #{tpu_custom_call.1} parent=5 // pred_fallthru
        _
      %p408 = scmp.le.s32.totalorder 1, %s27
      %p409 = scmp.lt.s32.totalorder %s27, 5
      %p410 = pnand %p408, %p409
      %p411 = pneg %p410
      // Predicated region
      $region57: #{tpu_custom_call.1} parent=5 // pred_check
        _
      $region58: #{tpu_custom_call.1} parent=5 // pred_check_branch
        %413 = sbr.rel (%p410) target = $region60
      $region59: #{tpu_custom_call.1} parent=5 // pred_region
        %s414 = ssub.s32 %s27, 1
        %s415 = sand.u32 %s54, 1
        %s416 = scalar_lea.sflag [#allocation8], %s415
        %s417 = sand.u32 %s54, 1
        %s418 = smul.addr %s417, 8
        %s419 = scalar_lea.vmem [#allocation7], %s418
        // Predicated region
        $region61: #{tpu_custom_call.1} parent=59 // pred_check
          %p420 = pneg %p67
        $region62: #{tpu_custom_call.1} parent=59 // pred_check_branch
          %422 = sbr.rel (%p420) target = $region64
        $region63: #{tpu_custom_call.1} parent=59 // pred_region
          %423 = dma.done %s416, 128
        $region64: #{tpu_custom_call.1} parent=59 // pred_fallthru
          _
        %s424 = sand.u32 %s32, 1
        %s425 = scalar_lea.sflag [#allocation11], %s424
        %s426 = sand.u32 %s80, 1
        %s427 = smul.addr %s426, 8
        %s428 = scalar_lea.vmem [#allocation10], %s427
        // Predicated region
        $region65: #{tpu_custom_call.1} parent=59 // pred_check
          %p429 = pneg %p93
        $region66: #{tpu_custom_call.1} parent=59 // pred_check_branch
          %431 = sbr.rel (%p429) target = $region68
        $region67: #{tpu_custom_call.1} parent=59 // pred_region
          %432 = dma.done %s425, 128
        $region68: #{tpu_custom_call.1} parent=59 // pred_fallthru
          _
        // Predicated region
        $region69: #{tpu_custom_call.1} parent=59 // pred_check
          %p433 = pneg %p198
        $region70: #{tpu_custom_call.1} parent=59 // pred_check_branch
          %435 = sbr.rel (%p433) target = $region72
        $region71: #{tpu_custom_call.1} parent=59 // pred_region
          %436 = dma.done [#allocation11], 512
        $region72: #{tpu_custom_call.1} parent=59 // pred_fallthru
          _
        // Predicated region
        $region73: #{tpu_custom_call.1} parent=59 // pred_check
          %p437 = pneg %p219
        $region74: #{tpu_custom_call.1} parent=59 // pred_check_branch
          %439 = sbr.rel (%p437) target = $region76
        $region75: #{tpu_custom_call.1} parent=59 // pred_region
          %440 = dma.done [#allocation14], 512
        $region76: #{tpu_custom_call.1} parent=59 // pred_fallthru
          _
        // Predicated region
        $region77: #{tpu_custom_call.1} parent=59 // pred_check
          %p441 = pneg %p240
        $region78: #{tpu_custom_call.1} parent=59 // pred_check_branch
          %443 = sbr.rel (%p441) target = $region80
        $region79: #{tpu_custom_call.1} parent=59 // pred_region
          %444 = dma.done [#allocation14], 512
        $region80: #{tpu_custom_call.1} parent=59 // pred_fallthru
          _
        // Predicated region
        $region81: #{tpu_custom_call.1} parent=59 // pred_check
          %p445 = pneg %p261
        $region82: #{tpu_custom_call.1} parent=59 // pred_check_branch
          %447 = sbr.rel (%p445) target = $region84
        $region83: #{tpu_custom_call.1} parent=59 // pred_region
          %448 = dma.done [#allocation17], 512
        $region84: #{tpu_custom_call.1} parent=59 // pred_fallthru
          _
        %s449 = sand.u32 %s54, 1
        %s450 = scalar_lea.sflag [#allocation8], %s449
        %s451 = sand.u32 %s54, 1
        %s452 = smul.addr %s451, 8
        %s453 = scalar_lea.vmem [#allocation7], %s452
        %p454 = pneg %p67
        %p455 = pneg %p64
        %s456 = sand.u32 %s32, 1
        %s457 = scalar_lea.sflag [#allocation11], %s456
        %s458 = sand.u32 %s80, 1
        %s459 = smul.addr %s458, 8
        %s460 = scalar_lea.vmem [#allocation10], %s459
        %p461 = pneg %p93
        %p462 = pneg %p90
        %p463 = pneg %p114
        %p464 = pneg %p111
        %p465 = pneg %p135
        %p466 = pneg %p132
        %p467 = pneg %p156
        %p468 = pneg %p153
        %p469 = pneg %p177
        %p470 = pneg %p174
        %p471 = pneg %p198
        %p472 = pneg %p195
        %p473 = pneg %p219
        %p474 = pneg %p216
        %p475 = pneg %p240
        %p476 = pneg %p237
        %p477 = pneg %p261
        %p478 = pneg %p258
        %p479 = pneg %p287
        %p480 = pneg %p284
        %s481 = sand.u32 %s274, 1
        %s482 = scalar_lea.sflag [#allocation9], %s481
        %s483 = sand.u32 %s274, 1
        %s484 = smul.addr %s483, 8
        %s485 = scalar_lea.vmem [#allocation18], %s484
        %p486 = scmp.eq.s32.totalorder %s37, 0
        // Predicated region
        $region85: #{tpu_custom_call.1} parent=59 // pred_check
          %p487 = pneg %p486
        $region86: #{tpu_custom_call.1} parent=59 // pred_check_branch
          %489 = sbr.rel (%p487) target = $region88
        $region87: #{tpu_custom_call.1} parent=59 // pred_region
          %v490 = vld [vmem:[%s428] sm:$0xff]
          %v491 = vld [vmem:[%s4] sm:$0x1]
          %v492 = vld [vmem:[%s5] sm:$0x1]
          %vm493 = vcmask 261120
          %v494 = vsel %vm493, %v490, 0.0
          %495 = vadd.xlane.f32.xlu0 %v494
          %v496 = vpop.xlane.xlu0 %495
          %v497 = vrcp.pop 32.0
          %v498 = vmul.f32 %v496, %v497
          %v499 = vsub.f32 %v490, %v498
          %v500 = vmul.f32 %v499, %v499
          %v501 = vsel %vm493, %v500, 0.0
          %502 = vadd.xlane.f32.xlu0 %v501
          %v503 = vpop.xlane.xlu0 %502
          %v504 = vmul.f32 %v503, %v497
          %v505 = vadd.f32 %v504, 1e-05
          %v506 = vrsqrt.pop %v505
          %v507 = vmul.f32 %v499, %v506
          %v509 = vlaneseq
          %v510 = vshrl.u32 %v509, 7
          %v511 = vsub.s32 0, %v510
          %v512 = vrot.slane %v491, %v511
          %v514 = vmul.f32 %v507, %v512
          %v516 = vlaneseq
          %v517 = vshrl.u32 %v516, 7
          %v518 = vsub.s32 0, %v517
          %v519 = vrot.slane %v492, %v518
          %v521 = vadd.f32 %v514, %v519
          %522 = vst.msk [vmem:[#allocation3] sm:$0xff] %vm493, %v521
          %v523 = vld [vmem:[#allocation12] sm:$0xff]
          %v524 = vld [vmem:[#allocation12 + $0x8] sm:$0xff]
          %v525 = vld [vmem:[#allocation12 + $0x10] sm:$0xff]
          %v526 = vld [vmem:[#allocation12 + $0x18] sm:$0xff]
          %v528 = vsel %vm493, %v521, 0
          %530 = vmatprep.subr.mxu0 0.0
          %531 = vmatpush1.msra.mxu0 0.0
          %532 = vmatprep.subr.mxu0 0.0
          %533 = vmatpush1.msra.mxu0 0.0
          %534 = vmatprep.subr.mxu0 0.0
          %535 = vmatpush1.msra.mxu0 0.0
          %536 = vmatprep.subr.mxu0 0.0
          %537 = vmatpush1.msra.mxu0 0.0
          %538 = vmatprep.subr.mxu0 0.0
          %539 = vmatpush1.msra.mxu0 0.0
          %540 = vmatprep.subr.mxu0 0.0
          %541 = vmatpush1.msra.mxu0 0.0
          %542 = vmatprep.subr.mxu0 0.0
          %543 = vmatpush1.msra.mxu0 0.0
          %544 = vmatprep.subr.mxu0 0.0
          %545 = vmatpush1.msra.mxu0 0.0
          %546 = vmatprep.subr.mxu0 0.0
          %547 = vmatpush1.msra.mxu0 0.0
          %548 = vmatprep.subr.mxu0 0.0
          %549 = vmatpush1.msra.mxu0 0.0
          %550 = vmatprep.subr.mxu0 0.0
          %551 = vmatpush1.msra.mxu0 0.0
          %552 = vmatprep.subr.mxu0 0.0
          %553 = vmatpush1.msra.mxu0 0.0
          %554 = vmatprep.subr.mxu0 0.0
          %555 = vmatpush1.msra.mxu0 %v526
          %556 = vmatprep.subr.mxu0 0.0
          %557 = vmatpush1.msra.mxu0 %v525
          %558 = vmatprep.subr.mxu0 0.0
          %559 = vmatpush1.msra.mxu0 %v524
          %560 = vmatprep.subr.mxu0 0.0
          %561 = vmatpush1.msra.mxu0 %v523
          %562 = vmatprep.subr.mxu0 0.0
          %563 = vmatpush2.msra.mxu0 0.0
          %564 = vmatprep.subr.mxu0 0.0
          %565 = vmatpush2.msra.mxu0 0.0
          %566 = vmatprep.subr.mxu0 0.0
          %567 = vmatpush2.msra.mxu0 0.0
          %568 = vmatprep.subr.mxu0 0.0
          %569 = vmatpush2.msra.mxu0 0.0
          %570 = vmatprep.subr.mxu0 0.0
          %571 = vmatpush2.msra.mxu0 0.0
          %572 = vmatprep.subr.mxu0 0.0
          %573 = vmatpush2.msra.mxu0 0.0
          %574 = vmatprep.subr.mxu0 0.0
          %575 = vmatpush2.msra.mxu0 0.0
          %576 = vmatprep.subr.mxu0 0.0
          %577 = vmatpush2.msra.mxu0 0.0
          %578 = vmatprep.subr.mxu0 0.0
          %579 = vmatpush2.msra.mxu0 0.0
          %580 = vmatprep.subr.mxu0 0.0
          %581 = vmatpush2.msra.mxu0 0.0
          %582 = vmatprep.subr.mxu0 0.0
          %583 = vmatpush2.msra.mxu0 0.0
          %584 = vmatprep.subr.mxu0 0.0
          %585 = vmatpush2.msra.mxu0 0.0
          %586 = vmatprep.subr.mxu0 0.0
          %587 = vmatpush2.msra.mxu0 0.0
          %588 = vmatprep.subr.mxu0 0.0
          %589 = vmatpush2.msra.mxu0 0.0
          %590 = vmatprep.subr.mxu0 0.0
          %591 = vmatpush2.msra.mxu0 0.0
          %592 = vmatprep.subr.mxu0 0.0
          %593 = vmatpush2.msra.mxu0 0.0
          %594 = vmatprep.mubr.f32.mxu0 0.0
          %595 = vmatmul.mubr.f32.gmra.mxu0 %v528
          %v596 = vpop.f32.mrf.mxu0
          %v597 = vadd.f32 0.0, %v596
          %v598 = vpop.f32.mrf.mxu0
          %599 = vdwg.mxu0
          %601 = vrot.lane.b32.xlu0 %v597, 120
          %v602 = vpop.permute.xlu0 %601
          %604 = vrot.lane.b32.xlu0 %v597, 112
          %v605 = vpop.permute.xlu0 %604
          %607 = vrot.lane.b32.xlu0 %v597, 104
          %v608 = vpop.permute.xlu0 %607
          %v610 = vcombine.low %v597, %v605
          %v611 = vcombine.high %v597, %v605
          %v613 = vunpack.c.l.s4 1983009808
          %v614 = vunpack.c.0.s8 %v613
          %v615 = vlaneseq
          %v616 = vshrl.u32 %v615, 7
          %v617 = vsub.s32 %v614, %v616
          %v618 = vrot.slane %v610, %v617
          %v620 = vunpack.c.l.s4 1983009808
          %v621 = vunpack.c.0.s8 %v620
          %v622 = vlaneseq
          %v623 = vshrl.u32 %v622, 7
          %v624 = vsub.s32 %v621, %v623
          %v625 = vrot.slane %v611, %v624
          %v626 = vcombine.low %v602, %v608
          %v627 = vcombine.high %v602, %v608
          %v629 = vunpack.c.l.s4 1983009808
          %v630 = vunpack.c.0.s8 %v629
          %v631 = vlaneseq
          %v632 = vshrl.u32 %v631, 7
          %v633 = vsub.s32 %v630, %v632
          %v634 = vrot.slane %v626, %v633
          %v636 = vunpack.c.l.s4 1983009808
          %v637 = vunpack.c.0.s8 %v636
          %v638 = vlaneseq
          %v639 = vshrl.u32 %v638, 7
          %v640 = vsub.s32 %v637, %v639
          %v641 = vrot.slane %v627, %v640
          %v642 = vcombine.low %v618, %v634
          %v643 = vcombine.high %v618, %v634
          %v645 = vunpack.c.l.s4 1934713408
          %v646 = vunpack.c.0.s8 %v645
          %v647 = vlaneseq
          %v648 = vshrl.u32 %v647, 7
          %v649 = vsub.s32 %v646, %v648
          %v650 = vrot.slane %v642, %v649
          %v652 = vunpack.c.l.s4 1934713408
          %v653 = vunpack.c.0.s8 %v652
          %v654 = vlaneseq
          %v655 = vshrl.u32 %v654, 7
          %v656 = vsub.s32 %v653, %v655
          %v657 = vrot.slane %v643, %v656
          %v658 = vcombine.low %v625, %v641
          %v659 = vcombine.high %v625, %v641
          %v661 = vunpack.c.l.s4 1934713408
          %v662 = vunpack.c.0.s8 %v661
          %v663 = vlaneseq
          %v664 = vshrl.u32 %v663, 7
          %v665 = vsub.s32 %v662, %v664
          %v666 = vrot.slane %v658, %v665
          %v668 = vunpack.c.l.s4 1934713408
          %v669 = vunpack.c.0.s8 %v668
          %v670 = vlaneseq
          %v671 = vshrl.u32 %v670, 7
          %v672 = vsub.s32 %v669, %v671
          %v673 = vrot.slane %v659, %v672
          %v674 = vcombine.high %v650, 0.0
          %v675 = vcombine.high %v657, 0.0
          %v676 = vcombine.high %v666, 0.0
          %v677 = vcombine.high %v673, 0.0
          %v678 = vcombine.low %v650, %v657
          %v680 = vunpack.c.l.s4 1983009808
          %v681 = vunpack.c.0.s8 %v680
          %v682 = vlaneseq
          %v683 = vshrl.u32 %v682, 7
          %v684 = vsub.s32 %v681, %v683
          %v685 = vrot.slane %v678, %v684
          %v686 = vcombine.low %v674, %v675
          %v688 = vunpack.c.l.s4 1983009808
          %v689 = vunpack.c.0.s8 %v688
          %v690 = vlaneseq
          %v691 = vshrl.u32 %v690, 7
          %v692 = vsub.s32 %v689, %v691
          %v693 = vrot.slane %v686, %v692
          %v694 = vcombine.low %v666, %v673
          %v696 = vunpack.c.l.s4 1983009808
          %v697 = vunpack.c.0.s8 %v696
          %v698 = vlaneseq
          %v699 = vshrl.u32 %v698, 7
          %v700 = vsub.s32 %v697, %v699
          %v701 = vrot.slane %v694, %v700
          %v702 = vcombine.low %v676, %v677
          %v704 = vunpack.c.l.s4 1983009808
          %v705 = vunpack.c.0.s8 %v704
          %v706 = vlaneseq
          %v707 = vshrl.u32 %v706, 7
          %v708 = vsub.s32 %v705, %v707
          %v709 = vrot.slane %v702, %v708
          %v710 = vcombine.low %v685, %v693
          %v711 = vcombine.high %v685, %v693
          %v713 = vunpack.c.l.s4 1934713408
          %v714 = vunpack.c.0.s8 %v713
          %v715 = vlaneseq
          %v716 = vshrl.u32 %v715, 7
          %v717 = vsub.s32 %v714, %v716
          %v718 = vrot.slane %v710, %v717
          %v720 = vunpack.c.l.s4 1934713408
          %v721 = vunpack.c.0.s8 %v720
          %v722 = vlaneseq
          %v723 = vshrl.u32 %v722, 7
          %v724 = vsub.s32 %v721, %v723
          %v725 = vrot.slane %v711, %v724
          %v726 = vcombine.low %v701, %v709
          %v727 = vcombine.high %v701, %v709
          %v729 = vunpack.c.l.s4 1934713408
          %v730 = vunpack.c.0.s8 %v729
          %v731 = vlaneseq
          %v732 = vshrl.u32 %v731, 7
          %v733 = vsub.s32 %v730, %v732
          %v734 = vrot.slane %v726, %v733
          %v736 = vunpack.c.l.s4 1934713408
          %v737 = vunpack.c.0.s8 %v736
          %v738 = vlaneseq
          %v739 = vshrl.u32 %v738, 7
          %v740 = vsub.s32 %v737, %v739
          %v741 = vrot.slane %v727, %v740
          %v742 = vcombine.low %v718, %v734
          %v743 = vcombine.high %v718, %v734
          %v744 = vcombine.low %v725, %v741
          %v745 = vcombine.high %v725, %v741
          %vm746 = vcmask 64512
          %747 = vst.msk [vmem:[#allocation2] sm:$0xff] %vm746, %v742
          %748 = vst.msk [vmem:[#allocation2 + $0x8] sm:$0xff] %vm746, %v743
          %749 = vst.msk [vmem:[#allocation2 + $0x10] sm:$0xff] %vm746, %v744
          %750 = vst.msk [vmem:[#allocation2 + $0x18] sm:$0xff] %vm746, %v745
          %vm751 = vcmask 7168
          %752 = vst.msk [vmem:[#allocation4] sm:$0xff] %vm751, -inf
          %753 = vst.msk [vmem:[#allocation4 + $0x8] sm:$0xff] %vm751, -inf
          %754 = vst.msk [vmem:[#allocation4 + $0x10] sm:$0xff] %vm751, -inf
          %755 = vst.msk [vmem:[#allocation4 + $0x18] sm:$0xff] %vm751, -inf
          %756 = vst.msk [vmem:[#allocation5] sm:$0xff] %vm751, 0.0
          %757 = vst.msk [vmem:[#allocation5 + $0x8] sm:$0xff] %vm751, 0.0
          %758 = vst.msk [vmem:[#allocation5 + $0x10] sm:$0xff] %vm751, 0.0
          %759 = vst.msk [vmem:[#allocation5 + $0x18] sm:$0xff] %vm751, 0.0
          %760 = vst.msk [vmem:[#allocation6] sm:$0xff] %vm746, 0.0
          %761 = vst.msk [vmem:[#allocation6 + $0x8] sm:$0xff] %vm746, 0.0
          %762 = vst.msk [vmem:[#allocation6 + $0x10] sm:$0xff] %vm746, 0.0
          %763 = vst.msk [vmem:[#allocation6 + $0x18] sm:$0xff] %vm746, 0.0
        $region88: #{tpu_custom_call.1} parent=59 // pred_fallthru
          _
        %v764 = vld [vmem:[%s419] sm:$0xff]
        %v765 = vld [vmem:[%s2] sm:$0x1]
        %v766 = vld [vmem:[%s3] sm:$0x1]
        %vm767 = vcmask 261120
        %v768 = vsel %vm767, %v764, 0.0
        %769 = vadd.xlane.f32.xlu0 %v768
        %v770 = vpop.xlane.xlu0 %769
        %v771 = vrcp.pop 32.0
        %v772 = vmul.f32 %v770, %v771
        %v773 = vsub.f32 %v764, %v772
        %v774 = vmul.f32 %v773, %v773
        %v775 = vsel %vm767, %v774, 0.0
        %776 = vadd.xlane.f32.xlu0 %v775
        %v777 = vpop.xlane.xlu0 %776
        %v778 = vmul.f32 %v777, %v771
        %v779 = vadd.f32 %v778, 1e-05
        %v780 = vrsqrt.pop %v779
        %v781 = vmul.f32 %v773, %v780
        %v783 = vlaneseq
        %v784 = vshrl.u32 %v783, 7
        %v785 = vsub.s32 0, %v784
        %v786 = vrot.slane %v765, %v785
        %v788 = vmul.f32 %v781, %v786
        %v790 = vlaneseq
        %v791 = vshrl.u32 %v790, 7
        %v792 = vsub.s32 0, %v791
        %v793 = vrot.slane %v766, %v792
        %v795 = vadd.f32 %v788, %v793
        %v796 = vld [vmem:[#allocation13] sm:$0xff]
        %v797 = vld [vmem:[#allocation13 + $0x8] sm:$0xff]
        %v798 = vld [vmem:[#allocation13 + $0x10] sm:$0xff]
        %v799 = vld [vmem:[#allocation13 + $0x18] sm:$0xff]
        %v801 = vsel %vm767, %v795, 0
        %803 = vmatprep.subr.mxu0 0.0
        %804 = vmatpush1.msra.mxu0 0.0
        %805 = vmatprep.subr.mxu0 0.0
        %806 = vmatpush1.msra.mxu0 0.0
        %807 = vmatprep.subr.mxu0 0.0
        %808 = vmatpush1.msra.mxu0 0.0
        %809 = vmatprep.subr.mxu0 0.0
        %810 = vmatpush1.msra.mxu0 0.0
        %811 = vmatprep.subr.mxu0 0.0
        %812 = vmatpush1.msra.mxu0 0.0
        %813 = vmatprep.subr.mxu0 0.0
        %814 = vmatpush1.msra.mxu0 0.0
        %815 = vmatprep.subr.mxu0 0.0
        %816 = vmatpush1.msra.mxu0 0.0
        %817 = vmatprep.subr.mxu0 0.0
        %818 = vmatpush1.msra.mxu0 0.0
        %819 = vmatprep.subr.mxu0 0.0
        %820 = vmatpush1.msra.mxu0 0.0
        %821 = vmatprep.subr.mxu0 0.0
        %822 = vmatpush1.msra.mxu0 0.0
        %823 = vmatprep.subr.mxu0 0.0
        %824 = vmatpush1.msra.mxu0 0.0
        %825 = vmatprep.subr.mxu0 0.0
        %826 = vmatpush1.msra.mxu0 0.0
        %827 = vmatprep.subr.mxu0 0.0
        %828 = vmatpush1.msra.mxu0 %v799
        %829 = vmatprep.subr.mxu0 0.0
        %830 = vmatpush1.msra.mxu0 %v798
        %831 = vmatprep.subr.mxu0 0.0
        %832 = vmatpush1.msra.mxu0 %v797
        %833 = vmatprep.subr.mxu0 0.0
        %834 = vmatpush1.msra.mxu0 %v796
        %835 = vmatprep.subr.mxu0 0.0
        %836 = vmatpush2.msra.mxu0 0.0
        %837 = vmatprep.subr.mxu0 0.0
        %838 = vmatpush2.msra.mxu0 0.0
        %839 = vmatprep.subr.mxu0 0.0
        %840 = vmatpush2.msra.mxu0 0.0
        %841 = vmatprep.subr.mxu0 0.0
        %842 = vmatpush2.msra.mxu0 0.0
        %843 = vmatprep.subr.mxu0 0.0
        %844 = vmatpush2.msra.mxu0 0.0
        %845 = vmatprep.subr.mxu0 0.0
        %846 = vmatpush2.msra.mxu0 0.0
        %847 = vmatprep.subr.mxu0 0.0
        %848 = vmatpush2.msra.mxu0 0.0
        %849 = vmatprep.subr.mxu0 0.0
        %850 = vmatpush2.msra.mxu0 0.0
        %851 = vmatprep.subr.mxu0 0.0
        %852 = vmatpush2.msra.mxu0 0.0
        %853 = vmatprep.subr.mxu0 0.0
        %854 = vmatpush2.msra.mxu0 0.0
        %855 = vmatprep.subr.mxu0 0.0
        %856 = vmatpush2.msra.mxu0 0.0
        %857 = vmatprep.subr.mxu0 0.0
        %858 = vmatpush2.msra.mxu0 0.0
        %859 = vmatprep.subr.mxu0 0.0
        %860 = vmatpush2.msra.mxu0 0.0
        %861 = vmatprep.subr.mxu0 0.0
        %862 = vmatpush2.msra.mxu0 0.0
        %863 = vmatprep.subr.mxu0 0.0
        %864 = vmatpush2.msra.mxu0 0.0
        %865 = vmatprep.subr.mxu0 0.0
        %866 = vmatpush2.msra.mxu0 0.0
        %867 = vmatprep.mubr.f32.mxu0 0.0
        %868 = vmatmul.mubr.f32.gmra.mxu0 %v801
        %v869 = vpop.f32.mrf.mxu0
        %v870 = vadd.f32 0.0, %v869
        %v871 = vpop.f32.mrf.mxu0
        %872 = vdwg.mxu0
        %v873 = vld [vmem:[#allocation15] sm:$0xff]
        %v874 = vld [vmem:[#allocation15 + $0x8] sm:$0xff]
        %v875 = vld [vmem:[#allocation15 + $0x10] sm:$0xff]
        %v876 = vld [vmem:[#allocation15 + $0x18] sm:$0xff]
        %877 = vmatprep.subr.mxu0 0.0
        %878 = vmatpush1.msra.mxu0 0.0
        %879 = vmatprep.subr.mxu0 0.0
        %880 = vmatpush1.msra.mxu0 0.0
        %881 = vmatprep.subr.mxu0 0.0
        %882 = vmatpush1.msra.mxu0 0.0
        %883 = vmatprep.subr.mxu0 0.0
        %884 = vmatpush1.msra.mxu0 0.0
        %885 = vmatprep.subr.mxu0 0.0
        %886 = vmatpush1.msra.mxu0 0.0
        %887 = vmatprep.subr.mxu0 0.0
        %888 = vmatpush1.msra.mxu0 0.0
        %889 = vmatprep.subr.mxu0 0.0
        %890 = vmatpush1.msra.mxu0 0.0
        %891 = vmatprep.subr.mxu0 0.0
        %892 = vmatpush1.msra.mxu0 0.0
        %893 = vmatprep.subr.mxu0 0.0
        %894 = vmatpush1.msra.mxu0 0.0
        %895 = vmatprep.subr.mxu0 0.0
        %896 = vmatpush1.msra.mxu0 0.0
        %897 = vmatprep.subr.mxu0 0.0
        %898 = vmatpush1.msra.mxu0 0.0
        %899 = vmatprep.subr.mxu0 0.0
        %900 = vmatpush1.msra.mxu0 0.0
        %901 = vmatprep.subr.mxu0 0.0
        %902 = vmatpush1.msra.mxu0 %v876
        %903 = vmatprep.subr.mxu0 0.0
        %904 = vmatpush1.msra.mxu0 %v875
        %905 = vmatprep.subr.mxu0 0.0
        %906 = vmatpush1.msra.mxu0 %v874
        %907 = vmatprep.subr.mxu0 0.0
        %908 = vmatpush1.msra.mxu0 %v873
        %909 = vmatprep.subr.mxu0 0.0
        %910 = vmatpush2.msra.mxu0 0.0
        %911 = vmatprep.subr.mxu0 0.0
        %912 = vmatpush2.msra.mxu0 0.0
        %913 = vmatprep.subr.mxu0 0.0
        %914 = vmatpush2.msra.mxu0 0.0
        %915 = vmatprep.subr.mxu0 0.0
        %916 = vmatpush2.msra.mxu0 0.0
        %917 = vmatprep.subr.mxu0 0.0
        %918 = vmatpush2.msra.mxu0 0.0
        %919 = vmatprep.subr.mxu0 0.0
        %920 = vmatpush2.msra.mxu0 0.0
        %921 = vmatprep.subr.mxu0 0.0
        %922 = vmatpush2.msra.mxu0 0.0
        %923 = vmatprep.subr.mxu0 0.0
        %924 = vmatpush2.msra.mxu0 0.0
        %925 = vmatprep.subr.mxu0 0.0
        %926 = vmatpush2.msra.mxu0 0.0
        %927 = vmatprep.subr.mxu0 0.0
        %928 = vmatpush2.msra.mxu0 0.0
        %929 = vmatprep.subr.mxu0 0.0
        %930 = vmatpush2.msra.mxu0 0.0
        %931 = vmatprep.subr.mxu0 0.0
        %932 = vmatpush2.msra.mxu0 0.0
        %933 = vmatprep.subr.mxu0 0.0
        %934 = vmatpush2.msra.mxu0 0.0
        %935 = vmatprep.subr.mxu0 0.0
        %936 = vmatpush2.msra.mxu0 0.0
        %937 = vmatprep.subr.mxu0 0.0
        %938 = vmatpush2.msra.mxu0 0.0
        %939 = vmatprep.subr.mxu0 0.0
        %940 = vmatpush2.msra.mxu0 0.0
        %941 = vmatprep.mubr.f32.mxu0 0.0
        %942 = vmatmul.mubr.f32.gmra.mxu0 %v801
        %v943 = vpop.f32.mrf.mxu0
        %v944 = vadd.f32 0.0, %v943
        %v945 = vpop.f32.mrf.mxu0
        %946 = vdwg.mxu0
        %948 = vrot.lane.b32.xlu0 %v870, 120
        %v949 = vpop.permute.xlu0 %948
        %951 = vrot.lane.b32.xlu0 %v870, 112
        %v952 = vpop.permute.xlu0 %951
        %954 = vrot.lane.b32.xlu0 %v870, 104
        %v955 = vpop.permute.xlu0 %954
        %v957 = vcombine.low %v870, %v952
        %v958 = vcombine.high %v870, %v952
        %v960 = vunpack.c.l.s4 1983009808
        %v961 = vunpack.c.0.s8 %v960
        %v962 = vlaneseq
        %v963 = vshrl.u32 %v962, 7
        %v964 = vsub.s32 %v961, %v963
        %v965 = vrot.slane %v957, %v964
        %v967 = vunpack.c.l.s4 1983009808
        %v968 = vunpack.c.0.s8 %v967
        %v969 = vlaneseq
        %v970 = vshrl.u32 %v969, 7
        %v971 = vsub.s32 %v968, %v970
        %v972 = vrot.slane %v958, %v971
        %v973 = vcombine.low %v949, %v955
        %v974 = vcombine.high %v949, %v955
        %v976 = vunpack.c.l.s4 1983009808
        %v977 = vunpack.c.0.s8 %v976
        %v978 = vlaneseq
        %v979 = vshrl.u32 %v978, 7
        %v980 = vsub.s32 %v977, %v979
        %v981 = vrot.slane %v973, %v980
        %v983 = vunpack.c.l.s4 1983009808
        %v984 = vunpack.c.0.s8 %v983
        %v985 = vlaneseq
        %v986 = vshrl.u32 %v985, 7
        %v987 = vsub.s32 %v984, %v986
        %v988 = vrot.slane %v974, %v987
        %v989 = vcombine.low %v965, %v981
        %v990 = vcombine.high %v965, %v981
        %v992 = vunpack.c.l.s4 1934713408
        %v993 = vunpack.c.0.s8 %v992
        %v994 = vlaneseq
        %v995 = vshrl.u32 %v994, 7
        %v996 = vsub.s32 %v993, %v995
        %v997 = vrot.slane %v989, %v996
        %v999 = vunpack.c.l.s4 1934713408
        %v1000 = vunpack.c.0.s8 %v999
        %v1001 = vlaneseq
        %v1002 = vshrl.u32 %v1001, 7
        %v1003 = vsub.s32 %v1000, %v1002
        %v1004 = vrot.slane %v990, %v1003
        %v1005 = vcombine.low %v972, %v988
        %v1006 = vcombine.high %v972, %v988
        %v1008 = vunpack.c.l.s4 1934713408
        %v1009 = vunpack.c.0.s8 %v1008
        %v1010 = vlaneseq
        %v1011 = vshrl.u32 %v1010, 7
        %v1012 = vsub.s32 %v1009, %v1011
        %v1013 = vrot.slane %v1005, %v1012
        %v1015 = vunpack.c.l.s4 1934713408
        %v1016 = vunpack.c.0.s8 %v1015
        %v1017 = vlaneseq
        %v1018 = vshrl.u32 %v1017, 7
        %v1019 = vsub.s32 %v1016, %v1018
        %v1020 = vrot.slane %v1006, %v1019
        %v1021 = vcombine.high %v997, 0.0
        %v1022 = vcombine.high %v1004, 0.0
        %v1023 = vcombine.high %v1013, 0.0
        %v1024 = vcombine.high %v1020, 0.0
        %v1025 = vcombine.low %v997, %v1004
        %v1027 = vunpack.c.l.s4 1983009808
        %v1028 = vunpack.c.0.s8 %v1027
        %v1029 = vlaneseq
        %v1030 = vshrl.u32 %v1029, 7
        %v1031 = vsub.s32 %v1028, %v1030
        %v1032 = vrot.slane %v1025, %v1031
        %v1033 = vcombine.low %v1021, %v1022
        %v1035 = vunpack.c.l.s4 1983009808
        %v1036 = vunpack.c.0.s8 %v1035
        %v1037 = vlaneseq
        %v1038 = vshrl.u32 %v1037, 7
        %v1039 = vsub.s32 %v1036, %v1038
        %v1040 = vrot.slane %v1033, %v1039
        %v1041 = vcombine.low %v1013, %v1020
        %v1043 = vunpack.c.l.s4 1983009808
        %v1044 = vunpack.c.0.s8 %v1043
        %v1045 = vlaneseq
        %v1046 = vshrl.u32 %v1045, 7
        %v1047 = vsub.s32 %v1044, %v1046
        %v1048 = vrot.slane %v1041, %v1047
        %v1049 = vcombine.low %v1023, %v1024
        %v1051 = vunpack.c.l.s4 1983009808
        %v1052 = vunpack.c.0.s8 %v1051
        %v1053 = vlaneseq
        %v1054 = vshrl.u32 %v1053, 7
        %v1055 = vsub.s32 %v1052, %v1054
        %v1056 = vrot.slane %v1049, %v1055
        %v1057 = vcombine.low %v1032, %v1040
        %v1058 = vcombine.high %v1032, %v1040
        %v1060 = vunpack.c.l.s4 1934713408
        %v1061 = vunpack.c.0.s8 %v1060
        %v1062 = vlaneseq
        %v1063 = vshrl.u32 %v1062, 7
        %v1064 = vsub.s32 %v1061, %v1063
        %v1065 = vrot.slane %v1057, %v1064
        %v1067 = vunpack.c.l.s4 1934713408
        %v1068 = vunpack.c.0.s8 %v1067
        %v1069 = vlaneseq
        %v1070 = vshrl.u32 %v1069, 7
        %v1071 = vsub.s32 %v1068, %v1070
        %v1072 = vrot.slane %v1058, %v1071
        %v1073 = vcombine.low %v1048, %v1056
        %v1074 = vcombine.high %v1048, %v1056
        %v1076 = vunpack.c.l.s4 1934713408
        %v1077 = vunpack.c.0.s8 %v1076
        %v1078 = vlaneseq
        %v1079 = vshrl.u32 %v1078, 7
        %v1080 = vsub.s32 %v1077, %v1079
        %v1081 = vrot.slane %v1073, %v1080
        %v1083 = vunpack.c.l.s4 1934713408
        %v1084 = vunpack.c.0.s8 %v1083
        %v1085 = vlaneseq
        %v1086 = vshrl.u32 %v1085, 7
        %v1087 = vsub.s32 %v1084, %v1086
        %v1088 = vrot.slane %v1074, %v1087
        %v1089 = vcombine.low %v1065, %v1081
        %v1090 = vcombine.high %v1065, %v1081
        %v1091 = vcombine.low %v1072, %v1088
        %v1092 = vcombine.high %v1072, %v1088
        %1094 = vrot.lane.b32.xlu0 %v944, 120
        %v1095 = vpop.permute.xlu0 %1094
        %1097 = vrot.lane.b32.xlu0 %v944, 112
        %v1098 = vpop.permute.xlu0 %1097
        %1100 = vrot.lane.b32.xlu0 %v944, 104
        %v1101 = vpop.permute.xlu0 %1100
        %v1103 = vcombine.low %v944, %v1098
        %v1104 = vcombine.high %v944, %v1098
        %v1106 = vunpack.c.l.s4 1983009808
        %v1107 = vunpack.c.0.s8 %v1106
        %v1108 = vlaneseq
        %v1109 = vshrl.u32 %v1108, 7
        %v1110 = vsub.s32 %v1107, %v1109
        %v1111 = vrot.slane %v1103, %v1110
        %v1113 = vunpack.c.l.s4 1983009808
        %v1114 = vunpack.c.0.s8 %v1113
        %v1115 = vlaneseq
        %v1116 = vshrl.u32 %v1115, 7
        %v1117 = vsub.s32 %v1114, %v1116
        %v1118 = vrot.slane %v1104, %v1117
        %v1119 = vcombine.low %v1095, %v1101
        %v1120 = vcombine.high %v1095, %v1101
        %v1122 = vunpack.c.l.s4 1983009808
        %v1123 = vunpack.c.0.s8 %v1122
        %v1124 = vlaneseq
        %v1125 = vshrl.u32 %v1124, 7
        %v1126 = vsub.s32 %v1123, %v1125
        %v1127 = vrot.slane %v1119, %v1126
        %v1129 = vunpack.c.l.s4 1983009808
        %v1130 = vunpack.c.0.s8 %v1129
        %v1131 = vlaneseq
        %v1132 = vshrl.u32 %v1131, 7
        %v1133 = vsub.s32 %v1130, %v1132
        %v1134 = vrot.slane %v1120, %v1133
        %v1135 = vcombine.low %v1111, %v1127
        %v1136 = vcombine.high %v1111, %v1127
        %v1138 = vunpack.c.l.s4 1934713408
        %v1139 = vunpack.c.0.s8 %v1138
        %v1140 = vlaneseq
        %v1141 = vshrl.u32 %v1140, 7
        %v1142 = vsub.s32 %v1139, %v1141
        %v1143 = vrot.slane %v1135, %v1142
        %v1145 = vunpack.c.l.s4 1934713408
        %v1146 = vunpack.c.0.s8 %v1145
        %v1147 = vlaneseq
        %v1148 = vshrl.u32 %v1147, 7
        %v1149 = vsub.s32 %v1146, %v1148
        %v1150 = vrot.slane %v1136, %v1149
        %v1151 = vcombine.low %v1118, %v1134
        %v1152 = vcombine.high %v1118, %v1134
        %v1154 = vunpack.c.l.s4 1934713408
        %v1155 = vunpack.c.0.s8 %v1154
        %v1156 = vlaneseq
        %v1157 = vshrl.u32 %v1156, 7
        %v1158 = vsub.s32 %v1155, %v1157
        %v1159 = vrot.slane %v1151, %v1158
        %v1161 = vunpack.c.l.s4 1934713408
        %v1162 = vunpack.c.0.s8 %v1161
        %v1163 = vlaneseq
        %v1164 = vshrl.u32 %v1163, 7
        %v1165 = vsub.s32 %v1162, %v1164
        %v1166 = vrot.slane %v1152, %v1165
        %v1167 = vcombine.high %v1143, 0.0
        %v1168 = vcombine.high %v1150, 0.0
        %v1169 = vcombine.high %v1159, 0.0
        %v1170 = vcombine.high %v1166, 0.0
        %v1171 = vcombine.low %v1143, %v1150
        %v1173 = vunpack.c.l.s4 1983009808
        %v1174 = vunpack.c.0.s8 %v1173
        %v1175 = vlaneseq
        %v1176 = vshrl.u32 %v1175, 7
        %v1177 = vsub.s32 %v1174, %v1176
        %v1178 = vrot.slane %v1171, %v1177
        %v1179 = vcombine.low %v1167, %v1168
        %v1181 = vunpack.c.l.s4 1983009808
        %v1182 = vunpack.c.0.s8 %v1181
        %v1183 = vlaneseq
        %v1184 = vshrl.u32 %v1183, 7
        %v1185 = vsub.s32 %v1182, %v1184
        %v1186 = vrot.slane %v1179, %v1185
        %v1187 = vcombine.low %v1159, %v1166
        %v1189 = vunpack.c.l.s4 1983009808
        %v1190 = vunpack.c.0.s8 %v1189
        %v1191 = vlaneseq
        %v1192 = vshrl.u32 %v1191, 7
        %v1193 = vsub.s32 %v1190, %v1192
        %v1194 = vrot.slane %v1187, %v1193
        %v1195 = vcombine.low %v1169, %v1170
        %v1197 = vunpack.c.l.s4 1983009808
        %v1198 = vunpack.c.0.s8 %v1197
        %v1199 = vlaneseq
        %v1200 = vshrl.u32 %v1199, 7
        %v1201 = vsub.s32 %v1198, %v1200
        %v1202 = vrot.slane %v1195, %v1201
        %v1203 = vcombine.low %v1178, %v1186
        %v1204 = vcombine.high %v1178, %v1186
        %v1206 = vunpack.c.l.s4 1934713408
        %v1207 = vunpack.c.0.s8 %v1206
        %v1208 = vlaneseq
        %v1209 = vshrl.u32 %v1208, 7
        %v1210 = vsub.s32 %v1207, %v1209
        %v1211 = vrot.slane %v1203, %v1210
        %v1213 = vunpack.c.l.s4 1934713408
        %v1214 = vunpack.c.0.s8 %v1213
        %v1215 = vlaneseq
        %v1216 = vshrl.u32 %v1215, 7
        %v1217 = vsub.s32 %v1214, %v1216
        %v1218 = vrot.slane %v1204, %v1217
        %v1219 = vcombine.low %v1194, %v1202
        %v1220 = vcombine.high %v1194, %v1202
        %v1222 = vunpack.c.l.s4 1934713408
        %v1223 = vunpack.c.0.s8 %v1222
        %v1224 = vlaneseq
        %v1225 = vshrl.u32 %v1224, 7
        %v1226 = vsub.s32 %v1223, %v1225
        %v1227 = vrot.slane %v1219, %v1226
        %v1229 = vunpack.c.l.s4 1934713408
        %v1230 = vunpack.c.0.s8 %v1229
        %v1231 = vlaneseq
        %v1232 = vshrl.u32 %v1231, 7
        %v1233 = vsub.s32 %v1230, %v1232
        %v1234 = vrot.slane %v1220, %v1233
        %v1235 = vcombine.low %v1211, %v1227
        %v1236 = vcombine.high %v1211, %v1227
        %v1237 = vcombine.low %v1218, %v1234
        %v1238 = vcombine.high %v1218, %v1234
        %v1239 = vld [vmem:[#allocation2] sm:$0xff]
        %v1240 = vld [vmem:[#allocation2 + $0x8] sm:$0xff]
        %v1241 = vld [vmem:[#allocation2 + $0x10] sm:$0xff]
        %v1242 = vld [vmem:[#allocation2 + $0x18] sm:$0xff]
        %vm1243 = vcmask 64512
        %v1245 = vsel %vm1243, %v1239, 0
        %v1248 = vsel %vm1243, %v1089, 0
        %1250 = vmatprep.subr.mxu0 0.0
        %1251 = vmatpush1.xpose.msra.mxu0 0.0
        %1252 = vmatprep.subr.mxu0 0.0
        %1253 = vmatpush1.xpose.msra.mxu0 0.0
        %1254 = vmatprep.subr.mxu0 0.0
        %1255 = vmatpush1.xpose.msra.mxu0 0.0
        %1256 = vmatprep.subr.mxu0 0.0
        %1257 = vmatpush1.xpose.msra.mxu0 0.0
        %1258 = vmatprep.subr.mxu0 0.0
        %1259 = vmatpush1.xpose.msra.mxu0 0.0
        %1260 = vmatprep.subr.mxu0 0.0
        %1261 = vmatpush1.xpose.msra.mxu0 0.0
        %1262 = vmatprep.subr.mxu0 0.0
        %1263 = vmatpush1.xpose.msra.mxu0 0.0
        %1264 = vmatprep.subr.mxu0 0.0
        %1265 = vmatpush1.xpose.msra.mxu0 0.0
        %1266 = vmatprep.subr.mxu0 0.0
        %1267 = vmatpush1.xpose.msra.mxu0 0.0
        %1268 = vmatprep.subr.mxu0 0.0
        %1269 = vmatpush1.xpose.msra.mxu0 0.0
        %1270 = vmatprep.subr.mxu0 0.0
        %1271 = vmatpush1.xpose.msra.mxu0 0.0
        %1272 = vmatprep.subr.mxu0 0.0
        %1273 = vmatpush1.xpose.msra.mxu0 0.0
        %1274 = vmatprep.subr.mxu0 0.0
        %1275 = vmatpush1.xpose.msra.mxu0 0.0
        %1276 = vmatprep.subr.mxu0 0.0
        %1277 = vmatpush1.xpose.msra.mxu0 0.0
        %1278 = vmatprep.subr.mxu0 0.0
        %1279 = vmatpush1.xpose.msra.mxu0 0.0
        %1280 = vmatprep.subr.mxu0 0.0
        %1281 = vmatpush1.xpose.msra.mxu0 %v1248
        %1282 = vmatprep.subr.mxu0 0.0
        %1283 = vmatpush2.xpose.msra.mxu0 0.0
        %1284 = vmatprep.subr.mxu0 0.0
        %1285 = vmatpush2.xpose.msra.mxu0 0.0
        %1286 = vmatprep.subr.mxu0 0.0
        %1287 = vmatpush2.xpose.msra.mxu0 0.0
        %1288 = vmatprep.subr.mxu0 0.0
        %1289 = vmatpush2.xpose.msra.mxu0 0.0
        %1290 = vmatprep.subr.mxu0 0.0
        %1291 = vmatpush2.xpose.msra.mxu0 0.0
        %1292 = vmatprep.subr.mxu0 0.0
        %1293 = vmatpush2.xpose.msra.mxu0 0.0
        %1294 = vmatprep.subr.mxu0 0.0
        %1295 = vmatpush2.xpose.msra.mxu0 0.0
        %1296 = vmatprep.subr.mxu0 0.0
        %1297 = vmatpush2.xpose.msra.mxu0 0.0
        %1298 = vmatprep.subr.mxu0 0.0
        %1299 = vmatpush2.xpose.msra.mxu0 0.0
        %1300 = vmatprep.subr.mxu0 0.0
        %1301 = vmatpush2.xpose.msra.mxu0 0.0
        %1302 = vmatprep.subr.mxu0 0.0
        %1303 = vmatpush2.xpose.msra.mxu0 0.0
        %1304 = vmatprep.subr.mxu0 0.0
        %1305 = vmatpush2.xpose.msra.mxu0 0.0
        %1306 = vmatprep.subr.mxu0 0.0
        %1307 = vmatpush2.xpose.msra.mxu0 0.0
        %1308 = vmatprep.subr.mxu0 0.0
        %1309 = vmatpush2.xpose.msra.mxu0 0.0
        %1310 = vmatprep.subr.mxu0 0.0
        %1311 = vmatpush2.xpose.msra.mxu0 0.0
        %1312 = vmatprep.subr.mxu0 0.0
        %1313 = vmatpush2.xpose.msra.mxu0 0.0
        %1314 = vmatprep.mubr.f32.mxu0 0.0
        %1315 = vmatmul.mubr.f32.gmra.mxu0 %v1245
        %v1316 = vpop.f32.mrf.mxu0
        %v1317 = vadd.f32 0.0, %v1316
        %v1318 = vpop.f32.mrf.mxu0
        %1319 = vdwg.mxu0
        %v1321 = vsel %vm1243, %v1240, 0
        %v1324 = vsel %vm1243, %v1090, 0
        %1326 = vmatprep.subr.mxu0 0.0
        %1327 = vmatpush1.xpose.msra.mxu0 0.0
        %1328 = vmatprep.subr.mxu0 0.0
        %1329 = vmatpush1.xpose.msra.mxu0 0.0
        %1330 = vmatprep.subr.mxu0 0.0
        %1331 = vmatpush1.xpose.msra.mxu0 0.0
        %1332 = vmatprep.subr.mxu0 0.0
        %1333 = vmatpush1.xpose.msra.mxu0 0.0
        %1334 = vmatprep.subr.mxu0 0.0
        %1335 = vmatpush1.xpose.msra.mxu0 0.0
        %1336 = vmatprep.subr.mxu0 0.0
        %1337 = vmatpush1.xpose.msra.mxu0 0.0
        %1338 = vmatprep.subr.mxu0 0.0
        %1339 = vmatpush1.xpose.msra.mxu0 0.0
        %1340 = vmatprep.subr.mxu0 0.0
        %1341 = vmatpush1.xpose.msra.mxu0 0.0
        %1342 = vmatprep.subr.mxu0 0.0
        %1343 = vmatpush1.xpose.msra.mxu0 0.0
        %1344 = vmatprep.subr.mxu0 0.0
        %1345 = vmatpush1.xpose.msra.mxu0 0.0
        %1346 = vmatprep.subr.mxu0 0.0
        %1347 = vmatpush1.xpose.msra.mxu0 0.0
        %1348 = vmatprep.subr.mxu0 0.0
        %1349 = vmatpush1.xpose.msra.mxu0 0.0
        %1350 = vmatprep.subr.mxu0 0.0
        %1351 = vmatpush1.xpose.msra.mxu0 0.0
        %1352 = vmatprep.subr.mxu0 0.0
        %1353 = vmatpush1.xpose.msra.mxu0 0.0
        %1354 = vmatprep.subr.mxu0 0.0
        %1355 = vmatpush1.xpose.msra.mxu0 0.0
        %1356 = vmatprep.subr.mxu0 0.0
        %1357 = vmatpush1.xpose.msra.mxu0 %v1324
        %1358 = vmatprep.subr.mxu0 0.0
        %1359 = vmatpush2.xpose.msra.mxu0 0.0
        %1360 = vmatprep.subr.mxu0 0.0
        %1361 = vmatpush2.xpose.msra.mxu0 0.0
        %1362 = vmatprep.subr.mxu0 0.0
        %1363 = vmatpush2.xpose.msra.mxu0 0.0
        %1364 = vmatprep.subr.mxu0 0.0
        %1365 = vmatpush2.xpose.msra.mxu0 0.0
        %1366 = vmatprep.subr.mxu0 0.0
        %1367 = vmatpush2.xpose.msra.mxu0 0.0
        %1368 = vmatprep.subr.mxu0 0.0
        %1369 = vmatpush2.xpose.msra.mxu0 0.0
        %1370 = vmatprep.subr.mxu0 0.0
        %1371 = vmatpush2.xpose.msra.mxu0 0.0
        %1372 = vmatprep.subr.mxu0 0.0
        %1373 = vmatpush2.xpose.msra.mxu0 0.0
        %1374 = vmatprep.subr.mxu0 0.0
        %1375 = vmatpush2.xpose.msra.mxu0 0.0
        %1376 = vmatprep.subr.mxu0 0.0
        %1377 = vmatpush2.xpose.msra.mxu0 0.0
        %1378 = vmatprep.subr.mxu0 0.0
        %1379 = vmatpush2.xpose.msra.mxu0 0.0
        %1380 = vmatprep.subr.mxu0 0.0
        %1381 = vmatpush2.xpose.msra.mxu0 0.0
        %1382 = vmatprep.subr.mxu0 0.0
        %1383 = vmatpush2.xpose.msra.mxu0 0.0
        %1384 = vmatprep.subr.mxu0 0.0
        %1385 = vmatpush2.xpose.msra.mxu0 0.0
        %1386 = vmatprep.subr.mxu0 0.0
        %1387 = vmatpush2.xpose.msra.mxu0 0.0
        %1388 = vmatprep.subr.mxu0 0.0
        %1389 = vmatpush2.xpose.msra.mxu0 0.0
        %1390 = vmatprep.mubr.f32.mxu0 0.0
        %1391 = vmatmul.mubr.f32.gmra.mxu0 %v1321
        %v1392 = vpop.f32.mrf.mxu0
        %v1393 = vadd.f32 0.0, %v1392
        %v1394 = vpop.f32.mrf.mxu0
        %1395 = vdwg.mxu0
        %v1397 = vsel %vm1243, %v1241, 0
        %v1400 = vsel %vm1243, %v1091, 0
        %1402 = vmatprep.subr.mxu0 0.0
        %1403 = vmatpush1.xpose.msra.mxu0 0.0
        %1404 = vmatprep.subr.mxu0 0.0
        %1405 = vmatpush1.xpose.msra.mxu0 0.0
        %1406 = vmatprep.subr.mxu0 0.0
        %1407 = vmatpush1.xpose.msra.mxu0 0.0
        %1408 = vmatprep.subr.mxu0 0.0
        %1409 = vmatpush1.xpose.msra.mxu0 0.0
        %1410 = vmatprep.subr.mxu0 0.0
        %1411 = vmatpush1.xpose.msra.mxu0 0.0
        %1412 = vmatprep.subr.mxu0 0.0
        %1413 = vmatpush1.xpose.msra.mxu0 0.0
        %1414 = vmatprep.subr.mxu0 0.0
        %1415 = vmatpush1.xpose.msra.mxu0 0.0
        %1416 = vmatprep.subr.mxu0 0.0
        %1417 = vmatpush1.xpose.msra.mxu0 0.0
        %1418 = vmatprep.subr.mxu0 0.0
        %1419 = vmatpush1.xpose.msra.mxu0 0.0
        %1420 = vmatprep.subr.mxu0 0.0
        %1421 = vmatpush1.xpose.msra.mxu0 0.0
        %1422 = vmatprep.subr.mxu0 0.0
        %1423 = vmatpush1.xpose.msra.mxu0 0.0
        %1424 = vmatprep.subr.mxu0 0.0
        %1425 = vmatpush1.xpose.msra.mxu0 0.0
        %1426 = vmatprep.subr.mxu0 0.0
        %1427 = vmatpush1.xpose.msra.mxu0 0.0
        %1428 = vmatprep.subr.mxu0 0.0
        %1429 = vmatpush1.xpose.msra.mxu0 0.0
        %1430 = vmatprep.subr.mxu0 0.0
        %1431 = vmatpush1.xpose.msra.mxu0 0.0
        %1432 = vmatprep.subr.mxu0 0.0
        %1433 = vmatpush1.xpose.msra.mxu0 %v1400
        %1434 = vmatprep.subr.mxu0 0.0
        %1435 = vmatpush2.xpose.msra.mxu0 0.0
        %1436 = vmatprep.subr.mxu0 0.0
        %1437 = vmatpush2.xpose.msra.mxu0 0.0
        %1438 = vmatprep.subr.mxu0 0.0
        %1439 = vmatpush2.xpose.msra.mxu0 0.0
        %1440 = vmatprep.subr.mxu0 0.0
        %1441 = vmatpush2.xpose.msra.mxu0 0.0
        %1442 = vmatprep.subr.mxu0 0.0
        %1443 = vmatpush2.xpose.msra.mxu0 0.0
        %1444 = vmatprep.subr.mxu0 0.0
        %1445 = vmatpush2.xpose.msra.mxu0 0.0
        %1446 = vmatprep.subr.mxu0 0.0
        %1447 = vmatpush2.xpose.msra.mxu0 0.0
        %1448 = vmatprep.subr.mxu0 0.0
        %1449 = vmatpush2.xpose.msra.mxu0 0.0
        %1450 = vmatprep.subr.mxu0 0.0
        %1451 = vmatpush2.xpose.msra.mxu0 0.0
        %1452 = vmatprep.subr.mxu0 0.0
        %1453 = vmatpush2.xpose.msra.mxu0 0.0
        %1454 = vmatprep.subr.mxu0 0.0
        %1455 = vmatpush2.xpose.msra.mxu0 0.0
        %1456 = vmatprep.subr.mxu0 0.0
        %1457 = vmatpush2.xpose.msra.mxu0 0.0
        %1458 = vmatprep.subr.mxu0 0.0
        %1459 = vmatpush2.xpose.msra.mxu0 0.0
        %1460 = vmatprep.subr.mxu0 0.0
        %1461 = vmatpush2.xpose.msra.mxu0 0.0
        %1462 = vmatprep.subr.mxu0 0.0
        %1463 = vmatpush2.xpose.msra.mxu0 0.0
        %1464 = vmatprep.subr.mxu0 0.0
        %1465 = vmatpush2.xpose.msra.mxu0 0.0
        %1466 = vmatprep.mubr.f32.mxu0 0.0
        %1467 = vmatmul.mubr.f32.gmra.mxu0 %v1397
        %v1468 = vpop.f32.mrf.mxu0
        %v1469 = vadd.f32 0.0, %v1468
        %v1470 = vpop.f32.mrf.mxu0
        %1471 = vdwg.mxu0
        %v1473 = vsel %vm1243, %v1242, 0
        %v1476 = vsel %vm1243, %v1092, 0
        %1478 = vmatprep.subr.mxu0 0.0
        %1479 = vmatpush1.xpose.msra.mxu0 0.0
        %1480 = vmatprep.subr.mxu0 0.0
        %1481 = vmatpush1.xpose.msra.mxu0 0.0
        %1482 = vmatprep.subr.mxu0 0.0
        %1483 = vmatpush1.xpose.msra.mxu0 0.0
        %1484 = vmatprep.subr.mxu0 0.0
        %1485 = vmatpush1.xpose.msra.mxu0 0.0
        %1486 = vmatprep.subr.mxu0 0.0
        %1487 = vmatpush1.xpose.msra.mxu0 0.0
        %1488 = vmatprep.subr.mxu0 0.0
        %1489 = vmatpush1.xpose.msra.mxu0 0.0
        %1490 = vmatprep.subr.mxu0 0.0
        %1491 = vmatpush1.xpose.msra.mxu0 0.0
        %1492 = vmatprep.subr.mxu0 0.0
        %1493 = vmatpush1.xpose.msra.mxu0 0.0
        %1494 = vmatprep.subr.mxu0 0.0
        %1495 = vmatpush1.xpose.msra.mxu0 0.0
        %1496 = vmatprep.subr.mxu0 0.0
        %1497 = vmatpush1.xpose.msra.mxu0 0.0
        %1498 = vmatprep.subr.mxu0 0.0
        %1499 = vmatpush1.xpose.msra.mxu0 0.0
        %1500 = vmatprep.subr.mxu0 0.0
        %1501 = vmatpush1.xpose.msra.mxu0 0.0
        %1502 = vmatprep.subr.mxu0 0.0
        %1503 = vmatpush1.xpose.msra.mxu0 0.0
        %1504 = vmatprep.subr.mxu0 0.0
        %1505 = vmatpush1.xpose.msra.mxu0 0.0
        %1506 = vmatprep.subr.mxu0 0.0
        %1507 = vmatpush1.xpose.msra.mxu0 0.0
        %1508 = vmatprep.subr.mxu0 0.0
        %1509 = vmatpush1.xpose.msra.mxu0 %v1476
        %1510 = vmatprep.subr.mxu0 0.0
        %1511 = vmatpush2.xpose.msra.mxu0 0.0
        %1512 = vmatprep.subr.mxu0 0.0
        %1513 = vmatpush2.xpose.msra.mxu0 0.0
        %1514 = vmatprep.subr.mxu0 0.0
        %1515 = vmatpush2.xpose.msra.mxu0 0.0
        %1516 = vmatprep.subr.mxu0 0.0
        %1517 = vmatpush2.xpose.msra.mxu0 0.0
        %1518 = vmatprep.subr.mxu0 0.0
        %1519 = vmatpush2.xpose.msra.mxu0 0.0
        %1520 = vmatprep.subr.mxu0 0.0
        %1521 = vmatpush2.xpose.msra.mxu0 0.0
        %1522 = vmatprep.subr.mxu0 0.0
        %1523 = vmatpush2.xpose.msra.mxu0 0.0
        %1524 = vmatprep.subr.mxu0 0.0
        %1525 = vmatpush2.xpose.msra.mxu0 0.0
        %1526 = vmatprep.subr.mxu0 0.0
        %1527 = vmatpush2.xpose.msra.mxu0 0.0
        %1528 = vmatprep.subr.mxu0 0.0
        %1529 = vmatpush2.xpose.msra.mxu0 0.0
        %1530 = vmatprep.subr.mxu0 0.0
        %1531 = vmatpush2.xpose.msra.mxu0 0.0
        %1532 = vmatprep.subr.mxu0 0.0
        %1533 = vmatpush2.xpose.msra.mxu0 0.0
        %1534 = vmatprep.subr.mxu0 0.0
        %1535 = vmatpush2.xpose.msra.mxu0 0.0
        %1536 = vmatprep.subr.mxu0 0.0
        %1537 = vmatpush2.xpose.msra.mxu0 0.0
        %1538 = vmatprep.subr.mxu0 0.0
        %1539 = vmatpush2.xpose.msra.mxu0 0.0
        %1540 = vmatprep.subr.mxu0 0.0
        %1541 = vmatpush2.xpose.msra.mxu0 0.0
        %1542 = vmatprep.mubr.f32.mxu0 0.0
        %1543 = vmatmul.mubr.f32.gmra.mxu0 %v1473
        %v1544 = vpop.f32.mrf.mxu0
        %v1545 = vadd.f32 0.0, %v1544
        %v1546 = vpop.f32.mrf.mxu0
        %1547 = vdwg.mxu0
        %v1548 = vld [vmem:[#allocation4] sm:$0xff]
        %v1549 = vld [vmem:[#allocation4 + $0x8] sm:$0xff]
        %v1550 = vld [vmem:[#allocation4 + $0x10] sm:$0xff]
        %v1551 = vld [vmem:[#allocation4 + $0x18] sm:$0xff]
        %v1552 = vsel %vm1243, %v1317, -inf
        %1553 = vmax.xlane.f32.xlu0 %v1552
        %v1554 = vpop.xlane.xlu0 %1553
        %v1555 = vsel %vm1243, %v1393, -inf
        %1556 = vmax.xlane.f32.xlu0 %v1555
        %v1557 = vpop.xlane.xlu0 %1556
        %v1558 = vsel %vm1243, %v1469, -inf
        %1559 = vmax.xlane.f32.xlu0 %v1558
        %v1560 = vpop.xlane.xlu0 %1559
        %v1561 = vsel %vm1243, %v1545, -inf
        %1562 = vmax.xlane.f32.xlu0 %v1561
        %v1563 = vpop.xlane.xlu0 %1562
        %v1564 = vmax.f32 %v1548, %v1554
        %v1565 = vmax.f32 %v1549, %v1557
        %v1566 = vmax.f32 %v1550, %v1560
        %v1567 = vmax.f32 %v1551, %v1563
        %v1568 = vsub.f32 %v1548, %v1564
        %v1569 = vsub.f32 %v1549, %v1565
        %v1570 = vsub.f32 %v1550, %v1566
        %v1571 = vsub.f32 %v1551, %v1567
        %v1572 = vmul.f32 %v1568, 1.442695
        %v1573 = vpow.pop %v1572
        %v1574 = vmul.f32 %v1569, 1.442695
        %v1575 = vpow.pop %v1574
        %v1576 = vmul.f32 %v1570, 1.442695
        %v1577 = vpow.pop %v1576
        %v1578 = vmul.f32 %v1571, 1.442695
        %v1579 = vpow.pop %v1578
        %1581 = vset.pattern.permute.xlu0 0
        %1582 = vperm.xlu0 %1581, %v1564
        %v1583 = vpop.permute.xlu0 %1582
        %1586 = vset.pattern.permute.xlu0 0
        %1587 = vperm.xlu0 %1586, %v1565
        %v1588 = vpop.permute.xlu0 %1587
        %1591 = vset.pattern.permute.xlu0 0
        %1592 = vperm.xlu0 %1591, %v1566
        %v1593 = vpop.permute.xlu0 %1592
        %1596 = vset.pattern.permute.xlu0 0
        %1597 = vperm.xlu0 %1596, %v1567
        %v1598 = vpop.permute.xlu0 %1597
        %v1600 = vsub.f32 %v1317, %v1583
        %v1601 = vsub.f32 %v1393, %v1588
        %v1602 = vsub.f32 %v1469, %v1593
        %v1603 = vsub.f32 %v1545, %v1598
        %v1604 = vmul.f32 %v1600, 1.442695
        %v1605 = vpow.pop %v1604
        %v1606 = vmul.f32 %v1601, 1.442695
        %v1607 = vpow.pop %v1606
        %v1608 = vmul.f32 %v1602, 1.442695
        %v1609 = vpow.pop %v1608
        %v1610 = vmul.f32 %v1603, 1.442695
        %v1611 = vpow.pop %v1610
        %v1612 = vld [vmem:[#allocation5] sm:$0xff]
        %v1613 = vld [vmem:[#allocation5 + $0x8] sm:$0xff]
        %v1614 = vld [vmem:[#allocation5 + $0x10] sm:$0xff]
        %v1615 = vld [vmem:[#allocation5 + $0x18] sm:$0xff]
        %v1616 = vmul.f32 %v1573, %v1612
        %v1617 = vmul.f32 %v1575, %v1613
        %v1618 = vmul.f32 %v1577, %v1614
        %v1619 = vmul.f32 %v1579, %v1615
        %v1620 = vsel %vm1243, %v1605, 0.0
        %1621 = vadd.xlane.f32.xlu0 %v1620
        %v1622 = vpop.xlane.xlu0 %1621
        %v1623 = vsel %vm1243, %v1607, 0.0
        %1624 = vadd.xlane.f32.xlu0 %v1623
        %v1625 = vpop.xlane.xlu0 %1624
        %v1626 = vsel %vm1243, %v1609, 0.0
        %1627 = vadd.xlane.f32.xlu0 %v1626
        %v1628 = vpop.xlane.xlu0 %1627
        %v1629 = vsel %vm1243, %v1611, 0.0
        %1630 = vadd.xlane.f32.xlu0 %v1629
        %v1631 = vpop.xlane.xlu0 %1630
        %v1632 = vadd.f32 %v1616, %v1622
        %v1633 = vadd.f32 %v1617, %v1625
        %v1634 = vadd.f32 %v1618, %v1628
        %v1635 = vadd.f32 %v1619, %v1631
        %vm1636 = vcmask 7168
        %1637 = vst.msk [vmem:[#allocation5] sm:$0xff] %vm1636, %v1632
        %1638 = vst.msk [vmem:[#allocation5 + $0x8] sm:$0xff] %vm1636, %v1633
        %1639 = vst.msk [vmem:[#allocation5 + $0x10] sm:$0xff] %vm1636, %v1634
        %1640 = vst.msk [vmem:[#allocation5 + $0x18] sm:$0xff] %vm1636, %v1635
        %v1641 = vld [vmem:[#allocation6] sm:$0xff]
        %v1642 = vld [vmem:[#allocation6 + $0x8] sm:$0xff]
        %v1643 = vld [vmem:[#allocation6 + $0x10] sm:$0xff]
        %v1644 = vld [vmem:[#allocation6 + $0x18] sm:$0xff]
        %1646 = vset.pattern.permute.xlu0 0
        %1647 = vperm.xlu0 %1646, %v1573
        %v1648 = vpop.permute.xlu0 %1647
        %1651 = vset.pattern.permute.xlu0 0
        %1652 = vperm.xlu0 %1651, %v1575
        %v1653 = vpop.permute.xlu0 %1652
        %1656 = vset.pattern.permute.xlu0 0
        %1657 = vperm.xlu0 %1656, %v1577
        %v1658 = vpop.permute.xlu0 %1657
        %1661 = vset.pattern.permute.xlu0 0
        %1662 = vperm.xlu0 %1661, %v1579
        %v1663 = vpop.permute.xlu0 %1662
        %v1665 = vmul.f32 %v1648, %v1641
        %v1666 = vmul.f32 %v1653, %v1642
        %v1667 = vmul.f32 %v1658, %v1643
        %v1668 = vmul.f32 %v1663, %v1644
        %v1670 = vsel %vm1243, %v1605, 0
        %1672 = vmatprep.subr.mxu0 0.0
        %1673 = vmatpush1.msra.mxu0 0.0
        %1674 = vmatprep.subr.mxu0 0.0
        %1675 = vmatpush1.msra.mxu0 0.0
        %1676 = vmatprep.subr.mxu0 0.0
        %1677 = vmatpush1.msra.mxu0 0.0
        %1678 = vmatprep.subr.mxu0 0.0
        %1679 = vmatpush1.msra.mxu0 0.0
        %1680 = vmatprep.subr.mxu0 0.0
        %1681 = vmatpush1.msra.mxu0 0.0
        %1682 = vmatprep.subr.mxu0 0.0
        %1683 = vmatpush1.msra.mxu0 0.0
        %1684 = vmatprep.subr.mxu0 0.0
        %1685 = vmatpush1.msra.mxu0 0.0
        %1686 = vmatprep.subr.mxu0 0.0
        %1687 = vmatpush1.msra.mxu0 0.0
        %1688 = vmatprep.subr.mxu0 0.0
        %1689 = vmatpush1.msra.mxu0 0.0
        %1690 = vmatprep.subr.mxu0 0.0
        %1691 = vmatpush1.msra.mxu0 0.0
        %1692 = vmatprep.subr.mxu0 0.0
        %1693 = vmatpush1.msra.mxu0 0.0
        %1694 = vmatprep.subr.mxu0 0.0
        %1695 = vmatpush1.msra.mxu0 0.0
        %1696 = vmatprep.subr.mxu0 0.0
        %1697 = vmatpush1.msra.mxu0 0.0
        %1698 = vmatprep.subr.mxu0 0.0
        %1699 = vmatpush1.msra.mxu0 0.0
        %1700 = vmatprep.subr.mxu0 0.0
        %1701 = vmatpush1.msra.mxu0 0.0
        %1702 = vmatprep.subr.mxu0 0.0
        %1703 = vmatpush1.msra.mxu0 %v1235
        %1704 = vmatprep.subr.mxu0 0.0
        %1705 = vmatpush2.msra.mxu0 0.0
        %1706 = vmatprep.subr.mxu0 0.0
        %1707 = vmatpush2.msra.mxu0 0.0
        %1708 = vmatprep.subr.mxu0 0.0
        %1709 = vmatpush2.msra.mxu0 0.0
        %1710 = vmatprep.subr.mxu0 0.0
        %1711 = vmatpush2.msra.mxu0 0.0
        %1712 = vmatprep.subr.mxu0 0.0
        %1713 = vmatpush2.msra.mxu0 0.0
        %1714 = vmatprep.subr.mxu0 0.0
        %1715 = vmatpush2.msra.mxu0 0.0
        %1716 = vmatprep.subr.mxu0 0.0
        %1717 = vmatpush2.msra.mxu0 0.0
        %1718 = vmatprep.subr.mxu0 0.0
        %1719 = vmatpush2.msra.mxu0 0.0
        %1720 = vmatprep.subr.mxu0 0.0
        %1721 = vmatpush2.msra.mxu0 0.0
        %1722 = vmatprep.subr.mxu0 0.0
        %1723 = vmatpush2.msra.mxu0 0.0
        %1724 = vmatprep.subr.mxu0 0.0
        %1725 = vmatpush2.msra.mxu0 0.0
        %1726 = vmatprep.subr.mxu0 0.0
        %1727 = vmatpush2.msra.mxu0 0.0
        %1728 = vmatprep.subr.mxu0 0.0
        %1729 = vmatpush2.msra.mxu0 0.0
        %1730 = vmatprep.subr.mxu0 0.0
        %1731 = vmatpush2.msra.mxu0 0.0
        %1732 = vmatprep.subr.mxu0 0.0
        %1733 = vmatpush2.msra.mxu0 0.0
        %1734 = vmatprep.subr.mxu0 0.0
        %1735 = vmatpush2.msra.mxu0 0.0
        %1736 = vmatprep.mubr.f32.mxu0 0.0
        %1737 = vmatmul.mubr.f32.gmra.mxu0 %v1670
        %v1738 = vpop.f32.mrf.mxu0
        %v1739 = vadd.f32 0.0, %v1738
        %v1740 = vpop.f32.mrf.mxu0
        %1741 = vdwg.mxu0
        %v1743 = vsel %vm1243, %v1607, 0
        %1745 = vmatprep.subr.mxu0 0.0
        %1746 = vmatpush1.msra.mxu0 0.0
        %1747 = vmatprep.subr.mxu0 0.0
        %1748 = vmatpush1.msra.mxu0 0.0
        %1749 = vmatprep.subr.mxu0 0.0
        %1750 = vmatpush1.msra.mxu0 0.0
        %1751 = vmatprep.subr.mxu0 0.0
        %1752 = vmatpush1.msra.mxu0 0.0
        %1753 = vmatprep.subr.mxu0 0.0
        %1754 = vmatpush1.msra.mxu0 0.0
        %1755 = vmatprep.subr.mxu0 0.0
        %1756 = vmatpush1.msra.mxu0 0.0
        %1757 = vmatprep.subr.mxu0 0.0
        %1758 = vmatpush1.msra.mxu0 0.0
        %1759 = vmatprep.subr.mxu0 0.0
        %1760 = vmatpush1.msra.mxu0 0.0
        %1761 = vmatprep.subr.mxu0 0.0
        %1762 = vmatpush1.msra.mxu0 0.0
        %1763 = vmatprep.subr.mxu0 0.0
        %1764 = vmatpush1.msra.mxu0 0.0
        %1765 = vmatprep.subr.mxu0 0.0
        %1766 = vmatpush1.msra.mxu0 0.0
        %1767 = vmatprep.subr.mxu0 0.0
        %1768 = vmatpush1.msra.mxu0 0.0
        %1769 = vmatprep.subr.mxu0 0.0
        %1770 = vmatpush1.msra.mxu0 0.0
        %1771 = vmatprep.subr.mxu0 0.0
        %1772 = vmatpush1.msra.mxu0 0.0
        %1773 = vmatprep.subr.mxu0 0.0
        %1774 = vmatpush1.msra.mxu0 0.0
        %1775 = vmatprep.subr.mxu0 0.0
        %1776 = vmatpush1.msra.mxu0 %v1236
        %1777 = vmatprep.subr.mxu0 0.0
        %1778 = vmatpush2.msra.mxu0 0.0
        %1779 = vmatprep.subr.mxu0 0.0
        %1780 = vmatpush2.msra.mxu0 0.0
        %1781 = vmatprep.subr.mxu0 0.0
        %1782 = vmatpush2.msra.mxu0 0.0
        %1783 = vmatprep.subr.mxu0 0.0
        %1784 = vmatpush2.msra.mxu0 0.0
        %1785 = vmatprep.subr.mxu0 0.0
        %1786 = vmatpush2.msra.mxu0 0.0
        %1787 = vmatprep.subr.mxu0 0.0
        %1788 = vmatpush2.msra.mxu0 0.0
        %1789 = vmatprep.subr.mxu0 0.0
        %1790 = vmatpush2.msra.mxu0 0.0
        %1791 = vmatprep.subr.mxu0 0.0
        %1792 = vmatpush2.msra.mxu0 0.0
        %1793 = vmatprep.subr.mxu0 0.0
        %1794 = vmatpush2.msra.mxu0 0.0
        %1795 = vmatprep.subr.mxu0 0.0
        %1796 = vmatpush2.msra.mxu0 0.0
        %1797 = vmatprep.subr.mxu0 0.0
        %1798 = vmatpush2.msra.mxu0 0.0
        %1799 = vmatprep.subr.mxu0 0.0
        %1800 = vmatpush2.msra.mxu0 0.0
        %1801 = vmatprep.subr.mxu0 0.0
        %1802 = vmatpush2.msra.mxu0 0.0
        %1803 = vmatprep.subr.mxu0 0.0
        %1804 = vmatpush2.msra.mxu0 0.0
        %1805 = vmatprep.subr.mxu0 0.0
        %1806 = vmatpush2.msra.mxu0 0.0
        %1807 = vmatprep.subr.mxu0 0.0
        %1808 = vmatpush2.msra.mxu0 0.0
        %1809 = vmatprep.mubr.f32.mxu0 0.0
        %1810 = vmatmul.mubr.f32.gmra.mxu0 %v1743
        %v1811 = vpop.f32.mrf.mxu0
        %v1812 = vadd.f32 0.0, %v1811
        %v1813 = vpop.f32.mrf.mxu0
        %1814 = vdwg.mxu0
        %v1816 = vsel %vm1243, %v1609, 0
        %1818 = vmatprep.subr.mxu0 0.0
        %1819 = vmatpush1.msra.mxu0 0.0
        %1820 = vmatprep.subr.mxu0 0.0
        %1821 = vmatpush1.msra.mxu0 0.0
        %1822 = vmatprep.subr.mxu0 0.0
        %1823 = vmatpush1.msra.mxu0 0.0
        %1824 = vmatprep.subr.mxu0 0.0
        %1825 = vmatpush1.msra.mxu0 0.0
        %1826 = vmatprep.subr.mxu0 0.0
        %1827 = vmatpush1.msra.mxu0 0.0
        %1828 = vmatprep.subr.mxu0 0.0
        %1829 = vmatpush1.msra.mxu0 0.0
        %1830 = vmatprep.subr.mxu0 0.0
        %1831 = vmatpush1.msra.mxu0 0.0
        %1832 = vmatprep.subr.mxu0 0.0
        %1833 = vmatpush1.msra.mxu0 0.0
        %1834 = vmatprep.subr.mxu0 0.0
        %1835 = vmatpush1.msra.mxu0 0.0
        %1836 = vmatprep.subr.mxu0 0.0
        %1837 = vmatpush1.msra.mxu0 0.0
        %1838 = vmatprep.subr.mxu0 0.0
        %1839 = vmatpush1.msra.mxu0 0.0
        %1840 = vmatprep.subr.mxu0 0.0
        %1841 = vmatpush1.msra.mxu0 0.0
        %1842 = vmatprep.subr.mxu0 0.0
        %1843 = vmatpush1.msra.mxu0 0.0
        %1844 = vmatprep.subr.mxu0 0.0
        %1845 = vmatpush1.msra.mxu0 0.0
        %1846 = vmatprep.subr.mxu0 0.0
        %1847 = vmatpush1.msra.mxu0 0.0
        %1848 = vmatprep.subr.mxu0 0.0
        %1849 = vmatpush1.msra.mxu0 %v1237
        %1850 = vmatprep.subr.mxu0 0.0
        %1851 = vmatpush2.msra.mxu0 0.0
        %1852 = vmatprep.subr.mxu0 0.0
        %1853 = vmatpush2.msra.mxu0 0.0
        %1854 = vmatprep.subr.mxu0 0.0
        %1855 = vmatpush2.msra.mxu0 0.0
        %1856 = vmatprep.subr.mxu0 0.0
        %1857 = vmatpush2.msra.mxu0 0.0
        %1858 = vmatprep.subr.mxu0 0.0
        %1859 = vmatpush2.msra.mxu0 0.0
        %1860 = vmatprep.subr.mxu0 0.0
        %1861 = vmatpush2.msra.mxu0 0.0
        %1862 = vmatprep.subr.mxu0 0.0
        %1863 = vmatpush2.msra.mxu0 0.0
        %1864 = vmatprep.subr.mxu0 0.0
        %1865 = vmatpush2.msra.mxu0 0.0
        %1866 = vmatprep.subr.mxu0 0.0
        %1867 = vmatpush2.msra.mxu0 0.0
        %1868 = vmatprep.subr.mxu0 0.0
        %1869 = vmatpush2.msra.mxu0 0.0
        %1870 = vmatprep.subr.mxu0 0.0
        %1871 = vmatpush2.msra.mxu0 0.0
        %1872 = vmatprep.subr.mxu0 0.0
        %1873 = vmatpush2.msra.mxu0 0.0
        %1874 = vmatprep.subr.mxu0 0.0
        %1875 = vmatpush2.msra.mxu0 0.0
        %1876 = vmatprep.subr.mxu0 0.0
        %1877 = vmatpush2.msra.mxu0 0.0
        %1878 = vmatprep.subr.mxu0 0.0
        %1879 = vmatpush2.msra.mxu0 0.0
        %1880 = vmatprep.subr.mxu0 0.0
        %1881 = vmatpush2.msra.mxu0 0.0
        %1882 = vmatprep.mubr.f32.mxu0 0.0
        %1883 = vmatmul.mubr.f32.gmra.mxu0 %v1816
        %v1884 = vpop.f32.mrf.mxu0
        %v1885 = vadd.f32 0.0, %v1884
        %v1886 = vpop.f32.mrf.mxu0
        %1887 = vdwg.mxu0
        %v1889 = vsel %vm1243, %v1611, 0
        %1891 = vmatprep.subr.mxu0 0.0
        %1892 = vmatpush1.msra.mxu0 0.0
        %1893 = vmatprep.subr.mxu0 0.0
        %1894 = vmatpush1.msra.mxu0 0.0
        %1895 = vmatprep.subr.mxu0 0.0
        %1896 = vmatpush1.msra.mxu0 0.0
        %1897 = vmatprep.subr.mxu0 0.0
        %1898 = vmatpush1.msra.mxu0 0.0
        %1899 = vmatprep.subr.mxu0 0.0
        %1900 = vmatpush1.msra.mxu0 0.0
        %1901 = vmatprep.subr.mxu0 0.0
        %1902 = vmatpush1.msra.mxu0 0.0
        %1903 = vmatprep.subr.mxu0 0.0
        %1904 = vmatpush1.msra.mxu0 0.0
        %1905 = vmatprep.subr.mxu0 0.0
        %1906 = vmatpush1.msra.mxu0 0.0
        %1907 = vmatprep.subr.mxu0 0.0
        %1908 = vmatpush1.msra.mxu0 0.0
        %1909 = vmatprep.subr.mxu0 0.0
        %1910 = vmatpush1.msra.mxu0 0.0
        %1911 = vmatprep.subr.mxu0 0.0
        %1912 = vmatpush1.msra.mxu0 0.0
        %1913 = vmatprep.subr.mxu0 0.0
        %1914 = vmatpush1.msra.mxu0 0.0
        %1915 = vmatprep.subr.mxu0 0.0
        %1916 = vmatpush1.msra.mxu0 0.0
        %1917 = vmatprep.subr.mxu0 0.0
        %1918 = vmatpush1.msra.mxu0 0.0
        %1919 = vmatprep.subr.mxu0 0.0
        %1920 = vmatpush1.msra.mxu0 0.0
        %1921 = vmatprep.subr.mxu0 0.0
        %1922 = vmatpush1.msra.mxu0 %v1238
        %1923 = vmatprep.subr.mxu0 0.0
        %1924 = vmatpush2.msra.mxu0 0.0
        %1925 = vmatprep.subr.mxu0 0.0
        %1926 = vmatpush2.msra.mxu0 0.0
        %1927 = vmatprep.subr.mxu0 0.0
        %1928 = vmatpush2.msra.mxu0 0.0
        %1929 = vmatprep.subr.mxu0 0.0
        %1930 = vmatpush2.msra.mxu0 0.0
        %1931 = vmatprep.subr.mxu0 0.0
        %1932 = vmatpush2.msra.mxu0 0.0
        %1933 = vmatprep.subr.mxu0 0.0
        %1934 = vmatpush2.msra.mxu0 0.0
        %1935 = vmatprep.subr.mxu0 0.0
        %1936 = vmatpush2.msra.mxu0 0.0
        %1937 = vmatprep.subr.mxu0 0.0
        %1938 = vmatpush2.msra.mxu0 0.0
        %1939 = vmatprep.subr.mxu0 0.0
        %1940 = vmatpush2.msra.mxu0 0.0
        %1941 = vmatprep.subr.mxu0 0.0
        %1942 = vmatpush2.msra.mxu0 0.0
        %1943 = vmatprep.subr.mxu0 0.0
        %1944 = vmatpush2.msra.mxu0 0.0
        %1945 = vmatprep.subr.mxu0 0.0
        %1946 = vmatpush2.msra.mxu0 0.0
        %1947 = vmatprep.subr.mxu0 0.0
        %1948 = vmatpush2.msra.mxu0 0.0
        %1949 = vmatprep.subr.mxu0 0.0
        %1950 = vmatpush2.msra.mxu0 0.0
        %1951 = vmatprep.subr.mxu0 0.0
        %1952 = vmatpush2.msra.mxu0 0.0
        %1953 = vmatprep.subr.mxu0 0.0
        %1954 = vmatpush2.msra.mxu0 0.0
        %1955 = vmatprep.mubr.f32.mxu0 0.0
        %1956 = vmatmul.mubr.f32.gmra.mxu0 %v1889
        %v1957 = vpop.f32.mrf.mxu0
        %v1958 = vadd.f32 0.0, %v1957
        %v1959 = vpop.f32.mrf.mxu0
        %1960 = vdwg.mxu0
        %v1961 = vadd.f32 %v1665, %v1739
        %v1962 = vadd.f32 %v1666, %v1812
        %v1963 = vadd.f32 %v1667, %v1885
        %v1964 = vadd.f32 %v1668, %v1958
        %1965 = vst.msk [vmem:[#allocation6] sm:$0xff] %vm1243, %v1961
        %1966 = vst.msk [vmem:[#allocation6 + $0x8] sm:$0xff] %vm1243, %v1962
        %1967 = vst.msk [vmem:[#allocation6 + $0x10] sm:$0xff] %vm1243, %v1963
        %1968 = vst.msk [vmem:[#allocation6 + $0x18] sm:$0xff] %vm1243, %v1964
        %1969 = vst.msk [vmem:[#allocation4] sm:$0xff] %vm1636, %v1564
        %1970 = vst.msk [vmem:[#allocation4 + $0x8] sm:$0xff] %vm1636, %v1565
        %1971 = vst.msk [vmem:[#allocation4 + $0x10] sm:$0xff] %vm1636, %v1566
        %1972 = vst.msk [vmem:[#allocation4 + $0x18] sm:$0xff] %vm1636, %v1567
        %p1973 = scmp.eq.s32.totalorder %s37, 1
        // Predicated region
        $region89: #{tpu_custom_call.1} parent=59 // pred_check
          %p1974 = pneg %p1973
        $region90: #{tpu_custom_call.1} parent=59 // pred_check_branch
          %1976 = sbr.rel (%p1974) target = $region92
        $region91: #{tpu_custom_call.1} parent=59 // pred_region
          %v1977 = vld [vmem:[#allocation3] sm:$0xff]
          %v1978 = vld [vmem:[#allocation13] sm:$0xff]
          %v1979 = vld [vmem:[#allocation13 + $0x8] sm:$0xff]
          %v1980 = vld [vmem:[#allocation13 + $0x10] sm:$0xff]
          %v1981 = vld [vmem:[#allocation13 + $0x18] sm:$0xff]
          %v1983 = vsel %vm767, %v1977, 0
          %1985 = vmatprep.subr.mxu0 0.0
          %1986 = vmatpush1.msra.mxu0 0.0
          %1987 = vmatprep.subr.mxu0 0.0
          %1988 = vmatpush1.msra.mxu0 0.0
          %1989 = vmatprep.subr.mxu0 0.0
          %1990 = vmatpush1.msra.mxu0 0.0
          %1991 = vmatprep.subr.mxu0 0.0
          %1992 = vmatpush1.msra.mxu0 0.0
          %1993 = vmatprep.subr.mxu0 0.0
          %1994 = vmatpush1.msra.mxu0 0.0
          %1995 = vmatprep.subr.mxu0 0.0
          %1996 = vmatpush1.msra.mxu0 0.0
          %1997 = vmatprep.subr.mxu0 0.0
          %1998 = vmatpush1.msra.mxu0 0.0
          %1999 = vmatprep.subr.mxu0 0.0
          %2000 = vmatpush1.msra.mxu0 0.0
          %2001 = vmatprep.subr.mxu0 0.0
          %2002 = vmatpush1.msra.mxu0 0.0
          %2003 = vmatprep.subr.mxu0 0.0
          %2004 = vmatpush1.msra.mxu0 0.0
          %2005 = vmatprep.subr.mxu0 0.0
          %2006 = vmatpush1.msra.mxu0 0.0
          %2007 = vmatprep.subr.mxu0 0.0
          %2008 = vmatpush1.msra.mxu0 0.0
          %2009 = vmatprep.subr.mxu0 0.0
          %2010 = vmatpush1.msra.mxu0 %v1981
          %2011 = vmatprep.subr.mxu0 0.0
          %2012 = vmatpush1.msra.mxu0 %v1980
          %2013 = vmatprep.subr.mxu0 0.0
          %2014 = vmatpush1.msra.mxu0 %v1979
          %2015 = vmatprep.subr.mxu0 0.0
          %2016 = vmatpush1.msra.mxu0 %v1978
          %2017 = vmatprep.subr.mxu0 0.0
          %2018 = vmatpush2.msra.mxu0 0.0
          %2019 = vmatprep.subr.mxu0 0.0
          %2020 = vmatpush2.msra.mxu0 0.0
          %2021 = vmatprep.subr.mxu0 0.0
          %2022 = vmatpush2.msra.mxu0 0.0
          %2023 = vmatprep.subr.mxu0 0.0
          %2024 = vmatpush2.msra.mxu0 0.0
          %2025 = vmatprep.subr.mxu0 0.0
          %2026 = vmatpush2.msra.mxu0 0.0
          %2027 = vmatprep.subr.mxu0 0.0
          %2028 = vmatpush2.msra.mxu0 0.0
          %2029 = vmatprep.subr.mxu0 0.0
          %2030 = vmatpush2.msra.mxu0 0.0
          %2031 = vmatprep.subr.mxu0 0.0
          %2032 = vmatpush2.msra.mxu0 0.0
          %2033 = vmatprep.subr.mxu0 0.0
          %2034 = vmatpush2.msra.mxu0 0.0
          %2035 = vmatprep.subr.mxu0 0.0
          %2036 = vmatpush2.msra.mxu0 0.0
          %2037 = vmatprep.subr.mxu0 0.0
          %2038 = vmatpush2.msra.mxu0 0.0
          %2039 = vmatprep.subr.mxu0 0.0
          %2040 = vmatpush2.msra.mxu0 0.0
          %2041 = vmatprep.subr.mxu0 0.0
          %2042 = vmatpush2.msra.mxu0 0.0
          %2043 = vmatprep.subr.mxu0 0.0
          %2044 = vmatpush2.msra.mxu0 0.0
          %2045 = vmatprep.subr.mxu0 0.0
          %2046 = vmatpush2.msra.mxu0 0.0
          %2047 = vmatprep.subr.mxu0 0.0
          %2048 = vmatpush2.msra.mxu0 0.0
          %2049 = vmatprep.mubr.f32.mxu0 0.0
          %2050 = vmatmul.mubr.f32.gmra.mxu0 %v1983
          %v2051 = vpop.f32.mrf.mxu0
          %v2052 = vadd.f32 0.0, %v2051
          %v2053 = vpop.f32.mrf.mxu0
          %2054 = vdwg.mxu0
          %v2055 = vld [vmem:[#allocation15] sm:$0xff]
          %v2056 = vld [vmem:[#allocation15 + $0x8] sm:$0xff]
          %v2057 = vld [vmem:[#allocation15 + $0x10] sm:$0xff]
          %v2058 = vld [vmem:[#allocation15 + $0x18] sm:$0xff]
          %2059 = vmatprep.subr.mxu0 0.0
          %2060 = vmatpush1.msra.mxu0 0.0
          %2061 = vmatprep.subr.mxu0 0.0
          %2062 = vmatpush1.msra.mxu0 0.0
          %2063 = vmatprep.subr.mxu0 0.0
          %2064 = vmatpush1.msra.mxu0 0.0
          %2065 = vmatprep.subr.mxu0 0.0
          %2066 = vmatpush1.msra.mxu0 0.0
          %2067 = vmatprep.subr.mxu0 0.0
          %2068 = vmatpush1.msra.mxu0 0.0
          %2069 = vmatprep.subr.mxu0 0.0
          %2070 = vmatpush1.msra.mxu0 0.0
          %2071 = vmatprep.subr.mxu0 0.0
          %2072 = vmatpush1.msra.mxu0 0.0
          %2073 = vmatprep.subr.mxu0 0.0
          %2074 = vmatpush1.msra.mxu0 0.0
          %2075 = vmatprep.subr.mxu0 0.0
          %2076 = vmatpush1.msra.mxu0 0.0
          %2077 = vmatprep.subr.mxu0 0.0
          %2078 = vmatpush1.msra.mxu0 0.0
          %2079 = vmatprep.subr.mxu0 0.0
          %2080 = vmatpush1.msra.mxu0 0.0
          %2081 = vmatprep.subr.mxu0 0.0
          %2082 = vmatpush1.msra.mxu0 0.0
          %2083 = vmatprep.subr.mxu0 0.0
          %2084 = vmatpush1.msra.mxu0 %v2058
          %2085 = vmatprep.subr.mxu0 0.0
          %2086 = vmatpush1.msra.mxu0 %v2057
          %2087 = vmatprep.subr.mxu0 0.0
          %2088 = vmatpush1.msra.mxu0 %v2056
          %2089 = vmatprep.subr.mxu0 0.0
          %2090 = vmatpush1.msra.mxu0 %v2055
          %2091 = vmatprep.subr.mxu0 0.0
          %2092 = vmatpush2.msra.mxu0 0.0
          %2093 = vmatprep.subr.mxu0 0.0
          %2094 = vmatpush2.msra.mxu0 0.0
          %2095 = vmatprep.subr.mxu0 0.0
          %2096 = vmatpush2.msra.mxu0 0.0
          %2097 = vmatprep.subr.mxu0 0.0
          %2098 = vmatpush2.msra.mxu0 0.0
          %2099 = vmatprep.subr.mxu0 0.0
          %2100 = vmatpush2.msra.mxu0 0.0
          %2101 = vmatprep.subr.mxu0 0.0
          %2102 = vmatpush2.msra.mxu0 0.0
          %2103 = vmatprep.subr.mxu0 0.0
          %2104 = vmatpush2.msra.mxu0 0.0
          %2105 = vmatprep.subr.mxu0 0.0
          %2106 = vmatpush2.msra.mxu0 0.0
          %2107 = vmatprep.subr.mxu0 0.0
          %2108 = vmatpush2.msra.mxu0 0.0
          %2109 = vmatprep.subr.mxu0 0.0
          %2110 = vmatpush2.msra.mxu0 0.0
          %2111 = vmatprep.subr.mxu0 0.0
          %2112 = vmatpush2.msra.mxu0 0.0
          %2113 = vmatprep.subr.mxu0 0.0
          %2114 = vmatpush2.msra.mxu0 0.0
          %2115 = vmatprep.subr.mxu0 0.0
          %2116 = vmatpush2.msra.mxu0 0.0
          %2117 = vmatprep.subr.mxu0 0.0
          %2118 = vmatpush2.msra.mxu0 0.0
          %2119 = vmatprep.subr.mxu0 0.0
          %2120 = vmatpush2.msra.mxu0 0.0
          %2121 = vmatprep.subr.mxu0 0.0
          %2122 = vmatpush2.msra.mxu0 0.0
          %2123 = vmatprep.mubr.f32.mxu0 0.0
          %2124 = vmatmul.mubr.f32.gmra.mxu0 %v1983
          %v2125 = vpop.f32.mrf.mxu0
          %v2126 = vadd.f32 0.0, %v2125
          %v2127 = vpop.f32.mrf.mxu0
          %2128 = vdwg.mxu0
          %2130 = vrot.lane.b32.xlu0 %v2052, 120
          %v2131 = vpop.permute.xlu0 %2130
          %2133 = vrot.lane.b32.xlu0 %v2052, 112
          %v2134 = vpop.permute.xlu0 %2133
          %2136 = vrot.lane.b32.xlu0 %v2052, 104
          %v2137 = vpop.permute.xlu0 %2136
          %v2139 = vcombine.low %v2052, %v2134
          %v2140 = vcombine.high %v2052, %v2134
          %v2142 = vunpack.c.l.s4 1983009808
          %v2143 = vunpack.c.0.s8 %v2142
          %v2144 = vlaneseq
          %v2145 = vshrl.u32 %v2144, 7
          %v2146 = vsub.s32 %v2143, %v2145
          %v2147 = vrot.slane %v2139, %v2146
          %v2149 = vunpack.c.l.s4 1983009808
          %v2150 = vunpack.c.0.s8 %v2149
          %v2151 = vlaneseq
          %v2152 = vshrl.u32 %v2151, 7
          %v2153 = vsub.s32 %v2150, %v2152
          %v2154 = vrot.slane %v2140, %v2153
          %v2155 = vcombine.low %v2131, %v2137
          %v2156 = vcombine.high %v2131, %v2137
          %v2158 = vunpack.c.l.s4 1983009808
          %v2159 = vunpack.c.0.s8 %v2158
          %v2160 = vlaneseq
          %v2161 = vshrl.u32 %v2160, 7
          %v2162 = vsub.s32 %v2159, %v2161
          %v2163 = vrot.slane %v2155, %v2162
          %v2165 = vunpack.c.l.s4 1983009808
          %v2166 = vunpack.c.0.s8 %v2165
          %v2167 = vlaneseq
          %v2168 = vshrl.u32 %v2167, 7
          %v2169 = vsub.s32 %v2166, %v2168
          %v2170 = vrot.slane %v2156, %v2169
          %v2171 = vcombine.low %v2147, %v2163
          %v2172 = vcombine.high %v2147, %v2163
          %v2174 = vunpack.c.l.s4 1934713408
          %v2175 = vunpack.c.0.s8 %v2174
          %v2176 = vlaneseq
          %v2177 = vshrl.u32 %v2176, 7
          %v2178 = vsub.s32 %v2175, %v2177
          %v2179 = vrot.slane %v2171, %v2178
          %v2181 = vunpack.c.l.s4 1934713408
          %v2182 = vunpack.c.0.s8 %v2181
          %v2183 = vlaneseq
          %v2184 = vshrl.u32 %v2183, 7
          %v2185 = vsub.s32 %v2182, %v2184
          %v2186 = vrot.slane %v2172, %v2185
          %v2187 = vcombine.low %v2154, %v2170
          %v2188 = vcombine.high %v2154, %v2170
          %v2190 = vunpack.c.l.s4 1934713408
          %v2191 = vunpack.c.0.s8 %v2190
          %v2192 = vlaneseq
          %v2193 = vshrl.u32 %v2192, 7
          %v2194 = vsub.s32 %v2191, %v2193
          %v2195 = vrot.slane %v2187, %v2194
          %v2197 = vunpack.c.l.s4 1934713408
          %v2198 = vunpack.c.0.s8 %v2197
          %v2199 = vlaneseq
          %v2200 = vshrl.u32 %v2199, 7
          %v2201 = vsub.s32 %v2198, %v2200
          %v2202 = vrot.slane %v2188, %v2201
          %v2203 = vcombine.high %v2179, 0.0
          %v2204 = vcombine.high %v2186, 0.0
          %v2205 = vcombine.high %v2195, 0.0
          %v2206 = vcombine.high %v2202, 0.0
          %v2207 = vcombine.low %v2179, %v2186
          %v2209 = vunpack.c.l.s4 1983009808
          %v2210 = vunpack.c.0.s8 %v2209
          %v2211 = vlaneseq
          %v2212 = vshrl.u32 %v2211, 7
          %v2213 = vsub.s32 %v2210, %v2212
          %v2214 = vrot.slane %v2207, %v2213
          %v2215 = vcombine.low %v2203, %v2204
          %v2217 = vunpack.c.l.s4 1983009808
          %v2218 = vunpack.c.0.s8 %v2217
          %v2219 = vlaneseq
          %v2220 = vshrl.u32 %v2219, 7
          %v2221 = vsub.s32 %v2218, %v2220
          %v2222 = vrot.slane %v2215, %v2221
          %v2223 = vcombine.low %v2195, %v2202
          %v2225 = vunpack.c.l.s4 1983009808
          %v2226 = vunpack.c.0.s8 %v2225
          %v2227 = vlaneseq
          %v2228 = vshrl.u32 %v2227, 7
          %v2229 = vsub.s32 %v2226, %v2228
          %v2230 = vrot.slane %v2223, %v2229
          %v2231 = vcombine.low %v2205, %v2206
          %v2233 = vunpack.c.l.s4 1983009808
          %v2234 = vunpack.c.0.s8 %v2233
          %v2235 = vlaneseq
          %v2236 = vshrl.u32 %v2235, 7
          %v2237 = vsub.s32 %v2234, %v2236
          %v2238 = vrot.slane %v2231, %v2237
          %v2239 = vcombine.low %v2214, %v2222
          %v2240 = vcombine.high %v2214, %v2222
          %v2242 = vunpack.c.l.s4 1934713408
          %v2243 = vunpack.c.0.s8 %v2242
          %v2244 = vlaneseq
          %v2245 = vshrl.u32 %v2244, 7
          %v2246 = vsub.s32 %v2243, %v2245
          %v2247 = vrot.slane %v2239, %v2246
          %v2249 = vunpack.c.l.s4 1934713408
          %v2250 = vunpack.c.0.s8 %v2249
          %v2251 = vlaneseq
          %v2252 = vshrl.u32 %v2251, 7
          %v2253 = vsub.s32 %v2250, %v2252
          %v2254 = vrot.slane %v2240, %v2253
          %v2255 = vcombine.low %v2230, %v2238
          %v2256 = vcombine.high %v2230, %v2238
          %v2258 = vunpack.c.l.s4 1934713408
          %v2259 = vunpack.c.0.s8 %v2258
          %v2260 = vlaneseq
          %v2261 = vshrl.u32 %v2260, 7
          %v2262 = vsub.s32 %v2259, %v2261
          %v2263 = vrot.slane %v2255, %v2262
          %v2265 = vunpack.c.l.s4 1934713408
          %v2266 = vunpack.c.0.s8 %v2265
          %v2267 = vlaneseq
          %v2268 = vshrl.u32 %v2267, 7
          %v2269 = vsub.s32 %v2266, %v2268
          %v2270 = vrot.slane %v2256, %v2269
          %v2271 = vcombine.low %v2247, %v2263
          %v2272 = vcombine.high %v2247, %v2263
          %v2273 = vcombine.low %v2254, %v2270
          %v2274 = vcombine.high %v2254, %v2270
          %2276 = vrot.lane.b32.xlu0 %v2126, 120
          %v2277 = vpop.permute.xlu0 %2276
          %2279 = vrot.lane.b32.xlu0 %v2126, 112
          %v2280 = vpop.permute.xlu0 %2279
          %2282 = vrot.lane.b32.xlu0 %v2126, 104
          %v2283 = vpop.permute.xlu0 %2282
          %v2285 = vcombine.low %v2126, %v2280
          %v2286 = vcombine.high %v2126, %v2280
          %v2288 = vunpack.c.l.s4 1983009808
          %v2289 = vunpack.c.0.s8 %v2288
          %v2290 = vlaneseq
          %v2291 = vshrl.u32 %v2290, 7
          %v2292 = vsub.s32 %v2289, %v2291
          %v2293 = vrot.slane %v2285, %v2292
          %v2295 = vunpack.c.l.s4 1983009808
          %v2296 = vunpack.c.0.s8 %v2295
          %v2297 = vlaneseq
          %v2298 = vshrl.u32 %v2297, 7
          %v2299 = vsub.s32 %v2296, %v2298
          %v2300 = vrot.slane %v2286, %v2299
          %v2301 = vcombine.low %v2277, %v2283
          %v2302 = vcombine.high %v2277, %v2283
          %v2304 = vunpack.c.l.s4 1983009808
          %v2305 = vunpack.c.0.s8 %v2304
          %v2306 = vlaneseq
          %v2307 = vshrl.u32 %v2306, 7
          %v2308 = vsub.s32 %v2305, %v2307
          %v2309 = vrot.slane %v2301, %v2308
          %v2311 = vunpack.c.l.s4 1983009808
          %v2312 = vunpack.c.0.s8 %v2311
          %v2313 = vlaneseq
          %v2314 = vshrl.u32 %v2313, 7
          %v2315 = vsub.s32 %v2312, %v2314
          %v2316 = vrot.slane %v2302, %v2315
          %v2317 = vcombine.low %v2293, %v2309
          %v2318 = vcombine.high %v2293, %v2309
          %v2320 = vunpack.c.l.s4 1934713408
          %v2321 = vunpack.c.0.s8 %v2320
          %v2322 = vlaneseq
          %v2323 = vshrl.u32 %v2322, 7
          %v2324 = vsub.s32 %v2321, %v2323
          %v2325 = vrot.slane %v2317, %v2324
          %v2327 = vunpack.c.l.s4 1934713408
          %v2328 = vunpack.c.0.s8 %v2327
          %v2329 = vlaneseq
          %v2330 = vshrl.u32 %v2329, 7
          %v2331 = vsub.s32 %v2328, %v2330
          %v2332 = vrot.slane %v2318, %v2331
          %v2333 = vcombine.low %v2300, %v2316
          %v2334 = vcombine.high %v2300, %v2316
          %v2336 = vunpack.c.l.s4 1934713408
          %v2337 = vunpack.c.0.s8 %v2336
          %v2338 = vlaneseq
          %v2339 = vshrl.u32 %v2338, 7
          %v2340 = vsub.s32 %v2337, %v2339
          %v2341 = vrot.slane %v2333, %v2340
          %v2343 = vunpack.c.l.s4 1934713408
          %v2344 = vunpack.c.0.s8 %v2343
          %v2345 = vlaneseq
          %v2346 = vshrl.u32 %v2345, 7
          %v2347 = vsub.s32 %v2344, %v2346
          %v2348 = vrot.slane %v2334, %v2347
          %v2349 = vcombine.high %v2325, 0.0
          %v2350 = vcombine.high %v2332, 0.0
          %v2351 = vcombine.high %v2341, 0.0
          %v2352 = vcombine.high %v2348, 0.0
          %v2353 = vcombine.low %v2325, %v2332
          %v2355 = vunpack.c.l.s4 1983009808
          %v2356 = vunpack.c.0.s8 %v2355
          %v2357 = vlaneseq
          %v2358 = vshrl.u32 %v2357, 7
          %v2359 = vsub.s32 %v2356, %v2358
          %v2360 = vrot.slane %v2353, %v2359
          %v2361 = vcombine.low %v2349, %v2350
          %v2363 = vunpack.c.l.s4 1983009808
          %v2364 = vunpack.c.0.s8 %v2363
          %v2365 = vlaneseq
          %v2366 = vshrl.u32 %v2365, 7
          %v2367 = vsub.s32 %v2364, %v2366
          %v2368 = vrot.slane %v2361, %v2367
          %v2369 = vcombine.low %v2341, %v2348
          %v2371 = vunpack.c.l.s4 1983009808
          %v2372 = vunpack.c.0.s8 %v2371
          %v2373 = vlaneseq
          %v2374 = vshrl.u32 %v2373, 7
          %v2375 = vsub.s32 %v2372, %v2374
          %v2376 = vrot.slane %v2369, %v2375
          %v2377 = vcombine.low %v2351, %v2352
          %v2379 = vunpack.c.l.s4 1983009808
          %v2380 = vunpack.c.0.s8 %v2379
          %v2381 = vlaneseq
          %v2382 = vshrl.u32 %v2381, 7
          %v2383 = vsub.s32 %v2380, %v2382
          %v2384 = vrot.slane %v2377, %v2383
          %v2385 = vcombine.low %v2360, %v2368
          %v2386 = vcombine.high %v2360, %v2368
          %v2388 = vunpack.c.l.s4 1934713408
          %v2389 = vunpack.c.0.s8 %v2388
          %v2390 = vlaneseq
          %v2391 = vshrl.u32 %v2390, 7
          %v2392 = vsub.s32 %v2389, %v2391
          %v2393 = vrot.slane %v2385, %v2392
          %v2395 = vunpack.c.l.s4 1934713408
          %v2396 = vunpack.c.0.s8 %v2395
          %v2397 = vlaneseq
          %v2398 = vshrl.u32 %v2397, 7
          %v2399 = vsub.s32 %v2396, %v2398
          %v2400 = vrot.slane %v2386, %v2399
          %v2401 = vcombine.low %v2376, %v2384
          %v2402 = vcombine.high %v2376, %v2384
          %v2404 = vunpack.c.l.s4 1934713408
          %v2405 = vunpack.c.0.s8 %v2404
          %v2406 = vlaneseq
          %v2407 = vshrl.u32 %v2406, 7
          %v2408 = vsub.s32 %v2405, %v2407
          %v2409 = vrot.slane %v2401, %v2408
          %v2411 = vunpack.c.l.s4 1934713408
          %v2412 = vunpack.c.0.s8 %v2411
          %v2413 = vlaneseq
          %v2414 = vshrl.u32 %v2413, 7
          %v2415 = vsub.s32 %v2412, %v2414
          %v2416 = vrot.slane %v2402, %v2415
          %v2417 = vcombine.low %v2393, %v2409
          %v2418 = vcombine.high %v2393, %v2409
          %v2419 = vcombine.low %v2400, %v2416
          %v2420 = vcombine.high %v2400, %v2416
          %v2421 = vld [vmem:[#allocation2] sm:$0xff]
          %v2422 = vld [vmem:[#allocation2 + $0x8] sm:$0xff]
          %v2423 = vld [vmem:[#allocation2 + $0x10] sm:$0xff]
          %v2424 = vld [vmem:[#allocation2 + $0x18] sm:$0xff]
          %v2426 = vsel %vm1243, %v2421, 0
          %v2429 = vsel %vm1243, %v2271, 0
          %2431 = vmatprep.subr.mxu0 0.0
          %2432 = vmatpush1.xpose.msra.mxu0 0.0
          %2433 = vmatprep.subr.mxu0 0.0
          %2434 = vmatpush1.xpose.msra.mxu0 0.0
          %2435 = vmatprep.subr.mxu0 0.0
          %2436 = vmatpush1.xpose.msra.mxu0 0.0
          %2437 = vmatprep.subr.mxu0 0.0
          %2438 = vmatpush1.xpose.msra.mxu0 0.0
          %2439 = vmatprep.subr.mxu0 0.0
          %2440 = vmatpush1.xpose.msra.mxu0 0.0
          %2441 = vmatprep.subr.mxu0 0.0
          %2442 = vmatpush1.xpose.msra.mxu0 0.0
          %2443 = vmatprep.subr.mxu0 0.0
          %2444 = vmatpush1.xpose.msra.mxu0 0.0
          %2445 = vmatprep.subr.mxu0 0.0
          %2446 = vmatpush1.xpose.msra.mxu0 0.0
          %2447 = vmatprep.subr.mxu0 0.0
          %2448 = vmatpush1.xpose.msra.mxu0 0.0
          %2449 = vmatprep.subr.mxu0 0.0
          %2450 = vmatpush1.xpose.msra.mxu0 0.0
          %2451 = vmatprep.subr.mxu0 0.0
          %2452 = vmatpush1.xpose.msra.mxu0 0.0
          %2453 = vmatprep.subr.mxu0 0.0
          %2454 = vmatpush1.xpose.msra.mxu0 0.0
          %2455 = vmatprep.subr.mxu0 0.0
          %2456 = vmatpush1.xpose.msra.mxu0 0.0
          %2457 = vmatprep.subr.mxu0 0.0
          %2458 = vmatpush1.xpose.msra.mxu0 0.0
          %2459 = vmatprep.subr.mxu0 0.0
          %2460 = vmatpush1.xpose.msra.mxu0 0.0
          %2461 = vmatprep.subr.mxu0 0.0
          %2462 = vmatpush1.xpose.msra.mxu0 %v2429
          %2463 = vmatprep.subr.mxu0 0.0
          %2464 = vmatpush2.xpose.msra.mxu0 0.0
          %2465 = vmatprep.subr.mxu0 0.0
          %2466 = vmatpush2.xpose.msra.mxu0 0.0
          %2467 = vmatprep.subr.mxu0 0.0
          %2468 = vmatpush2.xpose.msra.mxu0 0.0
          %2469 = vmatprep.subr.mxu0 0.0
          %2470 = vmatpush2.xpose.msra.mxu0 0.0
          %2471 = vmatprep.subr.mxu0 0.0
          %2472 = vmatpush2.xpose.msra.mxu0 0.0
          %2473 = vmatprep.subr.mxu0 0.0
          %2474 = vmatpush2.xpose.msra.mxu0 0.0
          %2475 = vmatprep.subr.mxu0 0.0
          %2476 = vmatpush2.xpose.msra.mxu0 0.0
          %2477 = vmatprep.subr.mxu0 0.0
          %2478 = vmatpush2.xpose.msra.mxu0 0.0
          %2479 = vmatprep.subr.mxu0 0.0
          %2480 = vmatpush2.xpose.msra.mxu0 0.0
          %2481 = vmatprep.subr.mxu0 0.0
          %2482 = vmatpush2.xpose.msra.mxu0 0.0
          %2483 = vmatprep.subr.mxu0 0.0
          %2484 = vmatpush2.xpose.msra.mxu0 0.0
          %2485 = vmatprep.subr.mxu0 0.0
          %2486 = vmatpush2.xpose.msra.mxu0 0.0
          %2487 = vmatprep.subr.mxu0 0.0
          %2488 = vmatpush2.xpose.msra.mxu0 0.0
          %2489 = vmatprep.subr.mxu0 0.0
          %2490 = vmatpush2.xpose.msra.mxu0 0.0
          %2491 = vmatprep.subr.mxu0 0.0
          %2492 = vmatpush2.xpose.msra.mxu0 0.0
          %2493 = vmatprep.subr.mxu0 0.0
          %2494 = vmatpush2.xpose.msra.mxu0 0.0
          %2495 = vmatprep.mubr.f32.mxu0 0.0
          %2496 = vmatmul.mubr.f32.gmra.mxu0 %v2426
          %v2497 = vpop.f32.mrf.mxu0
          %v2498 = vadd.f32 0.0, %v2497
          %v2499 = vpop.f32.mrf.mxu0
          %2500 = vdwg.mxu0
          %v2502 = vsel %vm1243, %v2422, 0
          %v2505 = vsel %vm1243, %v2272, 0
          %2507 = vmatprep.subr.mxu0 0.0
          %2508 = vmatpush1.xpose.msra.mxu0 0.0
          %2509 = vmatprep.subr.mxu0 0.0
          %2510 = vmatpush1.xpose.msra.mxu0 0.0
          %2511 = vmatprep.subr.mxu0 0.0
          %2512 = vmatpush1.xpose.msra.mxu0 0.0
          %2513 = vmatprep.subr.mxu0 0.0
          %2514 = vmatpush1.xpose.msra.mxu0 0.0
          %2515 = vmatprep.subr.mxu0 0.0
          %2516 = vmatpush1.xpose.msra.mxu0 0.0
          %2517 = vmatprep.subr.mxu0 0.0
          %2518 = vmatpush1.xpose.msra.mxu0 0.0
          %2519 = vmatprep.subr.mxu0 0.0
          %2520 = vmatpush1.xpose.msra.mxu0 0.0
          %2521 = vmatprep.subr.mxu0 0.0
          %2522 = vmatpush1.xpose.msra.mxu0 0.0
          %2523 = vmatprep.subr.mxu0 0.0
          %2524 = vmatpush1.xpose.msra.mxu0 0.0
          %2525 = vmatprep.subr.mxu0 0.0
          %2526 = vmatpush1.xpose.msra.mxu0 0.0
          %2527 = vmatprep.subr.mxu0 0.0
          %2528 = vmatpush1.xpose.msra.mxu0 0.0
          %2529 = vmatprep.subr.mxu0 0.0
          %2530 = vmatpush1.xpose.msra.mxu0 0.0
          %2531 = vmatprep.subr.mxu0 0.0
          %2532 = vmatpush1.xpose.msra.mxu0 0.0
          %2533 = vmatprep.subr.mxu0 0.0
          %2534 = vmatpush1.xpose.msra.mxu0 0.0
          %2535 = vmatprep.subr.mxu0 0.0
          %2536 = vmatpush1.xpose.msra.mxu0 0.0
          %2537 = vmatprep.subr.mxu0 0.0
          %2538 = vmatpush1.xpose.msra.mxu0 %v2505
          %2539 = vmatprep.subr.mxu0 0.0
          %2540 = vmatpush2.xpose.msra.mxu0 0.0
          %2541 = vmatprep.subr.mxu0 0.0
          %2542 = vmatpush2.xpose.msra.mxu0 0.0
          %2543 = vmatprep.subr.mxu0 0.0
          %2544 = vmatpush2.xpose.msra.mxu0 0.0
          %2545 = vmatprep.subr.mxu0 0.0
          %2546 = vmatpush2.xpose.msra.mxu0 0.0
          %2547 = vmatprep.subr.mxu0 0.0
          %2548 = vmatpush2.xpose.msra.mxu0 0.0
          %2549 = vmatprep.subr.mxu0 0.0
          %2550 = vmatpush2.xpose.msra.mxu0 0.0
          %2551 = vmatprep.subr.mxu0 0.0
          %2552 = vmatpush2.xpose.msra.mxu0 0.0
          %2553 = vmatprep.subr.mxu0 0.0
          %2554 = vmatpush2.xpose.msra.mxu0 0.0
          %2555 = vmatprep.subr.mxu0 0.0
          %2556 = vmatpush2.xpose.msra.mxu0 0.0
          %2557 = vmatprep.subr.mxu0 0.0
          %2558 = vmatpush2.xpose.msra.mxu0 0.0
          %2559 = vmatprep.subr.mxu0 0.0
          %2560 = vmatpush2.xpose.msra.mxu0 0.0
          %2561 = vmatprep.subr.mxu0 0.0
          %2562 = vmatpush2.xpose.msra.mxu0 0.0
          %2563 = vmatprep.subr.mxu0 0.0
          %2564 = vmatpush2.xpose.msra.mxu0 0.0
          %2565 = vmatprep.subr.mxu0 0.0
          %2566 = vmatpush2.xpose.msra.mxu0 0.0
          %2567 = vmatprep.subr.mxu0 0.0
          %2568 = vmatpush2.xpose.msra.mxu0 0.0
          %2569 = vmatprep.subr.mxu0 0.0
          %2570 = vmatpush2.xpose.msra.mxu0 0.0
          %2571 = vmatprep.mubr.f32.mxu0 0.0
          %2572 = vmatmul.mubr.f32.gmra.mxu0 %v2502
          %v2573 = vpop.f32.mrf.mxu0
          %v2574 = vadd.f32 0.0, %v2573
          %v2575 = vpop.f32.mrf.mxu0
          %2576 = vdwg.mxu0
          %v2578 = vsel %vm1243, %v2423, 0
          %v2581 = vsel %vm1243, %v2273, 0
          %2583 = vmatprep.subr.mxu0 0.0
          %2584 = vmatpush1.xpose.msra.mxu0 0.0
          %2585 = vmatprep.subr.mxu0 0.0
          %2586 = vmatpush1.xpose.msra.mxu0 0.0
          %2587 = vmatprep.subr.mxu0 0.0
          %2588 = vmatpush1.xpose.msra.mxu0 0.0
          %2589 = vmatprep.subr.mxu0 0.0
          %2590 = vmatpush1.xpose.msra.mxu0 0.0
          %2591 = vmatprep.subr.mxu0 0.0
          %2592 = vmatpush1.xpose.msra.mxu0 0.0
          %2593 = vmatprep.subr.mxu0 0.0
          %2594 = vmatpush1.xpose.msra.mxu0 0.0
          %2595 = vmatprep.subr.mxu0 0.0
          %2596 = vmatpush1.xpose.msra.mxu0 0.0
          %2597 = vmatprep.subr.mxu0 0.0
          %2598 = vmatpush1.xpose.msra.mxu0 0.0
          %2599 = vmatprep.subr.mxu0 0.0
          %2600 = vmatpush1.xpose.msra.mxu0 0.0
          %2601 = vmatprep.subr.mxu0 0.0
          %2602 = vmatpush1.xpose.msra.mxu0 0.0
          %2603 = vmatprep.subr.mxu0 0.0
          %2604 = vmatpush1.xpose.msra.mxu0 0.0
          %2605 = vmatprep.subr.mxu0 0.0
          %2606 = vmatpush1.xpose.msra.mxu0 0.0
          %2607 = vmatprep.subr.mxu0 0.0
          %2608 = vmatpush1.xpose.msra.mxu0 0.0
          %2609 = vmatprep.subr.mxu0 0.0
          %2610 = vmatpush1.xpose.msra.mxu0 0.0
          %2611 = vmatprep.subr.mxu0 0.0
          %2612 = vmatpush1.xpose.msra.mxu0 0.0
          %2613 = vmatprep.subr.mxu0 0.0
          %2614 = vmatpush1.xpose.msra.mxu0 %v2581
          %2615 = vmatprep.subr.mxu0 0.0
          %2616 = vmatpush2.xpose.msra.mxu0 0.0
          %2617 = vmatprep.subr.mxu0 0.0
          %2618 = vmatpush2.xpose.msra.mxu0 0.0
          %2619 = vmatprep.subr.mxu0 0.0
          %2620 = vmatpush2.xpose.msra.mxu0 0.0
          %2621 = vmatprep.subr.mxu0 0.0
          %2622 = vmatpush2.xpose.msra.mxu0 0.0
          %2623 = vmatprep.subr.mxu0 0.0
          %2624 = vmatpush2.xpose.msra.mxu0 0.0
          %2625 = vmatprep.subr.mxu0 0.0
          %2626 = vmatpush2.xpose.msra.mxu0 0.0
          %2627 = vmatprep.subr.mxu0 0.0
          %2628 = vmatpush2.xpose.msra.mxu0 0.0
          %2629 = vmatprep.subr.mxu0 0.0
          %2630 = vmatpush2.xpose.msra.mxu0 0.0
          %2631 = vmatprep.subr.mxu0 0.0
          %2632 = vmatpush2.xpose.msra.mxu0 0.0
          %2633 = vmatprep.subr.mxu0 0.0
          %2634 = vmatpush2.xpose.msra.mxu0 0.0
          %2635 = vmatprep.subr.mxu0 0.0
          %2636 = vmatpush2.xpose.msra.mxu0 0.0
          %2637 = vmatprep.subr.mxu0 0.0
          %2638 = vmatpush2.xpose.msra.mxu0 0.0
          %2639 = vmatprep.subr.mxu0 0.0
          %2640 = vmatpush2.xpose.msra.mxu0 0.0
          %2641 = vmatprep.subr.mxu0 0.0
          %2642 = vmatpush2.xpose.msra.mxu0 0.0
          %2643 = vmatprep.subr.mxu0 0.0
          %2644 = vmatpush2.xpose.msra.mxu0 0.0
          %2645 = vmatprep.subr.mxu0 0.0
          %2646 = vmatpush2.xpose.msra.mxu0 0.0
          %2647 = vmatprep.mubr.f32.mxu0 0.0
          %2648 = vmatmul.mubr.f32.gmra.mxu0 %v2578
          %v2649 = vpop.f32.mrf.mxu0
          %v2650 = vadd.f32 0.0, %v2649
          %v2651 = vpop.f32.mrf.mxu0
          %2652 = vdwg.mxu0
          %v2654 = vsel %vm1243, %v2424, 0
          %v2657 = vsel %vm1243, %v2274, 0
          %2659 = vmatprep.subr.mxu0 0.0
          %2660 = vmatpush1.xpose.msra.mxu0 0.0
          %2661 = vmatprep.subr.mxu0 0.0
          %2662 = vmatpush1.xpose.msra.mxu0 0.0
          %2663 = vmatprep.subr.mxu0 0.0
          %2664 = vmatpush1.xpose.msra.mxu0 0.0
          %2665 = vmatprep.subr.mxu0 0.0
          %2666 = vmatpush1.xpose.msra.mxu0 0.0
          %2667 = vmatprep.subr.mxu0 0.0
          %2668 = vmatpush1.xpose.msra.mxu0 0.0
          %2669 = vmatprep.subr.mxu0 0.0
          %2670 = vmatpush1.xpose.msra.mxu0 0.0
          %2671 = vmatprep.subr.mxu0 0.0
          %2672 = vmatpush1.xpose.msra.mxu0 0.0
          %2673 = vmatprep.subr.mxu0 0.0
          %2674 = vmatpush1.xpose.msra.mxu0 0.0
          %2675 = vmatprep.subr.mxu0 0.0
          %2676 = vmatpush1.xpose.msra.mxu0 0.0
          %2677 = vmatprep.subr.mxu0 0.0
          %2678 = vmatpush1.xpose.msra.mxu0 0.0
          %2679 = vmatprep.subr.mxu0 0.0
          %2680 = vmatpush1.xpose.msra.mxu0 0.0
          %2681 = vmatprep.subr.mxu0 0.0
          %2682 = vmatpush1.xpose.msra.mxu0 0.0
          %2683 = vmatprep.subr.mxu0 0.0
          %2684 = vmatpush1.xpose.msra.mxu0 0.0
          %2685 = vmatprep.subr.mxu0 0.0
          %2686 = vmatpush1.xpose.msra.mxu0 0.0
          %2687 = vmatprep.subr.mxu0 0.0
          %2688 = vmatpush1.xpose.msra.mxu0 0.0
          %2689 = vmatprep.subr.mxu0 0.0
          %2690 = vmatpush1.xpose.msra.mxu0 %v2657
          %2691 = vmatprep.subr.mxu0 0.0
          %2692 = vmatpush2.xpose.msra.mxu0 0.0
          %2693 = vmatprep.subr.mxu0 0.0
          %2694 = vmatpush2.xpose.msra.mxu0 0.0
          %2695 = vmatprep.subr.mxu0 0.0
          %2696 = vmatpush2.xpose.msra.mxu0 0.0
          %2697 = vmatprep.subr.mxu0 0.0
          %2698 = vmatpush2.xpose.msra.mxu0 0.0
          %2699 = vmatprep.subr.mxu0 0.0
          %2700 = vmatpush2.xpose.msra.mxu0 0.0
          %2701 = vmatprep.subr.mxu0 0.0
          %2702 = vmatpush2.xpose.msra.mxu0 0.0
          %2703 = vmatprep.subr.mxu0 0.0
          %2704 = vmatpush2.xpose.msra.mxu0 0.0
          %2705 = vmatprep.subr.mxu0 0.0
          %2706 = vmatpush2.xpose.msra.mxu0 0.0
          %2707 = vmatprep.subr.mxu0 0.0
          %2708 = vmatpush2.xpose.msra.mxu0 0.0
          %2709 = vmatprep.subr.mxu0 0.0
          %2710 = vmatpush2.xpose.msra.mxu0 0.0
          %2711 = vmatprep.subr.mxu0 0.0
          %2712 = vmatpush2.xpose.msra.mxu0 0.0
          %2713 = vmatprep.subr.mxu0 0.0
          %2714 = vmatpush2.xpose.msra.mxu0 0.0
          %2715 = vmatprep.subr.mxu0 0.0
          %2716 = vmatpush2.xpose.msra.mxu0 0.0
          %2717 = vmatprep.subr.mxu0 0.0
          %2718 = vmatpush2.xpose.msra.mxu0 0.0
          %2719 = vmatprep.subr.mxu0 0.0
          %2720 = vmatpush2.xpose.msra.mxu0 0.0
          %2721 = vmatprep.subr.mxu0 0.0
          %2722 = vmatpush2.xpose.msra.mxu0 0.0
          %2723 = vmatprep.mubr.f32.mxu0 0.0
          %2724 = vmatmul.mubr.f32.gmra.mxu0 %v2654
          %v2725 = vpop.f32.mrf.mxu0
          %v2726 = vadd.f32 0.0, %v2725
          %v2727 = vpop.f32.mrf.mxu0
          %2728 = vdwg.mxu0
          %v2729 = vld [vmem:[#allocation4] sm:$0xff]
          %v2730 = vld [vmem:[#allocation4 + $0x8] sm:$0xff]
          %v2731 = vld [vmem:[#allocation4 + $0x10] sm:$0xff]
          %v2732 = vld [vmem:[#allocation4 + $0x18] sm:$0xff]
          %v2733 = vsel %vm1243, %v2498, -inf
          %2734 = vmax.xlane.f32.xlu0 %v2733
          %v2735 = vpop.xlane.xlu0 %2734
          %v2736 = vsel %vm1243, %v2574, -inf
          %2737 = vmax.xlane.f32.xlu0 %v2736
          %v2738 = vpop.xlane.xlu0 %2737
          %v2739 = vsel %vm1243, %v2650, -inf
          %2740 = vmax.xlane.f32.xlu0 %v2739
          %v2741 = vpop.xlane.xlu0 %2740
          %v2742 = vsel %vm1243, %v2726, -inf
          %2743 = vmax.xlane.f32.xlu0 %v2742
          %v2744 = vpop.xlane.xlu0 %2743
          %v2745 = vmax.f32 %v2729, %v2735
          %v2746 = vmax.f32 %v2730, %v2738
          %v2747 = vmax.f32 %v2731, %v2741
          %v2748 = vmax.f32 %v2732, %v2744
          %v2749 = vsub.f32 %v2729, %v2745
          %v2750 = vsub.f32 %v2730, %v2746
          %v2751 = vsub.f32 %v2731, %v2747
          %v2752 = vsub.f32 %v2732, %v2748
          %v2753 = vmul.f32 %v2749, 1.442695
          %v2754 = vpow.pop %v2753
          %v2755 = vmul.f32 %v2750, 1.442695
          %v2756 = vpow.pop %v2755
          %v2757 = vmul.f32 %v2751, 1.442695
          %v2758 = vpow.pop %v2757
          %v2759 = vmul.f32 %v2752, 1.442695
          %v2760 = vpow.pop %v2759
          %2762 = vset.pattern.permute.xlu0 0
          %2763 = vperm.xlu0 %2762, %v2745
          %v2764 = vpop.permute.xlu0 %2763
          %2767 = vset.pattern.permute.xlu0 0
          %2768 = vperm.xlu0 %2767, %v2746
          %v2769 = vpop.permute.xlu0 %2768
          %2772 = vset.pattern.permute.xlu0 0
          %2773 = vperm.xlu0 %2772, %v2747
          %v2774 = vpop.permute.xlu0 %2773
          %2777 = vset.pattern.permute.xlu0 0
          %2778 = vperm.xlu0 %2777, %v2748
          %v2779 = vpop.permute.xlu0 %2778
          %v2781 = vsub.f32 %v2498, %v2764
          %v2782 = vsub.f32 %v2574, %v2769
          %v2783 = vsub.f32 %v2650, %v2774
          %v2784 = vsub.f32 %v2726, %v2779
          %v2785 = vmul.f32 %v2781, 1.442695
          %v2786 = vpow.pop %v2785
          %v2787 = vmul.f32 %v2782, 1.442695
          %v2788 = vpow.pop %v2787
          %v2789 = vmul.f32 %v2783, 1.442695
          %v2790 = vpow.pop %v2789
          %v2791 = vmul.f32 %v2784, 1.442695
          %v2792 = vpow.pop %v2791
          %v2793 = vld [vmem:[#allocation5] sm:$0xff]
          %v2794 = vld [vmem:[#allocation5 + $0x8] sm:$0xff]
          %v2795 = vld [vmem:[#allocation5 + $0x10] sm:$0xff]
          %v2796 = vld [vmem:[#allocation5 + $0x18] sm:$0xff]
          %v2797 = vmul.f32 %v2754, %v2793
          %v2798 = vmul.f32 %v2756, %v2794
          %v2799 = vmul.f32 %v2758, %v2795
          %v2800 = vmul.f32 %v2760, %v2796
          %v2801 = vsel %vm1243, %v2786, 0.0
          %2802 = vadd.xlane.f32.xlu0 %v2801
          %v2803 = vpop.xlane.xlu0 %2802
          %v2804 = vsel %vm1243, %v2788, 0.0
          %2805 = vadd.xlane.f32.xlu0 %v2804
          %v2806 = vpop.xlane.xlu0 %2805
          %v2807 = vsel %vm1243, %v2790, 0.0
          %2808 = vadd.xlane.f32.xlu0 %v2807
          %v2809 = vpop.xlane.xlu0 %2808
          %v2810 = vsel %vm1243, %v2792, 0.0
          %2811 = vadd.xlane.f32.xlu0 %v2810
          %v2812 = vpop.xlane.xlu0 %2811
          %v2813 = vadd.f32 %v2797, %v2803
          %v2814 = vadd.f32 %v2798, %v2806
          %v2815 = vadd.f32 %v2799, %v2809
          %v2816 = vadd.f32 %v2800, %v2812
          %v2817 = vld [vmem:[#allocation6] sm:$0xff]
          %v2818 = vld [vmem:[#allocation6 + $0x8] sm:$0xff]
          %v2819 = vld [vmem:[#allocation6 + $0x10] sm:$0xff]
          %v2820 = vld [vmem:[#allocation6 + $0x18] sm:$0xff]
          %2822 = vset.pattern.permute.xlu0 0
          %2823 = vperm.xlu0 %2822, %v2754
          %v2824 = vpop.permute.xlu0 %2823
          %2827 = vset.pattern.permute.xlu0 0
          %2828 = vperm.xlu0 %2827, %v2756
          %v2829 = vpop.permute.xlu0 %2828
          %2832 = vset.pattern.permute.xlu0 0
          %2833 = vperm.xlu0 %2832, %v2758
          %v2834 = vpop.permute.xlu0 %2833
          %2837 = vset.pattern.permute.xlu0 0
          %2838 = vperm.xlu0 %2837, %v2760
          %v2839 = vpop.permute.xlu0 %2838
          %v2841 = vmul.f32 %v2824, %v2817
          %v2842 = vmul.f32 %v2829, %v2818
          %v2843 = vmul.f32 %v2834, %v2819
          %v2844 = vmul.f32 %v2839, %v2820
          %v2846 = vsel %vm1243, %v2786, 0
          %2848 = vmatprep.subr.mxu0 0.0
          %2849 = vmatpush1.msra.mxu0 0.0
          %2850 = vmatprep.subr.mxu0 0.0
          %2851 = vmatpush1.msra.mxu0 0.0
          %2852 = vmatprep.subr.mxu0 0.0
          %2853 = vmatpush1.msra.mxu0 0.0
          %2854 = vmatprep.subr.mxu0 0.0
          %2855 = vmatpush1.msra.mxu0 0.0
          %2856 = vmatprep.subr.mxu0 0.0
          %2857 = vmatpush1.msra.mxu0 0.0
          %2858 = vmatprep.subr.mxu0 0.0
          %2859 = vmatpush1.msra.mxu0 0.0
          %2860 = vmatprep.subr.mxu0 0.0
          %2861 = vmatpush1.msra.mxu0 0.0
          %2862 = vmatprep.subr.mxu0 0.0
          %2863 = vmatpush1.msra.mxu0 0.0
          %2864 = vmatprep.subr.mxu0 0.0
          %2865 = vmatpush1.msra.mxu0 0.0
          %2866 = vmatprep.subr.mxu0 0.0
          %2867 = vmatpush1.msra.mxu0 0.0
          %2868 = vmatprep.subr.mxu0 0.0
          %2869 = vmatpush1.msra.mxu0 0.0
          %2870 = vmatprep.subr.mxu0 0.0
          %2871 = vmatpush1.msra.mxu0 0.0
          %2872 = vmatprep.subr.mxu0 0.0
          %2873 = vmatpush1.msra.mxu0 0.0
          %2874 = vmatprep.subr.mxu0 0.0
          %2875 = vmatpush1.msra.mxu0 0.0
          %2876 = vmatprep.subr.mxu0 0.0
          %2877 = vmatpush1.msra.mxu0 0.0
          %2878 = vmatprep.subr.mxu0 0.0
          %2879 = vmatpush1.msra.mxu0 %v2417
          %2880 = vmatprep.subr.mxu0 0.0
          %2881 = vmatpush2.msra.mxu0 0.0
          %2882 = vmatprep.subr.mxu0 0.0
          %2883 = vmatpush2.msra.mxu0 0.0
          %2884 = vmatprep.subr.mxu0 0.0
          %2885 = vmatpush2.msra.mxu0 0.0
          %2886 = vmatprep.subr.mxu0 0.0
          %2887 = vmatpush2.msra.mxu0 0.0
          %2888 = vmatprep.subr.mxu0 0.0
          %2889 = vmatpush2.msra.mxu0 0.0
          %2890 = vmatprep.subr.mxu0 0.0
          %2891 = vmatpush2.msra.mxu0 0.0
          %2892 = vmatprep.subr.mxu0 0.0
          %2893 = vmatpush2.msra.mxu0 0.0
          %2894 = vmatprep.subr.mxu0 0.0
          %2895 = vmatpush2.msra.mxu0 0.0
          %2896 = vmatprep.subr.mxu0 0.0
          %2897 = vmatpush2.msra.mxu0 0.0
          %2898 = vmatprep.subr.mxu0 0.0
          %2899 = vmatpush2.msra.mxu0 0.0
          %2900 = vmatprep.subr.mxu0 0.0
          %2901 = vmatpush2.msra.mxu0 0.0
          %2902 = vmatprep.subr.mxu0 0.0
          %2903 = vmatpush2.msra.mxu0 0.0
          %2904 = vmatprep.subr.mxu0 0.0
          %2905 = vmatpush2.msra.mxu0 0.0
          %2906 = vmatprep.subr.mxu0 0.0
          %2907 = vmatpush2.msra.mxu0 0.0
          %2908 = vmatprep.subr.mxu0 0.0
          %2909 = vmatpush2.msra.mxu0 0.0
          %2910 = vmatprep.subr.mxu0 0.0
          %2911 = vmatpush2.msra.mxu0 0.0
          %2912 = vmatprep.mubr.f32.mxu0 0.0
          %2913 = vmatmul.mubr.f32.gmra.mxu0 %v2846
          %v2914 = vpop.f32.mrf.mxu0
          %v2915 = vadd.f32 0.0, %v2914
          %v2916 = vpop.f32.mrf.mxu0
          %2917 = vdwg.mxu0
          %v2919 = vsel %vm1243, %v2788, 0
          %2921 = vmatprep.subr.mxu0 0.0
          %2922 = vmatpush1.msra.mxu0 0.0
          %2923 = vmatprep.subr.mxu0 0.0
          %2924 = vmatpush1.msra.mxu0 0.0
          %2925 = vmatprep.subr.mxu0 0.0
          %2926 = vmatpush1.msra.mxu0 0.0
          %2927 = vmatprep.subr.mxu0 0.0
          %2928 = vmatpush1.msra.mxu0 0.0
          %2929 = vmatprep.subr.mxu0 0.0
          %2930 = vmatpush1.msra.mxu0 0.0
          %2931 = vmatprep.subr.mxu0 0.0
          %2932 = vmatpush1.msra.mxu0 0.0
          %2933 = vmatprep.subr.mxu0 0.0
          %2934 = vmatpush1.msra.mxu0 0.0
          %2935 = vmatprep.subr.mxu0 0.0
          %2936 = vmatpush1.msra.mxu0 0.0
          %2937 = vmatprep.subr.mxu0 0.0
          %2938 = vmatpush1.msra.mxu0 0.0
          %2939 = vmatprep.subr.mxu0 0.0
          %2940 = vmatpush1.msra.mxu0 0.0
          %2941 = vmatprep.subr.mxu0 0.0
          %2942 = vmatpush1.msra.mxu0 0.0
          %2943 = vmatprep.subr.mxu0 0.0
          %2944 = vmatpush1.msra.mxu0 0.0
          %2945 = vmatprep.subr.mxu0 0.0
          %2946 = vmatpush1.msra.mxu0 0.0
          %2947 = vmatprep.subr.mxu0 0.0
          %2948 = vmatpush1.msra.mxu0 0.0
          %2949 = vmatprep.subr.mxu0 0.0
          %2950 = vmatpush1.msra.mxu0 0.0
          %2951 = vmatprep.subr.mxu0 0.0
          %2952 = vmatpush1.msra.mxu0 %v2418
          %2953 = vmatprep.subr.mxu0 0.0
          %2954 = vmatpush2.msra.mxu0 0.0
          %2955 = vmatprep.subr.mxu0 0.0
          %2956 = vmatpush2.msra.mxu0 0.0
          %2957 = vmatprep.subr.mxu0 0.0
          %2958 = vmatpush2.msra.mxu0 0.0
          %2959 = vmatprep.subr.mxu0 0.0
          %2960 = vmatpush2.msra.mxu0 0.0
          %2961 = vmatprep.subr.mxu0 0.0
          %2962 = vmatpush2.msra.mxu0 0.0
          %2963 = vmatprep.subr.mxu0 0.0
          %2964 = vmatpush2.msra.mxu0 0.0
          %2965 = vmatprep.subr.mxu0 0.0
          %2966 = vmatpush2.msra.mxu0 0.0
          %2967 = vmatprep.subr.mxu0 0.0
          %2968 = vmatpush2.msra.mxu0 0.0
          %2969 = vmatprep.subr.mxu0 0.0
          %2970 = vmatpush2.msra.mxu0 0.0
          %2971 = vmatprep.subr.mxu0 0.0
          %2972 = vmatpush2.msra.mxu0 0.0
          %2973 = vmatprep.subr.mxu0 0.0
          %2974 = vmatpush2.msra.mxu0 0.0
          %2975 = vmatprep.subr.mxu0 0.0
          %2976 = vmatpush2.msra.mxu0 0.0
          %2977 = vmatprep.subr.mxu0 0.0
          %2978 = vmatpush2.msra.mxu0 0.0
          %2979 = vmatprep.subr.mxu0 0.0
          %2980 = vmatpush2.msra.mxu0 0.0
          %2981 = vmatprep.subr.mxu0 0.0
          %2982 = vmatpush2.msra.mxu0 0.0
          %2983 = vmatprep.subr.mxu0 0.0
          %2984 = vmatpush2.msra.mxu0 0.0
          %2985 = vmatprep.mubr.f32.mxu0 0.0
          %2986 = vmatmul.mubr.f32.gmra.mxu0 %v2919
          %v2987 = vpop.f32.mrf.mxu0
          %v2988 = vadd.f32 0.0, %v2987
          %v2989 = vpop.f32.mrf.mxu0
          %2990 = vdwg.mxu0
          %v2992 = vsel %vm1243, %v2790, 0
          %2994 = vmatprep.subr.mxu0 0.0
          %2995 = vmatpush1.msra.mxu0 0.0
          %2996 = vmatprep.subr.mxu0 0.0
          %2997 = vmatpush1.msra.mxu0 0.0
          %2998 = vmatprep.subr.mxu0 0.0
          %2999 = vmatpush1.msra.mxu0 0.0
          %3000 = vmatprep.subr.mxu0 0.0
          %3001 = vmatpush1.msra.mxu0 0.0
          %3002 = vmatprep.subr.mxu0 0.0
          %3003 = vmatpush1.msra.mxu0 0.0
          %3004 = vmatprep.subr.mxu0 0.0
          %3005 = vmatpush1.msra.mxu0 0.0
          %3006 = vmatprep.subr.mxu0 0.0
          %3007 = vmatpush1.msra.mxu0 0.0
          %3008 = vmatprep.subr.mxu0 0.0
          %3009 = vmatpush1.msra.mxu0 0.0
          %3010 = vmatprep.subr.mxu0 0.0
          %3011 = vmatpush1.msra.mxu0 0.0
          %3012 = vmatprep.subr.mxu0 0.0
          %3013 = vmatpush1.msra.mxu0 0.0
          %3014 = vmatprep.subr.mxu0 0.0
          %3015 = vmatpush1.msra.mxu0 0.0
          %3016 = vmatprep.subr.mxu0 0.0
          %3017 = vmatpush1.msra.mxu0 0.0
          %3018 = vmatprep.subr.mxu0 0.0
          %3019 = vmatpush1.msra.mxu0 0.0
          %3020 = vmatprep.subr.mxu0 0.0
          %3021 = vmatpush1.msra.mxu0 0.0
          %3022 = vmatprep.subr.mxu0 0.0
          %3023 = vmatpush1.msra.mxu0 0.0
          %3024 = vmatprep.subr.mxu0 0.0
          %3025 = vmatpush1.msra.mxu0 %v2419
          %3026 = vmatprep.subr.mxu0 0.0
          %3027 = vmatpush2.msra.mxu0 0.0
          %3028 = vmatprep.subr.mxu0 0.0
          %3029 = vmatpush2.msra.mxu0 0.0
          %3030 = vmatprep.subr.mxu0 0.0
          %3031 = vmatpush2.msra.mxu0 0.0
          %3032 = vmatprep.subr.mxu0 0.0
          %3033 = vmatpush2.msra.mxu0 0.0
          %3034 = vmatprep.subr.mxu0 0.0
          %3035 = vmatpush2.msra.mxu0 0.0
          %3036 = vmatprep.subr.mxu0 0.0
          %3037 = vmatpush2.msra.mxu0 0.0
          %3038 = vmatprep.subr.mxu0 0.0
          %3039 = vmatpush2.msra.mxu0 0.0
          %3040 = vmatprep.subr.mxu0 0.0
          %3041 = vmatpush2.msra.mxu0 0.0
          %3042 = vmatprep.subr.mxu0 0.0
          %3043 = vmatpush2.msra.mxu0 0.0
          %3044 = vmatprep.subr.mxu0 0.0
          %3045 = vmatpush2.msra.mxu0 0.0
          %3046 = vmatprep.subr.mxu0 0.0
          %3047 = vmatpush2.msra.mxu0 0.0
          %3048 = vmatprep.subr.mxu0 0.0
          %3049 = vmatpush2.msra.mxu0 0.0
          %3050 = vmatprep.subr.mxu0 0.0
          %3051 = vmatpush2.msra.mxu0 0.0
          %3052 = vmatprep.subr.mxu0 0.0
          %3053 = vmatpush2.msra.mxu0 0.0
          %3054 = vmatprep.subr.mxu0 0.0
          %3055 = vmatpush2.msra.mxu0 0.0
          %3056 = vmatprep.subr.mxu0 0.0
          %3057 = vmatpush2.msra.mxu0 0.0
          %3058 = vmatprep.mubr.f32.mxu0 0.0
          %3059 = vmatmul.mubr.f32.gmra.mxu0 %v2992
          %v3060 = vpop.f32.mrf.mxu0
          %v3061 = vadd.f32 0.0, %v3060
          %v3062 = vpop.f32.mrf.mxu0
          %3063 = vdwg.mxu0
          %v3065 = vsel %vm1243, %v2792, 0
          %3067 = vmatprep.subr.mxu0 0.0
          %3068 = vmatpush1.msra.mxu0 0.0
          %3069 = vmatprep.subr.mxu0 0.0
          %3070 = vmatpush1.msra.mxu0 0.0
          %3071 = vmatprep.subr.mxu0 0.0
          %3072 = vmatpush1.msra.mxu0 0.0
          %3073 = vmatprep.subr.mxu0 0.0
          %3074 = vmatpush1.msra.mxu0 0.0
          %3075 = vmatprep.subr.mxu0 0.0
          %3076 = vmatpush1.msra.mxu0 0.0
          %3077 = vmatprep.subr.mxu0 0.0
          %3078 = vmatpush1.msra.mxu0 0.0
          %3079 = vmatprep.subr.mxu0 0.0
          %3080 = vmatpush1.msra.mxu0 0.0
          %3081 = vmatprep.subr.mxu0 0.0
          %3082 = vmatpush1.msra.mxu0 0.0
          %3083 = vmatprep.subr.mxu0 0.0
          %3084 = vmatpush1.msra.mxu0 0.0
          %3085 = vmatprep.subr.mxu0 0.0
          %3086 = vmatpush1.msra.mxu0 0.0
          %3087 = vmatprep.subr.mxu0 0.0
          %3088 = vmatpush1.msra.mxu0 0.0
          %3089 = vmatprep.subr.mxu0 0.0
          %3090 = vmatpush1.msra.mxu0 0.0
          %3091 = vmatprep.subr.mxu0 0.0
          %3092 = vmatpush1.msra.mxu0 0.0
          %3093 = vmatprep.subr.mxu0 0.0
          %3094 = vmatpush1.msra.mxu0 0.0
          %3095 = vmatprep.subr.mxu0 0.0
          %3096 = vmatpush1.msra.mxu0 0.0
          %3097 = vmatprep.subr.mxu0 0.0
          %3098 = vmatpush1.msra.mxu0 %v2420
          %3099 = vmatprep.subr.mxu0 0.0
          %3100 = vmatpush2.msra.mxu0 0.0
          %3101 = vmatprep.subr.mxu0 0.0
          %3102 = vmatpush2.msra.mxu0 0.0
          %3103 = vmatprep.subr.mxu0 0.0
          %3104 = vmatpush2.msra.mxu0 0.0
          %3105 = vmatprep.subr.mxu0 0.0
          %3106 = vmatpush2.msra.mxu0 0.0
          %3107 = vmatprep.subr.mxu0 0.0
          %3108 = vmatpush2.msra.mxu0 0.0
          %3109 = vmatprep.subr.mxu0 0.0
          %3110 = vmatpush2.msra.mxu0 0.0
          %3111 = vmatprep.subr.mxu0 0.0
          %3112 = vmatpush2.msra.mxu0 0.0
          %3113 = vmatprep.subr.mxu0 0.0
          %3114 = vmatpush2.msra.mxu0 0.0
          %3115 = vmatprep.subr.mxu0 0.0
          %3116 = vmatpush2.msra.mxu0 0.0
          %3117 = vmatprep.subr.mxu0 0.0
          %3118 = vmatpush2.msra.mxu0 0.0
          %3119 = vmatprep.subr.mxu0 0.0
          %3120 = vmatpush2.msra.mxu0 0.0
          %3121 = vmatprep.subr.mxu0 0.0
          %3122 = vmatpush2.msra.mxu0 0.0
          %3123 = vmatprep.subr.mxu0 0.0
          %3124 = vmatpush2.msra.mxu0 0.0
          %3125 = vmatprep.subr.mxu0 0.0
          %3126 = vmatpush2.msra.mxu0 0.0
          %3127 = vmatprep.subr.mxu0 0.0
          %3128 = vmatpush2.msra.mxu0 0.0
          %3129 = vmatprep.subr.mxu0 0.0
          %3130 = vmatpush2.msra.mxu0 0.0
          %3131 = vmatprep.mubr.f32.mxu0 0.0
          %3132 = vmatmul.mubr.f32.gmra.mxu0 %v3065
          %v3133 = vpop.f32.mrf.mxu0
          %v3134 = vadd.f32 0.0, %v3133
          %v3135 = vpop.f32.mrf.mxu0
          %3136 = vdwg.mxu0
          %v3137 = vadd.f32 %v2841, %v2915
          %v3138 = vadd.f32 %v2842, %v2988
          %v3139 = vadd.f32 %v2843, %v3061
          %v3140 = vadd.f32 %v2844, %v3134
          %v3141 = vrcp.pop %v2813
          %v3142 = vrcp.pop %v2814
          %v3143 = vrcp.pop %v2815
          %v3144 = vrcp.pop %v2816
          %3146 = vset.pattern.permute.xlu0 0
          %3147 = vperm.xlu0 %3146, %v3141
          %v3148 = vpop.permute.xlu0 %3147
          %3151 = vset.pattern.permute.xlu0 0
          %3152 = vperm.xlu0 %3151, %v3142
          %v3153 = vpop.permute.xlu0 %3152
          %3156 = vset.pattern.permute.xlu0 0
          %3157 = vperm.xlu0 %3156, %v3143
          %v3158 = vpop.permute.xlu0 %3157
          %3161 = vset.pattern.permute.xlu0 0
          %3162 = vperm.xlu0 %3161, %v3144
          %v3163 = vpop.permute.xlu0 %3162
          %v3165 = vmul.f32 %v3137, %v3148
          %v3166 = vmul.f32 %v3138, %v3153
          %v3167 = vmul.f32 %v3139, %v3158
          %v3168 = vmul.f32 %v3140, %v3163
          %v3169 = vcombine.low %v3165, %v3167
          %v3170 = vcombine.high %v3165, %v3167
          %v3172 = vunpack.c.l.s4 1983009808
          %v3173 = vunpack.c.0.s8 %v3172
          %v3174 = vlaneseq
          %v3175 = vshrl.u32 %v3174, 7
          %v3176 = vsub.s32 %v3173, %v3175
          %v3177 = vrot.slane %v3169, %v3176
          %v3179 = vunpack.c.l.s4 1983009808
          %v3180 = vunpack.c.0.s8 %v3179
          %v3181 = vlaneseq
          %v3182 = vshrl.u32 %v3181, 7
          %v3183 = vsub.s32 %v3180, %v3182
          %v3184 = vrot.slane %v3170, %v3183
          %v3185 = vcombine.low %v3166, %v3168
          %v3186 = vcombine.high %v3166, %v3168
          %v3188 = vunpack.c.l.s4 1983009808
          %v3189 = vunpack.c.0.s8 %v3188
          %v3190 = vlaneseq
          %v3191 = vshrl.u32 %v3190, 7
          %v3192 = vsub.s32 %v3189, %v3191
          %v3193 = vrot.slane %v3185, %v3192
          %v3195 = vunpack.c.l.s4 1983009808
          %v3196 = vunpack.c.0.s8 %v3195
          %v3197 = vlaneseq
          %v3198 = vshrl.u32 %v3197, 7
          %v3199 = vsub.s32 %v3196, %v3198
          %v3200 = vrot.slane %v3186, %v3199
          %v3201 = vcombine.low %v3177, %v3193
          %v3202 = vcombine.high %v3177, %v3193
          %v3204 = vunpack.c.l.s4 1934713408
          %v3205 = vunpack.c.0.s8 %v3204
          %v3206 = vlaneseq
          %v3207 = vshrl.u32 %v3206, 7
          %v3208 = vsub.s32 %v3205, %v3207
          %v3209 = vrot.slane %v3201, %v3208
          %v3211 = vunpack.c.l.s4 1934713408
          %v3212 = vunpack.c.0.s8 %v3211
          %v3213 = vlaneseq
          %v3214 = vshrl.u32 %v3213, 7
          %v3215 = vsub.s32 %v3212, %v3214
          %v3216 = vrot.slane %v3202, %v3215
          %v3217 = vcombine.low %v3184, %v3200
          %v3218 = vcombine.high %v3184, %v3200
          %v3220 = vunpack.c.l.s4 1934713408
          %v3221 = vunpack.c.0.s8 %v3220
          %v3222 = vlaneseq
          %v3223 = vshrl.u32 %v3222, 7
          %v3224 = vsub.s32 %v3221, %v3223
          %v3225 = vrot.slane %v3217, %v3224
          %v3227 = vunpack.c.l.s4 1934713408
          %v3228 = vunpack.c.0.s8 %v3227
          %v3229 = vlaneseq
          %v3230 = vshrl.u32 %v3229, 7
          %v3231 = vsub.s32 %v3228, %v3230
          %v3232 = vrot.slane %v3218, %v3231
          %v3233 = vcombine.high %v3209, 0.0
          %v3234 = vcombine.high %v3216, 0.0
          %v3235 = vcombine.high %v3225, 0.0
          %v3236 = vcombine.high %v3232, 0.0
          %v3237 = vcombine.low %v3209, %v3216
          %v3239 = vunpack.c.l.s4 1983009808
          %v3240 = vunpack.c.0.s8 %v3239
          %v3241 = vlaneseq
          %v3242 = vshrl.u32 %v3241, 7
          %v3243 = vsub.s32 %v3240, %v3242
          %v3244 = vrot.slane %v3237, %v3243
          %v3245 = vcombine.low %v3233, %v3234
          %v3247 = vunpack.c.l.s4 1983009808
          %v3248 = vunpack.c.0.s8 %v3247
          %v3249 = vlaneseq
          %v3250 = vshrl.u32 %v3249, 7
          %v3251 = vsub.s32 %v3248, %v3250
          %v3252 = vrot.slane %v3245, %v3251
          %v3253 = vcombine.low %v3225, %v3232
          %v3255 = vunpack.c.l.s4 1983009808
          %v3256 = vunpack.c.0.s8 %v3255
          %v3257 = vlaneseq
          %v3258 = vshrl.u32 %v3257, 7
          %v3259 = vsub.s32 %v3256, %v3258
          %v3260 = vrot.slane %v3253, %v3259
          %v3261 = vcombine.low %v3235, %v3236
          %v3263 = vunpack.c.l.s4 1983009808
          %v3264 = vunpack.c.0.s8 %v3263
          %v3265 = vlaneseq
          %v3266 = vshrl.u32 %v3265, 7
          %v3267 = vsub.s32 %v3264, %v3266
          %v3268 = vrot.slane %v3261, %v3267
          %v3269 = vcombine.low %v3244, %v3252
          %v3270 = vcombine.high %v3244, %v3252
          %v3272 = vunpack.c.l.s4 1934713408
          %v3273 = vunpack.c.0.s8 %v3272
          %v3274 = vlaneseq
          %v3275 = vshrl.u32 %v3274, 7
          %v3276 = vsub.s32 %v3273, %v3275
          %v3277 = vrot.slane %v3269, %v3276
          %v3279 = vunpack.c.l.s4 1934713408
          %v3280 = vunpack.c.0.s8 %v3279
          %v3281 = vlaneseq
          %v3282 = vshrl.u32 %v3281, 7
          %v3283 = vsub.s32 %v3280, %v3282
          %v3284 = vrot.slane %v3270, %v3283
          %v3285 = vcombine.low %v3260, %v3268
          %v3286 = vcombine.high %v3260, %v3268
          %v3288 = vunpack.c.l.s4 1934713408
          %v3289 = vunpack.c.0.s8 %v3288
          %v3290 = vlaneseq
          %v3291 = vshrl.u32 %v3290, 7
          %v3292 = vsub.s32 %v3289, %v3291
          %v3293 = vrot.slane %v3285, %v3292
          %v3295 = vunpack.c.l.s4 1934713408
          %v3296 = vunpack.c.0.s8 %v3295
          %v3297 = vlaneseq
          %v3298 = vshrl.u32 %v3297, 7
          %v3299 = vsub.s32 %v3296, %v3298
          %v3300 = vrot.slane %v3286, %v3299
          %v3301 = vcombine.low %v3277, %v3293
          %v3302 = vcombine.high %v3277, %v3293
          %v3303 = vcombine.low %v3284, %v3300
          %v3304 = vcombine.high %v3284, %v3300
          %3306 = vrot.lane.b32.xlu0 %v3302, 8
          %v3307 = vpop.permute.xlu0 %3306
          %3310 = vrot.lane.b32.xlu0 %v3303, 16
          %v3311 = vpop.permute.xlu0 %3310
          %3314 = vrot.lane.b32.xlu0 %v3304, 24
          %v3315 = vpop.permute.xlu0 %3314
          %v3317 = vsel %vm1243, %v3301, %v3307
          %vm3318 = vcmask 130048
          %v3319 = vsel %vm3318, %v3317, %v3311
          %vm3320 = vcmask 195584
          %v3321 = vsel %vm3320, %v3319, %v3315
          %v3322 = vld [vmem:[#allocation16] sm:$0xff]
          %v3323 = vld [vmem:[#allocation16 + $0x8] sm:$0xff]
          %v3324 = vld [vmem:[#allocation16 + $0x10] sm:$0xff]
          %v3325 = vld [vmem:[#allocation16 + $0x18] sm:$0xff]
          %v3327 = vsel %vm767, %v3321, 0
          %3329 = vmatprep.subr.mxu0 0.0
          %3330 = vmatpush1.msra.mxu0 0.0
          %3331 = vmatprep.subr.mxu0 0.0
          %3332 = vmatpush1.msra.mxu0 0.0
          %3333 = vmatprep.subr.mxu0 0.0
          %3334 = vmatpush1.msra.mxu0 0.0
          %3335 = vmatprep.subr.mxu0 0.0
          %3336 = vmatpush1.msra.mxu0 0.0
          %3337 = vmatprep.subr.mxu0 0.0
          %3338 = vmatpush1.msra.mxu0 0.0
          %3339 = vmatprep.subr.mxu0 0.0
          %3340 = vmatpush1.msra.mxu0 0.0
          %3341 = vmatprep.subr.mxu0 0.0
          %3342 = vmatpush1.msra.mxu0 0.0
          %3343 = vmatprep.subr.mxu0 0.0
          %3344 = vmatpush1.msra.mxu0 0.0
          %3345 = vmatprep.subr.mxu0 0.0
          %3346 = vmatpush1.msra.mxu0 0.0
          %3347 = vmatprep.subr.mxu0 0.0
          %3348 = vmatpush1.msra.mxu0 0.0
          %3349 = vmatprep.subr.mxu0 0.0
          %3350 = vmatpush1.msra.mxu0 0.0
          %3351 = vmatprep.subr.mxu0 0.0
          %3352 = vmatpush1.msra.mxu0 0.0
          %3353 = vmatprep.subr.mxu0 0.0
          %3354 = vmatpush1.msra.mxu0 %v3325
          %3355 = vmatprep.subr.mxu0 0.0
          %3356 = vmatpush1.msra.mxu0 %v3324
          %3357 = vmatprep.subr.mxu0 0.0
          %3358 = vmatpush1.msra.mxu0 %v3323
          %3359 = vmatprep.subr.mxu0 0.0
          %3360 = vmatpush1.msra.mxu0 %v3322
          %3361 = vmatprep.subr.mxu0 0.0
          %3362 = vmatpush2.msra.mxu0 0.0
          %3363 = vmatprep.subr.mxu0 0.0
          %3364 = vmatpush2.msra.mxu0 0.0
          %3365 = vmatprep.subr.mxu0 0.0
          %3366 = vmatpush2.msra.mxu0 0.0
          %3367 = vmatprep.subr.mxu0 0.0
          %3368 = vmatpush2.msra.mxu0 0.0
          %3369 = vmatprep.subr.mxu0 0.0
          %3370 = vmatpush2.msra.mxu0 0.0
          %3371 = vmatprep.subr.mxu0 0.0
          %3372 = vmatpush2.msra.mxu0 0.0
          %3373 = vmatprep.subr.mxu0 0.0
          %3374 = vmatpush2.msra.mxu0 0.0
          %3375 = vmatprep.subr.mxu0 0.0
          %3376 = vmatpush2.msra.mxu0 0.0
          %3377 = vmatprep.subr.mxu0 0.0
          %3378 = vmatpush2.msra.mxu0 0.0
          %3379 = vmatprep.subr.mxu0 0.0
          %3380 = vmatpush2.msra.mxu0 0.0
          %3381 = vmatprep.subr.mxu0 0.0
          %3382 = vmatpush2.msra.mxu0 0.0
          %3383 = vmatprep.subr.mxu0 0.0
          %3384 = vmatpush2.msra.mxu0 0.0
          %3385 = vmatprep.subr.mxu0 0.0
          %3386 = vmatpush2.msra.mxu0 0.0
          %3387 = vmatprep.subr.mxu0 0.0
          %3388 = vmatpush2.msra.mxu0 0.0
          %3389 = vmatprep.subr.mxu0 0.0
          %3390 = vmatpush2.msra.mxu0 0.0
          %3391 = vmatprep.subr.mxu0 0.0
          %3392 = vmatpush2.msra.mxu0 0.0
          %3393 = vmatprep.mubr.f32.mxu0 0.0
          %3394 = vmatmul.mubr.f32.gmra.mxu0 %v3327
          %v3395 = vpop.f32.mrf.mxu0
          %v3396 = vadd.f32 0.0, %v3395
          %v3397 = vpop.f32.mrf.mxu0
          %3398 = vdwg.mxu0
          %3399 = vst.msk [vmem:[%s485] sm:$0xff] %vm767, %v3396
        $region92: #{tpu_custom_call.1} parent=59 // pred_fallthru
          _
        %s3400 = sand.u32 %s274, 1
        %s3401 = scalar_lea.sflag [#allocation9], %s3400
        %s3402 = sand.u32 %s274, 1
        %s3403 = smul.addr %s3402, 8
        %s3404 = scalar_lea.vmem [#allocation18], %s3403
        // Predicated region
        $region93: #{tpu_custom_call.1} parent=59 // pred_check
          %p3405 = pneg %p284
        $region94: #{tpu_custom_call.1} parent=59 // pred_check_branch
          %3407 = sbr.rel (%p3405) target = $region96
        $region95: #{tpu_custom_call.1} parent=59 // pred_region
          %s3409 = ssub.s32 128, 128
          %3410 = vsyncadd %s3401, %s3409
          %s3411 = smul.addr %s36, 128
          %s3412 = scalar_lea.hbm %s10, %s3411
          %s3414 = sshll.u32 %s3404, 4
          %s3415 = int_to_ptr.vmem [resolvable:$true] %s3414
          %3417 = dma.vmem_to_hbm [thread:$0]  %s3415, 128, %s3412, %s3401
        $region96: #{tpu_custom_call.1} parent=59 // pred_fallthru
          _
      $region60: #{tpu_custom_call.1} parent=5 // pred_fallthru
        _
      %p3418 = scmp.le.s32.totalorder 2, %s27
      // Predicated region
      $region97: #{tpu_custom_call.1} parent=5 // pred_check
        %p3419 = pneg %p3418
      $region98: #{tpu_custom_call.1} parent=5 // pred_check_branch
        %3421 = sbr.rel (%p3419) target = $region100
      $region99: #{tpu_custom_call.1} parent=5 // pred_region
        %s3422 = ssub.s32 %s27, 2
        // Predicated region
        $region101: #{tpu_custom_call.1} parent=99 // pred_check
          %p3423 = pneg %p290
        $region102: #{tpu_custom_call.1} parent=99 // pred_check_branch
          %3425 = sbr.rel (%p3423) target = $region104
        $region103: #{tpu_custom_call.1} parent=99 // pred_region
          %s3426 = sand.u32 %s275, 1
          %s3427 = scalar_lea.sflag [#allocation9], %s3426
          %s3428 = sand.u32 %s275, 1
          %s3429 = smul.addr %s3428, 8
          %s3430 = scalar_lea.vmem [#allocation18], %s3429
          %3431 = dma.done %s3427, 128
        $region104: #{tpu_custom_call.1} parent=99 // pred_fallthru
          _
      $region100: #{tpu_custom_call.1} parent=5 // pred_fallthru
        _
    $region6: #{tpu_custom_call.1} parent=1 // loop_footer
      %s31 = sadd.s32 1, %s27
    $region7: #{tpu_custom_call.1} parent=1 // loop_footer_branch
      %26 = sbr.rel target = $region3
    $region8: #{tpu_custom_call.1} parent=1 // loop_exit
      _
    %3432 = vsyncpa [#allocation8], 1
    %s3433 = scalar_lea.sflag [#allocation8], 1
    %3434 = vsyncpa %s3433, 1
    %3435 = vsyncpa [#allocation11], 1
    %s3436 = scalar_lea.sflag [#allocation11], 1
    %3437 = vsyncpa %s3436, 1
    %3438 = vsyncpa [#allocation14], 1
    %3439 = vsyncpa [#allocation17], 1
    %3440 = vsyncpa [#allocation9], 1
    %s3441 = scalar_lea.sflag [#allocation9], 1
    %3442 = vsyncpa %s3441, 1

// kernel: tpu_custom_call.1
$region0: #{tpu_custom_call.1}
  #allocation0 [shape = 'u32[]', space=smem, size = 0x4, offset = 0x4, fixed_abs, tag = 'smem constant byte address 0x4 - core index']
  #allocation1 [shape = 'u32[144,128]{1,0:T(1,128)}', space=vmem, size = 0x12000, scoped, tag = 'internal scratch']
  #allocation2 [shape = 'f32[4,8,8]{2,1,0:T(8,128)}', space=vmem, size = 0x4000, scoped, tag = 'scratch operand']
  #allocation3 [shape = 'f32[8,32]{1,0:T(8,128)}', space=vmem, size = 0x1000, scoped, tag = 'scratch operand']
  #allocation4 [shape = 'f32[4,8,1]{2,1,0:T(8,128)}', space=vmem, size = 0x4000, scoped, tag = 'scratch operand']
  #allocation5 [shape = 'f32[4,8,1]{2,1,0:T(8,128)}', space=vmem, size = 0x4000, scoped, tag = 'scratch operand']
  #allocation6 [shape = 'f32[4,8,8]{2,1,0:T(8,128)}', space=vmem, size = 0x4000, scoped, tag = 'scratch operand']
  %s0 = inlined_call_operand.hbm [shape: f32[2,16,32], index: 0, kind: input, shape index: {}]
  %s1 = inlined_call_operand.hbm [shape: f32[2,8,32], index: 1, kind: input, shape index: {}]
  %s2 = inlined_call_operand.vmem [shape: f32[1,32], index: 2, kind: input, shape index: {}]
  %s3 = inlined_call_operand.vmem [shape: f32[1,32], index: 3, kind: input, shape index: {}]
  %s4 = inlined_call_operand.vmem [shape: f32[1,32], index: 4, kind: input, shape index: {}]
  %s5 = inlined_call_operand.vmem [shape: f32[1,32], index: 5, kind: input, shape index: {}]
  %s6 = inlined_call_operand.hbm [shape: f32[32,32], index: 6, kind: input, shape index: {}]
  %s7 = inlined_call_operand.hbm [shape: f32[32,32], index: 7, kind: input, shape index: {}]
  %s8 = inlined_call_operand.hbm [shape: f32[32,32], index: 8, kind: input, shape index: {}]
  %s9 = inlined_call_operand.hbm [shape: f32[32,32], index: 9, kind: input, shape index: {}]
  %s10 = inlined_call_operand.hbm [shape: f32[2,8,32], index: 10, kind: output, shape index: {}]
  %s11 = sld [smem:[#allocation0]]
  $region105: #{tpu_custom_call.1} parent=0
    _
  %s13 = ssub.s32 1, %s11
  %s14 = scalar_select 0, %s13, %s11
  $region1: #{tpu_custom_call.1} parent=0
    #allocation7 [shape = 'u8[8192]{0}', space=vmem, size = 0x2000, scoped, tag = 'input window, operand 0']
    #allocation8 [shape = 's32[2]{0}', space=sflag, size = 0x8, scoped, tag = 'scoped memory for tpu_custom_call.1']
    #allocation9 [shape = 's32[2]{0}', space=sflag, size = 0x8, scoped, tag = 'scoped memory for tpu_custom_call.1']
    #allocation10 [shape = 'u8[8192]{0}', space=vmem, size = 0x2000, scoped, tag = 'input window, operand 1']
    #allocation11 [shape = 's32[2]{0}', space=sflag, size = 0x8, scoped, tag = 'scoped memory for tpu_custom_call.1']
    #allocation12 [shape = 'u8[16384]{0}', space=vmem, size = 0x4000, scoped, tag = 'input window, operand 6, single buffered']
    #allocation13 [shape = 'u8[16384]{0}', space=vmem, size = 0x4000, scoped, tag = 'input window, operand 7, single buffered']
    #allocation14 [shape = 's32[1]{0}', space=sflag, size = 0x4, scoped, tag = 'scoped memory for tpu_custom_call.1']
    #allocation15 [shape = 'u8[16384]{0}', space=vmem, size = 0x4000, scoped, tag = 'input window, operand 8, single buffered']
    #allocation16 [shape = 'u8[16384]{0}', space=vmem, size = 0x4000, scoped, tag = 'input window, operand 9, single buffered']
    #allocation17 [shape = 's32[1]{0}', space=sflag, size = 0x4, scoped, tag = 'scoped memory for tpu_custom_call.1']
    #allocation18 [shape = 'u8[8192]{0}', space=vmem, size = 0x2000, scoped, tag = 'output window, operand 0']
    %15 = vsyncpa [#allocation8], 0
    %s16 = scalar_lea.sflag [#allocation8], 1
    %17 = vsyncpa %s16, 0
    %18 = vsyncpa [#allocation11], 0
    %s19 = scalar_lea.sflag [#allocation11], 1
    %20 = vsyncpa %s19, 0
    %21 = vsyncpa [#allocation14], 0
    %22 = vsyncpa [#allocation17], 0
    %23 = vsyncpa [#allocation9], 0
    %s24 = scalar_lea.sflag [#allocation9], 1
    %25 = vsyncpa %s24, 0
    loop: start=0, step=1, limit=6
    $region2: #{tpu_custom_call.1} parent=1 // loop_pre_header
      _
    $region3: #{tpu_custom_call.1} parent=1 // loop_header
      %s27 = sphi 0, %s31
      %p28 = scmp.ge.s32.totalorder %s27, 6
      %s34 = sphi 0, %s46
      %s35 = sphi 0, %s42
      %s36 = sphi 0, %s34
      %s37 = sphi 0, %s35
      %s38 = sphi 0, %s36
      %s39 = sphi 0, %s37
      %s51 = sphi 0, %s53
      %s54 = sphi 0, %s51
      %s55 = sphi 0, %s54
      %s71 = sphi 0, %s55
      %s77 = sphi 0, %s79
      %s80 = sphi 0, %s77
      %s81 = sphi 0, %s80
      %s97 = sphi 0, %s81
      %s101 = sphi 0, %s101
      %s103 = sphi 0, %s101
      %s104 = sphi 0, %s103
      %s118 = sphi 0, %s104
      %s122 = sphi 0, %s122
      %s124 = sphi 0, %s122
      %s125 = sphi 0, %s124
      %s139 = sphi 0, %s125
      %s143 = sphi 0, %s143
      %s145 = sphi 0, %s143
      %s146 = sphi 0, %s145
      %s160 = sphi 0, %s146
      %s164 = sphi 0, %s164
      %s166 = sphi 0, %s164
      %s167 = sphi 0, %s166
      %s181 = sphi 0, %s167
      %s185 = sphi 0, %s185
      %s187 = sphi 0, %s185
      %s188 = sphi 0, %s187
      %s202 = sphi 0, %s188
      %s206 = sphi 0, %s206
      %s208 = sphi 0, %s206
      %s209 = sphi 0, %s208
      %s223 = sphi 0, %s209
      %s227 = sphi 0, %s227
      %s229 = sphi 0, %s227
      %s230 = sphi 0, %s229
      %s244 = sphi 0, %s230
      %s248 = sphi 0, %s248
      %s250 = sphi 0, %s248
      %s251 = sphi 0, %s250
      %s265 = sphi 0, %s251
      %s271 = sphi 0, %s273
      %s274 = sphi 0, %s271
      %s275 = sphi 0, %s274
      %s291 = sphi 0, %s275
    $region4: #{tpu_custom_call.1} parent=1 // loop_header_branch
      %30 = sbr.rel (%p28) target = $region8
    $region5: #{tpu_custom_call.1} parent=1 // loop_body
      %s32 = ssub.s32 %s27, 1
      %s33 = ssub.s32 %s27, 2
      %s40 = sadd.s32 1, %s35
      %p41 = scmp.ge.s32.totalorder %s40, 2
      %s42 = scalar_select %p41, 0, %s40
      %s43 = sadd.s32 1, %s34
      %s44 = scalar_select %p41, %s43, %s34
      %p45 = scmp.ge.s32.totalorder %s44, 2
      %s46 = scalar_select %p45, 0, %s44
      %s47 = ssub.s32 %s34, %s46
      %s48 = ssub.s32 %s35, %s42
      %s49 = sor.u32 %s47, %s48
      %p50 = scmp.eq.s32.totalorder %s49, 0
      %s52 = sadd.s32 %s51, 1
      %s53 = scalar_select %p50, %s51, %s52
      %p56 = pneg %p50
      %p57 = scmp.eq.s32.totalorder %s27, 3
      %p58 = por %p56, %p57
      %p59 = scmp.ne.s32.totalorder %s51, %s54
      %p60 = scmp.eq.s32.totalorder %s27, 0
      %p61 = por %p59, %p60
      %p62 = scmp.ne.s32.totalorder %s51, %s54
      %p63 = scmp.eq.s32.totalorder %s32, 3
      %p64 = por %p62, %p63
      %p65 = scmp.ne.s32.totalorder %s54, %s55
      %p66 = scmp.eq.s32.totalorder %s32, 0
      %p67 = por %p65, %p66
      %p68 = scmp.ne.s32.totalorder %s54, %s55
      %p69 = scmp.eq.s32.totalorder %s33, 3
      %p70 = por %p68, %p69
      %p72 = scmp.ne.s32.totalorder %s55, %s71
      %p73 = scmp.eq.s32.totalorder %s33, 0
      %p74 = por %p72, %p73
      %s75 = ssub.s32 %s34, %s46
      %p76 = scmp.eq.s32.totalorder %s75, 0
      %s78 = sadd.s32 %s77, 1
      %s79 = scalar_select %p76, %s77, %s78
      %p82 = pneg %p76
      %p83 = scmp.eq.s32.totalorder %s27, 3
      %p84 = por %p82, %p83
      %p85 = scmp.ne.s32.totalorder %s77, %s80
      %p86 = scmp.eq.s32.totalorder %s27, 0
      %p87 = por %p85, %p86
      %p88 = scmp.ne.s32.totalorder %s77, %s80
      %p89 = scmp.eq.s32.totalorder %s32, 3
      %p90 = por %p88, %p89
      %p91 = scmp.ne.s32.totalorder %s80, %s81
      %p92 = scmp.eq.s32.totalorder %s32, 0
      %p93 = por %p91, %p92
      %p94 = scmp.ne.s32.totalorder %s80, %s81
      %p95 = scmp.eq.s32.totalorder %s33, 3
      %p96 = por %p94, %p95
      %p98 = scmp.ne.s32.totalorder %s81, %s97
      %p99 = scmp.eq.s32.totalorder %s33, 0
      %p100 = por %p98, %p99
      %s102 = sadd.s32 %s101, 1
      %p105 = scmp.eq.s32.totalorder %s27, 3
      %p106 = scmp.ne.s32.totalorder %s101, %s103
      %p107 = scmp.eq.s32.totalorder %s27, 0
      %p108 = por %p106, %p107
      %p109 = scmp.ne.s32.totalorder %s101, %s103
      %p110 = scmp.eq.s32.totalorder %s32, 3
      %p111 = por %p109, %p110
      %p112 = scmp.ne.s32.totalorder %s103, %s104
      %p113 = scmp.eq.s32.totalorder %s32, 0
      %p114 = por %p112, %p113
      %p115 = scmp.ne.s32.totalorder %s103, %s104
      %p116 = scmp.eq.s32.totalorder %s33, 3
      %p117 = por %p115, %p116
      %p119 = scmp.ne.s32.totalorder %s104, %s118
      %p120 = scmp.eq.s32.totalorder %s33, 0
      %p121 = por %p119, %p120
      %s123 = sadd.s32 %s122, 1
      %p126 = scmp.eq.s32.totalorder %s27, 3
      %p127 = scmp.ne.s32.totalorder %s122, %s124
      %p128 = scmp.eq.s32.totalorder %s27, 0
      %p129 = por %p127, %p128
      %p130 = scmp.ne.s32.totalorder %s122, %s124
      %p131 = scmp.eq.s32.totalorder %s32, 3
      %p132 = por %p130, %p131
      %p133 = scmp.ne.s32.totalorder %s124, %s125
      %p134 = scmp.eq.s32.totalorder %s32, 0
      %p135 = por %p133, %p134
      %p136 = scmp.ne.s32.totalorder %s124, %s125
      %p137 = scmp.eq.s32.totalorder %s33, 3
      %p138 = por %p136, %p137
      %p140 = scmp.ne.s32.totalorder %s125, %s139
      %p141 = scmp.eq.s32.totalorder %s33, 0
      %p142 = por %p140, %p141
      %s144 = sadd.s32 %s143, 1
      %p147 = scmp.eq.s32.totalorder %s27, 3
      %p148 = scmp.ne.s32.totalorder %s143, %s145
      %p149 = scmp.eq.s32.totalorder %s27, 0
      %p150 = por %p148, %p149
      %p151 = scmp.ne.s32.totalorder %s143, %s145
      %p152 = scmp.eq.s32.totalorder %s32, 3
      %p153 = por %p151, %p152
      %p154 = scmp.ne.s32.totalorder %s145, %s146
      %p155 = scmp.eq.s32.totalorder %s32, 0
      %p156 = por %p154, %p155
      %p157 = scmp.ne.s32.totalorder %s145, %s146
      %p158 = scmp.eq.s32.totalorder %s33, 3
      %p159 = por %p157, %p158
      %p161 = scmp.ne.s32.totalorder %s146, %s160
      %p162 = scmp.eq.s32.totalorder %s33, 0
      %p163 = por %p161, %p162
      %s165 = sadd.s32 %s164, 1
      %p168 = scmp.eq.s32.totalorder %s27, 3
      %p169 = scmp.ne.s32.totalorder %s164, %s166
      %p170 = scmp.eq.s32.totalorder %s27, 0
      %p171 = por %p169, %p170
      %p172 = scmp.ne.s32.totalorder %s164, %s166
      %p173 = scmp.eq.s32.totalorder %s32, 3
      %p174 = por %p172, %p173
      %p175 = scmp.ne.s32.totalorder %s166, %s167
      %p176 = scmp.eq.s32.totalorder %s32, 0
      %p177 = por %p175, %p176
      %p178 = scmp.ne.s32.totalorder %s166, %s167
      %p179 = scmp.eq.s32.totalorder %s33, 3
      %p180 = por %p178, %p179
      %p182 = scmp.ne.s32.totalorder %s167, %s181
      %p183 = scmp.eq.s32.totalorder %s33, 0
      %p184 = por %p182, %p183
      %s186 = sadd.s32 %s185, 1
      %p189 = scmp.eq.s32.totalorder %s27, 3
      %p190 = scmp.ne.s32.totalorder %s185, %s187
      %p191 = scmp.eq.s32.totalorder %s27, 0
      %p192 = por %p190, %p191
      %p193 = scmp.ne.s32.totalorder %s185, %s187
      %p194 = scmp.eq.s32.totalorder %s32, 3
      %p195 = por %p193, %p194
      %p196 = scmp.ne.s32.totalorder %s187, %s188
      %p197 = scmp.eq.s32.totalorder %s32, 0
      %p198 = por %p196, %p197
      %p199 = scmp.ne.s32.totalorder %s187, %s188
      %p200 = scmp.eq.s32.totalorder %s33, 3
      %p201 = por %p199, %p200
      %p203 = scmp.ne.s32.totalorder %s188, %s202
      %p204 = scmp.eq.s32.totalorder %s33, 0
      %p205 = por %p203, %p204
      %s207 = sadd.s32 %s206, 1
      %p210 = scmp.eq.s32.totalorder %s27, 3
      %p211 = scmp.ne.s32.totalorder %s206, %s208
      %p212 = scmp.eq.s32.totalorder %s27, 0
      %p213 = por %p211, %p212
      %p214 = scmp.ne.s32.totalorder %s206, %s208
      %p215 = scmp.eq.s32.totalorder %s32, 3
      %p216 = por %p214, %p215
      %p217 = scmp.ne.s32.totalorder %s208, %s209
      %p218 = scmp.eq.s32.totalorder %s32, 0
      %p219 = por %p217, %p218
      %p220 = scmp.ne.s32.totalorder %s208, %s209
      %p221 = scmp.eq.s32.totalorder %s33, 3
      %p222 = por %p220, %p221
      %p224 = scmp.ne.s32.totalorder %s209, %s223
      %p225 = scmp.eq.s32.totalorder %s33, 0
      %p226 = por %p224, %p225
      %s228 = sadd.s32 %s227, 1
      %p231 = scmp.eq.s32.totalorder %s27, 3
      %p232 = scmp.ne.s32.totalorder %s227, %s229
      %p233 = scmp.eq.s32.totalorder %s27, 0
      %p234 = por %p232, %p233
      %p235 = scmp.ne.s32.totalorder %s227, %s229
      %p236 = scmp.eq.s32.totalorder %s32, 3
      %p237 = por %p235, %p236
      %p238 = scmp.ne.s32.totalorder %s229, %s230
      %p239 = scmp.eq.s32.totalorder %s32, 0
      %p240 = por %p238, %p239
      %p241 = scmp.ne.s32.totalorder %s229, %s230
      %p242 = scmp.eq.s32.totalorder %s33, 3
      %p243 = por %p241, %p242
      %p245 = scmp.ne.s32.totalorder %s230, %s244
      %p246 = scmp.eq.s32.totalorder %s33, 0
      %p247 = por %p245, %p246
      %s249 = sadd.s32 %s248, 1
      %p252 = scmp.eq.s32.totalorder %s27, 3
      %p253 = scmp.ne.s32.totalorder %s248, %s250
      %p254 = scmp.eq.s32.totalorder %s27, 0
      %p255 = por %p253, %p254
      %p256 = scmp.ne.s32.totalorder %s248, %s250
      %p257 = scmp.eq.s32.totalorder %s32, 3
      %p258 = por %p256, %p257
      %p259 = scmp.ne.s32.totalorder %s250, %s251
      %p260 = scmp.eq.s32.totalorder %s32, 0
      %p261 = por %p259, %p260
      %p262 = scmp.ne.s32.totalorder %s250, %s251
      %p263 = scmp.eq.s32.totalorder %s33, 3
      %p264 = por %p262, %p263
      %p266 = scmp.ne.s32.totalorder %s251, %s265
      %p267 = scmp.eq.s32.totalorder %s33, 0
      %p268 = por %p266, %p267
      %s269 = ssub.s32 %s34, %s46
      %p270 = scmp.eq.s32.totalorder %s269, 0
      %s272 = sadd.s32 %s271, 1
      %s273 = scalar_select %p270, %s271, %s272
      %p276 = pneg %p270
      %p277 = scmp.eq.s32.totalorder %s27, 3
      %p278 = por %p276, %p277
      %p279 = scmp.ne.s32.totalorder %s271, %s274
      %p280 = scmp.eq.s32.totalorder %s27, 0
      %p281 = por %p279, %p280
      %p282 = scmp.ne.s32.totalorder %s271, %s274
      %p283 = scmp.eq.s32.totalorder %s32, 3
      %p284 = por %p282, %p283
      %p285 = scmp.ne.s32.totalorder %s274, %s275
      %p286 = scmp.eq.s32.totalorder %s32, 0
      %p287 = por %p285, %p286
      %p288 = scmp.ne.s32.totalorder %s274, %s275
      %p289 = scmp.eq.s32.totalorder %s33, 3
      %p290 = por %p288, %p289
      %p292 = scmp.ne.s32.totalorder %s275, %s291
      %p293 = scmp.eq.s32.totalorder %s33, 0
      %p294 = por %p292, %p293
      %p295 = scmp.le.s32.totalorder 1, %s27
      %p296 = scmp.lt.s32.totalorder %s27, 5
      %p297 = pnand %p295, %p296
      %p298 = pneg %p297
      // Predicated region
      $region9: #{tpu_custom_call.1} parent=5 // pred_check
        _
      $region10: #{tpu_custom_call.1} parent=5 // pred_check_branch
        %300 = sbr.rel (%p297) target = $region12
      $region11: #{tpu_custom_call.1} parent=5 // pred_region
        %s301 = ssub.s32 %s27, 1
        // Predicated region
        $region13: #{tpu_custom_call.1} parent=11 // pred_check
          %p302 = pneg %p114
        $region14: #{tpu_custom_call.1} parent=11 // pred_check_branch
          %304 = sbr.rel (%p302) target = $region16
        $region15: #{tpu_custom_call.1} parent=11 // pred_region
          _
        $region16: #{tpu_custom_call.1} parent=11 // pred_fallthru
          _
        // Predicated region
        $region17: #{tpu_custom_call.1} parent=11 // pred_check
          %p305 = pneg %p135
        $region18: #{tpu_custom_call.1} parent=11 // pred_check_branch
          %307 = sbr.rel (%p305) target = $region20
        $region19: #{tpu_custom_call.1} parent=11 // pred_region
          _
        $region20: #{tpu_custom_call.1} parent=11 // pred_fallthru
          _
        // Predicated region
        $region21: #{tpu_custom_call.1} parent=11 // pred_check
          %p308 = pneg %p156
        $region22: #{tpu_custom_call.1} parent=11 // pred_check_branch
          %310 = sbr.rel (%p308) target = $region24
        $region23: #{tpu_custom_call.1} parent=11 // pred_region
          _
        $region24: #{tpu_custom_call.1} parent=11 // pred_fallthru
          _
        // Predicated region
        $region25: #{tpu_custom_call.1} parent=11 // pred_check
          %p311 = pneg %p177
        $region26: #{tpu_custom_call.1} parent=11 // pred_check_branch
          %313 = sbr.rel (%p311) target = $region28
        $region27: #{tpu_custom_call.1} parent=11 // pred_region
          _
        $region28: #{tpu_custom_call.1} parent=11 // pred_fallthru
          _
        // Predicated region
        $region29: #{tpu_custom_call.1} parent=11 // pred_check
          %p314 = pneg %p198
        $region30: #{tpu_custom_call.1} parent=11 // pred_check_branch
          %316 = sbr.rel (%p314) target = $region32
        $region31: #{tpu_custom_call.1} parent=11 // pred_region
          %s318 = ssub.s32 512, 512
          %319 = vsyncadd [#allocation11], %s318
          %s320 = sshll.u32 [#allocation12], 4
          %s321 = int_to_ptr.vmem [resolvable:$true] %s320
          %326 = dma.hbm_to_vmem [thread:$0]  %s6, 512, %s321, [#allocation11], 128, 128, 8
        $region32: #{tpu_custom_call.1} parent=11 // pred_fallthru
          _
        // Predicated region
        $region33: #{tpu_custom_call.1} parent=11 // pred_check
          %p327 = pneg %p219
        $region34: #{tpu_custom_call.1} parent=11 // pred_check_branch
          %329 = sbr.rel (%p327) target = $region36
        $region35: #{tpu_custom_call.1} parent=11 // pred_region
          %s331 = ssub.s32 512, 512
          %332 = vsyncadd [#allocation14], %s331
          %s333 = sshll.u32 [#allocation13], 4
          %s334 = int_to_ptr.vmem [resolvable:$true] %s333
          %339 = dma.hbm_to_vmem [thread:$0]  %s7, 512, %s334, [#allocation14], 128, 128, 8
        $region36: #{tpu_custom_call.1} parent=11 // pred_fallthru
          _
        // Predicated region
        $region37: #{tpu_custom_call.1} parent=11 // pred_check
          %p340 = pneg %p240
        $region38: #{tpu_custom_call.1} parent=11 // pred_check_branch
          %342 = sbr.rel (%p340) target = $region40
        $region39: #{tpu_custom_call.1} parent=11 // pred_region
          %s344 = ssub.s32 512, 512
          %345 = vsyncadd [#allocation14], %s344
          %s346 = sshll.u32 [#allocation15], 4
          %s347 = int_to_ptr.vmem [resolvable:$true] %s346
          %352 = dma.hbm_to_vmem [thread:$0]  %s8, 512, %s347, [#allocation14], 128, 128, 8
        $region40: #{tpu_custom_call.1} parent=11 // pred_fallthru
          _
        // Predicated region
        $region41: #{tpu_custom_call.1} parent=11 // pred_check
          %p353 = pneg %p261
        $region42: #{tpu_custom_call.1} parent=11 // pred_check_branch
          %355 = sbr.rel (%p353) target = $region44
        $region43: #{tpu_custom_call.1} parent=11 // pred_region
          %s357 = ssub.s32 512, 512
          %358 = vsyncadd [#allocation17], %s357
          %s359 = sshll.u32 [#allocation16], 4
          %s360 = int_to_ptr.vmem [resolvable:$true] %s359
          %365 = dma.hbm_to_vmem [thread:$0]  %s9, 512, %s360, [#allocation17], 128, 128, 8
        $region44: #{tpu_custom_call.1} parent=11 // pred_fallthru
          _
      $region12: #{tpu_custom_call.1} parent=5 // pred_fallthru
        _
      %p366 = scmp.lt.s32.totalorder %s27, 4
      // Predicated region
      $region45: #{tpu_custom_call.1} parent=5 // pred_check
        %p367 = pneg %p366
      $region46: #{tpu_custom_call.1} parent=5 // pred_check_branch
        %369 = sbr.rel (%p367) target = $region48
      $region47: #{tpu_custom_call.1} parent=5 // pred_region
        // Predicated region
        $region49: #{tpu_custom_call.1} parent=47 // pred_check
          %p370 = pneg %p61
        $region50: #{tpu_custom_call.1} parent=47 // pred_check_branch
          %372 = sbr.rel (%p370) target = $region52
        $region51: #{tpu_custom_call.1} parent=47 // pred_region
          %s373 = sand.u32 %s51, 1
          %s374 = scalar_lea.sflag [#allocation8], %s373
          %s375 = sand.u32 %s51, 1
          %s376 = smul.addr %s375, 8
          %s377 = scalar_lea.vmem [#allocation7], %s376
          %s379 = ssub.s32 128, 128
          %380 = vsyncadd %s374, %s379
          %s381 = smul.addr %s34, 2
          %s382 = sadd.s32 %s35, %s381
          %s383 = smul.addr %s382, 128
          %s384 = scalar_lea.hbm %s0, %s383
          %s386 = sshll.u32 %s377, 4
          %s387 = int_to_ptr.vmem [resolvable:$true] %s386
          %389 = dma.hbm_to_vmem [thread:$0]  %s384, 128, %s387, %s374
        $region52: #{tpu_custom_call.1} parent=47 // pred_fallthru
          _
        // Predicated region
        $region53: #{tpu_custom_call.1} parent=47 // pred_check
          %p390 = pneg %p87
        $region54: #{tpu_custom_call.1} parent=47 // pred_check_branch
          %392 = sbr.rel (%p390) target = $region56
        $region55: #{tpu_custom_call.1} parent=47 // pred_region
          %s393 = sand.u32 %s27, 1
          %s394 = scalar_lea.sflag [#allocation11], %s393
          %s395 = sand.u32 %s77, 1
          %s396 = smul.addr %s395, 8
          %s397 = scalar_lea.vmem [#allocation10], %s396
          %s399 = ssub.s32 128, 128
          %400 = vsyncadd %s394, %s399
          %s401 = smul.addr %s34, 128
          %s402 = scalar_lea.hbm %s1, %s401
          %s404 = sshll.u32 %s397, 4
          %s405 = int_to_ptr.vmem [resolvable:$true] %s404
          %407 = dma.hbm_to_vmem [thread:$0]  %s402, 128, %s405, %s394
        $region56: #{tpu_custom_call.1} parent=47 // pred_fallthru
          _
      $region48: #{tpu_custom_call.1} parent=5 // pred_fallthru
        _
      %p408 = scmp.le.s32.totalorder 1, %s27
      %p409 = scmp.lt.s32.totalorder %s27, 5
      %p410 = pnand %p408, %p409
      %p411 = pneg %p410
      // Predicated region
      $region57: #{tpu_custom_call.1} parent=5 // pred_check
        _
      $region58: #{tpu_custom_call.1} parent=5 // pred_check_branch
        %413 = sbr.rel (%p410) target = $region60
      $region59: #{tpu_custom_call.1} parent=5 // pred_region
        %s414 = ssub.s32 %s27, 1
        %s415 = sand.u32 %s54, 1
        %s416 = scalar_lea.sflag [#allocation8], %s415
        %s417 = sand.u32 %s54, 1
        %s418 = smul.addr %s417, 8
        %s419 = scalar_lea.vmem [#allocation7], %s418
        // Predicated region
        $region61: #{tpu_custom_call.1} parent=59 // pred_check
          %p420 = pneg %p67
        $region62: #{tpu_custom_call.1} parent=59 // pred_check_branch
          %422 = sbr.rel (%p420) target = $region64
        $region63: #{tpu_custom_call.1} parent=59 // pred_region
          %423 = dma.done %s416, 128
        $region64: #{tpu_custom_call.1} parent=59 // pred_fallthru
          _
        %s424 = sand.u32 %s32, 1
        %s425 = scalar_lea.sflag [#allocation11], %s424
        %s426 = sand.u32 %s80, 1
        %s427 = smul.addr %s426, 8
        %s428 = scalar_lea.vmem [#allocation10], %s427
        // Predicated region
        $region65: #{tpu_custom_call.1} parent=59 // pred_check
          %p429 = pneg %p93
        $region66: #{tpu_custom_call.1} parent=59 // pred_check_branch
          %431 = sbr.rel (%p429) target = $region68
        $region67: #{tpu_custom_call.1} parent=59 // pred_region
          %432 = dma.done %s425, 128
        $region68: #{tpu_custom_call.1} parent=59 // pred_fallthru
          _
        // Predicated region
        $region69: #{tpu_custom_call.1} parent=59 // pred_check
          %p433 = pneg %p198
        $region70: #{tpu_custom_call.1} parent=59 // pred_check_branch
          %435 = sbr.rel (%p433) target = $region72
        $region71: #{tpu_custom_call.1} parent=59 // pred_region
          %436 = dma.done [#allocation11], 512
        $region72: #{tpu_custom_call.1} parent=59 // pred_fallthru
          _
        // Predicated region
        $region73: #{tpu_custom_call.1} parent=59 // pred_check
          %p437 = pneg %p219
        $region74: #{tpu_custom_call.1} parent=59 // pred_check_branch
          %439 = sbr.rel (%p437) target = $region76
        $region75: #{tpu_custom_call.1} parent=59 // pred_region
          %440 = dma.done [#allocation14], 512
        $region76: #{tpu_custom_call.1} parent=59 // pred_fallthru
          _
        // Predicated region
        $region77: #{tpu_custom_call.1} parent=59 // pred_check
          %p441 = pneg %p240
        $region78: #{tpu_custom_call.1} parent=59 // pred_check_branch
          %443 = sbr.rel (%p441) target = $region80
        $region79: #{tpu_custom_call.1} parent=59 // pred_region
          %444 = dma.done [#allocation14], 512
        $region80: #{tpu_custom_call.1} parent=59 // pred_fallthru
          _
        // Predicated region
        $region81: #{tpu_custom_call.1} parent=59 // pred_check
          %p445 = pneg %p261
        $region82: #{tpu_custom_call.1} parent=59 // pred_check_branch
          %447 = sbr.rel (%p445) target = $region84
        $region83: #{tpu_custom_call.1} parent=59 // pred_region
          %448 = dma.done [#allocation17], 512
        $region84: #{tpu_custom_call.1} parent=59 // pred_fallthru
          _
        %s449 = sand.u32 %s54, 1
        %s450 = scalar_lea.sflag [#allocation8], %s449
        %s451 = sand.u32 %s54, 1
        %s452 = smul.addr %s451, 8
        %s453 = scalar_lea.vmem [#allocation7], %s452
        %p454 = pneg %p67
        %p455 = pneg %p64
        %s456 = sand.u32 %s32, 1
        %s457 = scalar_lea.sflag [#allocation11], %s456
        %s458 = sand.u32 %s80, 1
        %s459 = smul.addr %s458, 8
        %s460 = scalar_lea.vmem [#allocation10], %s459
        %p461 = pneg %p93
        %p462 = pneg %p90
        %p463 = pneg %p114
        %p464 = pneg %p111
        %p465 = pneg %p135
        %p466 = pneg %p132
        %p467 = pneg %p156
        %p468 = pneg %p153
        %p469 = pneg %p177
        %p470 = pneg %p174
        %p471 = pneg %p198
        %p472 = pneg %p195
        %p473 = pneg %p219
        %p474 = pneg %p216
        %p475 = pneg %p240
        %p476 = pneg %p237
        %p477 = pneg %p261
        %p478 = pneg %p258
        %p479 = pneg %p287
        %p480 = pneg %p284
        %s481 = sand.u32 %s274, 1
        %s482 = scalar_lea.sflag [#allocation9], %s481
        %s483 = sand.u32 %s274, 1
        %s484 = smul.addr %s483, 8
        %s485 = scalar_lea.vmem [#allocation18], %s484
        %p486 = scmp.eq.s32.totalorder %s37, 0
        // Predicated region
        $region85: #{tpu_custom_call.1} parent=59 // pred_check
          %p487 = pneg %p486
        $region86: #{tpu_custom_call.1} parent=59 // pred_check_branch
          %489 = sbr.rel (%p487) target = $region88
        $region87: #{tpu_custom_call.1} parent=59 // pred_region
          %v490 = vld [vmem:[%s428] sm:$0xff]
          %v491 = vld [vmem:[%s4] sm:$0x1]
          %v492 = vld [vmem:[%s5] sm:$0x1]
          %vm493 = vcmask 261120
          %v494 = vsel %vm493, %v490, 0.0
          %495 = vadd.xlane.f32.xlu0 %v494
          %v496 = vpop.xlane.xlu0 %495
          %v497 = vrcp.pop 32.0
          %v498 = vmul.f32 %v496, %v497
          %v499 = vsub.f32 %v490, %v498
          %v500 = vmul.f32 %v499, %v499
          %v501 = vsel %vm493, %v500, 0.0
          %502 = vadd.xlane.f32.xlu0 %v501
          %v503 = vpop.xlane.xlu0 %502
          %v504 = vmul.f32 %v503, %v497
          %v505 = vadd.f32 %v504, 1e-05
          %v506 = vrsqrt.pop %v505
          %v507 = vmul.f32 %v499, %v506
          %v509 = vlaneseq
          %v510 = vshrl.u32 %v509, 7
          %v511 = vsub.s32 0, %v510
          %v512 = vrot.slane %v491, %v511
          %v514 = vmul.f32 %v507, %v512
          %v516 = vlaneseq
          %v517 = vshrl.u32 %v516, 7
          %v518 = vsub.s32 0, %v517
          %v519 = vrot.slane %v492, %v518
          %v521 = vadd.f32 %v514, %v519
          %522 = vst.msk [vmem:[#allocation3] sm:$0xff] %vm493, %v521
          %v523 = vld [vmem:[#allocation12] sm:$0xff]
          %v524 = vld [vmem:[#allocation12 + $0x8] sm:$0xff]
          %v525 = vld [vmem:[#allocation12 + $0x10] sm:$0xff]
          %v526 = vld [vmem:[#allocation12 + $0x18] sm:$0xff]
          %v528 = vsel %vm493, %v521, 0
          %530 = vmatprep.subr.mxu0 0.0
          %531 = vmatpush1.msra.mxu0 0.0
          %532 = vmatprep.subr.mxu0 0.0
          %533 = vmatpush1.msra.mxu0 0.0
          %534 = vmatprep.subr.mxu0 0.0
          %535 = vmatpush1.msra.mxu0 0.0
          %536 = vmatprep.subr.mxu0 0.0
          %537 = vmatpush1.msra.mxu0 0.0
          %538 = vmatprep.subr.mxu0 0.0
          %539 = vmatpush1.msra.mxu0 0.0
          %540 = vmatprep.subr.mxu0 0.0
          %541 = vmatpush1.msra.mxu0 0.0
          %542 = vmatprep.subr.mxu0 0.0
          %543 = vmatpush1.msra.mxu0 0.0
          %544 = vmatprep.subr.mxu0 0.0
          %545 = vmatpush1.msra.mxu0 0.0
          %546 = vmatprep.subr.mxu0 0.0
          %547 = vmatpush1.msra.mxu0 0.0
          %548 = vmatprep.subr.mxu0 0.0
          %549 = vmatpush1.msra.mxu0 0.0
          %550 = vmatprep.subr.mxu0 0.0
          %551 = vmatpush1.msra.mxu0 0.0
          %552 = vmatprep.subr.mxu0 0.0
          %553 = vmatpush1.msra.mxu0 0.0
          %554 = vmatprep.subr.mxu0 0.0
          %555 = vmatpush1.msra.mxu0 %v526
          %556 = vmatprep.subr.mxu0 0.0
          %557 = vmatpush1.msra.mxu0 %v525
          %558 = vmatprep.subr.mxu0 0.0
          %559 = vmatpush1.msra.mxu0 %v524
          %560 = vmatprep.subr.mxu0 0.0
          %561 = vmatpush1.msra.mxu0 %v523
          %562 = vmatprep.subr.mxu0 0.0
          %563 = vmatpush2.msra.mxu0 0.0
          %564 = vmatprep.subr.mxu0 0.0
          %565 = vmatpush2.msra.mxu0 0.0
          %566 = vmatprep.subr.mxu0 0.0
          %567 = vmatpush2.msra.mxu0 0.0
          %568 = vmatprep.subr.mxu0 0.0
          %569 = vmatpush2.msra.mxu0 0.0
          %570 = vmatprep.subr.mxu0 0.0
          %571 = vmatpush2.msra.mxu0 0.0
          %572 = vmatprep.subr.mxu0 0.0
          %573 = vmatpush2.msra.mxu0 0.0
          %574 = vmatprep.subr.mxu0 0.0
          %575 = vmatpush2.msra.mxu0 0.0
          %576 = vmatprep.subr.mxu0 0.0
          %577 = vmatpush2.msra.mxu0 0.0
          %578 = vmatprep.subr.mxu0 0.0
          %579 = vmatpush2.msra.mxu0 0.0
          %580 = vmatprep.subr.mxu0 0.0
          %581 = vmatpush2.msra.mxu0 0.0
          %582 = vmatprep.subr.mxu0 0.0
          %583 = vmatpush2.msra.mxu0 0.0
          %584 = vmatprep.subr.mxu0 0.0
          %585 = vmatpush2.msra.mxu0 0.0
          %586 = vmatprep.subr.mxu0 0.0
          %587 = vmatpush2.msra.mxu0 0.0
          %588 = vmatprep.subr.mxu0 0.0
          %589 = vmatpush2.msra.mxu0 0.0
          %590 = vmatprep.subr.mxu0 0.0
          %591 = vmatpush2.msra.mxu0 0.0
          %592 = vmatprep.subr.mxu0 0.0
          %593 = vmatpush2.msra.mxu0 0.0
          %594 = vmatprep.mubr.f32.mxu0 0.0
          %595 = vmatmul.mubr.f32.gmra.mxu0 %v528
          %v596 = vpop.f32.mrf.mxu0
          %v597 = vadd.f32 0.0, %v596
          %v598 = vpop.f32.mrf.mxu0
          %599 = vdwg.mxu0
          %601 = vrot.lane.b32.xlu0 %v597, 120
          %v602 = vpop.permute.xlu0 %601
          %604 = vrot.lane.b32.xlu0 %v597, 112
          %v605 = vpop.permute.xlu0 %604
          %607 = vrot.lane.b32.xlu0 %v597, 104
          %v608 = vpop.permute.xlu0 %607
          %v610 = vcombine.low %v597, %v605
          %v611 = vcombine.high %v597, %v605
          %v613 = vunpack.c.l.s4 1983009808
          %v614 = vunpack.c.0.s8 %v613
          %v615 = vlaneseq
          %v616 = vshrl.u32 %v615, 7
          %v617 = vsub.s32 %v614, %v616
          %v618 = vrot.slane %v610, %v617
          %v620 = vunpack.c.l.s4 1983009808
          %v621 = vunpack.c.0.s8 %v620
          %v622 = vlaneseq
          %v623 = vshrl.u32 %v622, 7
          %v624 = vsub.s32 %v621, %v623
          %v625 = vrot.slane %v611, %v624
          %v626 = vcombine.low %v602, %v608
          %v627 = vcombine.high %v602, %v608
          %v629 = vunpack.c.l.s4 1983009808
          %v630 = vunpack.c.0.s8 %v629
          %v631 = vlaneseq
          %v632 = vshrl.u32 %v631, 7
          %v633 = vsub.s32 %v630, %v632
          %v634 = vrot.slane %v626, %v633
          %v636 = vunpack.c.l.s4 1983009808
          %v637 = vunpack.c.0.s8 %v636
          %v638 = vlaneseq
          %v639 = vshrl.u32 %v638, 7
          %v640 = vsub.s32 %v637, %v639
          %v641 = vrot.slane %v627, %v640
          %v642 = vcombine.low %v618, %v634
          %v643 = vcombine.high %v618, %v634
          %v645 = vunpack.c.l.s4 1934713408
          %v646 = vunpack.c.0.s8 %v645
          %v647 = vlaneseq
          %v648 = vshrl.u32 %v647, 7
          %v649 = vsub.s32 %v646, %v648
          %v650 = vrot.slane %v642, %v649
          %v652 = vunpack.c.l.s4 1934713408
          %v653 = vunpack.c.0.s8 %v652
          %v654 = vlaneseq
          %v655 = vshrl.u32 %v654, 7
          %v656 = vsub.s32 %v653, %v655
          %v657 = vrot.slane %v643, %v656
          %v658 = vcombine.low %v625, %v641
          %v659 = vcombine.high %v625, %v641
          %v661 = vunpack.c.l.s4 1934713408
          %v662 = vunpack.c.0.s8 %v661
          %v663 = vlaneseq
          %v664 = vshrl.u32 %v663, 7
          %v665 = vsub.s32 %v662, %v664
          %v666 = vrot.slane %v658, %v665
          %v668 = vunpack.c.l.s4 1934713408
          %v669 = vunpack.c.0.s8 %v668
          %v670 = vlaneseq
          %v671 = vshrl.u32 %v670, 7
          %v672 = vsub.s32 %v669, %v671
          %v673 = vrot.slane %v659, %v672
          %v674 = vcombine.high %v650, 0.0
          %v675 = vcombine.high %v657, 0.0
          %v676 = vcombine.high %v666, 0.0
          %v677 = vcombine.high %v673, 0.0
          %v678 = vcombine.low %v650, %v657
          %v680 = vunpack.c.l.s4 1983009808
          %v681 = vunpack.c.0.s8 %v680
          %v682 = vlaneseq
          %v683 = vshrl.u32 %v682, 7
          %v684 = vsub.s32 %v681, %v683
          %v685 = vrot.slane %v678, %v684
          %v686 = vcombine.low %v674, %v675
          %v688 = vunpack.c.l.s4 1983009808
          %v689 = vunpack.c.0.s8 %v688
          %v690 = vlaneseq
          %v691 = vshrl.u32 %v690, 7
          %v692 = vsub.s32 %v689, %v691
          %v693 = vrot.slane %v686, %v692
          %v694 = vcombine.low %v666, %v673
          %v696 = vunpack.c.l.s4 1983009808
          %v697 = vunpack.c.0.s8 %v696
          %v698 = vlaneseq
          %v699 = vshrl.u32 %v698, 7
          %v700 = vsub.s32 %v697, %v699
          %v701 = vrot.slane %v694, %v700
          %v702 = vcombine.low %v676, %v677
          %v704 = vunpack.c.l.s4 1983009808
          %v705 = vunpack.c.0.s8 %v704
          %v706 = vlaneseq
          %v707 = vshrl.u32 %v706, 7
          %v708 = vsub.s32 %v705, %v707
          %v709 = vrot.slane %v702, %v708
          %v710 = vcombine.low %v685, %v693
          %v711 = vcombine.high %v685, %v693
          %v713 = vunpack.c.l.s4 1934713408
          %v714 = vunpack.c.0.s8 %v713
          %v715 = vlaneseq
          %v716 = vshrl.u32 %v715, 7
          %v717 = vsub.s32 %v714, %v716
          %v718 = vrot.slane %v710, %v717
          %v720 = vunpack.c.l.s4 1934713408
          %v721 = vunpack.c.0.s8 %v720
          %v722 = vlaneseq
          %v723 = vshrl.u32 %v722, 7
          %v724 = vsub.s32 %v721, %v723
          %v725 = vrot.slane %v711, %v724
          %v726 = vcombine.low %v701, %v709
          %v727 = vcombine.high %v701, %v709
          %v729 = vunpack.c.l.s4 1934713408
          %v730 = vunpack.c.0.s8 %v729
          %v731 = vlaneseq
          %v732 = vshrl.u32 %v731, 7
          %v733 = vsub.s32 %v730, %v732
          %v734 = vrot.slane %v726, %v733
          %v736 = vunpack.c.l.s4 1934713408
          %v737 = vunpack.c.0.s8 %v736
          %v738 = vlaneseq
          %v739 = vshrl.u32 %v738, 7
          %v740 = vsub.s32 %v737, %v739
          %v741 = vrot.slane %v727, %v740
          %v742 = vcombine.low %v718, %v734
          %v743 = vcombine.high %v718, %v734
          %v744 = vcombine.low %v725, %v741
          %v745 = vcombine.high %v725, %v741
          %vm746 = vcmask 64512
          %747 = vst.msk [vmem:[#allocation2] sm:$0xff] %vm746, %v742
          %748 = vst.msk [vmem:[#allocation2 + $0x8] sm:$0xff] %vm746, %v743
          %749 = vst.msk [vmem:[#allocation2 + $0x10] sm:$0xff] %vm746, %v744
          %750 = vst.msk [vmem:[#allocation2 + $0x18] sm:$0xff] %vm746, %v745
          %vm751 = vcmask 7168
          %752 = vst.msk [vmem:[#allocation4] sm:$0xff] %vm751, -inf
          %753 = vst.msk [vmem:[#allocation4 + $0x8] sm:$0xff] %vm751, -inf
          %754 = vst.msk [vmem:[#allocation4 + $0x10] sm:$0xff] %vm751, -inf
          %755 = vst.msk [vmem:[#allocation4 + $0x18] sm:$0xff] %vm751, -inf
          %756 = vst.msk [vmem:[#allocation5] sm:$0xff] %vm751, 0.0
          %757 = vst.msk [vmem:[#allocation5 + $0x8] sm:$0xff] %vm751, 0.0
          %758 = vst.msk [vmem:[#allocation5 + $0x10] sm:$0xff] %vm751, 0.0
          %759 = vst.msk [vmem:[#allocation5 + $0x18] sm:$0xff] %vm751, 0.0
          %760 = vst.msk [vmem:[#allocation6] sm:$0xff] %vm746, 0.0
          %761 = vst.msk [vmem:[#allocation6 + $0x8] sm:$0xff] %vm746, 0.0
          %762 = vst.msk [vmem:[#allocation6 + $0x10] sm:$0xff] %vm746, 0.0
          %763 = vst.msk [vmem:[#allocation6 + $0x18] sm:$0xff] %vm746, 0.0
        $region88: #{tpu_custom_call.1} parent=59 // pred_fallthru
          _
        %v764 = vld [vmem:[%s419] sm:$0xff]
        %v765 = vld [vmem:[%s2] sm:$0x1]
        %v766 = vld [vmem:[%s3] sm:$0x1]
        %vm767 = vcmask 261120
        %v768 = vsel %vm767, %v764, 0.0
        %769 = vadd.xlane.f32.xlu0 %v768
        %v770 = vpop.xlane.xlu0 %769
        %v771 = vrcp.pop 32.0
        %v772 = vmul.f32 %v770, %v771
        %v773 = vsub.f32 %v764, %v772
        %v774 = vmul.f32 %v773, %v773
        %v775 = vsel %vm767, %v774, 0.0
        %776 = vadd.xlane.f32.xlu0 %v775
        %v777 = vpop.xlane.xlu0 %776
        %v778 = vmul.f32 %v777, %v771
        %v779 = vadd.f32 %v778, 1e-05
        %v780 = vrsqrt.pop %v779
        %v781 = vmul.f32 %v773, %v780
        %v783 = vlaneseq
        %v784 = vshrl.u32 %v783, 7
        %v785 = vsub.s32 0, %v784
        %v786 = vrot.slane %v765, %v785
        %v788 = vmul.f32 %v781, %v786
        %v790 = vlaneseq
        %v791 = vshrl.u32 %v790, 7
        %v792 = vsub.s32 0, %v791
        %v793 = vrot.slane %v766, %v792
        %v795 = vadd.f32 %v788, %v793
        %v796 = vld [vmem:[#allocation13] sm:$0xff]
        %v797 = vld [vmem:[#allocation13 + $0x8] sm:$0xff]
        %v798 = vld [vmem:[#allocation13 + $0x10] sm:$0xff]
        %v799 = vld [vmem:[#allocation13 + $0x18] sm:$0xff]
        %v801 = vsel %vm767, %v795, 0
        %803 = vmatprep.subr.mxu0 0.0
        %804 = vmatpush1.msra.mxu0 0.0
        %805 = vmatprep.subr.mxu0 0.0
        %806 = vmatpush1.msra.mxu0 0.0
        %807 = vmatprep.subr.mxu0 0.0
        %808 = vmatpush1.msra.mxu0 0.0
        %809 = vmatprep.subr.mxu0 0.0
        %810 = vmatpush1.msra.mxu0 0.0
        %811 = vmatprep.subr.mxu0 0.0
        %812 = vmatpush1.msra.mxu0 0.0
        %813 = vmatprep.subr.mxu0 0.0
        %814 = vmatpush1.msra.mxu0 0.0
        %815 = vmatprep.subr.mxu0 0.0
        %816 = vmatpush1.msra.mxu0 0.0
        %817 = vmatprep.subr.mxu0 0.0
        %818 = vmatpush1.msra.mxu0 0.0
        %819 = vmatprep.subr.mxu0 0.0
        %820 = vmatpush1.msra.mxu0 0.0
        %821 = vmatprep.subr.mxu0 0.0
        %822 = vmatpush1.msra.mxu0 0.0
        %823 = vmatprep.subr.mxu0 0.0
        %824 = vmatpush1.msra.mxu0 0.0
        %825 = vmatprep.subr.mxu0 0.0
        %826 = vmatpush1.msra.mxu0 0.0
        %827 = vmatprep.subr.mxu0 0.0
        %828 = vmatpush1.msra.mxu0 %v799
        %829 = vmatprep.subr.mxu0 0.0
        %830 = vmatpush1.msra.mxu0 %v798
        %831 = vmatprep.subr.mxu0 0.0
        %832 = vmatpush1.msra.mxu0 %v797
        %833 = vmatprep.subr.mxu0 0.0
        %834 = vmatpush1.msra.mxu0 %v796
        %835 = vmatprep.subr.mxu0 0.0
        %836 = vmatpush2.msra.mxu0 0.0
        %837 = vmatprep.subr.mxu0 0.0
        %838 = vmatpush2.msra.mxu0 0.0
        %839 = vmatprep.subr.mxu0 0.0
        %840 = vmatpush2.msra.mxu0 0.0
        %841 = vmatprep.subr.mxu0 0.0
        %842 = vmatpush2.msra.mxu0 0.0
        %843 = vmatprep.subr.mxu0 0.0
        %844 = vmatpush2.msra.mxu0 0.0
        %845 = vmatprep.subr.mxu0 0.0
        %846 = vmatpush2.msra.mxu0 0.0
        %847 = vmatprep.subr.mxu0 0.0
        %848 = vmatpush2.msra.mxu0 0.0
        %849 = vmatprep.subr.mxu0 0.0
        %850 = vmatpush2.msra.mxu0 0.0
        %851 = vmatprep.subr.mxu0 0.0
        %852 = vmatpush2.msra.mxu0 0.0
        %853 = vmatprep.subr.mxu0 0.0
        %854 = vmatpush2.msra.mxu0 0.0
        %855 = vmatprep.subr.mxu0 0.0
        %856 = vmatpush2.msra.mxu0 0.0
        %857 = vmatprep.subr.mxu0 0.0
        %858 = vmatpush2.msra.mxu0 0.0
        %859 = vmatprep.subr.mxu0 0.0
        %860 = vmatpush2.msra.mxu0 0.0
        %861 = vmatprep.subr.mxu0 0.0
        %862 = vmatpush2.msra.mxu0 0.0
        %863 = vmatprep.subr.mxu0 0.0
        %864 = vmatpush2.msra.mxu0 0.0
        %865 = vmatprep.subr.mxu0 0.0
        %866 = vmatpush2.msra.mxu0 0.0
        %867 = vmatprep.mubr.f32.mxu0 0.0
        %868 = vmatmul.mubr.f32.gmra.mxu0 %v801
        %v869 = vpop.f32.mrf.mxu0
        %v870 = vadd.f32 0.0, %v869
        %v871 = vpop.f32.mrf.mxu0
        %872 = vdwg.mxu0
        %v873 = vld [vmem:[#allocation15] sm:$0xff]
        %v874 = vld [vmem:[#allocation15 + $0x8] sm:$0xff]
        %v875 = vld [vmem:[#allocation15 + $0x10] sm:$0xff]
        %v876 = vld [vmem:[#allocation15 + $0x18] sm:$0xff]
        %877 = vmatprep.subr.mxu0 0.0
        %878 = vmatpush1.msra.mxu0 0.0
        %879 = vmatprep.subr.mxu0 0.0
        %880 = vmatpush1.msra.mxu0 0.0
        %881 = vmatprep.subr.mxu0 0.0
        %882 = vmatpush1.msra.mxu0 0.0
        %883 = vmatprep.subr.mxu0 0.0
        %884 = vmatpush1.msra.mxu0 0.0
        %885 = vmatprep.subr.mxu0 0.0
        %886 = vmatpush1.msra.mxu0 0.0
        %887 = vmatprep.subr.mxu0 0.0
        %888 = vmatpush1.msra.mxu0 0.0
        %889 = vmatprep.subr.mxu0 0.0
        %890 = vmatpush1.msra.mxu0 0.0
        %891 = vmatprep.subr.mxu0 0.0
        %892 = vmatpush1.msra.mxu0 0.0
        %893 = vmatprep.subr.mxu0 0.0
        %894 = vmatpush1.msra.mxu0 0.0
        %895 = vmatprep.subr.mxu0 0.0
        %896 = vmatpush1.msra.mxu0 0.0
        %897 = vmatprep.subr.mxu0 0.0
        %898 = vmatpush1.msra.mxu0 0.0
        %899 = vmatprep.subr.mxu0 0.0
        %900 = vmatpush1.msra.mxu0 0.0
        %901 = vmatprep.subr.mxu0 0.0
        %902 = vmatpush1.msra.mxu0 %v876
        %903 = vmatprep.subr.mxu0 0.0
        %904 = vmatpush1.msra.mxu0 %v875
        %905 = vmatprep.subr.mxu0 0.0
        %906 = vmatpush1.msra.mxu0 %v874
        %907 = vmatprep.subr.mxu0 0.0
        %908 = vmatpush1.msra.mxu0 %v873
        %909 = vmatprep.subr.mxu0 0.0
        %910 = vmatpush2.msra.mxu0 0.0
        %911 = vmatprep.subr.mxu0 0.0
        %912 = vmatpush2.msra.mxu0 0.0
        %913 = vmatprep.subr.mxu0 0.0
        %914 = vmatpush2.msra.mxu0 0.0
        %915 = vmatprep.subr.mxu0 0.0
        %916 = vmatpush2.msra.mxu0 0.0
        %917 = vmatprep.subr.mxu0 0.0
        %918 = vmatpush2.msra.mxu0 0.0
        %919 = vmatprep.subr.mxu0 0.0
        %920 = vmatpush2.msra.mxu0 0.0
        %921 = vmatprep.subr.mxu0 0.0
        %922 = vmatpush2.msra.mxu0 0.0
        %923 = vmatprep.subr.mxu0 0.0
        %924 = vmatpush2.msra.mxu0 0.0
        %925 = vmatprep.subr.mxu0 0.0
        %926 = vmatpush2.msra.mxu0 0.0
        %927 = vmatprep.subr.mxu0 0.0
        %928 = vmatpush2.msra.mxu0 0.0
        %929 = vmatprep.subr.mxu0 0.0
        %930 = vmatpush2.msra.mxu0 0.0
        %931 = vmatprep.subr.mxu0 0.0
        %932 = vmatpush2.msra.mxu0 0.0
        %933 = vmatprep.subr.mxu0 0.0
        %934 = vmatpush2.msra.mxu0 0.0
        %935 = vmatprep.subr.mxu0 0.0
        %936 = vmatpush2.msra.mxu0 0.0
        %937 = vmatprep.subr.mxu0 0.0
        %938 = vmatpush2.msra.mxu0 0.0
        %939 = vmatprep.subr.mxu0 0.0
        %940 = vmatpush2.msra.mxu0 0.0
        %941 = vmatprep.mubr.f32.mxu0 0.0
        %942 = vmatmul.mubr.f32.gmra.mxu0 %v801
        %v943 = vpop.f32.mrf.mxu0
        %v944 = vadd.f32 0.0, %v943
        %v945 = vpop.f32.mrf.mxu0
        %946 = vdwg.mxu0
        %948 = vrot.lane.b32.xlu0 %v870, 120
        %v949 = vpop.permute.xlu0 %948
        %951 = vrot.lane.b32.xlu0 %v870, 112
        %v952 = vpop.permute.xlu0 %951
        %954 = vrot.lane.b32.xlu0 %v870, 104
        %v955 = vpop.permute.xlu0 %954
        %v957 = vcombine.low %v870, %v952
        %v958 = vcombine.high %v870, %v952
        %v960 = vunpack.c.l.s4 1983009808
        %v961 = vunpack.c.0.s8 %v960
        %v962 = vlaneseq
        %v963 = vshrl.u32 %v962, 7
        %v964 = vsub.s32 %v961, %v963
        %v965 = vrot.slane %v957, %v964
        %v967 = vunpack.c.l.s4 1983009808
        %v968 = vunpack.c.0.s8 %v967
        %v969 = vlaneseq
        %v970 = vshrl.u32 %v969, 7
        %v971 = vsub.s32 %v968, %v970
        %v972 = vrot.slane %v958, %v971
        %v973 = vcombine.low %v949, %v955
        %v974 = vcombine.high %v949, %v955
        %v976 = vunpack.c.l.s4 1983009808
        %v977 = vunpack.c.0.s8 %v976
        %v978 = vlaneseq
        %v979 = vshrl.u32 %v978, 7
        %v980 = vsub.s32 %v977, %v979
        %v981 = vrot.slane %v973, %v980
        %v983 = vunpack.c.l.s4 1983009808
        %v984 = vunpack.c.0.s8 %v983
        %v985 = vlaneseq
        %v986 = vshrl.u32 %v985, 7
        %v987 = vsub.s32 %v984, %v986
        %v988 = vrot.slane %v974, %v987
        %v989 = vcombine.low %v965, %v981
        %v990 = vcombine.high %v965, %v981
        %v992 = vunpack.c.l.s4 1934713408
        %v993 = vunpack.c.0.s8 %v992
        %v994 = vlaneseq
        %v995 = vshrl.u32 %v994, 7
        %v996 = vsub.s32 %v993, %v995
        %v997 = vrot.slane %v989, %v996
        %v999 = vunpack.c.l.s4 1934713408
        %v1000 = vunpack.c.0.s8 %v999
        %v1001 = vlaneseq
        %v1002 = vshrl.u32 %v1001, 7
        %v1003 = vsub.s32 %v1000, %v1002
        %v1004 = vrot.slane %v990, %v1003
        %v1005 = vcombine.low %v972, %v988
        %v1006 = vcombine.high %v972, %v988
        %v1008 = vunpack.c.l.s4 1934713408
        %v1009 = vunpack.c.0.s8 %v1008
        %v1010 = vlaneseq
        %v1011 = vshrl.u32 %v1010, 7
        %v1012 = vsub.s32 %v1009, %v1011
        %v1013 = vrot.slane %v1005, %v1012
        %v1015 = vunpack.c.l.s4 1934713408
        %v1016 = vunpack.c.0.s8 %v1015
        %v1017 = vlaneseq
        %v1018 = vshrl.u32 %v1017, 7
        %v1019 = vsub.s32 %v1016, %v1018
        %v1020 = vrot.slane %v1006, %v1019
        %v1021 = vcombine.high %v997, 0.0
        %v1022 = vcombine.high %v1004, 0.0
        %v1023 = vcombine.high %v1013, 0.0
        %v1024 = vcombine.high %v1020, 0.0
        %v1025 = vcombine.low %v997, %v1004
        %v1027 = vunpack.c.l.s4 1983009808
        %v1028 = vunpack.c.0.s8 %v1027
        %v1029 = vlaneseq
        %v1030 = vshrl.u32 %v1029, 7
        %v1031 = vsub.s32 %v1028, %v1030
        %v1032 = vrot.slane %v1025, %v1031
        %v1033 = vcombine.low %v1021, %v1022
        %v1035 = vunpack.c.l.s4 1983009808
        %v1036 = vunpack.c.0.s8 %v1035
        %v1037 = vlaneseq
        %v1038 = vshrl.u32 %v1037, 7
        %v1039 = vsub.s32 %v1036, %v1038
        %v1040 = vrot.slane %v1033, %v1039
        %v1041 = vcombine.low %v1013, %v1020
        %v1043 = vunpack.c.l.s4 1983009808
        %v1044 = vunpack.c.0.s8 %v1043
        %v1045 = vlaneseq
        %v1046 = vshrl.u32 %v1045, 7
        %v1047 = vsub.s32 %v1044, %v1046
        %v1048 = vrot.slane %v1041, %v1047
        %v1049 = vcombine.low %v1023, %v1024
        %v1051 = vunpack.c.l.s4 1983009808
        %v1052 = vunpack.c.0.s8 %v1051
        %v1053 = vlaneseq
        %v1054 = vshrl.u32 %v1053, 7
        %v1055 = vsub.s32 %v1052, %v1054
        %v1056 = vrot.slane %v1049, %v1055
        %v1057 = vcombine.low %v1032, %v1040
        %v1058 = vcombine.high %v1032, %v1040
        %v1060 = vunpack.c.l.s4 1934713408
        %v1061 = vunpack.c.0.s8 %v1060
        %v1062 = vlaneseq
        %v1063 = vshrl.u32 %v1062, 7
        %v1064 = vsub.s32 %v1061, %v1063
        %v1065 = vrot.slane %v1057, %v1064
        %v1067 = vunpack.c.l.s4 1934713408
        %v1068 = vunpack.c.0.s8 %v1067
        %v1069 = vlaneseq
        %v1070 = vshrl.u32 %v1069, 7
        %v1071 = vsub.s32 %v1068, %v1070
        %v1072 = vrot.slane %v1058, %v1071
        %v1073 = vcombine.low %v1048, %v1056
        %v1074 = vcombine.high %v1048, %v1056
        %v1076 = vunpack.c.l.s4 1934713408
        %v1077 = vunpack.c.0.s8 %v1076
        %v1078 = vlaneseq
        %v1079 = vshrl.u32 %v1078, 7
        %v1080 = vsub.s32 %v1077, %v1079
        %v1081 = vrot.slane %v1073, %v1080
        %v1083 = vunpack.c.l.s4 1934713408
        %v1084 = vunpack.c.0.s8 %v1083
        %v1085 = vlaneseq
        %v1086 = vshrl.u32 %v1085, 7
        %v1087 = vsub.s32 %v1084, %v1086
        %v1088 = vrot.slane %v1074, %v1087
        %v1089 = vcombine.low %v1065, %v1081
        %v1090 = vcombine.high %v1065, %v1081
        %v1091 = vcombine.low %v1072, %v1088
        %v1092 = vcombine.high %v1072, %v1088
        %1094 = vrot.lane.b32.xlu0 %v944, 120
        %v1095 = vpop.permute.xlu0 %1094
        %1097 = vrot.lane.b32.xlu0 %v944, 112
        %v1098 = vpop.permute.xlu0 %1097
        %1100 = vrot.lane.b32.xlu0 %v944, 104
        %v1101 = vpop.permute.xlu0 %1100
        %v1103 = vcombine.low %v944, %v1098
        %v1104 = vcombine.high %v944, %v1098
        %v1106 = vunpack.c.l.s4 1983009808
        %v1107 = vunpack.c.0.s8 %v1106
        %v1108 = vlaneseq
        %v1109 = vshrl.u32 %v1108, 7
        %v1110 = vsub.s32 %v1107, %v1109
        %v1111 = vrot.slane %v1103, %v1110
        %v1113 = vunpack.c.l.s4 1983009808
        %v1114 = vunpack.c.0.s8 %v1113
        %v1115 = vlaneseq
        %v1116 = vshrl.u32 %v1115, 7
        %v1117 = vsub.s32 %v1114, %v1116
        %v1118 = vrot.slane %v1104, %v1117
        %v1119 = vcombine.low %v1095, %v1101
        %v1120 = vcombine.high %v1095, %v1101
        %v1122 = vunpack.c.l.s4 1983009808
        %v1123 = vunpack.c.0.s8 %v1122
        %v1124 = vlaneseq
        %v1125 = vshrl.u32 %v1124, 7
        %v1126 = vsub.s32 %v1123, %v1125
        %v1127 = vrot.slane %v1119, %v1126
        %v1129 = vunpack.c.l.s4 1983009808
        %v1130 = vunpack.c.0.s8 %v1129
        %v1131 = vlaneseq
        %v1132 = vshrl.u32 %v1131, 7
        %v1133 = vsub.s32 %v1130, %v1132
        %v1134 = vrot.slane %v1120, %v1133
        %v1135 = vcombine.low %v1111, %v1127
        %v1136 = vcombine.high %v1111, %v1127
        %v1138 = vunpack.c.l.s4 1934713408
        %v1139 = vunpack.c.0.s8 %v1138
        %v1140 = vlaneseq
        %v1141 = vshrl.u32 %v1140, 7
        %v1142 = vsub.s32 %v1139, %v1141
        %v1143 = vrot.slane %v1135, %v1142
        %v1145 = vunpack.c.l.s4 1934713408
        %v1146 = vunpack.c.0.s8 %v1145
        %v1147 = vlaneseq
        %v1148 = vshrl.u32 %v1147, 7
        %v1149 = vsub.s32 %v1146, %v1148
        %v1150 = vrot.slane %v1136, %v1149
        %v1151 = vcombine.low %v1118, %v1134
        %v1152 = vcombine.high %v1118, %v1134
        %v1154 = vunpack.c.l.s4 1934713408
        %v1155 = vunpack.c.0.s8 %v1154
        %v1156 = vlaneseq
        %v1157 = vshrl.u32 %v1156, 7
        %v1158 = vsub.s32 %v1155, %v1157
        %v1159 = vrot.slane %v1151, %v1158
        %v1161 = vunpack.c.l.s4 1934713408
        %v1162 = vunpack.c.0.s8 %v1161
        %v1163 = vlaneseq
        %v1164 = vshrl.u32 %v1163, 7
        %v1165 = vsub.s32 %v1162, %v1164
        %v1166 = vrot.slane %v1152, %v1165
        %v1167 = vcombine.high %v1143, 0.0
        %v1168 = vcombine.high %v1150, 0.0
        %v1169 = vcombine.high %v1159, 0.0
        %v1170 = vcombine.high %v1166, 0.0
        %v1171 = vcombine.low %v1143, %v1150
        %v1173 = vunpack.c.l.s4 1983009808
        %v1174 = vunpack.c.0.s8 %v1173
        %v1175 = vlaneseq
        %v1176 = vshrl.u32 %v1175, 7
        %v1177 = vsub.s32 %v1174, %v1176
        %v1178 = vrot.slane %v1171, %v1177
        %v1179 = vcombine.low %v1167, %v1168
        %v1181 = vunpack.c.l.s4 1983009808
        %v1182 = vunpack.c.0.s8 %v1181
        %v1183 = vlaneseq
        %v1184 = vshrl.u32 %v1183, 7
        %v1185 = vsub.s32 %v1182, %v1184
        %v1186 = vrot.slane %v1179, %v1185
        %v1187 = vcombine.low %v1159, %v1166
        %v1189 = vunpack.c.l.s4 1983009808
        %v1190 = vunpack.c.0.s8 %v1189
        %v1191 = vlaneseq
        %v1192 = vshrl.u32 %v1191, 7
        %v1193 = vsub.s32 %v1190, %v1192
        %v1194 = vrot.slane %v1187, %v1193
        %v1195 = vcombine.low %v1169, %v1170
        %v1197 = vunpack.c.l.s4 1983009808
        %v1198 = vunpack.c.0.s8 %v1197
        %v1199 = vlaneseq
        %v1200 = vshrl.u32 %v1199, 7
        %v1201 = vsub.s32 %v1198, %v1200
        %v1202 = vrot.slane %v1195, %v1201
        %v1203 = vcombine.low %v1178, %v1186
        %v1204 = vcombine.high %v1178, %v1186
        %v1206 = vunpack.c.l.s4 1934713408
        %v1207 = vunpack.c.0.s8 %v1206
        %v1208 = vlaneseq
        %v1209 = vshrl.u32 %v1208, 7
        %v1210 = vsub.s32 %v1207, %v1209
        %v1211 = vrot.slane %v1203, %v1210
        %v1213 = vunpack.c.l.s4 1934713408
        %v1214 = vunpack.c.0.s8 %v1213
        %v1215 = vlaneseq
        %v1216 = vshrl.u32 %v1215, 7
        %v1217 = vsub.s32 %v1214, %v1216
        %v1218 = vrot.slane %v1204, %v1217
        %v1219 = vcombine.low %v1194, %v1202
        %v1220 = vcombine.high %v1194, %v1202
        %v1222 = vunpack.c.l.s4 1934713408
        %v1223 = vunpack.c.0.s8 %v1222
        %v1224 = vlaneseq
        %v1225 = vshrl.u32 %v1224, 7
        %v1226 = vsub.s32 %v1223, %v1225
        %v1227 = vrot.slane %v1219, %v1226
        %v1229 = vunpack.c.l.s4 1934713408
        %v1230 = vunpack.c.0.s8 %v1229
        %v1231 = vlaneseq
        %v1232 = vshrl.u32 %v1231, 7
        %v1233 = vsub.s32 %v1230, %v1232
        %v1234 = vrot.slane %v1220, %v1233
        %v1235 = vcombine.low %v1211, %v1227
        %v1236 = vcombine.high %v1211, %v1227
        %v1237 = vcombine.low %v1218, %v1234
        %v1238 = vcombine.high %v1218, %v1234
        %v1239 = vld [vmem:[#allocation2] sm:$0xff]
        %v1240 = vld [vmem:[#allocation2 + $0x8] sm:$0xff]
        %v1241 = vld [vmem:[#allocation2 + $0x10] sm:$0xff]
        %v1242 = vld [vmem:[#allocation2 + $0x18] sm:$0xff]
        %vm1243 = vcmask 64512
        %v1245 = vsel %vm1243, %v1239, 0
        %v1248 = vsel %vm1243, %v1089, 0
        %1250 = vmatprep.subr.mxu0 0.0
        %1251 = vmatpush1.xpose.msra.mxu0 0.0
        %1252 = vmatprep.subr.mxu0 0.0
        %1253 = vmatpush1.xpose.msra.mxu0 0.0
        %1254 = vmatprep.subr.mxu0 0.0
        %1255 = vmatpush1.xpose.msra.mxu0 0.0
        %1256 = vmatprep.subr.mxu0 0.0
        %1257 = vmatpush1.xpose.msra.mxu0 0.0
        %1258 = vmatprep.subr.mxu0 0.0
        %1259 = vmatpush1.xpose.msra.mxu0 0.0
        %1260 = vmatprep.subr.mxu0 0.0
        %1261 = vmatpush1.xpose.msra.mxu0 0.0
        %1262 = vmatprep.subr.mxu0 0.0
        %1263 = vmatpush1.xpose.msra.mxu0 0.0
        %1264 = vmatprep.subr.mxu0 0.0
        %1265 = vmatpush1.xpose.msra.mxu0 0.0
        %1266 = vmatprep.subr.mxu0 0.0
        %1267 = vmatpush1.xpose.msra.mxu0 0.0
        %1268 = vmatprep.subr.mxu0 0.0
        %1269 = vmatpush1.xpose.msra.mxu0 0.0
        %1270 = vmatprep.subr.mxu0 0.0
        %1271 = vmatpush1.xpose.msra.mxu0 0.0
        %1272 = vmatprep.subr.mxu0 0.0
        %1273 = vmatpush1.xpose.msra.mxu0 0.0
        %1274 = vmatprep.subr.mxu0 0.0
        %1275 = vmatpush1.xpose.msra.mxu0 0.0
        %1276 = vmatprep.subr.mxu0 0.0
        %1277 = vmatpush1.xpose.msra.mxu0 0.0
        %1278 = vmatprep.subr.mxu0 0.0
        %1279 = vmatpush1.xpose.msra.mxu0 0.0
        %1280 = vmatprep.subr.mxu0 0.0
        %1281 = vmatpush1.xpose.msra.mxu0 %v1248
        %1282 = vmatprep.subr.mxu0 0.0
        %1283 = vmatpush2.xpose.msra.mxu0 0.0
        %1284 = vmatprep.subr.mxu0 0.0
        %1285 = vmatpush2.xpose.msra.mxu0 0.0
        %1286 = vmatprep.subr.mxu0 0.0
        %1287 = vmatpush2.xpose.msra.mxu0 0.0
        %1288 = vmatprep.subr.mxu0 0.0
        %1289 = vmatpush2.xpose.msra.mxu0 0.0
        %1290 = vmatprep.subr.mxu0 0.0
        %1291 = vmatpush2.xpose.msra.mxu0 0.0
        %1292 = vmatprep.subr.mxu0 0.0
        %1293 = vmatpush2.xpose.msra.mxu0 0.0
        %1294 = vmatprep.subr.mxu0 0.0
        %1295 = vmatpush2.xpose.msra.mxu0 0.0
        %1296 = vmatprep.subr.mxu0 0.0
        %1297 = vmatpush2.xpose.msra.mxu0 0.0
        %1298 = vmatprep.subr.mxu0 0.0
        %1299 = vmatpush2.xpose.msra.mxu0 0.0
        %1300 = vmatprep.subr.mxu0 0.0
        %1301 = vmatpush2.xpose.msra.mxu0 0.0
        %1302 = vmatprep.subr.mxu0 0.0
        %1303 = vmatpush2.xpose.msra.mxu0 0.0
        %1304 = vmatprep.subr.mxu0 0.0
        %1305 = vmatpush2.xpose.msra.mxu0 0.0
        %1306 = vmatprep.subr.mxu0 0.0
        %1307 = vmatpush2.xpose.msra.mxu0 0.0
        %1308 = vmatprep.subr.mxu0 0.0
        %1309 = vmatpush2.xpose.msra.mxu0 0.0
        %1310 = vmatprep.subr.mxu0 0.0
        %1311 = vmatpush2.xpose.msra.mxu0 0.0
        %1312 = vmatprep.subr.mxu0 0.0
        %1313 = vmatpush2.xpose.msra.mxu0 0.0
        %1314 = vmatprep.mubr.f32.mxu0 0.0
        %1315 = vmatmul.mubr.f32.gmra.mxu0 %v1245
        %v1316 = vpop.f32.mrf.mxu0
        %v1317 = vadd.f32 0.0, %v1316
        %v1318 = vpop.f32.mrf.mxu0
        %1319 = vdwg.mxu0
        %v1321 = vsel %vm1243, %v1240, 0
        %v1324 = vsel %vm1243, %v1090, 0
        %1326 = vmatprep.subr.mxu0 0.0
        %1327 = vmatpush1.xpose.msra.mxu0 0.0
        %1328 = vmatprep.subr.mxu0 0.0
        %1329 = vmatpush1.xpose.msra.mxu0 0.0
        %1330 = vmatprep.subr.mxu0 0.0
        %1331 = vmatpush1.xpose.msra.mxu0 0.0
        %1332 = vmatprep.subr.mxu0 0.0
        %1333 = vmatpush1.xpose.msra.mxu0 0.0
        %1334 = vmatprep.subr.mxu0 0.0
        %1335 = vmatpush1.xpose.msra.mxu0 0.0
        %1336 = vmatprep.subr.mxu0 0.0
        %1337 = vmatpush1.xpose.msra.mxu0 0.0
        %1338 = vmatprep.subr.mxu0 0.0
        %1339 = vmatpush1.xpose.msra.mxu0 0.0
        %1340 = vmatprep.subr.mxu0 0.0
        %1341 = vmatpush1.xpose.msra.mxu0 0.0
        %1342 = vmatprep.subr.mxu0 0.0
        %1343 = vmatpush1.xpose.msra.mxu0 0.0
        %1344 = vmatprep.subr.mxu0 0.0
        %1345 = vmatpush1.xpose.msra.mxu0 0.0
        %1346 = vmatprep.subr.mxu0 0.0
        %1347 = vmatpush1.xpose.msra.mxu0 0.0
        %1348 = vmatprep.subr.mxu0 0.0
        %1349 = vmatpush1.xpose.msra.mxu0 0.0
        %1350 = vmatprep.subr.mxu0 0.0
        %1351 = vmatpush1.xpose.msra.mxu0 0.0
        %1352 = vmatprep.subr.mxu0 0.0
        %1353 = vmatpush1.xpose.msra.mxu0 0.0
        %1354 = vmatprep.subr.mxu0 0.0
        %1355 = vmatpush1.xpose.msra.mxu0 0.0
        %1356 = vmatprep.subr.mxu0 0.0
        %1357 = vmatpush1.xpose.msra.mxu0 %v1324
        %1358 = vmatprep.subr.mxu0 0.0
        %1359 = vmatpush2.xpose.msra.mxu0 0.0
        %1360 = vmatprep.subr.mxu0 0.0
        %1361 = vmatpush2.xpose.msra.mxu0 0.0
        %1362 = vmatprep.subr.mxu0 0.0
        %1363 = vmatpush2.xpose.msra.mxu0 0.0
        %1364 = vmatprep.subr.mxu0 0.0
        %1365 = vmatpush2.xpose.msra.mxu0 0.0
        %1366 = vmatprep.subr.mxu0 0.0
        %1367 = vmatpush2.xpose.msra.mxu0 0.0
        %1368 = vmatprep.subr.mxu0 0.0
        %1369 = vmatpush2.xpose.msra.mxu0 0.0
        %1370 = vmatprep.subr.mxu0 0.0
        %1371 = vmatpush2.xpose.msra.mxu0 0.0
        %1372 = vmatprep.subr.mxu0 0.0
        %1373 = vmatpush2.xpose.msra.mxu0 0.0
        %1374 = vmatprep.subr.mxu0 0.0
        %1375 = vmatpush2.xpose.msra.mxu0 0.0
        %1376 = vmatprep.subr.mxu0 0.0
        %1377 = vmatpush2.xpose.msra.mxu0 0.0
        %1378 = vmatprep.subr.mxu0 0.0
        %1379 = vmatpush2.xpose.msra.mxu0 0.0
        %1380 = vmatprep.subr.mxu0 0.0
        %1381 = vmatpush2.xpose.msra.mxu0 0.0
        %1382 = vmatprep.subr.mxu0 0.0
        %1383 = vmatpush2.xpose.msra.mxu0 0.0
        %1384 = vmatprep.subr.mxu0 0.0
        %1385 = vmatpush2.xpose.msra.mxu0 0.0
        %1386 = vmatprep.subr.mxu0 0.0
        %1387 = vmatpush2.xpose.msra.mxu0 0.0
        %1388 = vmatprep.subr.mxu0 0.0
        %1389 = vmatpush2.xpose.msra.mxu0 0.0
        %1390 = vmatprep.mubr.f32.mxu0 0.0
        %1391 = vmatmul.mubr.f32.gmra.mxu0 %v1321
        %v1392 = vpop.f32.mrf.mxu0
        %v1393 = vadd.f32 0.0, %v1392
        %v1394 = vpop.f32.mrf.mxu0
        %1395 = vdwg.mxu0
        %v1397 = vsel %vm1243, %v1241, 0
        %v1400 = vsel %vm1243, %v1091, 0
        %1402 = vmatprep.subr.mxu0 0.0
        %1403 = vmatpush1.xpose.msra.mxu0 0.0
        %1404 = vmatprep.subr.mxu0 0.0
        %1405 = vmatpush1.xpose.msra.mxu0 0.0
        %1406 = vmatprep.subr.mxu0 0.0
        %1407 = vmatpush1.xpose.msra.mxu0 0.0
        %1408 = vmatprep.subr.mxu0 0.0
        %1409 = vmatpush1.xpose.msra.mxu0 0.0
        %1410 = vmatprep.subr.mxu0 0.0
        %1411 = vmatpush1.xpose.msra.mxu0 0.0
        %1412 = vmatprep.subr.mxu0 0.0
        %1413 = vmatpush1.xpose.msra.mxu0 0.0
        %1414 = vmatprep.subr.mxu0 0.0
        %1415 = vmatpush1.xpose.msra.mxu0 0.0
        %1416 = vmatprep.subr.mxu0 0.0
        %1417 = vmatpush1.xpose.msra.mxu0 0.0
        %1418 = vmatprep.subr.mxu0 0.0
        %1419 = vmatpush1.xpose.msra.mxu0 0.0
        %1420 = vmatprep.subr.mxu0 0.0
        %1421 = vmatpush1.xpose.msra.mxu0 0.0
        %1422 = vmatprep.subr.mxu0 0.0
        %1423 = vmatpush1.xpose.msra.mxu0 0.0
        %1424 = vmatprep.subr.mxu0 0.0
        %1425 = vmatpush1.xpose.msra.mxu0 0.0
        %1426 = vmatprep.subr.mxu0 0.0
        %1427 = vmatpush1.xpose.msra.mxu0 0.0
        %1428 = vmatprep.subr.mxu0 0.0
        %1429 = vmatpush1.xpose.msra.mxu0 0.0
        %1430 = vmatprep.subr.mxu0 0.0
        %1431 = vmatpush1.xpose.msra.mxu0 0.0
        %1432 = vmatprep.subr.mxu0 0.0
        %1433 = vmatpush1.xpose.msra.mxu0 %v1400
        %1434 = vmatprep.subr.mxu0 0.0
        %1435 = vmatpush2.xpose.msra.mxu0 0.0
        %1436 = vmatprep.subr.mxu0 0.0
        %1437 = vmatpush2.xpose.msra.mxu0 0.0
        %1438 = vmatprep.subr.mxu0 0.0
        %1439 = vmatpush2.xpose.msra.mxu0 0.0
        %1440 = vmatprep.subr.mxu0 0.0
        %1441 = vmatpush2.xpose.msra.mxu0 0.0
        %1442 = vmatprep.subr.mxu0 0.0
        %1443 = vmatpush2.xpose.msra.mxu0 0.0
        %1444 = vmatprep.subr.mxu0 0.0
        %1445 = vmatpush2.xpose.msra.mxu0 0.0
        %1446 = vmatprep.subr.mxu0 0.0
        %1447 = vmatpush2.xpose.msra.mxu0 0.0
        %1448 = vmatprep.subr.mxu0 0.0
        %1449 = vmatpush2.xpose.msra.mxu0 0.0
        %1450 = vmatprep.subr.mxu0 0.0
        %1451 = vmatpush2.xpose.msra.mxu0 0.0
        %1452 = vmatprep.subr.mxu0 0.0
        %1453 = vmatpush2.xpose.msra.mxu0 0.0
        %1454 = vmatprep.subr.mxu0 0.0
        %1455 = vmatpush2.xpose.msra.mxu0 0.0
        %1456 = vmatprep.subr.mxu0 0.0
        %1457 = vmatpush2.xpose.msra.mxu0 0.0
        %1458 = vmatprep.subr.mxu0 0.0
        %1459 = vmatpush2.xpose.msra.mxu0 0.0
        %1460 = vmatprep.subr.mxu0 0.0
        %1461 = vmatpush2.xpose.msra.mxu0 0.0
        %1462 = vmatprep.subr.mxu0 0.0
        %1463 = vmatpush2.xpose.msra.mxu0 0.0
        %1464 = vmatprep.subr.mxu0 0.0
        %1465 = vmatpush2.xpose.msra.mxu0 0.0
        %1466 = vmatprep.mubr.f32.mxu0 0.0
        %1467 = vmatmul.mubr.f32.gmra.mxu0 %v1397
        %v1468 = vpop.f32.mrf.mxu0
        %v1469 = vadd.f32 0.0, %v1468
        %v1470 = vpop.f32.mrf.mxu0
        %1471 = vdwg.mxu0
        %v1473 = vsel %vm1243, %v1242, 0
        %v1476 = vsel %vm1243, %v1092, 0
        %1478 = vmatprep.subr.mxu0 0.0
        %1479 = vmatpush1.xpose.msra.mxu0 0.0
        %1480 = vmatprep.subr.mxu0 0.0
        %1481 = vmatpush1.xpose.msra.mxu0 0.0
        %1482 = vmatprep.subr.mxu0 0.0
        %1483 = vmatpush1.xpose.msra.mxu0 0.0
        %1484 = vmatprep.subr.mxu0 0.0
        %1485 = vmatpush1.xpose.msra.mxu0 0.0
        %1486 = vmatprep.subr.mxu0 0.0
        %1487 = vmatpush1.xpose.msra.mxu0 0.0
        %1488 = vmatprep.subr.mxu0 0.0
        %1489 = vmatpush1.xpose.msra.mxu0 0.0
        %1490 = vmatprep.subr.mxu0 0.0
        %1491 = vmatpush1.xpose.msra.mxu0 0.0
        %1492 = vmatprep.subr.mxu0 0.0
        %1493 = vmatpush1.xpose.msra.mxu0 0.0
        %1494 = vmatprep.subr.mxu0 0.0
        %1495 = vmatpush1.xpose.msra.mxu0 0.0
        %1496 = vmatprep.subr.mxu0 0.0
        %1497 = vmatpush1.xpose.msra.mxu0 0.0
        %1498 = vmatprep.subr.mxu0 0.0
        %1499 = vmatpush1.xpose.msra.mxu0 0.0
        %1500 = vmatprep.subr.mxu0 0.0
        %1501 = vmatpush1.xpose.msra.mxu0 0.0
        %1502 = vmatprep.subr.mxu0 0.0
        %1503 = vmatpush1.xpose.msra.mxu0 0.0
        %1504 = vmatprep.subr.mxu0 0.0
        %1505 = vmatpush1.xpose.msra.mxu0 0.0
        %1506 = vmatprep.subr.mxu0 0.0
        %1507 = vmatpush1.xpose.msra.mxu0 0.0
        %1508 = vmatprep.subr.mxu0 0.0
        %1509 = vmatpush1.xpose.msra.mxu0 %v1476
        %1510 = vmatprep.subr.mxu0 0.0
        %1511 = vmatpush2.xpose.msra.mxu0 0.0
        %1512 = vmatprep.subr.mxu0 0.0
        %1513 = vmatpush2.xpose.msra.mxu0 0.0
        %1514 = vmatprep.subr.mxu0 0.0
        %1515 = vmatpush2.xpose.msra.mxu0 0.0
        %1516 = vmatprep.subr.mxu0 0.0
        %1517 = vmatpush2.xpose.msra.mxu0 0.0
        %1518 = vmatprep.subr.mxu0 0.0
        %1519 = vmatpush2.xpose.msra.mxu0 0.0
        %1520 = vmatprep.subr.mxu0 0.0
        %1521 = vmatpush2.xpose.msra.mxu0 0.0
        %1522 = vmatprep.subr.mxu0 0.0
        %1523 = vmatpush2.xpose.msra.mxu0 0.0
        %1524 = vmatprep.subr.mxu0 0.0
        %1525 = vmatpush2.xpose.msra.mxu0 0.0
        %1526 = vmatprep.subr.mxu0 0.0
        %1527 = vmatpush2.xpose.msra.mxu0 0.0
        %1528 = vmatprep.subr.mxu0 0.0
        %1529 = vmatpush2.xpose.msra.mxu0 0.0
        %1530 = vmatprep.subr.mxu0 0.0
        %1531 = vmatpush2.xpose.msra.mxu0 0.0
        %1532 = vmatprep.subr.mxu0 0.0
        %1533 = vmatpush2.xpose.msra.mxu0 0.0
        %1534 = vmatprep.subr.mxu0 0.0
        %1535 = vmatpush2.xpose.msra.mxu0 0.0
        %1536 = vmatprep.subr.mxu0 0.0
        %1537 = vmatpush2.xpose.msra.mxu0 0.0
        %1538 = vmatprep.subr.mxu0 0.0
        %1539 = vmatpush2.xpose.msra.mxu0 0.0
        %1540 = vmatprep.subr.mxu0 0.0
        %1541 = vmatpush2.xpose.msra.mxu0 0.0
        %1542 = vmatprep.mubr.f32.mxu0 0.0
        %1543 = vmatmul.mubr.f32.gmra.mxu0 %v1473
        %v1544 = vpop.f32.mrf.mxu0
        %v1545 = vadd.f32 0.0, %v1544
        %v1546 = vpop.f32.mrf.mxu0
        %1547 = vdwg.mxu0
        %v1548 = vld [vmem:[#allocation4] sm:$0xff]
        %v1549 = vld [vmem:[#allocation4 + $0x8] sm:$0xff]
        %v1550 = vld [vmem:[#allocation4 + $0x10] sm:$0xff]
        %v1551 = vld [vmem:[#allocation4 + $0x18] sm:$0xff]
        %v1552 = vsel %vm1243, %v1317, -inf
        %1553 = vmax.xlane.f32.xlu0 %v1552
        %v1554 = vpop.xlane.xlu0 %1553
        %v1555 = vsel %vm1243, %v1393, -inf
        %1556 = vmax.xlane.f32.xlu0 %v1555
        %v1557 = vpop.xlane.xlu0 %1556
        %v1558 = vsel %vm1243, %v1469, -inf
        %1559 = vmax.xlane.f32.xlu0 %v1558
        %v1560 = vpop.xlane.xlu0 %1559
        %v1561 = vsel %vm1243, %v1545, -inf
        %1562 = vmax.xlane.f32.xlu0 %v1561
        %v1563 = vpop.xlane.xlu0 %1562
        %v1564 = vmax.f32 %v1548, %v1554
        %v1565 = vmax.f32 %v1549, %v1557
        %v1566 = vmax.f32 %v1550, %v1560
        %v1567 = vmax.f32 %v1551, %v1563
        %v1568 = vsub.f32 %v1548, %v1564
        %v1569 = vsub.f32 %v1549, %v1565
        %v1570 = vsub.f32 %v1550, %v1566
        %v1571 = vsub.f32 %v1551, %v1567
        %v1572 = vmul.f32 %v1568, 1.442695
        %v1573 = vpow.pop %v1572
        %v1574 = vmul.f32 %v1569, 1.442695
        %v1575 = vpow.pop %v1574
        %v1576 = vmul.f32 %v1570, 1.442695
        %v1577 = vpow.pop %v1576
        %v1578 = vmul.f32 %v1571, 1.442695
        %v1579 = vpow.pop %v1578
        %1581 = vset.pattern.permute.xlu0 0
        %1582 = vperm.xlu0 %1581, %v1564
        %v1583 = vpop.permute.xlu0 %1582
        %1586 = vset.pattern.permute.xlu0 0
        %1587 = vperm.xlu0 %1586, %v1565
        %v1588 = vpop.permute.xlu0 %1587
        %1591 = vset.pattern.permute.xlu0 0
        %1592 = vperm.xlu0 %1591, %v1566
        %v1593 = vpop.permute.xlu0 %1592
        %1596 = vset.pattern.permute.xlu0 0
        %1597 = vperm.xlu0 %1596, %v1567
        %v1598 = vpop.permute.xlu0 %1597
        %v1600 = vsub.f32 %v1317, %v1583
        %v1601 = vsub.f32 %v1393, %v1588
        %v1602 = vsub.f32 %v1469, %v1593
        %v1603 = vsub.f32 %v1545, %v1598
        %v1604 = vmul.f32 %v1600, 1.442695
        %v1605 = vpow.pop %v1604
        %v1606 = vmul.f32 %v1601, 1.442695
        %v1607 = vpow.pop %v1606
        %v1608 = vmul.f32 %v1602, 1.442695
        %v1609 = vpow.pop %v1608
        %v1610 = vmul.f32 %v1603, 1.442695
        %v1611 = vpow.pop %v1610
        %v1612 = vld [vmem:[#allocation5] sm:$0xff]
        %v1613 = vld [vmem:[#allocation5 + $0x8] sm:$0xff]
        %v1614 = vld [vmem:[#allocation5 + $0x10] sm:$0xff]
        %v1615 = vld [vmem:[#allocation5 + $0x18] sm:$0xff]
        %v1616 = vmul.f32 %v1573, %v1612
        %v1617 = vmul.f32 %v1575, %v1613
        %v1618 = vmul.f32 %v1577, %v1614
        %v1619 = vmul.f32 %v1579, %v1615
        %v1620 = vsel %vm1243, %v1605, 0.0
        %1621 = vadd.xlane.f32.xlu0 %v1620
        %v1622 = vpop.xlane.xlu0 %1621
        %v1623 = vsel %vm1243, %v1607, 0.0
        %1624 = vadd.xlane.f32.xlu0 %v1623
        %v1625 = vpop.xlane.xlu0 %1624
        %v1626 = vsel %vm1243, %v1609, 0.0
        %1627 = vadd.xlane.f32.xlu0 %v1626
        %v1628 = vpop.xlane.xlu0 %1627
        %v1629 = vsel %vm1243, %v1611, 0.0
        %1630 = vadd.xlane.f32.xlu0 %v1629
        %v1631 = vpop.xlane.xlu0 %1630
        %v1632 = vadd.f32 %v1616, %v1622
        %v1633 = vadd.f32 %v1617, %v1625
        %v1634 = vadd.f32 %v1618, %v1628
        %v1635 = vadd.f32 %v1619, %v1631
        %vm1636 = vcmask 7168
        %1637 = vst.msk [vmem:[#allocation5] sm:$0xff] %vm1636, %v1632
        %1638 = vst.msk [vmem:[#allocation5 + $0x8] sm:$0xff] %vm1636, %v1633
        %1639 = vst.msk [vmem:[#allocation5 + $0x10] sm:$0xff] %vm1636, %v1634
        %1640 = vst.msk [vmem:[#allocation5 + $0x18] sm:$0xff] %vm1636, %v1635
        %v1641 = vld [vmem:[#allocation6] sm:$0xff]
        %v1642 = vld [vmem:[#allocation6 + $0x8] sm:$0xff]
        %v1643 = vld [vmem:[#allocation6 + $0x10] sm:$0xff]
        %v1644 = vld [vmem:[#allocation6 + $0x18] sm:$0xff]
        %1646 = vset.pattern.permute.xlu0 0
        %1647 = vperm.xlu0 %1646, %v1573
        %v1648 = vpop.permute.xlu0 %1647
        %1651 = vset.pattern.permute.xlu0 0
        %1652 = vperm.xlu0 %1651, %v1575
        %v1653 = vpop.permute.xlu0 %1652
        %1656 = vset.pattern.permute.xlu0 0
        %1657 = vperm.xlu0 %1656, %v1577
        %v1658 = vpop.permute.xlu0 %1657
        %1661 = vset.pattern.permute.xlu0 0
        %1662 = vperm.xlu0 %1661, %v1579
        %v1663 = vpop.permute.xlu0 %1662
        %v1665 = vmul.f32 %v1648, %v1641
        %v1666 = vmul.f32 %v1653, %v1642
        %v1667 = vmul.f32 %v1658, %v1643
        %v1668 = vmul.f32 %v1663, %v1644
        %v1670 = vsel %vm1243, %v1605, 0
        %1672 = vmatprep.subr.mxu0 0.0
        %1673 = vmatpush1.msra.mxu0 0.0
        %1674 = vmatprep.subr.mxu0 0.0
        %1675 = vmatpush1.msra.mxu0 0.0
        %1676 = vmatprep.subr.mxu0 0.0
        %1677 = vmatpush1.msra.mxu0 0.0
        %1678 = vmatprep.subr.mxu0 0.0
        %1679 = vmatpush1.msra.mxu0 0.0
        %1680 = vmatprep.subr.mxu0 0.0
        %1681 = vmatpush1.msra.mxu0 0.0
        %1682 = vmatprep.subr.mxu0 0.0
        %1683 = vmatpush1.msra.mxu0 0.0
        %1684 = vmatprep.subr.mxu0 0.0
        %1685 = vmatpush1.msra.mxu0 0.0
        %1686 = vmatprep.subr.mxu0 0.0
        %1687 = vmatpush1.msra.mxu0 0.0
        %1688 = vmatprep.subr.mxu0 0.0
        %1689 = vmatpush1.msra.mxu0 0.0
        %1690 = vmatprep.subr.mxu0 0.0
        %1691 = vmatpush1.msra.mxu0 0.0
        %1692 = vmatprep.subr.mxu0 0.0
        %1693 = vmatpush1.msra.mxu0 0.0
        %1694 = vmatprep.subr.mxu0 0.0
        %1695 = vmatpush1.msra.mxu0 0.0
        %1696 = vmatprep.subr.mxu0 0.0
        %1697 = vmatpush1.msra.mxu0 0.0
        %1698 = vmatprep.subr.mxu0 0.0
        %1699 = vmatpush1.msra.mxu0 0.0
        %1700 = vmatprep.subr.mxu0 0.0
        %1701 = vmatpush1.msra.mxu0 0.0
        %1702 = vmatprep.subr.mxu0 0.0
        %1703 = vmatpush1.msra.mxu0 %v1235
        %1704 = vmatprep.subr.mxu0 0.0
        %1705 = vmatpush2.msra.mxu0 0.0
        %1706 = vmatprep.subr.mxu0 0.0
        %1707 = vmatpush2.msra.mxu0 0.0
        %1708 = vmatprep.subr.mxu0 0.0
        %1709 = vmatpush2.msra.mxu0 0.0
        %1710 = vmatprep.subr.mxu0 0.0
        %1711 = vmatpush2.msra.mxu0 0.0
        %1712 = vmatprep.subr.mxu0 0.0
        %1713 = vmatpush2.msra.mxu0 0.0
        %1714 = vmatprep.subr.mxu0 0.0
        %1715 = vmatpush2.msra.mxu0 0.0
        %1716 = vmatprep.subr.mxu0 0.0
        %1717 = vmatpush2.msra.mxu0 0.0
        %1718 = vmatprep.subr.mxu0 0.0
        %1719 = vmatpush2.msra.mxu0 0.0
        %1720 = vmatprep.subr.mxu0 0.0
        %1721 = vmatpush2.msra.mxu0 0.0
        %1722 = vmatprep.subr.mxu0 0.0
        %1723 = vmatpush2.msra.mxu0 0.0
        %1724 = vmatprep.subr.mxu0 0.0
        %1725 = vmatpush2.msra.mxu0 0.0
        %1726 = vmatprep.subr.mxu0 0.0
        %1727 = vmatpush2.msra.mxu0 0.0
        %1728 = vmatprep.subr.mxu0 0.0
        %1729 = vmatpush2.msra.mxu0 0.0
        %1730 = vmatprep.subr.mxu0 0.0
        %1731 = vmatpush2.msra.mxu0 0.0
        %1732 = vmatprep.subr.mxu0 0.0
        %1733 = vmatpush2.msra.mxu0 0.0
        %1734 = vmatprep.subr.mxu0 0.0
        %1735 = vmatpush2.msra.mxu0 0.0
        %1736 = vmatprep.mubr.f32.mxu0 0.0
        %1737 = vmatmul.mubr.f32.gmra.mxu0 %v1670
        %v1738 = vpop.f32.mrf.mxu0
        %v1739 = vadd.f32 0.0, %v1738
        %v1740 = vpop.f32.mrf.mxu0
        %1741 = vdwg.mxu0
        %v1743 = vsel %vm1243, %v1607, 0
        %1745 = vmatprep.subr.mxu0 0.0
        %1746 = vmatpush1.msra.mxu0 0.0
        %1747 = vmatprep.subr.mxu0 0.0
        %1748 = vmatpush1.msra.mxu0 0.0
        %1749 = vmatprep.subr.mxu0 0.0
        %1750 = vmatpush1.msra.mxu0 0.0
        %1751 = vmatprep.subr.mxu0 0.0
        %1752 = vmatpush1.msra.mxu0 0.0
        %1753 = vmatprep.subr.mxu0 0.0
        %1754 = vmatpush1.msra.mxu0 0.0
        %1755 = vmatprep.subr.mxu0 0.0
        %1756 = vmatpush1.msra.mxu0 0.0
        %1757 = vmatprep.subr.mxu0 0.0
        %1758 = vmatpush1.msra.mxu0 0.0
        %1759 = vmatprep.subr.mxu0 0.0
        %1760 = vmatpush1.msra.mxu0 0.0
        %1761 = vmatprep.subr.mxu0 0.0
        %1762 = vmatpush1.msra.mxu0 0.0
        %1763 = vmatprep.subr.mxu0 0.0
        %1764 = vmatpush1.msra.mxu0 0.0
        %1765 = vmatprep.subr.mxu0 0.0
        %1766 = vmatpush1.msra.mxu0 0.0
        %1767 = vmatprep.subr.mxu0 0.0
        %1768 = vmatpush1.msra.mxu0 0.0
        %1769 = vmatprep.subr.mxu0 0.0
        %1770 = vmatpush1.msra.mxu0 0.0
        %1771 = vmatprep.subr.mxu0 0.0
        %1772 = vmatpush1.msra.mxu0 0.0
        %1773 = vmatprep.subr.mxu0 0.0
        %1774 = vmatpush1.msra.mxu0 0.0
        %1775 = vmatprep.subr.mxu0 0.0
        %1776 = vmatpush1.msra.mxu0 %v1236
        %1777 = vmatprep.subr.mxu0 0.0
        %1778 = vmatpush2.msra.mxu0 0.0
        %1779 = vmatprep.subr.mxu0 0.0
        %1780 = vmatpush2.msra.mxu0 0.0
        %1781 = vmatprep.subr.mxu0 0.0
        %1782 = vmatpush2.msra.mxu0 0.0
        %1783 = vmatprep.subr.mxu0 0.0
        %1784 = vmatpush2.msra.mxu0 0.0
        %1785 = vmatprep.subr.mxu0 0.0
        %1786 = vmatpush2.msra.mxu0 0.0
        %1787 = vmatprep.subr.mxu0 0.0
        %1788 = vmatpush2.msra.mxu0 0.0
        %1789 = vmatprep.subr.mxu0 0.0
        %1790 = vmatpush2.msra.mxu0 0.0
        %1791 = vmatprep.subr.mxu0 0.0
        %1792 = vmatpush2.msra.mxu0 0.0
        %1793 = vmatprep.subr.mxu0 0.0
        %1794 = vmatpush2.msra.mxu0 0.0
        %1795 = vmatprep.subr.mxu0 0.0
        %1796 = vmatpush2.msra.mxu0 0.0
        %1797 = vmatprep.subr.mxu0 0.0
        %1798 = vmatpush2.msra.mxu0 0.0
        %1799 = vmatprep.subr.mxu0 0.0
        %1800 = vmatpush2.msra.mxu0 0.0
        %1801 = vmatprep.subr.mxu0 0.0
        %1802 = vmatpush2.msra.mxu0 0.0
        %1803 = vmatprep.subr.mxu0 0.0
        %1804 = vmatpush2.msra.mxu0 0.0
        %1805 = vmatprep.subr.mxu0 0.0
        %1806 = vmatpush2.msra.mxu0 0.0
        %1807 = vmatprep.subr.mxu0 0.0
        %1808 = vmatpush2.msra.mxu0 0.0
        %1809 = vmatprep.mubr.f32.mxu0 0.0
        %1810 = vmatmul.mubr.f32.gmra.mxu0 %v1743
        %v1811 = vpop.f32.mrf.mxu0
        %v1812 = vadd.f32 0.0, %v1811
        %v1813 = vpop.f32.mrf.mxu0
        %1814 = vdwg.mxu0
        %v1816 = vsel %vm1243, %v1609, 0
        %1818 = vmatprep.subr.mxu0 0.0
        %1819 = vmatpush1.msra.mxu0 0.0
        %1820 = vmatprep.subr.mxu0 0.0
        %1821 = vmatpush1.msra.mxu0 0.0
        %1822 = vmatprep.subr.mxu0 0.0
        %1823 = vmatpush1.msra.mxu0 0.0
        %1824 = vmatprep.subr.mxu0 0.0
        %1825 = vmatpush1.msra.mxu0 0.0
        %1826 = vmatprep.subr.mxu0 0.0
        %1827 = vmatpush1.msra.mxu0 0.0
        %1828 = vmatprep.subr.mxu0 0.0
        %1829 = vmatpush1.msra.mxu0 0.0
        %1830 = vmatprep.subr.mxu0 0.0
        %1831 = vmatpush1.msra.mxu0 0.0
        %1832 = vmatprep.subr.mxu0 0.0
        %1833 = vmatpush1.msra.mxu0 0.0
        %1834 = vmatprep.subr.mxu0 0.0
        %1835 = vmatpush1.msra.mxu0 0.0
        %1836 = vmatprep.subr.mxu0 0.0
        %1837 = vmatpush1.msra.mxu0 0.0
        %1838 = vmatprep.subr.mxu0 0.0
        %1839 = vmatpush1.msra.mxu0 0.0
        %1840 = vmatprep.subr.mxu0 0.0
        %1841 = vmatpush1.msra.mxu0 0.0
        %1842 = vmatprep.subr.mxu0 0.0
        %1843 = vmatpush1.msra.mxu0 0.0
        %1844 = vmatprep.subr.mxu0 0.0
        %1845 = vmatpush1.msra.mxu0 0.0
        %1846 = vmatprep.subr.mxu0 0.0
        %1847 = vmatpush1.msra.mxu0 0.0
        %1848 = vmatprep.subr.mxu0 0.0
        %1849 = vmatpush1.msra.mxu0 %v1237
        %1850 = vmatprep.subr.mxu0 0.0
        %1851 = vmatpush2.msra.mxu0 0.0
        %1852 = vmatprep.subr.mxu0 0.0
        %1853 = vmatpush2.msra.mxu0 0.0
        %1854 = vmatprep.subr.mxu0 0.0
        %1855 = vmatpush2.msra.mxu0 0.0
        %1856 = vmatprep.subr.mxu0 0.0
        %1857 = vmatpush2.msra.mxu0 0.0
        %1858 = vmatprep.subr.mxu0 0.0
        %1859 = vmatpush2.msra.mxu0 0.0
        %1860 = vmatprep.subr.mxu0 0.0
        %1861 = vmatpush2.msra.mxu0 0.0
        %1862 = vmatprep.subr.mxu0 0.0
        %1863 = vmatpush2.msra.mxu0 0.0
        %1864 = vmatprep.subr.mxu0 0.0
        %1865 = vmatpush2.msra.mxu0 0.0
        %1866 = vmatprep.subr.mxu0 0.0
        %1867 = vmatpush2.msra.mxu0 0.0
        %1868 = vmatprep.subr.mxu0 0.0
        %1869 = vmatpush2.msra.mxu0 0.0
        %1870 = vmatprep.subr.mxu0 0.0
        %1871 = vmatpush2.msra.mxu0 0.0
        %1872 = vmatprep.subr.mxu0 0.0
        %1873 = vmatpush2.msra.mxu0 0.0
        %1874 = vmatprep.subr.mxu0 0.0
        %1875 = vmatpush2.msra.mxu0 0.0
        %1876 = vmatprep.subr.mxu0 0.0
        %1877 = vmatpush2.msra.mxu0 0.0
        %1878 = vmatprep.subr.mxu0 0.0
        %1879 = vmatpush2.msra.mxu0 0.0
        %1880 = vmatprep.subr.mxu0 0.0
        %1881 = vmatpush2.msra.mxu0 0.0
        %1882 = vmatprep.mubr.f32.mxu0 0.0
        %1883 = vmatmul.mubr.f32.gmra.mxu0 %v1816
        %v1884 = vpop.f32.mrf.mxu0
        %v1885 = vadd.f32 0.0, %v1884
        %v1886 = vpop.f32.mrf.mxu0
        %1887 = vdwg.mxu0
        %v1889 = vsel %vm1243, %v1611, 0
        %1891 = vmatprep.subr.mxu0 0.0
        %1892 = vmatpush1.msra.mxu0 0.0
        %1893 = vmatprep.subr.mxu0 0.0
        %1894 = vmatpush1.msra.mxu0 0.0
        %1895 = vmatprep.subr.mxu0 0.0
        %1896 = vmatpush1.msra.mxu0 0.0
        %1897 = vmatprep.subr.mxu0 0.0
        %1898 = vmatpush1.msra.mxu0 0.0
        %1899 = vmatprep.subr.mxu0 0.0
        %1900 = vmatpush1.msra.mxu0 0.0
        %1901 = vmatprep.subr.mxu0 0.0
        %1902 = vmatpush1.msra.mxu0 0.0
        %1903 = vmatprep.subr.mxu0 0.0
        %1904 = vmatpush1.msra.mxu0 0.0
        %1905 = vmatprep.subr.mxu0 0.0
        %1906 = vmatpush1.msra.mxu0 0.0
        %1907 = vmatprep.subr.mxu0 0.0
        %1908 = vmatpush1.msra.mxu0 0.0
        %1909 = vmatprep.subr.mxu0 0.0
        %1910 = vmatpush1.msra.mxu0 0.0
        %1911 = vmatprep.subr.mxu0 0.0
        %1912 = vmatpush1.msra.mxu0 0.0
        %1913 = vmatprep.subr.mxu0 0.0
        %1914 = vmatpush1.msra.mxu0 0.0
        %1915 = vmatprep.subr.mxu0 0.0
        %1916 = vmatpush1.msra.mxu0 0.0
        %1917 = vmatprep.subr.mxu0 0.0
        %1918 = vmatpush1.msra.mxu0 0.0
        %1919 = vmatprep.subr.mxu0 0.0
        %1920 = vmatpush1.msra.mxu0 0.0
        %1921 = vmatprep.subr.mxu0 0.0
        %1922 = vmatpush1.msra.mxu0 %v1238
        %1923 = vmatprep.subr.mxu0 0.0
        %1924 = vmatpush2.msra.mxu0 0.0
        %1925 = vmatprep.subr.mxu0 0.0
        %1926 = vmatpush2.msra.mxu0 0.0
        %1927 = vmatprep.subr.mxu0 0.0
        %1928 = vmatpush2.msra.mxu0 0.0
        %1929 = vmatprep.subr.mxu0 0.0
        %1930 = vmatpush2.msra.mxu0 0.0
        %1931 = vmatprep.subr.mxu0 0.0
        %1932 = vmatpush2.msra.mxu0 0.0
        %1933 = vmatprep.subr.mxu0 0.0
        %1934 = vmatpush2.msra.mxu0 0.0
        %1935 = vmatprep.subr.mxu0 0.0
        %1936 = vmatpush2.msra.mxu0 0.0
        %1937 = vmatprep.subr.mxu0 0.0
        %1938 = vmatpush2.msra.mxu0 0.0
        %1939 = vmatprep.subr.mxu0 0.0
        %1940 = vmatpush2.msra.mxu0 0.0
        %1941 = vmatprep.subr.mxu0 0.0
        %1942 = vmatpush2.msra.mxu0 0.0
        %1943 = vmatprep.subr.mxu0 0.0
        %1944 = vmatpush2.msra.mxu0 0.0
        %1945 = vmatprep.subr.mxu0 0.0
        %1946 = vmatpush2.msra.mxu0 0.0
        %1947 = vmatprep.subr.mxu0 0.0
        %1948 = vmatpush2.msra.mxu0 0.0
        %1949 = vmatprep.subr.mxu0 0.0
        %1950 = vmatpush2.msra.mxu0 0.0
        %1951 = vmatprep.subr.mxu0 0.0
        %1952 = vmatpush2.msra.mxu0 0.0
        %1953 = vmatprep.subr.mxu0 0.0
        %1954 = vmatpush2.msra.mxu0 0.0
        %1955 = vmatprep.mubr.f32.mxu0 0.0
        %1956 = vmatmul.mubr.f32.gmra.mxu0 %v1889
        %v1957 = vpop.f32.mrf.mxu0
        %v1958 = vadd.f32 0.0, %v1957
        %v1959 = vpop.f32.mrf.mxu0
        %1960 = vdwg.mxu0
        %v1961 = vadd.f32 %v1665, %v1739
        %v1962 = vadd.f32 %v1666, %v1812
        %v1963 = vadd.f32 %v1667, %v1885
        %v1964 = vadd.f32 %v1668, %v1958
        %1965 = vst.msk [vmem:[#allocation6] sm:$0xff] %vm1243, %v1961
        %1966 = vst.msk [vmem:[#allocation6 + $0x8] sm:$0xff] %vm1243, %v1962
        %1967 = vst.msk [vmem:[#allocation6 + $0x10] sm:$0xff] %vm1243, %v1963
        %1968 = vst.msk [vmem:[#allocation6 + $0x18] sm:$0xff] %vm1243, %v1964
        %1969 = vst.msk [vmem:[#allocation4] sm:$0xff] %vm1636, %v1564
        %1970 = vst.msk [vmem:[#allocation4 + $0x8] sm:$0xff] %vm1636, %v1565
        %1971 = vst.msk [vmem:[#allocation4 + $0x10] sm:$0xff] %vm1636, %v1566
        %1972 = vst.msk [vmem:[#allocation4 + $0x18] sm:$0xff] %vm1636, %v1567
        %p1973 = scmp.eq.s32.totalorder %s37, 1
        // Predicated region
        $region89: #{tpu_custom_call.1} parent=59 // pred_check
          %p1974 = pneg %p1973
        $region90: #{tpu_custom_call.1} parent=59 // pred_check_branch
          %1976 = sbr.rel (%p1974) target = $region92
        $region91: #{tpu_custom_call.1} parent=59 // pred_region
          %v1977 = vld [vmem:[#allocation3] sm:$0xff]
          %v1978 = vld [vmem:[#allocation13] sm:$0xff]
          %v1979 = vld [vmem:[#allocation13 + $0x8] sm:$0xff]
          %v1980 = vld [vmem:[#allocation13 + $0x10] sm:$0xff]
          %v1981 = vld [vmem:[#allocation13 + $0x18] sm:$0xff]
          %v1983 = vsel %vm767, %v1977, 0
          %1985 = vmatprep.subr.mxu0 0.0
          %1986 = vmatpush1.msra.mxu0 0.0
          %1987 = vmatprep.subr.mxu0 0.0
          %1988 = vmatpush1.msra.mxu0 0.0
          %1989 = vmatprep.subr.mxu0 0.0
          %1990 = vmatpush1.msra.mxu0 0.0
          %1991 = vmatprep.subr.mxu0 0.0
          %1992 = vmatpush1.msra.mxu0 0.0
          %1993 = vmatprep.subr.mxu0 0.0
          %1994 = vmatpush1.msra.mxu0 0.0
          %1995 = vmatprep.subr.mxu0 0.0
          %1996 = vmatpush1.msra.mxu0 0.0
          %1997 = vmatprep.subr.mxu0 0.0
          %1998 = vmatpush1.msra.mxu0 0.0
          %1999 = vmatprep.subr.mxu0 0.0
          %2000 = vmatpush1.msra.mxu0 0.0
          %2001 = vmatprep.subr.mxu0 0.0
          %2002 = vmatpush1.msra.mxu0 0.0
          %2003 = vmatprep.subr.mxu0 0.0
          %2004 = vmatpush1.msra.mxu0 0.0
          %2005 = vmatprep.subr.mxu0 0.0
          %2006 = vmatpush1.msra.mxu0 0.0
          %2007 = vmatprep.subr.mxu0 0.0
          %2008 = vmatpush1.msra.mxu0 0.0
          %2009 = vmatprep.subr.mxu0 0.0
          %2010 = vmatpush1.msra.mxu0 %v1981
          %2011 = vmatprep.subr.mxu0 0.0
          %2012 = vmatpush1.msra.mxu0 %v1980
          %2013 = vmatprep.subr.mxu0 0.0
          %2014 = vmatpush1.msra.mxu0 %v1979
          %2015 = vmatprep.subr.mxu0 0.0
          %2016 = vmatpush1.msra.mxu0 %v1978
          %2017 = vmatprep.subr.mxu0 0.0
          %2018 = vmatpush2.msra.mxu0 0.0
          %2019 = vmatprep.subr.mxu0 0.0
          %2020 = vmatpush2.msra.mxu0 0.0
          %2021 = vmatprep.subr.mxu0 0.0
          %2022 = vmatpush2.msra.mxu0 0.0
          %2023 = vmatprep.subr.mxu0 0.0
          %2024 = vmatpush2.msra.mxu0 0.0
          %2025 = vmatprep.subr.mxu0 0.0
          %2026 = vmatpush2.msra.mxu0 0.0
          %2027 = vmatprep.subr.mxu0 0.0
          %2028 = vmatpush2.msra.mxu0 0.0
          %2029 = vmatprep.subr.mxu0 0.0
          %2030 = vmatpush2.msra.mxu0 0.0
          %2031 = vmatprep.subr.mxu0 0.0
          %2032 = vmatpush2.msra.mxu0 0.0
          %2033 = vmatprep.subr.mxu0 0.0
          %2034 = vmatpush2.msra.mxu0 0.0
          %2035 = vmatprep.subr.mxu0 0.0
          %2036 = vmatpush2.msra.mxu0 0.0
          %2037 = vmatprep.subr.mxu0 0.0
          %2038 = vmatpush2.msra.mxu0 0.0
          %2039 = vmatprep.subr.mxu0 0.0
          %2040 = vmatpush2.msra.mxu0 0.0
          %2041 = vmatprep.subr.mxu0 0.0
          %2042 = vmatpush2.msra.mxu0 0.0
          %2043 = vmatprep.subr.mxu0 0.0
          %2044 = vmatpush2.msra.mxu0 0.0
          %2045 = vmatprep.subr.mxu0 0.0
          %2046 = vmatpush2.msra.mxu0 0.0
          %2047 = vmatprep.subr.mxu0 0.0
          %2048 = vmatpush2.msra.mxu0 0.0
          %2049 = vmatprep.mubr.f32.mxu0 0.0
          %2050 = vmatmul.mubr.f32.gmra.mxu0 %v1983
          %v2051 = vpop.f32.mrf.mxu0
          %v2052 = vadd.f32 0.0, %v2051
          %v2053 = vpop.f32.mrf.mxu0
          %2054 = vdwg.mxu0
          %v2055 = vld [vmem:[#allocation15] sm:$0xff]
          %v2056 = vld [vmem:[#allocation15 + $0x8] sm:$0xff]
          %v2057 = vld [vmem:[#allocation15 + $0x10] sm:$0xff]
          %v2058 = vld [vmem:[#allocation15 + $0x18] sm:$0xff]
          %2059 = vmatprep.subr.mxu0 0.0
          %2060 = vmatpush1.msra.mxu0 0.0
          %2061 = vmatprep.subr.mxu0 0.0
          %2062 = vmatpush1.msra.mxu0 0.0
          %2063 = vmatprep.subr.mxu0 0.0
          %2064 = vmatpush1.msra.mxu0 0.0
          %2065 = vmatprep.subr.mxu0 0.0
          %2066 = vmatpush1.msra.mxu0 0.0
          %2067 = vmatprep.subr.mxu0 0.0
          %2068 = vmatpush1.msra.mxu0 0.0
          %2069 = vmatprep.subr.mxu0 0.0
          %2070 = vmatpush1.msra.mxu0 0.0
          %2071 = vmatprep.subr.mxu0 0.0
          %2072 = vmatpush1.msra.mxu0 0.0
          %2073 = vmatprep.subr.mxu0 0.0
          %2074 = vmatpush1.msra.mxu0 0.0
          %2075 = vmatprep.subr.mxu0 0.0
          %2076 = vmatpush1.msra.mxu0 0.0
          %2077 = vmatprep.subr.mxu0 0.0
          %2078 = vmatpush1.msra.mxu0 0.0
          %2079 = vmatprep.subr.mxu0 0.0
          %2080 = vmatpush1.msra.mxu0 0.0
          %2081 = vmatprep.subr.mxu0 0.0
          %2082 = vmatpush1.msra.mxu0 0.0
          %2083 = vmatprep.subr.mxu0 0.0
          %2084 = vmatpush1.msra.mxu0 %v2058
          %2085 = vmatprep.subr.mxu0 0.0
          %2086 = vmatpush1.msra.mxu0 %v2057
          %2087 = vmatprep.subr.mxu0 0.0
          %2088 = vmatpush1.msra.mxu0 %v2056
          %2089 = vmatprep.subr.mxu0 0.0
          %2090 = vmatpush1.msra.mxu0 %v2055
          %2091 = vmatprep.subr.mxu0 0.0
          %2092 = vmatpush2.msra.mxu0 0.0
          %2093 = vmatprep.subr.mxu0 0.0
          %2094 = vmatpush2.msra.mxu0 0.0
          %2095 = vmatprep.subr.mxu0 0.0
          %2096 = vmatpush2.msra.mxu0 0.0
          %2097 = vmatprep.subr.mxu0 0.0
          %2098 = vmatpush2.msra.mxu0 0.0
          %2099 = vmatprep.subr.mxu0 0.0
          %2100 = vmatpush2.msra.mxu0 0.0
          %2101 = vmatprep.subr.mxu0 0.0
          %2102 = vmatpush2.msra.mxu0 0.0
          %2103 = vmatprep.subr.mxu0 0.0
          %2104 = vmatpush2.msra.mxu0 0.0
          %2105 = vmatprep.subr.mxu0 0.0
          %2106 = vmatpush2.msra.mxu0 0.0
          %2107 = vmatprep.subr.mxu0 0.0
          %2108 = vmatpush2.msra.mxu0 0.0
          %2109 = vmatprep.subr.mxu0 0.0
          %2110 = vmatpush2.msra.mxu0 0.0
          %2111 = vmatprep.subr.mxu0 0.0
          %2112 = vmatpush2.msra.mxu0 0.0
          %2113 = vmatprep.subr.mxu0 0.0
          %2114 = vmatpush2.msra.mxu0 0.0
          %2115 = vmatprep.subr.mxu0 0.0
          %2116 = vmatpush2.msra.mxu0 0.0
          %2117 = vmatprep.subr.mxu0 0.0
          %2118 = vmatpush2.msra.mxu0 0.0
          %2119 = vmatprep.subr.mxu0 0.0
          %2120 = vmatpush2.msra.mxu0 0.0
          %2121 = vmatprep.subr.mxu0 0.0
          %2122 = vmatpush2.msra.mxu0 0.0
          %2123 = vmatprep.mubr.f32.mxu0 0.0
          %2124 = vmatmul.mubr.f32.gmra.mxu0 %v1983
          %v2125 = vpop.f32.mrf.mxu0
          %v2126 = vadd.f32 0.0, %v2125
          %v2127 = vpop.f32.mrf.mxu0
          %2128 = vdwg.mxu0
          %2130 = vrot.lane.b32.xlu0 %v2052, 120
          %v2131 = vpop.permute.xlu0 %2130
          %2133 = vrot.lane.b32.xlu0 %v2052, 112
          %v2134 = vpop.permute.xlu0 %2133
          %2136 = vrot.lane.b32.xlu0 %v2052, 104
          %v2137 = vpop.permute.xlu0 %2136
          %v2139 = vcombine.low %v2052, %v2134
          %v2140 = vcombine.high %v2052, %v2134
          %v2142 = vunpack.c.l.s4 1983009808
          %v2143 = vunpack.c.0.s8 %v2142
          %v2144 = vlaneseq
          %v2145 = vshrl.u32 %v2144, 7
          %v2146 = vsub.s32 %v2143, %v2145
          %v2147 = vrot.slane %v2139, %v2146
          %v2149 = vunpack.c.l.s4 1983009808
          %v2150 = vunpack.c.0.s8 %v2149
          %v2151 = vlaneseq
          %v2152 = vshrl.u32 %v2151, 7
          %v2153 = vsub.s32 %v2150, %v2152
          %v2154 = vrot.slane %v2140, %v2153
          %v2155 = vcombine.low %v2131, %v2137
          %v2156 = vcombine.high %v2131, %v2137
          %v2158 = vunpack.c.l.s4 1983009808
          %v2159 = vunpack.c.0.s8 %v2158
          %v2160 = vlaneseq
          %v2161 = vshrl.u32 %v2160, 7
          %v2162 = vsub.s32 %v2159, %v2161
          %v2163 = vrot.slane %v2155, %v2162
          %v2165 = vunpack.c.l.s4 1983009808
          %v2166 = vunpack.c.0.s8 %v2165
          %v2167 = vlaneseq
          %v2168 = vshrl.u32 %v2167, 7
          %v2169 = vsub.s32 %v2166, %v2168
          %v2170 = vrot.slane %v2156, %v2169
          %v2171 = vcombine.low %v2147, %v2163
          %v2172 = vcombine.high %v2147, %v2163
          %v2174 = vunpack.c.l.s4 1934713408
          %v2175 = vunpack.c.0.s8 %v2174
          %v2176 = vlaneseq
          %v2177 = vshrl.u32 %v2176, 7
          %v2178 = vsub.s32 %v2175, %v2177
          %v2179 = vrot.slane %v2171, %v2178
          %v2181 = vunpack.c.l.s4 1934713408
          %v2182 = vunpack.c.0.s8 %v2181
          %v2183 = vlaneseq
          %v2184 = vshrl.u32 %v2183, 7
          %v2185 = vsub.s32 %v2182, %v2184
          %v2186 = vrot.slane %v2172, %v2185
          %v2187 = vcombine.low %v2154, %v2170
          %v2188 = vcombine.high %v2154, %v2170
          %v2190 = vunpack.c.l.s4 1934713408
          %v2191 = vunpack.c.0.s8 %v2190
          %v2192 = vlaneseq
          %v2193 = vshrl.u32 %v2192, 7
          %v2194 = vsub.s32 %v2191, %v2193
          %v2195 = vrot.slane %v2187, %v2194
          %v2197 = vunpack.c.l.s4 1934713408
          %v2198 = vunpack.c.0.s8 %v2197
          %v2199 = vlaneseq
          %v2200 = vshrl.u32 %v2199, 7
          %v2201 = vsub.s32 %v2198, %v2200
          %v2202 = vrot.slane %v2188, %v2201
          %v2203 = vcombine.high %v2179, 0.0
          %v2204 = vcombine.high %v2186, 0.0
          %v2205 = vcombine.high %v2195, 0.0
          %v2206 = vcombine.high %v2202, 0.0
          %v2207 = vcombine.low %v2179, %v2186
          %v2209 = vunpack.c.l.s4 1983009808
          %v2210 = vunpack.c.0.s8 %v2209
          %v2211 = vlaneseq
          %v2212 = vshrl.u32 %v2211, 7
          %v2213 = vsub.s32 %v2210, %v2212
          %v2214 = vrot.slane %v2207, %v2213
          %v2215 = vcombine.low %v2203, %v2204
          %v2217 = vunpack.c.l.s4 1983009808
          %v2218 = vunpack.c.0.s8 %v2217
          %v2219 = vlaneseq
          %v2220 = vshrl.u32 %v2219, 7
          %v2221 = vsub.s32 %v2218, %v2220
          %v2222 = vrot.slane %v2215, %v2221
          %v2223 = vcombine.low %v2195, %v2202
          %v2225 = vunpack.c.l.s4 1983009808
          %v2226 = vunpack.c.0.s8 %v2225
          %v2227 = vlaneseq
          %v2228 = vshrl.u32 %v2227, 7
          %v2229 = vsub.s32 %v2226, %v2228
          %v2230 = vrot.slane %v2223, %v2229
          %v2231 = vcombine.low %v2205, %v2206
          %v2233 = vunpack.c.l.s4 1983009808
          %v2234 = vunpack.c.0.s8 %v2233
          %v2235 = vlaneseq
          %v2236 = vshrl.u32 %v2235, 7
          %v2237 = vsub.s32 %v2234, %v2236
          %v2238 = vrot.slane %v2231, %v2237
          %v2239 = vcombine.low %v2214, %v2222
          %v2240 = vcombine.high %v2214, %v2222
          %v2242 = vunpack.c.l.s4 1934713408
          %v2243 = vunpack.c.0.s8 %v2242
          %v2244 = vlaneseq
          %v2245 = vshrl.u32 %v2244, 7
          %v2246 = vsub.s32 %v2243, %v2245
          %v2247 = vrot.slane %v2239, %v2246
          %v2249 = vunpack.c.l.s4 1934713408
          %v2250 = vunpack.c.0.s8 %v2249
          %v2251 = vlaneseq
          %v2252 = vshrl.u32 %v2251, 7
          %v2253 = vsub.s32 %v2250, %v2252
          %v2254 = vrot.slane %v2240, %v2253
          %v2255 = vcombine.low %v2230, %v2238
          %v2256 = vcombine.high %v2230, %v2238
          %v2258 = vunpack.c.l.s4 1934713408
          %v2259 = vunpack.c.0.s8 %v2258
          %v2260 = vlaneseq
          %v2261 = vshrl.u32 %v2260, 7
          %v2262 = vsub.s32 %v2259, %v2261
          %v2263 = vrot.slane %v2255, %v2262
          %v2265 = vunpack.c.l.s4 1934713408
          %v2266 = vunpack.c.0.s8 %v2265
          %v2267 = vlaneseq
          %v2268 = vshrl.u32 %v2267, 7
          %v2269 = vsub.s32 %v2266, %v2268
          %v2270 = vrot.slane %v2256, %v2269
          %v2271 = vcombine.low %v2247, %v2263
          %v2272 = vcombine.high %v2247, %v2263
          %v2273 = vcombine.low %v2254, %v2270
          %v2274 = vcombine.high %v2254, %v2270
          %2276 = vrot.lane.b32.xlu0 %v2126, 120
          %v2277 = vpop.permute.xlu0 %2276
          %2279 = vrot.lane.b32.xlu0 %v2126, 112
          %v2280 = vpop.permute.xlu0 %2279
          %2282 = vrot.lane.b32.xlu0 %v2126, 104
          %v2283 = vpop.permute.xlu0 %2282
          %v2285 = vcombine.low %v2126, %v2280
          %v2286 = vcombine.high %v2126, %v2280
          %v2288 = vunpack.c.l.s4 1983009808
          %v2289 = vunpack.c.0.s8 %v2288
          %v2290 = vlaneseq
          %v2291 = vshrl.u32 %v2290, 7
          %v2292 = vsub.s32 %v2289, %v2291
          %v2293 = vrot.slane %v2285, %v2292
          %v2295 = vunpack.c.l.s4 1983009808
          %v2296 = vunpack.c.0.s8 %v2295
          %v2297 = vlaneseq
          %v2298 = vshrl.u32 %v2297, 7
          %v2299 = vsub.s32 %v2296, %v2298
          %v2300 = vrot.slane %v2286, %v2299
          %v2301 = vcombine.low %v2277, %v2283
          %v2302 = vcombine.high %v2277, %v2283
          %v2304 = vunpack.c.l.s4 1983009808
          %v2305 = vunpack.c.0.s8 %v2304
          %v2306 = vlaneseq
          %v2307 = vshrl.u32 %v2306, 7
          %v2308 = vsub.s32 %v2305, %v2307
          %v2309 = vrot.slane %v2301, %v2308
          %v2311 = vunpack.c.l.s4 1983009808
          %v2312 = vunpack.c.0.s8 %v2311
          %v2313 = vlaneseq
          %v2314 = vshrl.u32 %v2313, 7
          %v2315 = vsub.s32 %v2312, %v2314
          %v2316 = vrot.slane %v2302, %v2315
          %v2317 = vcombine.low %v2293, %v2309
          %v2318 = vcombine.high %v2293, %v2309
          %v2320 = vunpack.c.l.s4 1934713408
          %v2321 = vunpack.c.0.s8 %v2320
          %v2322 = vlaneseq
          %v2323 = vshrl.u32 %v2322, 7
          %v2324 = vsub.s32 %v2321, %v2323
          %v2325 = vrot.slane %v2317, %v2324
          %v2327 = vunpack.c.l.s4 1934713408
          %v2328 = vunpack.c.0.s8 %v2327
          %v2329 = vlaneseq
          %v2330 = vshrl.u32 %v2329, 7
          %v2331 = vsub.s32 %v2328, %v2330
          %v2332 = vrot.slane %v2318, %v2331
          %v2333 = vcombine.low %v2300, %v2316
          %v2334 = vcombine.high %v2300, %v2316
          %v2336 = vunpack.c.l.s4 1934713408
          %v2337 = vunpack.c.0.s8 %v2336
          %v2338 = vlaneseq
          %v2339 = vshrl.u32 %v2338, 7
          %v2340 = vsub.s32 %v2337, %v2339
          %v2341 = vrot.slane %v2333, %v2340
          %v2343 = vunpack.c.l.s4 1934713408
          %v2344 = vunpack.c.0.s8 %v2343
          %v2345 = vlaneseq
          %v2346 = vshrl.u32 %v2345, 7
          %v2347 = vsub.s32 %v2344, %v2346
          %v2348 = vrot.slane %v2334, %v2347
          %v2349 = vcombine.high %v2325, 0.0
          %v2350 = vcombine.high %v2332, 0.0
          %v2351 = vcombine.high %v2341, 0.0
          %v2352 = vcombine.high %v2348, 0.0
          %v2353 = vcombine.low %v2325, %v2332
          %v2355 = vunpack.c.l.s4 1983009808
          %v2356 = vunpack.c.0.s8 %v2355
          %v2357 = vlaneseq
          %v2358 = vshrl.u32 %v2357, 7
          %v2359 = vsub.s32 %v2356, %v2358
          %v2360 = vrot.slane %v2353, %v2359
          %v2361 = vcombine.low %v2349, %v2350
          %v2363 = vunpack.c.l.s4 1983009808
          %v2364 = vunpack.c.0.s8 %v2363
          %v2365 = vlaneseq
          %v2366 = vshrl.u32 %v2365, 7
          %v2367 = vsub.s32 %v2364, %v2366
          %v2368 = vrot.slane %v2361, %v2367
          %v2369 = vcombine.low %v2341, %v2348
          %v2371 = vunpack.c.l.s4 1983009808
          %v2372 = vunpack.c.0.s8 %v2371
          %v2373 = vlaneseq
          %v2374 = vshrl.u32 %v2373, 7
          %v2375 = vsub.s32 %v2372, %v2374
          %v2376 = vrot.slane %v2369, %v2375
          %v2377 = vcombine.low %v2351, %v2352
          %v2379 = vunpack.c.l.s4 1983009808
          %v2380 = vunpack.c.0.s8 %v2379
          %v2381 = vlaneseq
          %v2382 = vshrl.u32 %v2381, 7
          %v2383 = vsub.s32 %v2380, %v2382
          %v2384 = vrot.slane %v2377, %v2383
          %v2385 = vcombine.low %v2360, %v2368
          %v2386 = vcombine.high %v2360, %v2368
          %v2388 = vunpack.c.l.s4 1934713408
          %v2389 = vunpack.c.0.s8 %v2388
          %v2390 = vlaneseq
          %v2391 = vshrl.u32 %v2390, 7
          %v2392 = vsub.s32 %v2389, %v2391
          %v2393 = vrot.slane %v2385, %v2392
          %v2395 = vunpack.c.l.s4 1934713408
          %v2396 = vunpack.c.0.s8 %v2395
          %v2397 = vlaneseq
          %v2398 = vshrl.u32 %v2397, 7
          %v2399 = vsub.s32 %v2396, %v2398
          %v2400 = vrot.slane %v2386, %v2399
          %v2401 = vcombine.low %v2376, %v2384
          %v2402 = vcombine.high %v2376, %v2384
          %v2404 = vunpack.c.l.s4 1934713408
          %v2405 = vunpack.c.0.s8 %v2404
          %v2406 = vlaneseq
          %v2407 = vshrl.u32 %v2406, 7
          %v2408 = vsub.s32 %v2405, %v2407
          %v2409 = vrot.slane %v2401, %v2408
          %v2411 = vunpack.c.l.s4 1934713408
          %v2412 = vunpack.c.0.s8 %v2411
          %v2413 = vlaneseq
          %v2414 = vshrl.u32 %v2413, 7
          %v2415 = vsub.s32 %v2412, %v2414
          %v2416 = vrot.slane %v2402, %v2415
          %v2417 = vcombine.low %v2393, %v2409
          %v2418 = vcombine.high %v2393, %v2409
          %v2419 = vcombine.low %v2400, %v2416
          %v2420 = vcombine.high %v2400, %v2416
          %v2421 = vld [vmem:[#allocation2] sm:$0xff]
          %v2422 = vld [vmem:[#allocation2 + $0x8] sm:$0xff]
          %v2423 = vld [vmem:[#allocation2 + $0x10] sm:$0xff]
          %v2424 = vld [vmem:[#allocation2 + $0x18] sm:$0xff]
          %v2426 = vsel %vm1243, %v2421, 0
          %v2429 = vsel %vm1243, %v2271, 0
          %2431 = vmatprep.subr.mxu0 0.0
          %2432 = vmatpush1.xpose.msra.mxu0 0.0
          %2433 = vmatprep.subr.mxu0 0.0
          %2434 = vmatpush1.xpose.msra.mxu0 0.0
          %2435 = vmatprep.subr.mxu0 0.0
          %2436 = vmatpush1.xpose.msra.mxu0 0.0
          %2437 = vmatprep.subr.mxu0 0.0
          %2438 = vmatpush1.xpose.msra.mxu0 0.0
          %2439 = vmatprep.subr.mxu0 0.0
          %2440 = vmatpush1.xpose.msra.mxu0 0.0
          %2441 = vmatprep.subr.mxu0 0.0
          %2442 = vmatpush1.xpose.msra.mxu0 0.0
          %2443 = vmatprep.subr.mxu0 0.0
          %2444 = vmatpush1.xpose.msra.mxu0 0.0
          %2445 = vmatprep.subr.mxu0 0.0
          %2446 = vmatpush1.xpose.msra.mxu0 0.0
          %2447 = vmatprep.subr.mxu0 0.0
          %2448 = vmatpush1.xpose.msra.mxu0 0.0
          %2449 = vmatprep.subr.mxu0 0.0
          %2450 = vmatpush1.xpose.msra.mxu0 0.0
          %2451 = vmatprep.subr.mxu0 0.0
          %2452 = vmatpush1.xpose.msra.mxu0 0.0
          %2453 = vmatprep.subr.mxu0 0.0
          %2454 = vmatpush1.xpose.msra.mxu0 0.0
          %2455 = vmatprep.subr.mxu0 0.0
          %2456 = vmatpush1.xpose.msra.mxu0 0.0
          %2457 = vmatprep.subr.mxu0 0.0
          %2458 = vmatpush1.xpose.msra.mxu0 0.0
          %2459 = vmatprep.subr.mxu0 0.0
          %2460 = vmatpush1.xpose.msra.mxu0 0.0
          %2461 = vmatprep.subr.mxu0 0.0
          %2462 = vmatpush1.xpose.msra.mxu0 %v2429
          %2463 = vmatprep.subr.mxu0 0.0
          %2464 = vmatpush2.xpose.msra.mxu0 0.0
          %2465 = vmatprep.subr.mxu0 0.0
          %2466 = vmatpush2.xpose.msra.mxu0 0.0
          %2467 = vmatprep.subr.mxu0 0.0
          %2468 = vmatpush2.xpose.msra.mxu0 0.0
          %2469 = vmatprep.subr.mxu0 0.0
          %2470 = vmatpush2.xpose.msra.mxu0 0.0
          %2471 = vmatprep.subr.mxu0 0.0
          %2472 = vmatpush2.xpose.msra.mxu0 0.0
          %2473 = vmatprep.subr.mxu0 0.0
          %2474 = vmatpush2.xpose.msra.mxu0 0.0
          %2475 = vmatprep.subr.mxu0 0.0
          %2476 = vmatpush2.xpose.msra.mxu0 0.0
          %2477 = vmatprep.subr.mxu0 0.0
          %2478 = vmatpush2.xpose.msra.mxu0 0.0
          %2479 = vmatprep.subr.mxu0 0.0
          %2480 = vmatpush2.xpose.msra.mxu0 0.0
          %2481 = vmatprep.subr.mxu0 0.0
          %2482 = vmatpush2.xpose.msra.mxu0 0.0
          %2483 = vmatprep.subr.mxu0 0.0
          %2484 = vmatpush2.xpose.msra.mxu0 0.0
          %2485 = vmatprep.subr.mxu0 0.0
          %2486 = vmatpush2.xpose.msra.mxu0 0.0
          %2487 = vmatprep.subr.mxu0 0.0
          %2488 = vmatpush2.xpose.msra.mxu0 0.0
          %2489 = vmatprep.subr.mxu0 0.0
          %2490 = vmatpush2.xpose.msra.mxu0 0.0
          %2491 = vmatprep.subr.mxu0 0.0
          %2492 = vmatpush2.xpose.msra.mxu0 0.0
          %2493 = vmatprep.subr.mxu0 0.0
          %2494 = vmatpush2.xpose.msra.mxu0 0.0
          %2495 = vmatprep.mubr.f32.mxu0 0.0
          %2496 = vmatmul.mubr.f32.gmra.mxu0 %v2426
          %v2497 = vpop.f32.mrf.mxu0
          %v2498 = vadd.f32 0.0, %v2497
          %v2499 = vpop.f32.mrf.mxu0
          %2500 = vdwg.mxu0
          %v2502 = vsel %vm1243, %v2422, 0
          %v2505 = vsel %vm1243, %v2272, 0
          %2507 = vmatprep.subr.mxu0 0.0
          %2508 = vmatpush1.xpose.msra.mxu0 0.0
          %2509 = vmatprep.subr.mxu0 0.0
          %2510 = vmatpush1.xpose.msra.mxu0 0.0
          %2511 = vmatprep.subr.mxu0 0.0
          %2512 = vmatpush1.xpose.msra.mxu0 0.0
          %2513 = vmatprep.subr.mxu0 0.0
          %2514 = vmatpush1.xpose.msra.mxu0 0.0
          %2515 = vmatprep.subr.mxu0 0.0
          %2516 = vmatpush1.xpose.msra.mxu0 0.0
          %2517 = vmatprep.subr.mxu0 0.0
          %2518 = vmatpush1.xpose.msra.mxu0 0.0
          %2519 = vmatprep.subr.mxu0 0.0
          %2520 = vmatpush1.xpose.msra.mxu0 0.0
          %2521 = vmatprep.subr.mxu0 0.0
          %2522 = vmatpush1.xpose.msra.mxu0 0.0
          %2523 = vmatprep.subr.mxu0 0.0
          %2524 = vmatpush1.xpose.msra.mxu0 0.0
          %2525 = vmatprep.subr.mxu0 0.0
          %2526 = vmatpush1.xpose.msra.mxu0 0.0
          %2527 = vmatprep.subr.mxu0 0.0
          %2528 = vmatpush1.xpose.msra.mxu0 0.0
          %2529 = vmatprep.subr.mxu0 0.0
          %2530 = vmatpush1.xpose.msra.mxu0 0.0
          %2531 = vmatprep.subr.mxu0 0.0
          %2532 = vmatpush1.xpose.msra.mxu0 0.0
          %2533 = vmatprep.subr.mxu0 0.0
          %2534 = vmatpush1.xpose.msra.mxu0 0.0
          %2535 = vmatprep.subr.mxu0 0.0
          %2536 = vmatpush1.xpose.msra.mxu0 0.0
          %2537 = vmatprep.subr.mxu0 0.0
          %2538 = vmatpush1.xpose.msra.mxu0 %v2505
          %2539 = vmatprep.subr.mxu0 0.0
          %2540 = vmatpush2.xpose.msra.mxu0 0.0
          %2541 = vmatprep.subr.mxu0 0.0
          %2542 = vmatpush2.xpose.msra.mxu0 0.0
          %2543 = vmatprep.subr.mxu0 0.0
          %2544 = vmatpush2.xpose.msra.mxu0 0.0
          %2545 = vmatprep.subr.mxu0 0.0
          %2546 = vmatpush2.xpose.msra.mxu0 0.0
          %2547 = vmatprep.subr.mxu0 0.0
          %2548 = vmatpush2.xpose.msra.mxu0 0.0
          %2549 = vmatprep.subr.mxu0 0.0
          %2550 = vmatpush2.xpose.msra.mxu0 0.0
          %2551 = vmatprep.subr.mxu0 0.0
          %2552 = vmatpush2.xpose.msra.mxu0 0.0
          %2553 = vmatprep.subr.mxu0 0.0
          %2554 = vmatpush2.xpose.msra.mxu0 0.0
          %2555 = vmatprep.subr.mxu0 0.0
          %2556 = vmatpush2.xpose.msra.mxu0 0.0
          %2557 = vmatprep.subr.mxu0 0.0
          %2558 = vmatpush2.xpose.msra.mxu0 0.0
          %2559 = vmatprep.subr.mxu0 0.0
          %2560 = vmatpush2.xpose.msra.mxu0 0.0
          %2561 = vmatprep.subr.mxu0 0.0
          %2562 = vmatpush2.xpose.msra.mxu0 0.0
          %2563 = vmatprep.subr.mxu0 0.0
          %2564 = vmatpush2.xpose.msra.mxu0 0.0
          %2565 = vmatprep.subr.mxu0 0.0
          %2566 = vmatpush2.xpose.msra.mxu0 0.0
          %2567 = vmatprep.subr.mxu0 0.0
          %2568 = vmatpush2.xpose.msra.mxu0 0.0
          %2569 = vmatprep.subr.mxu0 0.0
          %2570 = vmatpush2.xpose.msra.mxu0 0.0
          %2571 = vmatprep.mubr.f32.mxu0 0.0
          %2572 = vmatmul.mubr.f32.gmra.mxu0 %v2502
          %v2573 = vpop.f32.mrf.mxu0
          %v2574 = vadd.f32 0.0, %v2573
          %v2575 = vpop.f32.mrf.mxu0
          %2576 = vdwg.mxu0
          %v2578 = vsel %vm1243, %v2423, 0
          %v2581 = vsel %vm1243, %v2273, 0
          %2583 = vmatprep.subr.mxu0 0.0
          %2584 = vmatpush1.xpose.msra.mxu0 0.0
          %2585 = vmatprep.subr.mxu0 0.0
          %2586 = vmatpush1.xpose.msra.mxu0 0.0
          %2587 = vmatprep.subr.mxu0 0.0
          %2588 = vmatpush1.xpose.msra.mxu0 0.0
          %2589 = vmatprep.subr.mxu0 0.0
          %2590 = vmatpush1.xpose.msra.mxu0 0.0
          %2591 = vmatprep.subr.mxu0 0.0
          %2592 = vmatpush1.xpose.msra.mxu0 0.0
          %2593 = vmatprep.subr.mxu0 0.0
          %2594 = vmatpush1.xpose.msra.mxu0 0.0
          %2595 = vmatprep.subr.mxu0 0.0
          %2596 = vmatpush1.xpose.msra.mxu0 0.0
          %2597 = vmatprep.subr.mxu0 0.0
          %2598 = vmatpush1.xpose.msra.mxu0 0.0
          %2599 = vmatprep.subr.mxu0 0.0
          %2600 = vmatpush1.xpose.msra.mxu0 0.0
          %2601 = vmatprep.subr.mxu0 0.0
          %2602 = vmatpush1.xpose.msra.mxu0 0.0
          %2603 = vmatprep.subr.mxu0 0.0
          %2604 = vmatpush1.xpose.msra.mxu0 0.0
          %2605 = vmatprep.subr.mxu0 0.0
          %2606 = vmatpush1.xpose.msra.mxu0 0.0
          %2607 = vmatprep.subr.mxu0 0.0
          %2608 = vmatpush1.xpose.msra.mxu0 0.0
          %2609 = vmatprep.subr.mxu0 0.0
          %2610 = vmatpush1.xpose.msra.mxu0 0.0
          %2611 = vmatprep.subr.mxu0 0.0
          %2612 = vmatpush1.xpose.msra.mxu0 0.0
          %2613 = vmatprep.subr.mxu0 0.0
          %2614 = vmatpush1.xpose.msra.mxu0 %v2581
          %2615 = vmatprep.subr.mxu0 0.0
          %2616 = vmatpush2.xpose.msra.mxu0 0.0
          %2617 = vmatprep.subr.mxu0 0.0
          %2618 = vmatpush2.xpose.msra.mxu0 0.0
          %2619 = vmatprep.subr.mxu0 0.0
          %2620 = vmatpush2.xpose.msra.mxu0 0.0
          %2621 = vmatprep.subr.mxu0 0.0
          %2622 = vmatpush2.xpose.msra.mxu0 0.0
          %2623 = vmatprep.subr.mxu0 0.0
          %2624 = vmatpush2.xpose.msra.mxu0 0.0
          %2625 = vmatprep.subr.mxu0 0.0
          %2626 = vmatpush2.xpose.msra.mxu0 0.0
          %2627 = vmatprep.subr.mxu0 0.0
          %2628 = vmatpush2.xpose.msra.mxu0 0.0
          %2629 = vmatprep.subr.mxu0 0.0
          %2630 = vmatpush2.xpose.msra.mxu0 0.0
          %2631 = vmatprep.subr.mxu0 0.0
          %2632 = vmatpush2.xpose.msra.mxu0 0.0
          %2633 = vmatprep.subr.mxu0 0.0
          %2634 = vmatpush2.xpose.msra.mxu0 0.0
          %2635 = vmatprep.subr.mxu0 0.0
          %2636 = vmatpush2.xpose.msra.mxu0 0.0
          %2637 = vmatprep.subr.mxu0 0.0
          %2638 = vmatpush2.xpose.msra.mxu0 0.0
          %2639 = vmatprep.subr.mxu0 0.0
          %2640 = vmatpush2.xpose.msra.mxu0 0.0
          %2641 = vmatprep.subr.mxu0 0.0
          %2642 = vmatpush2.xpose.msra.mxu0 0.0
          %2643 = vmatprep.subr.mxu0 0.0
          %2644 = vmatpush2.xpose.msra.mxu0 0.0
          %2645 = vmatprep.subr.mxu0 0.0
          %2646 = vmatpush2.xpose.msra.mxu0 0.0
          %2647 = vmatprep.mubr.f32.mxu0 0.0
          %2648 = vmatmul.mubr.f32.gmra.mxu0 %v2578
          %v2649 = vpop.f32.mrf.mxu0
          %v2650 = vadd.f32 0.0, %v2649
          %v2651 = vpop.f32.mrf.mxu0
          %2652 = vdwg.mxu0
          %v2654 = vsel %vm1243, %v2424, 0
          %v2657 = vsel %vm1243, %v2274, 0
          %2659 = vmatprep.subr.mxu0 0.0
          %2660 = vmatpush1.xpose.msra.mxu0 0.0
          %2661 = vmatprep.subr.mxu0 0.0
          %2662 = vmatpush1.xpose.msra.mxu0 0.0
          %2663 = vmatprep.subr.mxu0 0.0
          %2664 = vmatpush1.xpose.msra.mxu0 0.0
          %2665 = vmatprep.subr.mxu0 0.0
          %2666 = vmatpush1.xpose.msra.mxu0 0.0
          %2667 = vmatprep.subr.mxu0 0.0
          %2668 = vmatpush1.xpose.msra.mxu0 0.0
          %2669 = vmatprep.subr.mxu0 0.0
          %2670 = vmatpush1.xpose.msra.mxu0 0.0
          %2671 = vmatprep.subr.mxu0 0.0
          %2672 = vmatpush1.xpose.msra.mxu0 0.0
          %2673 = vmatprep.subr.mxu0 0.0
          %2674 = vmatpush1.xpose.msra.mxu0 0.0
          %2675 = vmatprep.subr.mxu0 0.0
          %2676 = vmatpush1.xpose.msra.mxu0 0.0
          %2677 = vmatprep.subr.mxu0 0.0
          %2678 = vmatpush1.xpose.msra.mxu0 0.0
          %2679 = vmatprep.subr.mxu0 0.0
          %2680 = vmatpush1.xpose.msra.mxu0 0.0
          %2681 = vmatprep.subr.mxu0 0.0
          %2682 = vmatpush1.xpose.msra.mxu0 0.0
          %2683 = vmatprep.subr.mxu0 0.0
          %2684 = vmatpush1.xpose.msra.mxu0 0.0
          %2685 = vmatprep.subr.mxu0 0.0
          %2686 = vmatpush1.xpose.msra.mxu0 0.0
          %2687 = vmatprep.subr.mxu0 0.0
          %2688 = vmatpush1.xpose.msra.mxu0 0.0
          %2689 = vmatprep.subr.mxu0 0.0
          %2690 = vmatpush1.xpose.msra.mxu0 %v2657
          %2691 = vmatprep.subr.mxu0 0.0
          %2692 = vmatpush2.xpose.msra.mxu0 0.0
          %2693 = vmatprep.subr.mxu0 0.0
          %2694 = vmatpush2.xpose.msra.mxu0 0.0
          %2695 = vmatprep.subr.mxu0 0.0
          %2696 = vmatpush2.xpose.msra.mxu0 0.0
          %2697 = vmatprep.subr.mxu0 0.0
          %2698 = vmatpush2.xpose.msra.mxu0 0.0
          %2699 = vmatprep.subr.mxu0 0.0
          %2700 = vmatpush2.xpose.msra.mxu0 0.0
          %2701 = vmatprep.subr.mxu0 0.0
          %2702 = vmatpush2.xpose.msra.mxu0 0.0
          %2703 = vmatprep.subr.mxu0 0.0
          %2704 = vmatpush2.xpose.msra.mxu0 0.0
          %2705 = vmatprep.subr.mxu0 0.0
          %2706 = vmatpush2.xpose.msra.mxu0 0.0
          %2707 = vmatprep.subr.mxu0 0.0
          %2708 = vmatpush2.xpose.msra.mxu0 0.0
          %2709 = vmatprep.subr.mxu0 0.0
          %2710 = vmatpush2.xpose.msra.mxu0 0.0
          %2711 = vmatprep.subr.mxu0 0.0
          %2712 = vmatpush2.xpose.msra.mxu0 0.0
          %2713 = vmatprep.subr.mxu0 0.0
          %2714 = vmatpush2.xpose.msra.mxu0 0.0
          %2715 = vmatprep.subr.mxu0 0.0
          %2716 = vmatpush2.xpose.msra.mxu0 0.0
          %2717 = vmatprep.subr.mxu0 0.0
          %2718 = vmatpush2.xpose.msra.mxu0 0.0
          %2719 = vmatprep.subr.mxu0 0.0
          %2720 = vmatpush2.xpose.msra.mxu0 0.0
          %2721 = vmatprep.subr.mxu0 0.0
          %2722 = vmatpush2.xpose.msra.mxu0 0.0
          %2723 = vmatprep.mubr.f32.mxu0 0.0
          %2724 = vmatmul.mubr.f32.gmra.mxu0 %v2654
          %v2725 = vpop.f32.mrf.mxu0
          %v2726 = vadd.f32 0.0, %v2725
          %v2727 = vpop.f32.mrf.mxu0
          %2728 = vdwg.mxu0
          %v2729 = vld [vmem:[#allocation4] sm:$0xff]
          %v2730 = vld [vmem:[#allocation4 + $0x8] sm:$0xff]
          %v2731 = vld [vmem:[#allocation4 + $0x10] sm:$0xff]
          %v2732 = vld [vmem:[#allocation4 + $0x18] sm:$0xff]
          %v2733 = vsel %vm1243, %v2498, -inf
          %2734 = vmax.xlane.f32.xlu0 %v2733
          %v2735 = vpop.xlane.xlu0 %2734
          %v2736 = vsel %vm1243, %v2574, -inf
          %2737 = vmax.xlane.f32.xlu0 %v2736
          %v2738 = vpop.xlane.xlu0 %2737
          %v2739 = vsel %vm1243, %v2650, -inf
          %2740 = vmax.xlane.f32.xlu0 %v2739
          %v2741 = vpop.xlane.xlu0 %2740
          %v2742 = vsel %vm1243, %v2726, -inf
          %2743 = vmax.xlane.f32.xlu0 %v2742
          %v2744 = vpop.xlane.xlu0 %2743
          %v2745 = vmax.f32 %v2729, %v2735
          %v2746 = vmax.f32 %v2730, %v2738
          %v2747 = vmax.f32 %v2731, %v2741
          %v2748 = vmax.f32 %v2732, %v2744
          %v2749 = vsub.f32 %v2729, %v2745
          %v2750 = vsub.f32 %v2730, %v2746
          %v2751 = vsub.f32 %v2731, %v2747
          %v2752 = vsub.f32 %v2732, %v2748
          %v2753 = vmul.f32 %v2749, 1.442695
          %v2754 = vpow.pop %v2753
          %v2755 = vmul.f32 %v2750, 1.442695
          %v2756 = vpow.pop %v2755
          %v2757 = vmul.f32 %v2751, 1.442695
          %v2758 = vpow.pop %v2757
          %v2759 = vmul.f32 %v2752, 1.442695
          %v2760 = vpow.pop %v2759
          %2762 = vset.pattern.permute.xlu0 0
          %2763 = vperm.xlu0 %2762, %v2745
          %v2764 = vpop.permute.xlu0 %2763
          %2767 = vset.pattern.permute.xlu0 0
          %2768 = vperm.xlu0 %2767, %v2746
          %v2769 = vpop.permute.xlu0 %2768
          %2772 = vset.pattern.permute.xlu0 0
          %2773 = vperm.xlu0 %2772, %v2747
          %v2774 = vpop.permute.xlu0 %2773
          %2777 = vset.pattern.permute.xlu0 0
          %2778 = vperm.xlu0 %2777, %v2748
          %v2779 = vpop.permute.xlu0 %2778
          %v2781 = vsub.f32 %v2498, %v2764
          %v2782 = vsub.f32 %v2574, %v2769
          %v2783 = vsub.f32 %v2650, %v2774
          %v2784 = vsub.f32 %v2726, %v2779
          %v2785 = vmul.f32 %v2781, 1.442695
          %v2786 = vpow.pop %v2785
          %v2787 = vmul.f32 %v2782, 1.442695
          %v2788 = vpow.pop %v2787
          %v2789 = vmul.f32 %v2783, 1.442695
          %v2790 = vpow.pop %v2789
          %v2791 = vmul.f32 %v2784, 1.442695
          %v2792 = vpow.pop %v2791
          %v2793 = vld [vmem:[#allocation5] sm:$0xff]
          %v2794 = vld [vmem:[#allocation5 + $0x8] sm:$0xff]
          %v2795 = vld [vmem:[#allocation5 + $0x10] sm:$0xff]
          %v2796 = vld [vmem:[#allocation5 + $0x18] sm:$0xff]
          %v2797 = vmul.f32 %v2754, %v2793
          %v2798 = vmul.f32 %v2756, %v2794
          %v2799 = vmul.f32 %v2758, %v2795
          %v2800 = vmul.f32 %v2760, %v2796
          %v2801 = vsel %vm1243, %v2786, 0.0
          %2802 = vadd.xlane.f32.xlu0 %v2801
          %v2803 = vpop.xlane.xlu0 %2802
          %v2804 = vsel %vm1243, %v2788, 0.0
          %2805 = vadd.xlane.f32.xlu0 %v2804
          %v2806 = vpop.xlane.xlu0 %2805
          %v2807 = vsel %vm1243, %v2790, 0.0
          %2808 = vadd.xlane.f32.xlu0 %v2807
          %v2809 = vpop.xlane.xlu0 %2808
          %v2810 = vsel %vm1243, %v2792, 0.0
          %2811 = vadd.xlane.f32.xlu0 %v2810
          %v2812 = vpop.xlane.xlu0 %2811
          %v2813 = vadd.f32 %v2797, %v2803
          %v2814 = vadd.f32 %v2798, %v2806
          %v2815 = vadd.f32 %v2799, %v2809
          %v2816 = vadd.f32 %v2800, %v2812
          %v2817 = vld [vmem:[#allocation6] sm:$0xff]
          %v2818 = vld [vmem:[#allocation6 + $0x8] sm:$0xff]
          %v2819 = vld [vmem:[#allocation6 + $0x10] sm:$0xff]
          %v2820 = vld [vmem:[#allocation6 + $0x18] sm:$0xff]
          %2822 = vset.pattern.permute.xlu0 0
          %2823 = vperm.xlu0 %2822, %v2754
          %v2824 = vpop.permute.xlu0 %2823
          %2827 = vset.pattern.permute.xlu0 0
          %2828 = vperm.xlu0 %2827, %v2756
          %v2829 = vpop.permute.xlu0 %2828
          %2832 = vset.pattern.permute.xlu0 0
          %2833 = vperm.xlu0 %2832, %v2758
          %v2834 = vpop.permute.xlu0 %2833
          %2837 = vset.pattern.permute.xlu0 0
          %2838 = vperm.xlu0 %2837, %v2760
          %v2839 = vpop.permute.xlu0 %2838
          %v2841 = vmul.f32 %v2824, %v2817
          %v2842 = vmul.f32 %v2829, %v2818
          %v2843 = vmul.f32 %v2834, %v2819
          %v2844 = vmul.f32 %v2839, %v2820
          %v2846 = vsel %vm1243, %v2786, 0
          %2848 = vmatprep.subr.mxu0 0.0
          %2849 = vmatpush1.msra.mxu0 0.0
          %2850 = vmatprep.subr.mxu0 0.0
          %2851 = vmatpush1.msra.mxu0 0.0
          %2852 = vmatprep.subr.mxu0 0.0
          %2853 = vmatpush1.msra.mxu0 0.0
          %2854 = vmatprep.subr.mxu0 0.0
          %2855 = vmatpush1.msra.mxu0 0.0
          %2856 = vmatprep.subr.mxu0 0.0
          %2857 = vmatpush1.msra.mxu0 0.0
          %2858 = vmatprep.subr.mxu0 0.0
          %2859 = vmatpush1.msra.mxu0 0.0
          %2860 = vmatprep.subr.mxu0 0.0
          %2861 = vmatpush1.msra.mxu0 0.0
          %2862 = vmatprep.subr.mxu0 0.0
          %2863 = vmatpush1.msra.mxu0 0.0
          %2864 = vmatprep.subr.mxu0 0.0
          %2865 = vmatpush1.msra.mxu0 0.0
          %2866 = vmatprep.subr.mxu0 0.0
          %2867 = vmatpush1.msra.mxu0 0.0
          %2868 = vmatprep.subr.mxu0 0.0
          %2869 = vmatpush1.msra.mxu0 0.0
          %2870 = vmatprep.subr.mxu0 0.0
          %2871 = vmatpush1.msra.mxu0 0.0
          %2872 = vmatprep.subr.mxu0 0.0
          %2873 = vmatpush1.msra.mxu0 0.0
          %2874 = vmatprep.subr.mxu0 0.0
          %2875 = vmatpush1.msra.mxu0 0.0
          %2876 = vmatprep.subr.mxu0 0.0
          %2877 = vmatpush1.msra.mxu0 0.0
          %2878 = vmatprep.subr.mxu0 0.0
          %2879 = vmatpush1.msra.mxu0 %v2417
          %2880 = vmatprep.subr.mxu0 0.0
          %2881 = vmatpush2.msra.mxu0 0.0
          %2882 = vmatprep.subr.mxu0 0.0
          %2883 = vmatpush2.msra.mxu0 0.0
          %2884 = vmatprep.subr.mxu0 0.0
          %2885 = vmatpush2.msra.mxu0 0.0
          %2886 = vmatprep.subr.mxu0 0.0
          %2887 = vmatpush2.msra.mxu0 0.0
          %2888 = vmatprep.subr.mxu0 0.0
          %2889 = vmatpush2.msra.mxu0 0.0
          %2890 = vmatprep.subr.mxu0 0.0
          %2891 = vmatpush2.msra.mxu0 0.0
          %2892 = vmatprep.subr.mxu0 0.0
          %2893 = vmatpush2.msra.mxu0 0.0
          %2894 = vmatprep.subr.mxu0 0.0
          %2895 = vmatpush2.msra.mxu0 0.0
          %2896 = vmatprep.subr.mxu0 0.0
          %2897 = vmatpush2.msra.mxu0 0.0
          %2898 = vmatprep.subr.mxu0 0.0
          %2899 = vmatpush2.msra.mxu0 0.0
          %2900 = vmatprep.subr.mxu0 0.0
          %2901 = vmatpush2.msra.mxu0 0.0
          %2902 = vmatprep.subr.mxu0 0.0
          %2903 = vmatpush2.msra.mxu0 0.0
          %2904 = vmatprep.subr.mxu0 0.0
          %2905 = vmatpush2.msra.mxu0 0.0
          %2906 = vmatprep.subr.mxu0 0.0
          %2907 = vmatpush2.msra.mxu0 0.0
          %2908 = vmatprep.subr.mxu0 0.0
          %2909 = vmatpush2.msra.mxu0 0.0
          %2910 = vmatprep.subr.mxu0 0.0
          %2911 = vmatpush2.msra.mxu0 0.0
          %2912 = vmatprep.mubr.f32.mxu0 0.0
          %2913 = vmatmul.mubr.f32.gmra.mxu0 %v2846
          %v2914 = vpop.f32.mrf.mxu0
          %v2915 = vadd.f32 0.0, %v2914
          %v2916 = vpop.f32.mrf.mxu0
          %2917 = vdwg.mxu0
          %v2919 = vsel %vm1243, %v2788, 0
          %2921 = vmatprep.subr.mxu0 0.0
          %2922 = vmatpush1.msra.mxu0 0.0
          %2923 = vmatprep.subr.mxu0 0.0
          %2924 = vmatpush1.msra.mxu0 0.0
          %2925 = vmatprep.subr.mxu0 0.0
          %2926 = vmatpush1.msra.mxu0 0.0
          %2927 = vmatprep.subr.mxu0 0.0
          %2928 = vmatpush1.msra.mxu0 0.0
          %2929 = vmatprep.subr.mxu0 0.0
          %2930 = vmatpush1.msra.mxu0 0.0
          %2931 = vmatprep.subr.mxu0 0.0
          %2932 = vmatpush1.msra.mxu0 0.0
          %2933 = vmatprep.subr.mxu0 0.0
          %2934 = vmatpush1.msra.mxu0 0.0
          %2935 = vmatprep.subr.mxu0 0.0
          %2936 = vmatpush1.msra.mxu0 0.0
          %2937 = vmatprep.subr.mxu0 0.0
          %2938 = vmatpush1.msra.mxu0 0.0
          %2939 = vmatprep.subr.mxu0 0.0
          %2940 = vmatpush1.msra.mxu0 0.0
          %2941 = vmatprep.subr.mxu0 0.0
          %2942 = vmatpush1.msra.mxu0 0.0
          %2943 = vmatprep.subr.mxu0 0.0
          %2944 = vmatpush1.msra.mxu0 0.0
          %2945 = vmatprep.subr.mxu0 0.0
          %2946 = vmatpush1.msra.mxu0 0.0
          %2947 = vmatprep.subr.mxu0 0.0
          %2948 = vmatpush1.msra.mxu0 0.0
          %2949 = vmatprep.subr.mxu0 0.0
          %2950 = vmatpush1.msra.mxu0 0.0
          %2951 = vmatprep.subr.mxu0 0.0
          %2952 = vmatpush1.msra.mxu0 %v2418
          %2953 = vmatprep.subr.mxu0 0.0
          %2954 = vmatpush2.msra.mxu0 0.0
          %2955 = vmatprep.subr.mxu0 0.0
          %2956 = vmatpush2.msra.mxu0 0.0
          %2957 = vmatprep.subr.mxu0 0.0
          %2958 = vmatpush2.msra.mxu0 0.0
          %2959 = vmatprep.subr.mxu0 0.0
          %2960 = vmatpush2.msra.mxu0 0.0
          %2961 = vmatprep.subr.mxu0 0.0
          %2962 = vmatpush2.msra.mxu0 0.0
          %2963 = vmatprep.subr.mxu0 0.0
          %2964 = vmatpush2.msra.mxu0 0.0
          %2965 = vmatprep.subr.mxu0 0.0
          %2966 = vmatpush2.msra.mxu0 0.0
          %2967 = vmatprep.subr.mxu0 0.0
          %2968 = vmatpush2.msra.mxu0 0.0
          %2969 = vmatprep.subr.mxu0 0.0
          %2970 = vmatpush2.msra.mxu0 0.0
          %2971 = vmatprep.subr.mxu0 0.0
          %2972 = vmatpush2.msra.mxu0 0.0
          %2973 = vmatprep.subr.mxu0 0.0
          %2974 = vmatpush2.msra.mxu0 0.0
          %2975 = vmatprep.subr.mxu0 0.0
          %2976 = vmatpush2.msra.mxu0 0.0
          %2977 = vmatprep.subr.mxu0 0.0
          %2978 = vmatpush2.msra.mxu0 0.0
          %2979 = vmatprep.subr.mxu0 0.0
          %2980 = vmatpush2.msra.mxu0 0.0
          %2981 = vmatprep.subr.mxu0 0.0
          %2982 = vmatpush2.msra.mxu0 0.0
          %2983 = vmatprep.subr.mxu0 0.0
          %2984 = vmatpush2.msra.mxu0 0.0
          %2985 = vmatprep.mubr.f32.mxu0 0.0
          %2986 = vmatmul.mubr.f32.gmra.mxu0 %v2919
          %v2987 = vpop.f32.mrf.mxu0
          %v2988 = vadd.f32 0.0, %v2987
          %v2989 = vpop.f32.mrf.mxu0
          %2990 = vdwg.mxu0
          %v2992 = vsel %vm1243, %v2790, 0
          %2994 = vmatprep.subr.mxu0 0.0
          %2995 = vmatpush1.msra.mxu0 0.0
          %2996 = vmatprep.subr.mxu0 0.0
          %2997 = vmatpush1.msra.mxu0 0.0
          %2998 = vmatprep.subr.mxu0 0.0
          %2999 = vmatpush1.msra.mxu0 0.0
          %3000 = vmatprep.subr.mxu0 0.0
          %3001 = vmatpush1.msra.mxu0 0.0
          %3002 = vmatprep.subr.mxu0 0.0
          %3003 = vmatpush1.msra.mxu0 0.0
          %3004 = vmatprep.subr.mxu0 0.0
          %3005 = vmatpush1.msra.mxu0 0.0
          %3006 = vmatprep.subr.mxu0 0.0
          %3007 = vmatpush1.msra.mxu0 0.0
          %3008 = vmatprep.subr.mxu0 0.0
          %3009 = vmatpush1.msra.mxu0 0.0
          %3010 = vmatprep.subr.mxu0 0.0
          %3011 = vmatpush1.msra.mxu0 0.0
          %3012 = vmatprep.subr.mxu0 0.0
          %3013 = vmatpush1.msra.mxu0 0.0
          %3014 = vmatprep.subr.mxu0 0.0
          %3015 = vmatpush1.msra.mxu0 0.0
          %3016 = vmatprep.subr.mxu0 0.0
          %3017 = vmatpush1.msra.mxu0 0.0
          %3018 = vmatprep.subr.mxu0 0.0
          %3019 = vmatpush1.msra.mxu0 0.0
          %3020 = vmatprep.subr.mxu0 0.0
          %3021 = vmatpush1.msra.mxu0 0.0
          %3022 = vmatprep.subr.mxu0 0.0
          %3023 = vmatpush1.msra.mxu0 0.0
          %3024 = vmatprep.subr.mxu0 0.0
          %3025 = vmatpush1.msra.mxu0 %v2419
          %3026 = vmatprep.subr.mxu0 0.0
          %3027 = vmatpush2.msra.mxu0 0.0
          %3028 = vmatprep.subr.mxu0 0.0
          %3029 = vmatpush2.msra.mxu0 0.0
          %3030 = vmatprep.subr.mxu0 0.0
          %3031 = vmatpush2.msra.mxu0 0.0
          %3032 = vmatprep.subr.mxu0 0.0
          %3033 = vmatpush2.msra.mxu0 0.0
          %3034 = vmatprep.subr.mxu0 0.0
          %3035 = vmatpush2.msra.mxu0 0.0
          %3036 = vmatprep.subr.mxu0 0.0
          %3037 = vmatpush2.msra.mxu0 0.0
          %3038 = vmatprep.subr.mxu0 0.0
          %3039 = vmatpush2.msra.mxu0 0.0
          %3040 = vmatprep.subr.mxu0 0.0
          %3041 = vmatpush2.msra.mxu0 0.0
          %3042 = vmatprep.subr.mxu0 0.0
          %3043 = vmatpush2.msra.mxu0 0.0
          %3044 = vmatprep.subr.mxu0 0.0
          %3045 = vmatpush2.msra.mxu0 0.0
          %3046 = vmatprep.subr.mxu0 0.0
          %3047 = vmatpush2.msra.mxu0 0.0
          %3048 = vmatprep.subr.mxu0 0.0
          %3049 = vmatpush2.msra.mxu0 0.0
          %3050 = vmatprep.subr.mxu0 0.0
          %3051 = vmatpush2.msra.mxu0 0.0
          %3052 = vmatprep.subr.mxu0 0.0
          %3053 = vmatpush2.msra.mxu0 0.0
          %3054 = vmatprep.subr.mxu0 0.0
          %3055 = vmatpush2.msra.mxu0 0.0
          %3056 = vmatprep.subr.mxu0 0.0
          %3057 = vmatpush2.msra.mxu0 0.0
          %3058 = vmatprep.mubr.f32.mxu0 0.0
          %3059 = vmatmul.mubr.f32.gmra.mxu0 %v2992
          %v3060 = vpop.f32.mrf.mxu0
          %v3061 = vadd.f32 0.0, %v3060
          %v3062 = vpop.f32.mrf.mxu0
          %3063 = vdwg.mxu0
          %v3065 = vsel %vm1243, %v2792, 0
          %3067 = vmatprep.subr.mxu0 0.0
          %3068 = vmatpush1.msra.mxu0 0.0
          %3069 = vmatprep.subr.mxu0 0.0
          %3070 = vmatpush1.msra.mxu0 0.0
          %3071 = vmatprep.subr.mxu0 0.0
          %3072 = vmatpush1.msra.mxu0 0.0
          %3073 = vmatprep.subr.mxu0 0.0
          %3074 = vmatpush1.msra.mxu0 0.0
          %3075 = vmatprep.subr.mxu0 0.0
          %3076 = vmatpush1.msra.mxu0 0.0
          %3077 = vmatprep.subr.mxu0 0.0
          %3078 = vmatpush1.msra.mxu0 0.0
          %3079 = vmatprep.subr.mxu0 0.0
          %3080 = vmatpush1.msra.mxu0 0.0
          %3081 = vmatprep.subr.mxu0 0.0
          %3082 = vmatpush1.msra.mxu0 0.0
          %3083 = vmatprep.subr.mxu0 0.0
          %3084 = vmatpush1.msra.mxu0 0.0
          %3085 = vmatprep.subr.mxu0 0.0
          %3086 = vmatpush1.msra.mxu0 0.0
          %3087 = vmatprep.subr.mxu0 0.0
          %3088 = vmatpush1.msra.mxu0 0.0
          %3089 = vmatprep.subr.mxu0 0.0
          %3090 = vmatpush1.msra.mxu0 0.0
          %3091 = vmatprep.subr.mxu0 0.0
          %3092 = vmatpush1.msra.mxu0 0.0
          %3093 = vmatprep.subr.mxu0 0.0
          %3094 = vmatpush1.msra.mxu0 0.0
          %3095 = vmatprep.subr.mxu0 0.0
          %3096 = vmatpush1.msra.mxu0 0.0
          %3097 = vmatprep.subr.mxu0 0.0
          %3098 = vmatpush1.msra.mxu0 %v2420
          %3099 = vmatprep.subr.mxu0 0.0
          %3100 = vmatpush2.msra.mxu0 0.0
          %3101 = vmatprep.subr.mxu0 0.0
          %3102 = vmatpush2.msra.mxu0 0.0
          %3103 = vmatprep.subr.mxu0 0.0
          %3104 = vmatpush2.msra.mxu0 0.0
          %3105 = vmatprep.subr.mxu0 0.0
          %3106 = vmatpush2.msra.mxu0 0.0
          %3107 = vmatprep.subr.mxu0 0.0
          %3108 = vmatpush2.msra.mxu0 0.0
          %3109 = vmatprep.subr.mxu0 0.0
          %3110 = vmatpush2.msra.mxu0 0.0
          %3111 = vmatprep.subr.mxu0 0.0
          %3112 = vmatpush2.msra.mxu0 0.0
          %3113 = vmatprep.subr.mxu0 0.0
          %3114 = vmatpush2.msra.mxu0 0.0
          %3115 = vmatprep.subr.mxu0 0.0
          %3116 = vmatpush2.msra.mxu0 0.0
          %3117 = vmatprep.subr.mxu0 0.0
          %3118 = vmatpush2.msra.mxu0 0.0
          %3119 = vmatprep.subr.mxu0 0.0
          %3120 = vmatpush2.msra.mxu0 0.0
          %3121 = vmatprep.subr.mxu0 0.0
          %3122 = vmatpush2.msra.mxu0 0.0
          %3123 = vmatprep.subr.mxu0 0.0
          %3124 = vmatpush2.msra.mxu0 0.0
          %3125 = vmatprep.subr.mxu0 0.0
          %3126 = vmatpush2.msra.mxu0 0.0
          %3127 = vmatprep.subr.mxu0 0.0
          %3128 = vmatpush2.msra.mxu0 0.0
          %3129 = vmatprep.subr.mxu0 0.0
          %3130 = vmatpush2.msra.mxu0 0.0
          %3131 = vmatprep.mubr.f32.mxu0 0.0
          %3132 = vmatmul.mubr.f32.gmra.mxu0 %v3065
          %v3133 = vpop.f32.mrf.mxu0
          %v3134 = vadd.f32 0.0, %v3133
          %v3135 = vpop.f32.mrf.mxu0
          %3136 = vdwg.mxu0
          %v3137 = vadd.f32 %v2841, %v2915
          %v3138 = vadd.f32 %v2842, %v2988
          %v3139 = vadd.f32 %v2843, %v3061
          %v3140 = vadd.f32 %v2844, %v3134
          %v3141 = vrcp.pop %v2813
          %v3142 = vrcp.pop %v2814
          %v3143 = vrcp.pop %v2815
          %v3144 = vrcp.pop %v2816
          %3146 = vset.pattern.permute.xlu0 0
          %3147 = vperm.xlu0 %3146, %v3141
          %v3148 = vpop.permute.xlu0 %3147
          %3151 = vset.pattern.permute.xlu0 0
          %3152 = vperm.xlu0 %3151, %v3142
          %v3153 = vpop.permute.xlu0 %3152
          %3156 = vset.pattern.permute.xlu0 0
          %3157 = vperm.xlu0 %3156, %v3143
          %v3158 = vpop.permute.xlu0 %3157
          %3161 = vset.pattern.permute.xlu0 0
          %3162 = vperm.xlu0 %3161, %v3144
          %v3163 = vpop.permute.xlu0 %3162
          %v3165 = vmul.f32 %v3137, %v3148
          %v3166 = vmul.f32 %v3138, %v3153
          %v3167 = vmul.f32 %v3139, %v3158
          %v3168 = vmul.f32 %v3140, %v3163
          %v3169 = vcombine.low %v3165, %v3167
          %v3170 = vcombine.high %v3165, %v3167
          %v3172 = vunpack.c.l.s4 1983009808
          %v3173 = vunpack.c.0.s8 %v3172
          %v3174 = vlaneseq
          %v3175 = vshrl.u32 %v3174, 7
          %v3176 = vsub.s32 %v3173, %v3175
          %v3177 = vrot.slane %v3169, %v3176
          %v3179 = vunpack.c.l.s4 1983009808
          %v3180 = vunpack.c.0.s8 %v3179
          %v3181 = vlaneseq
          %v3182 = vshrl.u32 %v3181, 7
          %v3183 = vsub.s32 %v3180, %v3182
          %v3184 = vrot.slane %v3170, %v3183
          %v3185 = vcombine.low %v3166, %v3168
          %v3186 = vcombine.high %v3166, %v3168
          %v3188 = vunpack.c.l.s4 1983009808
          %v3189 = vunpack.c.0.s8 %v3188
          %v3190 = vlaneseq
          %v3191 = vshrl.u32 %v3190, 7
          %v3192 = vsub.s32 %v3189, %v3191
          %v3193 = vrot.slane %v3185, %v3192
          %v3195 = vunpack.c.l.s4 1983009808
          %v3196 = vunpack.c.0.s8 %v3195
          %v3197 = vlaneseq
          %v3198 = vshrl.u32 %v3197, 7
          %v3199 = vsub.s32 %v3196, %v3198
          %v3200 = vrot.slane %v3186, %v3199
          %v3201 = vcombine.low %v3177, %v3193
          %v3202 = vcombine.high %v3177, %v3193
          %v3204 = vunpack.c.l.s4 1934713408
          %v3205 = vunpack.c.0.s8 %v3204
          %v3206 = vlaneseq
          %v3207 = vshrl.u32 %v3206, 7
          %v3208 = vsub.s32 %v3205, %v3207
          %v3209 = vrot.slane %v3201, %v3208
          %v3211 = vunpack.c.l.s4 1934713408
          %v3212 = vunpack.c.0.s8 %v3211
          %v3213 = vlaneseq
          %v3214 = vshrl.u32 %v3213, 7
          %v3215 = vsub.s32 %v3212, %v3214
          %v3216 = vrot.slane %v3202, %v3215
          %v3217 = vcombine.low %v3184, %v3200
          %v3218 = vcombine.high %v3184, %v3200
          %v3220 = vunpack.c.l.s4 1934713408
          %v3221 = vunpack.c.0.s8 %v3220
          %v3222 = vlaneseq
          %v3223 = vshrl.u32 %v3222, 7
          %v3224 = vsub.s32 %v3221, %v3223
          %v3225 = vrot.slane %v3217, %v3224
          %v3227 = vunpack.c.l.s4 1934713408
          %v3228 = vunpack.c.0.s8 %v3227
          %v3229 = vlaneseq
          %v3230 = vshrl.u32 %v3229, 7
          %v3231 = vsub.s32 %v3228, %v3230
          %v3232 = vrot.slane %v3218, %v3231
          %v3233 = vcombine.high %v3209, 0.0
          %v3234 = vcombine.high %v3216, 0.0
          %v3235 = vcombine.high %v3225, 0.0
          %v3236 = vcombine.high %v3232, 0.0
          %v3237 = vcombine.low %v3209, %v3216
          %v3239 = vunpack.c.l.s4 1983009808
          %v3240 = vunpack.c.0.s8 %v3239
          %v3241 = vlaneseq
          %v3242 = vshrl.u32 %v3241, 7
          %v3243 = vsub.s32 %v3240, %v3242
          %v3244 = vrot.slane %v3237, %v3243
          %v3245 = vcombine.low %v3233, %v3234
          %v3247 = vunpack.c.l.s4 1983009808
          %v3248 = vunpack.c.0.s8 %v3247
          %v3249 = vlaneseq
          %v3250 = vshrl.u32 %v3249, 7
          %v3251 = vsub.s32 %v3248, %v3250
          %v3252 = vrot.slane %v3245, %v3251
          %v3253 = vcombine.low %v3225, %v3232
          %v3255 = vunpack.c.l.s4 1983009808
          %v3256 = vunpack.c.0.s8 %v3255
          %v3257 = vlaneseq
          %v3258 = vshrl.u32 %v3257, 7
          %v3259 = vsub.s32 %v3256, %v3258
          %v3260 = vrot.slane %v3253, %v3259
          %v3261 = vcombine.low %v3235, %v3236
          %v3263 = vunpack.c.l.s4 1983009808
          %v3264 = vunpack.c.0.s8 %v3263
          %v3265 = vlaneseq
          %v3266 = vshrl.u32 %v3265, 7
          %v3267 = vsub.s32 %v3264, %v3266
          %v3268 = vrot.slane %v3261, %v3267
          %v3269 = vcombine.low %v3244, %v3252
          %v3270 = vcombine.high %v3244, %v3252
          %v3272 = vunpack.c.l.s4 1934713408
          %v3273 = vunpack.c.0.s8 %v3272
          %v3274 = vlaneseq
          %v3275 = vshrl.u32 %v3274, 7
          %v3276 = vsub.s32 %v3273, %v3275
          %v3277 = vrot.slane %v3269, %v3276
          %v3279 = vunpack.c.l.s4 1934713408
          %v3280 = vunpack.c.0.s8 %v3279
          %v3281 = vlaneseq
          %v3282 = vshrl.u32 %v3281, 7
          %v3283 = vsub.s32 %v3280, %v3282
          %v3284 = vrot.slane %v3270, %v3283
          %v3285 = vcombine.low %v3260, %v3268
          %v3286 = vcombine.high %v3260, %v3268
          %v3288 = vunpack.c.l.s4 1934713408
          %v3289 = vunpack.c.0.s8 %v3288
          %v3290 = vlaneseq
          %v3291 = vshrl.u32 %v3290, 7
          %v3292 = vsub.s32 %v3289, %v3291
          %v3293 = vrot.slane %v3285, %v3292
          %v3295 = vunpack.c.l.s4 1934713408
          %v3296 = vunpack.c.0.s8 %v3295
          %v3297 = vlaneseq
          %v3298 = vshrl.u32 %v3297, 7
          %v3299 = vsub.s32 %v3296, %v3298
          %v3300 = vrot.slane %v3286, %v3299
          %v3301 = vcombine.low %v3277, %v3293
          %v3302 = vcombine.high %v3277, %v3293
          %v3303 = vcombine.low %v3284, %v3300
          %v3304 = vcombine.high %v3284, %v3300
          %3306 = vrot.lane.b32.xlu0 %v3302, 8
          %v3307 = vpop.permute.xlu0 %3306
          %3310 = vrot.lane.b32.xlu0 %v3303, 16
          %v3311 = vpop.permute.xlu0 %3310
          %3314 = vrot.lane.b32.xlu0 %v3304, 24
          %v3315 = vpop.permute.xlu0 %3314
          %v3317 = vsel %vm1243, %v3301, %v3307
          %vm3318 = vcmask 130048
          %v3319 = vsel %vm3318, %v3317, %v3311
          %vm3320 = vcmask 195584
          %v3321 = vsel %vm3320, %v3319, %v3315
          %v3322 = vld [vmem:[#allocation16] sm:$0xff]
          %v3323 = vld [vmem:[#allocation16 + $0x8] sm:$0xff]
          %v3324 = vld [vmem:[#allocation16 + $0x10] sm:$0xff]
          %v3325 = vld [vmem:[#allocation16 + $0x18] sm:$0xff]
          %v3327 = vsel %vm767, %v3321, 0
          %3329 = vmatprep.subr.mxu0 0.0
          %3330 = vmatpush1.msra.mxu0 0.0
          %3331 = vmatprep.subr.mxu0 0.0
          %3332 = vmatpush1.msra.mxu0 0.0
          %3333 = vmatprep.subr.mxu0 0.0
          %3334 = vmatpush1.msra.mxu0 0.0
          %3335 = vmatprep.subr.mxu0 0.0
          %3336 = vmatpush1.msra.mxu0 0.0
          %3337 = vmatprep.subr.mxu0 0.0
          %3338 = vmatpush1.msra.mxu0 0.0
          %3339 = vmatprep.subr.mxu0 0.0
          %3340 = vmatpush1.msra.mxu0 0.0
          %3341 = vmatprep.subr.mxu0 0.0
          %3342 = vmatpush1.msra.mxu0 0.0
          %3343 = vmatprep.subr.mxu0 0.0
          %3344 = vmatpush1.msra.mxu0 0.0
          %3345 = vmatprep.subr.mxu0 0.0
          %3346 = vmatpush1.msra.mxu0 0.0
          %3347 = vmatprep.subr.mxu0 0.0
          %3348 = vmatpush1.msra.mxu0 0.0
          %3349 = vmatprep.subr.mxu0 0.0
          %3350 = vmatpush1.msra.mxu0 0.0
          %3351 = vmatprep.subr.mxu0 0.0
          %3352 = vmatpush1.msra.mxu0 0.0
          %3353 = vmatprep.subr.mxu0 0.0
          %3354 = vmatpush1.msra.mxu0 %v3325
          %3355 = vmatprep.subr.mxu0 0.0
          %3356 = vmatpush1.msra.mxu0 %v3324
          %3357 = vmatprep.subr.mxu0 0.0
          %3358 = vmatpush1.msra.mxu0 %v3323
          %3359 = vmatprep.subr.mxu0 0.0
          %3360 = vmatpush1.msra.mxu0 %v3322
          %3361 = vmatprep.subr.mxu0 0.0
          %3362 = vmatpush2.msra.mxu0 0.0
          %3363 = vmatprep.subr.mxu0 0.0
          %3364 = vmatpush2.msra.mxu0 0.0
          %3365 = vmatprep.subr.mxu0 0.0
          %3366 = vmatpush2.msra.mxu0 0.0
          %3367 = vmatprep.subr.mxu0 0.0
          %3368 = vmatpush2.msra.mxu0 0.0
          %3369 = vmatprep.subr.mxu0 0.0
          %3370 = vmatpush2.msra.mxu0 0.0
          %3371 = vmatprep.subr.mxu0 0.0
          %3372 = vmatpush2.msra.mxu0 0.0
          %3373 = vmatprep.subr.mxu0 0.0
          %3374 = vmatpush2.msra.mxu0 0.0
          %3375 = vmatprep.subr.mxu0 0.0
          %3376 = vmatpush2.msra.mxu0 0.0
          %3377 = vmatprep.subr.mxu0 0.0
          %3378 = vmatpush2.msra.mxu0 0.0
          %3379 = vmatprep.subr.mxu0 0.0
          %3380 = vmatpush2.msra.mxu0 0.0
          %3381 = vmatprep.subr.mxu0 0.0
          %3382 = vmatpush2.msra.mxu0 0.0
          %3383 = vmatprep.subr.mxu0 0.0
          %3384 = vmatpush2.msra.mxu0 0.0
          %3385 = vmatprep.subr.mxu0 0.0
          %3386 = vmatpush2.msra.mxu0 0.0
          %3387 = vmatprep.subr.mxu0 0.0
          %3388 = vmatpush2.msra.mxu0 0.0
          %3389 = vmatprep.subr.mxu0 0.0
          %3390 = vmatpush2.msra.mxu0 0.0
          %3391 = vmatprep.subr.mxu0 0.0
          %3392 = vmatpush2.msra.mxu0 0.0
          %3393 = vmatprep.mubr.f32.mxu0 0.0
          %3394 = vmatmul.mubr.f32.gmra.mxu0 %v3327
          %v3395 = vpop.f32.mrf.mxu0
          %v3396 = vadd.f32 0.0, %v3395
          %v3397 = vpop.f32.mrf.mxu0
          %3398 = vdwg.mxu0
          %3399 = vst.msk [vmem:[%s485] sm:$0xff] %vm767, %v3396
        $region92: #{tpu_custom_call.1} parent=59 // pred_fallthru
          _
        %s3400 = sand.u32 %s274, 1
        %s3401 = scalar_lea.sflag [#allocation9], %s3400
        %s3402 = sand.u32 %s274, 1
        %s3403 = smul.addr %s3402, 8
        %s3404 = scalar_lea.vmem [#allocation18], %s3403
        // Predicated region
        $region93: #{tpu_custom_call.1} parent=59 // pred_check
          %p3405 = pneg %p284
        $region94: #{tpu_custom_call.1} parent=59 // pred_check_branch
          %3407 = sbr.rel (%p3405) target = $region96
        $region95: #{tpu_custom_call.1} parent=59 // pred_region
          %s3409 = ssub.s32 128, 128
          %3410 = vsyncadd %s3401, %s3409
          %s3411 = smul.addr %s36, 128
          %s3412 = scalar_lea.hbm %s10, %s3411
          %s3414 = sshll.u32 %s3404, 4
          %s3415 = int_to_ptr.vmem [resolvable:$true] %s3414
          %3417 = dma.vmem_to_hbm [thread:$0]  %s3415, 128, %s3412, %s3401
        $region96: #{tpu_custom_call.1} parent=59 // pred_fallthru
          _
      $region60: #{tpu_custom_call.1} parent=5 // pred_fallthru
        _
      %p3418 = scmp.le.s32.totalorder 2, %s27
      // Predicated region
      $region97: #{tpu_custom_call.1} parent=5 // pred_check
        %p3419 = pneg %p3418
      $region98: #{tpu_custom_call.1} parent=5 // pred_check_branch
        %3421 = sbr.rel (%p3419) target = $region100
      $region99: #{tpu_custom_call.1} parent=5 // pred_region
        %s3422 = ssub.s32 %s27, 2
        // Predicated region
        $region101: #{tpu_custom_call.1} parent=99 // pred_check
          %p3423 = pneg %p290
        $region102: #{tpu_custom_call.1} parent=99 // pred_check_branch
          %3425 = sbr.rel (%p3423) target = $region104
        $region103: #{tpu_custom_call.1} parent=99 // pred_region
          %s3426 = sand.u32 %s275, 1
          %s3427 = scalar_lea.sflag [#allocation9], %s3426
          %s3428 = sand.u32 %s275, 1
          %s3429 = smul.addr %s3428, 8
          %s3430 = scalar_lea.vmem [#allocation18], %s3429
          %3431 = dma.done %s3427, 128
        $region104: #{tpu_custom_call.1} parent=99 // pred_fallthru
          _
      $region100: #{tpu_custom_call.1} parent=5 // pred_fallthru
        _
    $region6: #{tpu_custom_call.1} parent=1 // loop_footer
      %s31 = sadd.s32 1, %s27
    $region7: #{tpu_custom_call.1} parent=1 // loop_footer_branch
      %26 = sbr.rel target = $region3
    $region8: #{tpu_custom_call.1} parent=1 // loop_exit
      _
    %3432 = vsyncpa [#allocation8], 1
    %s3433 = scalar_lea.sflag [#allocation8], 1
    %3434 = vsyncpa %s3433, 1
    %3435 = vsyncpa [#allocation11], 1
    %s3436 = scalar_lea.sflag [#allocation11], 1
    %3437 = vsyncpa %s3436, 1
    %3438 = vsyncpa [#allocation14], 1
    %3439 = vsyncpa [#allocation17], 1
    %3440 = vsyncpa [#allocation9], 1
    %s3441 = scalar_lea.sflag [#allocation9], 1
    %3442 = vsyncpa %s3441, 1

</llo_original>
